<compile_context>
chip_gen: v7x
topology: tpu7x:2x2x1
jax: 0.10.0
libtpu: 0.0.40
codegen_flags: <defaults>
</compile_context>

<pallas_src>
import functools

import jax
import jax.numpy as jnp
from jax.experimental import pallas as pl
from jax.experimental.pallas import tpu as pltpu


def _round_up(x, m):
    return (x + m - 1) // m * m


# ----------------------------- fused conv kernel -----------------------------

def _fused_conv_kernel(x_ref, w1_ref, b1_ref, w2_ref, b2_ref, sel_ref, o_ref,
                       s1_ref, a1_ref, s2_ref, *, row, c1w, c2w, pw):
    """conv1(3x3)+ReLU -> conv2(3x3)+ReLU -> 2x2 maxpool -> lane compaction.

    Activations live in a channels-first flat-spatial layout (C, N*H*W):
    tap (i, j) of a valid 3x3 conv is the lane offset i*row + j.  Each conv is
    one MXU matmul against a staged (K, width) scratch.  Only lanes whose
    (n, h, w) decomposition is in-bounds are meaningful; out-of-bounds lanes
    hold finite garbage and are zeroed out by the 0/1 selection matmul.
    """
    cin2 = a1_ref.shape[0]                              # 32

    # --- stage conv1 taps (single input channel; K padded 9 -> 16) ---
    s1_ref[...] = jnp.zeros_like(s1_ref)
    for t in range(9):
        off = (t // 3) * row + (t % 3)
        s1_ref[t:t + 1, :] = x_ref[:, off:off + c1w]

    # --- conv1 + bias + ReLU (f32), store flat activation as bf16 ---
    a1 = jnp.dot(w1_ref[...], s1_ref[...], preferred_element_type=jnp.float32)
    a1 = jnp.maximum(a1 + b1_ref[...], 0.0)
    a1_ref[...] = a1.astype(a1_ref.dtype)

    # --- stage conv2 taps: (9 * Cin, c2w) bf16 ---
    for t in range(9):
        off = (t // 3) * row + (t % 3)
        s2_ref[t * cin2:(t + 1) * cin2, :] = a1_ref[:, off:off + c2w]

    # --- conv2 as one K=288 MXU matmul, f32 bias + ReLU epilogue ---
    c2 = jnp.dot(w2_ref[...], s2_ref[...], preferred_element_type=jnp.float32)
    c2 = jnp.maximum(c2 + b2_ref[...], 0.0)

    # --- fused 2x2 max-pool: 4-way shifted max on the flat 28-grid ---
    pooled = jnp.maximum(
        jnp.maximum(c2[:, 0:pw], c2[:, 1:pw + 1]),
        jnp.maximum(c2[:, row:row + pw], c2[:, row + 1:row + 1 + pw]))

    # --- stride-2 pooled-lane compaction via a constant 0/1 selection matmul.
    #     Output lanes are ordered n*144 + ph*12 + pw; pad lanes come out 0.
    gathered = jnp.dot(pooled.astype(jnp.bfloat16), sel_ref[...],
                       preferred_element_type=jnp.float32)
    o_ref[...] = gathered.astype(o_ref.dtype)


def fused_conv(xf, w1, b1, w2, b2, sel, *, row, c1w, c2w, pw, out_w):
    """xf: (1, x_w) f32 flat input.  w1: (32, 16) f32.  w2: (64, 288) bf16.
    sel: (pw, out_w) bf16 0/1 selection matrix.  Returns (64, out_w) bf16."""
    cout1 = w1.shape[0]
    cout2 = w2.shape[0]
    kernel = functools.partial(_fused_conv_kernel,
                               row=row, c1w=c1w, c2w=c2w, pw=pw)
    flops = 2 * (cout1 * w1.shape[1] * c1w            # conv1
                 + cout2 * w2.shape[1] * c2w          # conv2
                 + cout2 * pw * out_w)                # compaction matmul
    bytes_accessed = (xf.size * 4 + w1.size * 4 + w2.size * 2 + sel.size * 2
                      + (b1.size + b2.size) * 4 + cout2 * out_w * 2)
    return pl.pallas_call(
        kernel,
        out_shape=jax.ShapeDtypeStruct((cout2, out_w), jnp.bfloat16),
        grid=(1,),
        in_specs=[
            pl.BlockSpec(xf.shape, lambda i: (0, 0)),
            pl.BlockSpec(w1.shape, lambda i: (0, 0)),
            pl.BlockSpec(b1.shape, lambda i: (0, 0)),
            pl.BlockSpec(w2.shape, lambda i: (0, 0)),
            pl.BlockSpec(b2.shape, lambda i: (0, 0)),
            pl.BlockSpec(sel.shape, lambda i: (0, 0)),
        ],
        out_specs=pl.BlockSpec((cout2, out_w), lambda i: (0, 0)),
        scratch_shapes=[
            pltpu.VMEM((16, c1w), jnp.float32),           # staged conv1 taps
            pltpu.VMEM((cout1, c1w), jnp.bfloat16),       # conv1 activation
            pltpu.VMEM((9 * cout1, c2w), jnp.bfloat16),   # staged conv2 taps
        ],
        compiler_params=pltpu.CompilerParams(
            dimension_semantics=("arbitrary",),
            vmem_limit_bytes=32 * 1024 * 1024),
        cost_estimate=pl.CostEstimate(flops=flops, transcendentals=0,
                                      bytes_accessed=bytes_accessed),
    )(xf, w1, b1, w2, b2, sel)


# -------------------------------- fc head ----------------------------------

def _fc_head_kernel(a_ref, w1_ref, b1_ref, w2_ref, b2_ref, o_ref):
    h = jnp.dot(a_ref[...], w1_ref[...], preferred_element_type=jnp.float32)
    h = jnp.maximum(h + b1_ref[...], 0.0)                 # fc1 + ReLU, f32
    logits = jnp.dot(h.astype(jnp.bfloat16), w2_ref[...],
                     preferred_element_type=jnp.float32) + b2_ref[...]
    o_ref[...] = logits.astype(o_ref.dtype)


def fc_head(a, w1, b1, w2, b2):
    """relu(a @ w1 + b1) @ w2 + b2, single-step (whole fc1 weight in VMEM)."""
    n, kdim = a.shape
    hid = w1.shape[1]
    c = w2.shape[1]
    flops = 2 * (n * kdim * hid + n * hid * c)
    bytes_accessed = (a.size * 2 + w1.size * 2 + w2.size * 2
                      + (b1.size + b2.size) * 4 + n * c * 4)
    return pl.pallas_call(
        _fc_head_kernel,
        out_shape=jax.ShapeDtypeStruct((n, c), jnp.float32),
        grid=(1,),
        in_specs=[
            pl.BlockSpec((n, kdim), lambda i: (0, 0)),
            pl.BlockSpec((kdim, hid), lambda i: (0, 0)),
            pl.BlockSpec((1, hid), lambda i: (0, 0)),
            pl.BlockSpec((hid, c), lambda i: (0, 0)),
            pl.BlockSpec((1, c), lambda i: (0, 0)),
        ],
        out_specs=pl.BlockSpec((n, c), lambda i: (0, 0)),
        compiler_params=pltpu.CompilerParams(
            dimension_semantics=("arbitrary",),
            vmem_limit_bytes=32 * 1024 * 1024),
        cost_estimate=pl.CostEstimate(flops=flops, transcendentals=0,
                                      bytes_accessed=bytes_accessed),
    )(a, w1, b1, w2, b2)


# ------------------------------ params & glue ------------------------------

def init_params(key, num_classes):
    ks = jax.random.split(key, 8)
    s = 0.05
    return {
        "conv1_w": s * jax.random.normal(ks[0], (32, 1, 3, 3), jnp.float32),
        "conv1_b": s * jax.random.normal(ks[1], (32,), jnp.float32),
        "conv2_w": s * jax.random.normal(ks[2], (64, 32, 3, 3), jnp.float32),
        "conv2_b": s * jax.random.normal(ks[3], (64,), jnp.float32),
        "fc1_w":   s * jax.random.normal(ks[4], (128, 9216), jnp.float32),
        "fc1_b":   s * jax.random.normal(ks[5], (128,), jnp.float32),
        "fc2_w":   s * jax.random.normal(ks[6], (num_classes, 128), jnp.float32),
        "fc2_b":   s * jax.random.normal(ks[7], (num_classes,), jnp.float32),
    }


def pack_params(p):
    """One-time re-layout / cast of torch-layout params into kernel form."""
    co1, ci1 = p["conv1_w"].shape[0], p["conv1_w"].shape[1]
    co2, ci2 = p["conv2_w"].shape[0], p["conv2_w"].shape[1]
    # conv1: (Cout, 1, 3, 3) -> (Cout, 9) with tap index t = i*3+j, pad K -> 16.
    w1 = p["conv1_w"].reshape(co1, 9 * ci1)
    w1 = jnp.pad(w1, ((0, 0), (0, 16 - 9 * ci1))).astype(jnp.float32)
    # conv2: (Cout, Cin, 3, 3) -> (Cout, 9*Cin) with column index t*Cin + ci.
    w2 = (p["conv2_w"].transpose(0, 2, 3, 1)
          .reshape(co2, 9 * ci2).astype(jnp.bfloat16))
    return {
        "conv1_w": w1,
        "conv1_b": p["conv1_b"].reshape(-1, 1).astype(jnp.float32),
        "conv2_w": w2,
        "conv2_b": p["conv2_b"].reshape(-1, 1).astype(jnp.float32),
        "fc1_w": p["fc1_w"].T.astype(jnp.bfloat16),            # (9216, 128)
        "fc1_b": p["fc1_b"].reshape(1, -1).astype(jnp.float32),
        "fc2_w": p["fc2_w"].T.astype(jnp.bfloat16),            # (128, classes)
        "fc2_b": p["fc2_b"].reshape(1, -1).astype(jnp.float32),
    }


def _pool_selection_matrix(n, img, row, pooled_hw, pooled_w, out_w):
    """S[m, k] = 1 iff flat lane m == n_i*img + 2*ph*row + 2*pw for
    k = n_i*144 + ph*12 + pw (k >= n*144 -> all-zero pad column)."""
    feats = pooled_hw * pooled_hw
    k = jnp.arange(out_w)
    n_i = k // feats
    rem = k % feats
    ph = rem // pooled_hw
    pw = rem % pooled_hw
    lane = n_i * img + (2 * ph) * row + 2 * pw
    valid = k < n * feats
    m = jnp.arange(pooled_w)[:, None]
    return ((m == lane[None, :]) & valid[None, :]).astype(jnp.bfloat16)


def net_forward(packed, x):
    """Forward pass of Net (inference; Dropout2d == identity)."""
    n, cin, h, w = x.shape
    assert cin == 1 and h == 28 and w == 28, "Net expects (N, 1, 28, 28) inputs"
    img = h * w                          # 784
    nhw = n * img
    pool_hw = (h - 4) // 2               # 12
    feats = 64 * pool_hw * pool_hw       # 9216

    # Lane widths, derived so every shifted in-kernel read stays in bounds.
    max_pool_lane = (n - 1) * img + (pool_hw - 1) * 2 * w + (pool_hw - 1) * 2
    pooled_w = _round_up(max_pool_lane + 1, 8)          # 1424 at n=2
    c2_w = _round_up(pooled_w + w + 1, 128)             # 1536
    c1_w = _round_up(c2_w + 2 * w + 2, 128)             # 1664
    x_w = _round_up(max(c1_w + 2 * w + 2, nhw), 128)    # 1792
    out_w = _round_up(n * pool_hw * pool_hw, 128)       # 384

    # Input -> channels-first flat-spatial (1, N*H*W), zero-padded lanes, f32.
    xf = x.transpose(1, 0, 2, 3).reshape(cin, nhw)
    xf = jnp.pad(xf, ((0, 0), (0, x_w - nhw))).astype(jnp.float32)

    sel = _pool_selection_matrix(n, img, w, pool_hw, pooled_w, out_w)

    # conv1 + ReLU + conv2 + ReLU + 2x2 maxpool + compaction, one kernel.
    a2 = fused_conv(xf, packed["conv1_w"], packed["conv1_b"],
                    packed["conv2_w"], packed["conv2_b"], sel,
                    row=w, c1w=c1_w, c2w=c2_w, pw=pooled_w, out_w=out_w)

    # dropout1 / dropout2: identity in eval mode.
    # Remaining XLA glue: one tiny (64, n*144) -> (n, 9216) transpose (36 KB)
    # so the feature axis matches torch's (C, 12, 12) flatten order.
    a = (a2[:, :n * pool_hw * pool_hw]
         .reshape(64, n, pool_hw * pool_hw)
         .transpose(1, 0, 2)
         .reshape(n, feats))

    # fc1 + ReLU + (dropout2: identity) + fc2, one single-step kernel.
    return fc_head(a, packed["fc1_w"], packed["fc1_b"],
                   packed["fc2_w"], packed["fc2_b"])


def net_forward_reference(params, x):
    """Pure-JAX f32 reference for correctness checking."""
    y = jax.lax.conv_general_dilated(x, params["conv1_w"], (1, 1), "VALID",
                                     dimension_numbers=("NCHW", "OIHW", "NCHW"))
    y = jax.nn.relu(y + params["conv1_b"][None, :, None, None])
    y = jax.lax.conv_general_dilated(y, params["conv2_w"], (1, 1), "VALID",
                                     dimension_numbers=("NCHW", "OIHW", "NCHW"))
    y = jax.nn.relu(y + params["conv2_b"][None, :, None, None])
    n, c, hh, ww = y.shape
    y = y.reshape(n, c, hh // 2, 2, ww // 2, 2).max(axis=(3, 5))
    y = y.reshape(n, -1)
    y = jax.nn.relu(y @ params["fc1_w"].T + params["fc1_b"])
    y = y @ params["fc2_w"].T + params["fc2_b"]
    return y


if __name__ == "__main__":
    num_classes = 10
    key = jax.random.PRNGKey(0)
    k_param, k_x = jax.random.split(key)

    params = init_params(k_param, num_classes)
    packed = pack_params(params)                 # one-time re-layout / cast
    # fc1 expects 9216 = 64*12*12 features -> input must be (N, 1, 28, 28).
    x = jax.random.normal(k_x, (2, 1, 28, 28), jnp.float32)

    fwd = jax.jit(net_forward)
    out = jax.block_until_ready(fwd(packed, x))
    assert out.shape == (2, num_classes)

    ref = net_forward_reference(params, x)
    scale = float(jnp.max(jnp.abs(ref))) + 1e-6
    err = float(jnp.max(jnp.abs(out - ref)))
    # bf16 MXU operands with f32 accumulation -> loosened tolerance vs f32 ref.
    assert err <= 5e-2 * scale + 5e-3, f"mismatch vs reference: err={err}, scale={scale}"

    print("KERNEL_OK")
</pallas_src>

<mosaic_0001>
module attributes {stable_mosaic.version = 11 : i64} {
  func.func @_fused_conv_kernel(%arg0: i32, %arg1: memref<1x1792xf32, #tpu.memory_space<vmem>>, %arg2: memref<32x16xf32, #tpu.memory_space<vmem>>, %arg3: memref<32x1xf32, #tpu.memory_space<vmem>>, %arg4: memref<64x288xbf16, #tpu.memory_space<vmem>>, %arg5: memref<64x1xf32, #tpu.memory_space<vmem>>, %arg6: memref<1424x384xbf16, #tpu.memory_space<vmem>>, %arg7: memref<64x384xbf16, #tpu.memory_space<vmem>>, %arg8: memref<16x1664xf32, #tpu.memory_space<vmem>>, %arg9: memref<32x1664xbf16, #tpu.memory_space<vmem>>, %arg10: memref<288x1536xbf16, #tpu.memory_space<vmem>>) attributes {dimension_semantics = [#tpu.dimension_semantics<arbitrary>], iteration_bounds = array<i64: 1>, scalar_prefetch = 0 : i64, scratch_operands = 3 : i64, tpu.core_type = #tpu.core_type<tc>, window_params = [{pipeline_mode = #tpu.pipeline_mode<synchronous>, transform_indices = @transform_0, window_bounds = array<i64: 1, 1792>}, {pipeline_mode = #tpu.pipeline_mode<synchronous>, transform_indices = @transform_1, window_bounds = array<i64: 32, 16>}, {pipeline_mode = #tpu.pipeline_mode<synchronous>, transform_indices = @transform_2, window_bounds = array<i64: 32, 1>}, {pipeline_mode = #tpu.pipeline_mode<synchronous>, transform_indices = @transform_3, window_bounds = array<i64: 64, 288>}, {pipeline_mode = #tpu.pipeline_mode<synchronous>, transform_indices = @transform_4, window_bounds = array<i64: 64, 1>}, {pipeline_mode = #tpu.pipeline_mode<synchronous>, transform_indices = @transform_5, window_bounds = array<i64: 1424, 384>}, {pipeline_mode = #tpu.pipeline_mode<synchronous>, transform_indices = @transform_6, window_bounds = array<i64: 64, 384>}]} {
    %cst = arith.constant 0.000000e+00 : f32
    %0 = vector.broadcast %cst : f32 to vector<16x1664xf32>
    %c0 = arith.constant 0 : index
    %c0_0 = arith.constant 0 : index
    %1 = vector.load %arg8[%c0, %c0_0] : memref<16x1664xf32, #tpu.memory_space<vmem>>, vector<16x1664xf32>
    tpu.vector_store %arg8[%c0, %c0_0], %0 {strides = array<i32>} : memref<16x1664xf32, #tpu.memory_space<vmem>>, vector<16x1664xf32>,
    %c0_1 = arith.constant 0 : index
    %c0_2 = arith.constant 0 : index
    %2 = vector.load %arg1[%c0_1, %c0_2] : memref<1x1792xf32, #tpu.memory_space<vmem>>, vector<1x1664xf32>
    %c0_3 = arith.constant 0 : index
    %c0_4 = arith.constant 0 : index
    %3 = vector.load %arg8[%c0_3, %c0_4] : memref<16x1664xf32, #tpu.memory_space<vmem>>, vector<1x1664xf32>
    tpu.vector_store %arg8[%c0_3, %c0_4], %2 {strides = array<i32>} : memref<16x1664xf32, #tpu.memory_space<vmem>>, vector<1x1664xf32>,
    %c0_5 = arith.constant 0 : index
    %c1 = arith.constant 1 : index
    %4 = vector.load %arg1[%c0_5, %c1] : memref<1x1792xf32, #tpu.memory_space<vmem>>, vector<1x1664xf32>
    %c1_6 = arith.constant 1 : index
    %c0_7 = arith.constant 0 : index
    %5 = vector.load %arg8[%c1_6, %c0_7] : memref<16x1664xf32, #tpu.memory_space<vmem>>, vector<1x1664xf32>
    tpu.vector_store %arg8[%c1_6, %c0_7], %4 {strides = array<i32>} : memref<16x1664xf32, #tpu.memory_space<vmem>>, vector<1x1664xf32>,
    %c0_8 = arith.constant 0 : index
    %c2 = arith.constant 2 : index
    %6 = vector.load %arg1[%c0_8, %c2] : memref<1x1792xf32, #tpu.memory_space<vmem>>, vector<1x1664xf32>
    %c2_9 = arith.constant 2 : index
    %c0_10 = arith.constant 0 : index
    %7 = vector.load %arg8[%c2_9, %c0_10] : memref<16x1664xf32, #tpu.memory_space<vmem>>, vector<1x1664xf32>
    tpu.vector_store %arg8[%c2_9, %c0_10], %6 {strides = array<i32>} : memref<16x1664xf32, #tpu.memory_space<vmem>>, vector<1x1664xf32>,
    %c0_11 = arith.constant 0 : index
    %c28 = arith.constant 28 : index
    %8 = vector.load %arg1[%c0_11, %c28] : memref<1x1792xf32, #tpu.memory_space<vmem>>, vector<1x1664xf32>
    %c3 = arith.constant 3 : index
    %c0_12 = arith.constant 0 : index
    %9 = vector.load %arg8[%c3, %c0_12] : memref<16x1664xf32, #tpu.memory_space<vmem>>, vector<1x1664xf32>
    tpu.vector_store %arg8[%c3, %c0_12], %8 {strides = array<i32>} : memref<16x1664xf32, #tpu.memory_space<vmem>>, vector<1x1664xf32>,
    %c0_13 = arith.constant 0 : index
    %c29 = arith.constant 29 : index
    %10 = vector.load %arg1[%c0_13, %c29] : memref<1x1792xf32, #tpu.memory_space<vmem>>, vector<1x1664xf32>
    %c4 = arith.constant 4 : index
    %c0_14 = arith.constant 0 : index
    %11 = vector.load %arg8[%c4, %c0_14] : memref<16x1664xf32, #tpu.memory_space<vmem>>, vector<1x1664xf32>
    tpu.vector_store %arg8[%c4, %c0_14], %10 {strides = array<i32>} : memref<16x1664xf32, #tpu.memory_space<vmem>>, vector<1x1664xf32>,
    %c0_15 = arith.constant 0 : index
    %c30 = arith.constant 30 : index
    %12 = vector.load %arg1[%c0_15, %c30] : memref<1x1792xf32, #tpu.memory_space<vmem>>, vector<1x1664xf32>
    %c5 = arith.constant 5 : index
    %c0_16 = arith.constant 0 : index
    %13 = vector.load %arg8[%c5, %c0_16] : memref<16x1664xf32, #tpu.memory_space<vmem>>, vector<1x1664xf32>
    tpu.vector_store %arg8[%c5, %c0_16], %12 {strides = array<i32>} : memref<16x1664xf32, #tpu.memory_space<vmem>>, vector<1x1664xf32>,
    %c0_17 = arith.constant 0 : index
    %c56 = arith.constant 56 : index
    %14 = vector.load %arg1[%c0_17, %c56] : memref<1x1792xf32, #tpu.memory_space<vmem>>, vector<1x1664xf32>
    %c6 = arith.constant 6 : index
    %c0_18 = arith.constant 0 : index
    %15 = vector.load %arg8[%c6, %c0_18] : memref<16x1664xf32, #tpu.memory_space<vmem>>, vector<1x1664xf32>
    tpu.vector_store %arg8[%c6, %c0_18], %14 {strides = array<i32>} : memref<16x1664xf32, #tpu.memory_space<vmem>>, vector<1x1664xf32>,
    %c0_19 = arith.constant 0 : index
    %c57 = arith.constant 57 : index
    %16 = vector.load %arg1[%c0_19, %c57] : memref<1x1792xf32, #tpu.memory_space<vmem>>, vector<1x1664xf32>
    %c7 = arith.constant 7 : index
    %c0_20 = arith.constant 0 : index
    %17 = vector.load %arg8[%c7, %c0_20] : memref<16x1664xf32, #tpu.memory_space<vmem>>, vector<1x1664xf32>
    tpu.vector_store %arg8[%c7, %c0_20], %16 {strides = array<i32>} : memref<16x1664xf32, #tpu.memory_space<vmem>>, vector<1x1664xf32>,
    %c0_21 = arith.constant 0 : index
    %c58 = arith.constant 58 : index
    %18 = vector.load %arg1[%c0_21, %c58] : memref<1x1792xf32, #tpu.memory_space<vmem>>, vector<1x1664xf32>
    %c8 = arith.constant 8 : index
    %c0_22 = arith.constant 0 : index
    %19 = vector.load %arg8[%c8, %c0_22] : memref<16x1664xf32, #tpu.memory_space<vmem>>, vector<1x1664xf32>
    tpu.vector_store %arg8[%c8, %c0_22], %18 {strides = array<i32>} : memref<16x1664xf32, #tpu.memory_space<vmem>>, vector<1x1664xf32>,
    %c0_23 = arith.constant 0 : index
    %c0_24 = arith.constant 0 : index
    %20 = vector.load %arg2[%c0_23, %c0_24] : memref<32x16xf32, #tpu.memory_space<vmem>>, vector<32x16xf32>
    %c0_25 = arith.constant 0 : index
    %c0_26 = arith.constant 0 : index
    %21 = vector.load %arg8[%c0_25, %c0_26] : memref<16x1664xf32, #tpu.memory_space<vmem>>, vector<16x1664xf32>
    %cst_27 = arith.constant dense<0.000000e+00> : vector<32x1664xf32>
    %22 = tpu.matmul %20, %21, %cst_27 {dimension_numbers = #tpu.dot_dimension_numbers<[1], [0], [0], [1], [0, 0, 1, 1], [], []>} : vector<32x16xf32>, vector<16x1664xf32>, vector<32x1664xf32> -> vector<32x1664xf32>
    %c0_28 = arith.constant 0 : index
    %c0_29 = arith.constant 0 : index
    %23 = vector.load %arg3[%c0_28, %c0_29] : memref<32x1xf32, #tpu.memory_space<vmem>>, vector<32x1xf32>
    %24 = vector.broadcast %23 : vector<32x1xf32> to vector<32x1664xf32>
    %25 = arith.addf %22, %24 : vector<32x1664xf32>
    %cst_30 = arith.constant 0.000000e+00 : f32
    %26 = vector.broadcast %cst_30 : f32 to vector<32x1664xf32>
    %27 = arith.maximumf %25, %26 : vector<32x1664xf32>
    %28 = arith.truncf %27 : vector<32x1664xf32> to vector<32x1664xbf16>
    %c0_31 = arith.constant 0 : index
    %c0_32 = arith.constant 0 : index
    %29 = vector.load %arg9[%c0_31, %c0_32] : memref<32x1664xbf16, #tpu.memory_space<vmem>>, vector<32x1664xbf16>
    tpu.vector_store %arg9[%c0_31, %c0_32], %28 {strides = array<i32>} : memref<32x1664xbf16, #tpu.memory_space<vmem>>, vector<32x1664xbf16>,
    %c0_33 = arith.constant 0 : index
    %c0_34 = arith.constant 0 : index
    %30 = vector.load %arg9[%c0_33, %c0_34] : memref<32x1664xbf16, #tpu.memory_space<vmem>>, vector<32x1536xbf16>
    %c0_35 = arith.constant 0 : index
    %c0_36 = arith.constant 0 : index
    %31 = vector.load %arg10[%c0_35, %c0_36] : memref<288x1536xbf16, #tpu.memory_space<vmem>>, vector<32x1536xbf16>
    tpu.vector_store %arg10[%c0_35, %c0_36], %30 {strides = array<i32>} : memref<288x1536xbf16, #tpu.memory_space<vmem>>, vector<32x1536xbf16>,
    %c0_37 = arith.constant 0 : index
    %c1_38 = arith.constant 1 : index
    %32 = vector.load %arg9[%c0_37, %c1_38] : memref<32x1664xbf16, #tpu.memory_space<vmem>>, vector<32x1536xbf16>
    %c32 = arith.constant 32 : index
    %c0_39 = arith.constant 0 : index
    %33 = vector.load %arg10[%c32, %c0_39] : memref<288x1536xbf16, #tpu.memory_space<vmem>>, vector<32x1536xbf16>
    tpu.vector_store %arg10[%c32, %c0_39], %32 {strides = array<i32>} : memref<288x1536xbf16, #tpu.memory_space<vmem>>, vector<32x1536xbf16>,
    %c0_40 = arith.constant 0 : index
    %c2_41 = arith.constant 2 : index
    %34 = vector.load %arg9[%c0_40, %c2_41] : memref<32x1664xbf16, #tpu.memory_space<vmem>>, vector<32x1536xbf16>
    %c64 = arith.constant 64 : index
    %c0_42 = arith.constant 0 : index
    %35 = vector.load %arg10[%c64, %c0_42] : memref<288x1536xbf16, #tpu.memory_space<vmem>>, vector<32x1536xbf16>
    tpu.vector_store %arg10[%c64, %c0_42], %34 {strides = array<i32>} : memref<288x1536xbf16, #tpu.memory_space<vmem>>, vector<32x1536xbf16>,
    %c0_43 = arith.constant 0 : index
    %c28_44 = arith.constant 28 : index
    %36 = vector.load %arg9[%c0_43, %c28_44] : memref<32x1664xbf16, #tpu.memory_space<vmem>>, vector<32x1536xbf16>
    %c96 = arith.constant 96 : index
    %c0_45 = arith.constant 0 : index
    %37 = vector.load %arg10[%c96, %c0_45] : memref<288x1536xbf16, #tpu.memory_space<vmem>>, vector<32x1536xbf16>
    tpu.vector_store %arg10[%c96, %c0_45], %36 {strides = array<i32>} : memref<288x1536xbf16, #tpu.memory_space<vmem>>, vector<32x1536xbf16>,
    %c0_46 = arith.constant 0 : index
    %c29_47 = arith.constant 29 : index
    %38 = vector.load %arg9[%c0_46, %c29_47] : memref<32x1664xbf16, #tpu.memory_space<vmem>>, vector<32x1536xbf16>
    %c128 = arith.constant 128 : index
    %c0_48 = arith.constant 0 : index
    %39 = vector.load %arg10[%c128, %c0_48] : memref<288x1536xbf16, #tpu.memory_space<vmem>>, vector<32x1536xbf16>
    tpu.vector_store %arg10[%c128, %c0_48], %38 {strides = array<i32>} : memref<288x1536xbf16, #tpu.memory_space<vmem>>, vector<32x1536xbf16>,
    %c0_49 = arith.constant 0 : index
    %c30_50 = arith.constant 30 : index
    %40 = vector.load %arg9[%c0_49, %c30_50] : memref<32x1664xbf16, #tpu.memory_space<vmem>>, vector<32x1536xbf16>
    %c160 = arith.constant 160 : index
    %c0_51 = arith.constant 0 : index
    %41 = vector.load %arg10[%c160, %c0_51] : memref<288x1536xbf16, #tpu.memory_space<vmem>>, vector<32x1536xbf16>
    tpu.vector_store %arg10[%c160, %c0_51], %40 {strides = array<i32>} : memref<288x1536xbf16, #tpu.memory_space<vmem>>, vector<32x1536xbf16>,
    %c0_52 = arith.constant 0 : index
    %c56_53 = arith.constant 56 : index
    %42 = vector.load %arg9[%c0_52, %c56_53] : memref<32x1664xbf16, #tpu.memory_space<vmem>>, vector<32x1536xbf16>
    %c192 = arith.constant 192 : index
    %c0_54 = arith.constant 0 : index
    %43 = vector.load %arg10[%c192, %c0_54] : memref<288x1536xbf16, #tpu.memory_space<vmem>>, vector<32x1536xbf16>
    tpu.vector_store %arg10[%c192, %c0_54], %42 {strides = array<i32>} : memref<288x1536xbf16, #tpu.memory_space<vmem>>, vector<32x1536xbf16>,
    %c0_55 = arith.constant 0 : index
    %c57_56 = arith.constant 57 : index
    %44 = vector.load %arg9[%c0_55, %c57_56] : memref<32x1664xbf16, #tpu.memory_space<vmem>>, vector<32x1536xbf16>
    %c224 = arith.constant 224 : index
    %c0_57 = arith.constant 0 : index
    %45 = vector.load %arg10[%c224, %c0_57] : memref<288x1536xbf16, #tpu.memory_space<vmem>>, vector<32x1536xbf16>
    tpu.vector_store %arg10[%c224, %c0_57], %44 {strides = array<i32>} : memref<288x1536xbf16, #tpu.memory_space<vmem>>, vector<32x1536xbf16>,
    %c0_58 = arith.constant 0 : index
    %c58_59 = arith.constant 58 : index
    %46 = vector.load %arg9[%c0_58, %c58_59] : memref<32x1664xbf16, #tpu.memory_space<vmem>>, vector<32x1536xbf16>
    %c256 = arith.constant 256 : index
    %c0_60 = arith.constant 0 : index
    %47 = vector.load %arg10[%c256, %c0_60] : memref<288x1536xbf16, #tpu.memory_space<vmem>>, vector<32x1536xbf16>
    tpu.vector_store %arg10[%c256, %c0_60], %46 {strides = array<i32>} : memref<288x1536xbf16, #tpu.memory_space<vmem>>, vector<32x1536xbf16>,
    %c0_61 = arith.constant 0 : index
    %c0_62 = arith.constant 0 : index
    %48 = vector.load %arg4[%c0_61, %c0_62] : memref<64x288xbf16, #tpu.memory_space<vmem>>, vector<64x288xbf16>
    %c0_63 = arith.constant 0 : index
    %c0_64 = arith.constant 0 : index
    %49 = vector.load %arg10[%c0_63, %c0_64] : memref<288x1536xbf16, #tpu.memory_space<vmem>>, vector<288x1536xbf16>
    %cst_65 = arith.constant dense<0.000000e+00> : vector<64x1536xf32>
    %50 = tpu.matmul %48, %49, %cst_65 {dimension_numbers = #tpu.dot_dimension_numbers<[1], [0], [0], [1], [0, 0, 1, 1], [], []>} : vector<64x288xbf16>, vector<288x1536xbf16>, vector<64x1536xf32> -> vector<64x1536xf32>
    %c0_66 = arith.constant 0 : index
    %c0_67 = arith.constant 0 : index
    %51 = vector.load %arg5[%c0_66, %c0_67] : memref<64x1xf32, #tpu.memory_space<vmem>>, vector<64x1xf32>
    %52 = vector.broadcast %51 : vector<64x1xf32> to vector<64x1536xf32>
    %53 = arith.addf %50, %52 : vector<64x1536xf32>
    %cst_68 = arith.constant 0.000000e+00 : f32
    %54 = vector.broadcast %cst_68 : f32 to vector<64x1536xf32>
    %55 = arith.maximumf %53, %54 : vector<64x1536xf32>
    %56 = vector.extract_strided_slice %55 {offsets = [0, 0], sizes = [64, 1424], strides = [1, 1]} : vector<64x1536xf32> to vector<64x1424xf32>
    %57 = vector.extract_strided_slice %55 {offsets = [0, 1], sizes = [64, 1424], strides = [1, 1]} : vector<64x1536xf32> to vector<64x1424xf32>
    %58 = arith.maximumf %56, %57 : vector<64x1424xf32>
    %59 = vector.extract_strided_slice %55 {offsets = [0, 28], sizes = [64, 1424], strides = [1, 1]} : vector<64x1536xf32> to vector<64x1424xf32>
    %60 = vector.extract_strided_slice %55 {offsets = [0, 29], sizes = [64, 1424], strides = [1, 1]} : vector<64x1536xf32> to vector<64x1424xf32>
    %61 = arith.maximumf %59, %60 : vector<64x1424xf32>
    %62 = arith.maximumf %58, %61 : vector<64x1424xf32>
    %63 = arith.truncf %62 : vector<64x1424xf32> to vector<64x1424xbf16>
    %c0_69 = arith.constant 0 : index
    %c0_70 = arith.constant 0 : index
    %64 = vector.load %arg6[%c0_69, %c0_70] : memref<1424x384xbf16, #tpu.memory_space<vmem>>, vector<1424x384xbf16>
    %cst_71 = arith.constant dense<0.000000e+00> : vector<64x384xf32>
    %65 = tpu.matmul %63, %64, %cst_71 {dimension_numbers = #tpu.dot_dimension_numbers<[1], [0], [0], [1], [0, 0, 1, 1], [], []>} : vector<64x1424xbf16>, vector<1424x384xbf16>, vector<64x384xf32> -> vector<64x384xf32>
    %66 = arith.truncf %65 : vector<64x384xf32> to vector<64x384xbf16>
    %c0_72 = arith.constant 0 : index
    %c0_73 = arith.constant 0 : index
    %67 = vector.load %arg7[%c0_72, %c0_73] : memref<64x384xbf16, #tpu.memory_space<vmem>>, vector<64x384xbf16>
    tpu.vector_store %arg7[%c0_72, %c0_73], %66 {strides = array<i32>} : memref<64x384xbf16, #tpu.memory_space<vmem>>, vector<64x384xbf16>,
    return
  }
  func.func @transform_0(%arg0: i32) -> (i32, i32) {
    %c0_i32 = arith.constant 0 : i32
    %c0_i32_0 = arith.constant 0 : i32
    %c0_i32_1 = arith.constant 0 : i32
    return %c0_i32, %c0_i32_0 : i32, i32
  }
  func.func @transform_1(%arg0: i32) -> (i32, i32) {
    %c0_i32 = arith.constant 0 : i32
    %c0_i32_0 = arith.constant 0 : i32
    %c0_i32_1 = arith.constant 0 : i32
    return %c0_i32, %c0_i32_0 : i32, i32
  }
  func.func @transform_2(%arg0: i32) -> (i32, i32) {
    %c0_i32 = arith.constant 0 : i32
    %c0_i32_0 = arith.constant 0 : i32
    %c0_i32_1 = arith.constant 0 : i32
    return %c0_i32, %c0_i32_0 : i32, i32
  }
  func.func @transform_3(%arg0: i32) -> (i32, i32) {
    %c0_i32 = arith.constant 0 : i32
    %c0_i32_0 = arith.constant 0 : i32
    %c0_i32_1 = arith.constant 0 : i32
    return %c0_i32, %c0_i32_0 : i32, i32
  }
  func.func @transform_4(%arg0: i32) -> (i32, i32) {
    %c0_i32 = arith.constant 0 : i32
    %c0_i32_0 = arith.constant 0 : i32
    %c0_i32_1 = arith.constant 0 : i32
    return %c0_i32, %c0_i32_0 : i32, i32
  }
  func.func @transform_5(%arg0: i32) -> (i32, i32) {
    %c0_i32 = arith.constant 0 : i32
    %c0_i32_0 = arith.constant 0 : i32
    %c0_i32_1 = arith.constant 0 : i32
    return %c0_i32, %c0_i32_0 : i32, i32
  }
  func.func @transform_6(%arg0: i32) -> (i32, i32) {
    %c0_i32 = arith.constant 0 : i32
    %c0_i32_0 = arith.constant 0 : i32
    %c0_i32_1 = arith.constant 0 : i32
    return %c0_i32, %c0_i32_0 : i32, i32
  }
}

module attributes {stable_mosaic.version = 11 : i64} {
  func.func @_fc_head_kernel(%arg0: i32, %arg1: memref<2x9216xbf16, #tpu.memory_space<vmem>>, %arg2: memref<9216x128xbf16, #tpu.memory_space<vmem>>, %arg3: memref<1x128xf32, #tpu.memory_space<vmem>>, %arg4: memref<128x10xbf16, #tpu.memory_space<vmem>>, %arg5: memref<1x10xf32, #tpu.memory_space<vmem>>, %arg6: memref<2x10xf32, #tpu.memory_space<vmem>>) attributes {dimension_semantics = [#tpu.dimension_semantics<arbitrary>], iteration_bounds = array<i64: 1>, scalar_prefetch = 0 : i64, scratch_operands = 0 : i64, tpu.core_type = #tpu.core_type<tc>, window_params = [{pipeline_mode = #tpu.pipeline_mode<synchronous>, transform_indices = @transform_0, window_bounds = array<i64: 2, 9216>}, {pipeline_mode = #tpu.pipeline_mode<synchronous>, transform_indices = @transform_1, window_bounds = array<i64: 9216, 128>}, {pipeline_mode = #tpu.pipeline_mode<synchronous>, transform_indices = @transform_2, window_bounds = array<i64: 1, 128>}, {pipeline_mode = #tpu.pipeline_mode<synchronous>, transform_indices = @transform_3, window_bounds = array<i64: 128, 10>}, {pipeline_mode = #tpu.pipeline_mode<synchronous>, transform_indices = @transform_4, window_bounds = array<i64: 1, 10>}, {pipeline_mode = #tpu.pipeline_mode<synchronous>, transform_indices = @transform_5, window_bounds = array<i64: 2, 10>}]} {
    %c0 = arith.constant 0 : index
    %c0_0 = arith.constant 0 : index
    %0 = vector.load %arg1[%c0, %c0_0] : memref<2x9216xbf16, #tpu.memory_space<vmem>>, vector<2x9216xbf16>
    %c0_1 = arith.constant 0 : index
    %c0_2 = arith.constant 0 : index
    %1 = vector.load %arg2[%c0_1, %c0_2] : memref<9216x128xbf16, #tpu.memory_space<vmem>>, vector<9216x128xbf16>
    %cst = arith.constant dense<0.000000e+00> : vector<2x128xf32>
    %2 = tpu.matmul %0, %1, %cst {dimension_numbers = #tpu.dot_dimension_numbers<[1], [0], [0], [1], [0, 0, 1, 1], [], []>} : vector<2x9216xbf16>, vector<9216x128xbf16>, vector<2x128xf32> -> vector<2x128xf32>
    %c0_3 = arith.constant 0 : index
    %c0_4 = arith.constant 0 : index
    %3 = vector.load %arg3[%c0_3, %c0_4] : memref<1x128xf32, #tpu.memory_space<vmem>>, vector<1x128xf32>
    %4 = vector.broadcast %3 : vector<1x128xf32> to vector<2x128xf32>
    %5 = arith.addf %2, %4 : vector<2x128xf32>
    %cst_5 = arith.constant 0.000000e+00 : f32
    %6 = vector.broadcast %cst_5 : f32 to vector<2x128xf32>
    %7 = arith.maximumf %5, %6 : vector<2x128xf32>
    %8 = arith.truncf %7 : vector<2x128xf32> to vector<2x128xbf16>
    %c0_6 = arith.constant 0 : index
    %c0_7 = arith.constant 0 : index
    %9 = vector.load %arg4[%c0_6, %c0_7] : memref<128x10xbf16, #tpu.memory_space<vmem>>, vector<128x10xbf16>
    %cst_8 = arith.constant dense<0.000000e+00> : vector<2x10xf32>
    %10 = tpu.matmul %8, %9, %cst_8 {dimension_numbers = #tpu.dot_dimension_numbers<[1], [0], [0], [1], [0, 0, 1, 1], [], []>} : vector<2x128xbf16>, vector<128x10xbf16>, vector<2x10xf32> -> vector<2x10xf32>
    %c0_9 = arith.constant 0 : index
    %c0_10 = arith.constant 0 : index
    %11 = vector.load %arg5[%c0_9, %c0_10] : memref<1x10xf32, #tpu.memory_space<vmem>>, vector<1x10xf32>
    %12 = vector.broadcast %11 : vector<1x10xf32> to vector<2x10xf32>
    %13 = arith.addf %10, %12 : vector<2x10xf32>
    %c0_11 = arith.constant 0 : index
    %c0_12 = arith.constant 0 : index
    %14 = vector.load %arg6[%c0_11, %c0_12] : memref<2x10xf32, #tpu.memory_space<vmem>>, vector<2x10xf32>
    tpu.vector_store %arg6[%c0_11, %c0_12], %13 {strides = array<i32>} : memref<2x10xf32, #tpu.memory_space<vmem>>, vector<2x10xf32>,
    return
  }
  func.func @transform_0(%arg0: i32) -> (i32, i32) {
    %c0_i32 = arith.constant 0 : i32
    %c0_i32_0 = arith.constant 0 : i32
    %c0_i32_1 = arith.constant 0 : i32
    return %c0_i32, %c0_i32_0 : i32, i32
  }
  func.func @transform_1(%arg0: i32) -> (i32, i32) {
    %c0_i32 = arith.constant 0 : i32
    %c0_i32_0 = arith.constant 0 : i32
    %c0_i32_1 = arith.constant 0 : i32
    return %c0_i32, %c0_i32_0 : i32, i32
  }
  func.func @transform_2(%arg0: i32) -> (i32, i32) {
    %c0_i32 = arith.constant 0 : i32
    %c0_i32_0 = arith.constant 0 : i32
    %c0_i32_1 = arith.constant 0 : i32
    return %c0_i32, %c0_i32_0 : i32, i32
  }
  func.func @transform_3(%arg0: i32) -> (i32, i32) {
    %c0_i32 = arith.constant 0 : i32
    %c0_i32_0 = arith.constant 0 : i32
    %c0_i32_1 = arith.constant 0 : i32
    return %c0_i32, %c0_i32_0 : i32, i32
  }
  func.func @transform_4(%arg0: i32) -> (i32, i32) {
    %c0_i32 = arith.constant 0 : i32
    %c0_i32_0 = arith.constant 0 : i32
    %c0_i32_1 = arith.constant 0 : i32
    return %c0_i32, %c0_i32_0 : i32, i32
  }
  func.func @transform_5(%arg0: i32) -> (i32, i32) {
    %c0_i32 = arith.constant 0 : i32
    %c0_i32_0 = arith.constant 0 : i32
    %c0_i32_1 = arith.constant 0 : i32
    return %c0_i32, %c0_i32_0 : i32, i32
  }
}

</mosaic_0001>

<llo_original>
// kernel: net_forward.2
$region0: #{net_forward.2}
  #allocation0 [shape = 'u32[]', space=smem, size = 0x4, offset = 0x4, fixed_abs, tag = 'smem constant byte address 0x4 - core index']
  #allocation1 [shape = 'u32[144,128]{1,0:T(1,128)}', space=vmem, size = 0x12000, scoped, tag = 'internal scratch']
  #allocation2 [shape = 'f32[16,1664]{1,0:T(8,128)}', space=vmem, size = 0x1a000, scoped, tag = 'scratch operand']
  #allocation3 [shape = 'bf16[32,1664]{1,0:T(16,128)(2,1)}', space=vmem, size = 0x1a000, scoped, tag = 'scratch operand']
  #allocation4 [shape = 'bf16[288,1536]{1,0:T(16,128)(2,1)}', space=vmem, size = 0xd8000, scoped, tag = 'scratch operand']
  %s0 = inlined_call_operand.vmem [shape: f32[1,1792], index: 0, kind: input, shape index: {}]
  %s1 = inlined_call_operand.vmem [shape: f32[32,16], index: 1, kind: input, shape index: {}]
  %s2 = inlined_call_operand.vmem [shape: f32[32,1], index: 2, kind: input, shape index: {}]
  %s3 = inlined_call_operand.hbm [shape: bf16[64,288], index: 3, kind: input, shape index: {}]
  %s4 = inlined_call_operand.vmem [shape: f32[64,1], index: 4, kind: input, shape index: {}]
  %s5 = inlined_call_operand.vmem [shape: bf16[1424,384], index: 5, kind: input, shape index: {}]
  %s6 = inlined_call_operand.vmem [shape: bf16[64,384], index: 6, kind: output, shape index: {}]
  %s7 = sld [smem:[#allocation0]]
  $region38: #{net_forward.2} parent=0
    _
  %s9 = ssub.s32 1, %s7
  %s10 = scalar_select 0, %s9, %s7
  $region1: #{net_forward.2} parent=0
    #allocation5 [shape = 'u8[49152]{0}', space=vmem, size = 0xc000, scoped, tag = 'input window, operand 3, single buffered']
    #allocation6 [shape = 's32[1]{0}', space=sflag, size = 0x4, scoped, tag = 'scoped memory for net_forward.2']
    %11 = vsyncpa [#allocation6], 0
    // Predicated region
    $region2: #{net_forward.2} parent=1 // pred_check
      _
    $region3: #{net_forward.2} parent=1 // pred_check_branch
      %13 = sbr.rel (0) target = $region5
    $region4: #{net_forward.2} parent=1 // pred_region
      _
    $region5: #{net_forward.2} parent=1 // pred_fallthru
      _
    // Predicated region
    $region6: #{net_forward.2} parent=1 // pred_check
      _
    $region7: #{net_forward.2} parent=1 // pred_check_branch
      %15 = sbr.rel (0) target = $region9
    $region8: #{net_forward.2} parent=1 // pred_region
      _
    $region9: #{net_forward.2} parent=1 // pred_fallthru
      _
    // Predicated region
    $region10: #{net_forward.2} parent=1 // pred_check
      _
    $region11: #{net_forward.2} parent=1 // pred_check_branch
      %17 = sbr.rel (0) target = $region13
    $region12: #{net_forward.2} parent=1 // pred_region
      _
    $region13: #{net_forward.2} parent=1 // pred_fallthru
      _
    // Predicated region
    $region14: #{net_forward.2} parent=1 // pred_check
      _
    $region15: #{net_forward.2} parent=1 // pred_check_branch
      %19 = sbr.rel (0) target = $region17
    $region16: #{net_forward.2} parent=1 // pred_region
      %s21 = ssub.s32 1536, 1536
      %22 = vsyncadd [#allocation6], %s21
      %s23 = sshll.u32 [#allocation5], 4
      %s24 = int_to_ptr.vmem [resolvable:$true] %s23
      %29 = dma.hbm_to_vmem [thread:$0]  %s3, 1536, %s24, [#allocation6], 192, 192, 12
    $region17: #{net_forward.2} parent=1 // pred_fallthru
      _
    // Predicated region
    $region18: #{net_forward.2} parent=1 // pred_check
      _
    $region19: #{net_forward.2} parent=1 // pred_check_branch
      %31 = sbr.rel (0) target = $region21
    $region20: #{net_forward.2} parent=1 // pred_region
      _
    $region21: #{net_forward.2} parent=1 // pred_fallthru
      _
    // Predicated region
    $region22: #{net_forward.2} parent=1 // pred_check
      _
    $region23: #{net_forward.2} parent=1 // pred_check_branch
      %33 = sbr.rel (0) target = $region25
    $region24: #{net_forward.2} parent=1 // pred_region
      _
    $region25: #{net_forward.2} parent=1 // pred_fallthru
      _
    // Predicated region
    $region26: #{net_forward.2} parent=1 // pred_check
      _
    $region27: #{net_forward.2} parent=1 // pred_check_branch
      %35 = sbr.rel (0) target = $region29
    $region28: #{net_forward.2} parent=1 // pred_region
      %36 = dma.done [#allocation6], 1536
    $region29: #{net_forward.2} parent=1 // pred_fallthru
      _
    %38 = vst [vmem:[#allocation2] sm:$0xff] 0.0
    %39 = vst [vmem:[#allocation2 + $0x8] sm:$0xff] 0.0
    %40 = vst [vmem:[#allocation2 + $0x10] sm:$0xff] 0.0
    %41 = vst [vmem:[#allocation2 + $0x18] sm:$0xff] 0.0
    %42 = vst [vmem:[#allocation2 + $0x20] sm:$0xff] 0.0
    %43 = vst [vmem:[#allocation2 + $0x28] sm:$0xff] 0.0
    %44 = vst [vmem:[#allocation2 + $0x30] sm:$0xff] 0.0
    %45 = vst [vmem:[#allocation2 + $0x38] sm:$0xff] 0.0
    %46 = vst [vmem:[#allocation2 + $0x40] sm:$0xff] 0.0
    %47 = vst [vmem:[#allocation2 + $0x48] sm:$0xff] 0.0
    %48 = vst [vmem:[#allocation2 + $0x50] sm:$0xff] 0.0
    %49 = vst [vmem:[#allocation2 + $0x58] sm:$0xff] 0.0
    %50 = vst [vmem:[#allocation2 + $0x60] sm:$0xff] 0.0
    %51 = vst [vmem:[#allocation2 + $0x68] sm:$0xff] 0.0
    %52 = vst [vmem:[#allocation2 + $0x70] sm:$0xff] 0.0
    %53 = vst [vmem:[#allocation2 + $0x78] sm:$0xff] 0.0
    %54 = vst [vmem:[#allocation2 + $0x80] sm:$0xff] 0.0
    %55 = vst [vmem:[#allocation2 + $0x88] sm:$0xff] 0.0
    %56 = vst [vmem:[#allocation2 + $0x90] sm:$0xff] 0.0
    %57 = vst [vmem:[#allocation2 + $0x98] sm:$0xff] 0.0
    %58 = vst [vmem:[#allocation2 + $0xa0] sm:$0xff] 0.0
    %59 = vst [vmem:[#allocation2 + $0xa8] sm:$0xff] 0.0
    %60 = vst [vmem:[#allocation2 + $0xb0] sm:$0xff] 0.0
    %61 = vst [vmem:[#allocation2 + $0xb8] sm:$0xff] 0.0
    %62 = vst [vmem:[#allocation2 + $0xc0] sm:$0xff] 0.0
    %63 = vst [vmem:[#allocation2 + $0xc8] sm:$0xff] 0.0
    %v64 = vld [vmem:[%s0] sm:$0xff]
    %v65 = vld [vmem:[%s0 + $0x8] sm:$0x1f]
    %66 = vst [vmem:[#allocation2] ss:$8 sm:$0xf] %v64
    %67 = vst [vmem:[#allocation2] ss:$8 sm:$0xf0] %v64
    %v68 = vlaneseq
    %vm69 = vcmp.ge.s32.totalorder %v68, 0
    %vm70 = vcmp.lt.s32.totalorder %v68, 640
    %vm71 = vmand %vm69, %vm70
    %s72 = scalar_lea.vmem [#allocation2], 64
    %73 = vst.msk [vmem:[%s72] ss:$8 sm:$0xf] %vm71, %v65
    %74 = vst.msk [vmem:[%s72] ss:$8 sm:$0x10] %vm71, %v65
    %v75 = vld [vmem:[%s0] sm:$0xff]
    %v76 = vld [vmem:[%s0 + $0x8] sm:$0x3f]
    %79 = vrot.lane.b32.xlu0 %v75, 127
    %v80 = vpop.permute.xlu0 %79
    %81 = vrot.lane.b32.xlu0 %v76, 127
    %v82 = vpop.permute.xlu0 %81
    %v83 = vrot.slane %v80, 1
    %v84 = vrot.slane %v82, 1
    %vm85 = vcmask 1046528
    %v86 = vsel %vm85, %v83, %v84
    %vm87 = vcmask 1039360
    %v88 = vsel %vm87, %v80, %v86
    %v89 = vsel %vm87, %v82, %v84
    %s92 = scalar_lea.vmem [#allocation2], 1
    %93 = vst [vmem:[%s92] ss:$8 sm:$0xf] %v88
    %94 = vst [vmem:[%s92] ss:$8 sm:$0xf0] %v88
    %s95 = scalar_lea.vmem [#allocation2], 65
    %96 = vst.msk [vmem:[%s95] ss:$8 sm:$0xf] %vm71, %v89
    %97 = vst.msk [vmem:[%s95] ss:$8 sm:$0x10] %vm71, %v89
    %v98 = vld [vmem:[%s0] sm:$0xff]
    %v99 = vld [vmem:[%s0 + $0x8] sm:$0x3f]
    %102 = vrot.lane.b32.xlu0 %v98, 126
    %v103 = vpop.permute.xlu0 %102
    %104 = vrot.lane.b32.xlu0 %v99, 126
    %v105 = vpop.permute.xlu0 %104
    %v106 = vrot.slane %v103, 1
    %v107 = vrot.slane %v105, 1
    %v108 = vsel %vm85, %v106, %v107
    %vm109 = vcmask 1031168
    %v110 = vsel %vm109, %v103, %v108
    %v111 = vsel %vm109, %v105, %v107
    %s114 = scalar_lea.vmem [#allocation2], 2
    %115 = vst [vmem:[%s114] ss:$8 sm:$0xf] %v110
    %116 = vst [vmem:[%s114] ss:$8 sm:$0xf0] %v110
    %s117 = scalar_lea.vmem [#allocation2], 66
    %118 = vst.msk [vmem:[%s117] ss:$8 sm:$0xf] %vm71, %v111
    %119 = vst.msk [vmem:[%s117] ss:$8 sm:$0x10] %vm71, %v111
    %v120 = vld [vmem:[%s0] sm:$0xff]
    %v121 = vld [vmem:[%s0 + $0x8] sm:$0x3f]
    %124 = vrot.lane.b32.xlu0 %v120, 100
    %v125 = vpop.permute.xlu0 %124
    %126 = vrot.lane.b32.xlu0 %v121, 100
    %v127 = vpop.permute.xlu0 %126
    %v128 = vrot.slane %v125, 1
    %v129 = vrot.slane %v127, 1
    %v130 = vsel %vm85, %v128, %v129
    %vm131 = vcmask 818176
    %v132 = vsel %vm131, %v125, %v130
    %v133 = vsel %vm131, %v127, %v129
    %s136 = scalar_lea.vmem [#allocation2], 3
    %137 = vst [vmem:[%s136] ss:$8 sm:$0xf] %v132
    %138 = vst [vmem:[%s136] ss:$8 sm:$0xf0] %v132
    %s139 = scalar_lea.vmem [#allocation2], 67
    %140 = vst.msk [vmem:[%s139] ss:$8 sm:$0xf] %vm71, %v133
    %141 = vst.msk [vmem:[%s139] ss:$8 sm:$0x10] %vm71, %v133
    %v142 = vld [vmem:[%s0] sm:$0xff]
    %v143 = vld [vmem:[%s0 + $0x8] sm:$0x3f]
    %146 = vrot.lane.b32.xlu0 %v142, 99
    %v147 = vpop.permute.xlu0 %146
    %148 = vrot.lane.b32.xlu0 %v143, 99
    %v149 = vpop.permute.xlu0 %148
    %v150 = vrot.slane %v147, 1
    %v151 = vrot.slane %v149, 1
    %v152 = vsel %vm85, %v150, %v151
    %vm153 = vcmask 809984
    %v154 = vsel %vm153, %v147, %v152
    %v155 = vsel %vm153, %v149, %v151
    %s158 = scalar_lea.vmem [#allocation2], 4
    %159 = vst [vmem:[%s158] ss:$8 sm:$0xf] %v154
    %160 = vst [vmem:[%s158] ss:$8 sm:$0xf0] %v154
    %s161 = scalar_lea.vmem [#allocation2], 68
    %162 = vst.msk [vmem:[%s161] ss:$8 sm:$0xf] %vm71, %v155
    %163 = vst.msk [vmem:[%s161] ss:$8 sm:$0x10] %vm71, %v155
    %v164 = vld [vmem:[%s0] sm:$0xff]
    %v165 = vld [vmem:[%s0 + $0x8] sm:$0x3f]
    %168 = vrot.lane.b32.xlu0 %v164, 98
    %v169 = vpop.permute.xlu0 %168
    %170 = vrot.lane.b32.xlu0 %v165, 98
    %v171 = vpop.permute.xlu0 %170
    %v172 = vrot.slane %v169, 1
    %v173 = vrot.slane %v171, 1
    %v174 = vsel %vm85, %v172, %v173
    %vm175 = vcmask 801792
    %v176 = vsel %vm175, %v169, %v174
    %v177 = vsel %vm175, %v171, %v173
    %s180 = scalar_lea.vmem [#allocation2], 5
    %181 = vst [vmem:[%s180] ss:$8 sm:$0xf] %v176
    %182 = vst [vmem:[%s180] ss:$8 sm:$0xf0] %v176
    %s183 = scalar_lea.vmem [#allocation2], 69
    %184 = vst.msk [vmem:[%s183] ss:$8 sm:$0xf] %vm71, %v177
    %185 = vst.msk [vmem:[%s183] ss:$8 sm:$0x10] %vm71, %v177
    %v186 = vld [vmem:[%s0] sm:$0xff]
    %v187 = vld [vmem:[%s0 + $0x8] sm:$0x3f]
    %190 = vrot.lane.b32.xlu0 %v186, 72
    %v191 = vpop.permute.xlu0 %190
    %192 = vrot.lane.b32.xlu0 %v187, 72
    %v193 = vpop.permute.xlu0 %192
    %v194 = vrot.slane %v191, 1
    %v195 = vrot.slane %v193, 1
    %v196 = vsel %vm85, %v194, %v195
    %vm197 = vcmask 588800
    %v198 = vsel %vm197, %v191, %v196
    %v199 = vsel %vm197, %v193, %v195
    %s202 = scalar_lea.vmem [#allocation2], 6
    %203 = vst [vmem:[%s202] ss:$8 sm:$0xf] %v198
    %204 = vst [vmem:[%s202] ss:$8 sm:$0xf0] %v198
    %s205 = scalar_lea.vmem [#allocation2], 70
    %206 = vst.msk [vmem:[%s205] ss:$8 sm:$0xf] %vm71, %v199
    %207 = vst.msk [vmem:[%s205] ss:$8 sm:$0x10] %vm71, %v199
    %v208 = vld [vmem:[%s0] sm:$0xff]
    %v209 = vld [vmem:[%s0 + $0x8] sm:$0x3f]
    %212 = vrot.lane.b32.xlu0 %v208, 71
    %v213 = vpop.permute.xlu0 %212
    %214 = vrot.lane.b32.xlu0 %v209, 71
    %v215 = vpop.permute.xlu0 %214
    %v216 = vrot.slane %v213, 1
    %v217 = vrot.slane %v215, 1
    %v218 = vsel %vm85, %v216, %v217
    %vm219 = vcmask 580608
    %v220 = vsel %vm219, %v213, %v218
    %v221 = vsel %vm219, %v215, %v217
    %s224 = scalar_lea.vmem [#allocation2], 7
    %225 = vst [vmem:[%s224] ss:$8 sm:$0xf] %v220
    %226 = vst [vmem:[%s224] ss:$8 sm:$0xf0] %v220
    %s227 = scalar_lea.vmem [#allocation2], 71
    %228 = vst.msk [vmem:[%s227] ss:$8 sm:$0xf] %vm71, %v221
    %229 = vst.msk [vmem:[%s227] ss:$8 sm:$0x10] %vm71, %v221
    %v230 = vld [vmem:[%s0] sm:$0xff]
    %v231 = vld [vmem:[%s0 + $0x8] sm:$0x3f]
    %234 = vrot.lane.b32.xlu0 %v230, 70
    %v235 = vpop.permute.xlu0 %234
    %236 = vrot.lane.b32.xlu0 %v231, 70
    %v237 = vpop.permute.xlu0 %236
    %v238 = vrot.slane %v235, 1
    %v239 = vrot.slane %v237, 1
    %v240 = vsel %vm85, %v238, %v239
    %vm241 = vcmask 572416
    %v242 = vsel %vm241, %v235, %v240
    %v243 = vsel %vm241, %v237, %v239
    %s246 = scalar_lea.vmem [#allocation2], 104
    %247 = vst [vmem:[%s246] ss:$8 sm:$0xf] %v242
    %248 = vst [vmem:[%s246] ss:$8 sm:$0xf0] %v242
    %s249 = scalar_lea.vmem [#allocation2], 168
    %250 = vst.msk [vmem:[%s249] ss:$8 sm:$0xf] %vm71, %v243
    %251 = vst.msk [vmem:[%s249] ss:$8 sm:$0x10] %vm71, %v243
    %v252 = vld [vmem:[%s1] sm:$0xff]
    %v253 = vld [vmem:[%s1 + $0x8] sm:$0xff]
    %v254 = vld [vmem:[%s1 + $0x10] sm:$0xff]
    %v255 = vld [vmem:[%s1 + $0x18] sm:$0xff]
    %v256 = vld [vmem:[#allocation2] sm:$0xff]
    %v257 = vld [vmem:[#allocation2 + $0x8] sm:$0xff]
    %v258 = vld [vmem:[#allocation2 + $0x10] sm:$0xff]
    %v259 = vld [vmem:[#allocation2 + $0x18] sm:$0xff]
    %v260 = vld [vmem:[#allocation2 + $0x20] sm:$0xff]
    %v261 = vld [vmem:[#allocation2 + $0x28] sm:$0xff]
    %v262 = vld [vmem:[#allocation2 + $0x30] sm:$0xff]
    %v263 = vld [vmem:[#allocation2 + $0x38] sm:$0xff]
    %v264 = vld [vmem:[#allocation2 + $0x40] sm:$0xff]
    %v265 = vld [vmem:[#allocation2 + $0x48] sm:$0xff]
    %v266 = vld [vmem:[#allocation2 + $0x50] sm:$0xff]
    %v267 = vld [vmem:[#allocation2 + $0x58] sm:$0xff]
    %v268 = vld [vmem:[#allocation2 + $0x60] sm:$0xff]
    %v269 = vld [vmem:[#allocation2 + $0x68] sm:$0xff]
    %v270 = vld [vmem:[#allocation2 + $0x70] sm:$0xff]
    %v271 = vld [vmem:[#allocation2 + $0x78] sm:$0xff]
    %v272 = vld [vmem:[#allocation2 + $0x80] sm:$0xff]
    %v273 = vld [vmem:[#allocation2 + $0x88] sm:$0xff]
    %v274 = vld [vmem:[#allocation2 + $0x90] sm:$0xff]
    %v275 = vld [vmem:[#allocation2 + $0x98] sm:$0xff]
    %v276 = vld [vmem:[#allocation2 + $0xa0] sm:$0xff]
    %v277 = vld [vmem:[#allocation2 + $0xa8] sm:$0xff]
    %v278 = vld [vmem:[#allocation2 + $0xb0] sm:$0xff]
    %v279 = vld [vmem:[#allocation2 + $0xb8] sm:$0xff]
    %v280 = vld [vmem:[#allocation2 + $0xc0] sm:$0xff]
    %v281 = vld [vmem:[#allocation2 + $0xc8] sm:$0xff]
    %v282 = vld [vmem:[%s2] sm:$0xff]
    %v283 = vld [vmem:[%s2 + $0x8] sm:$0xff]
    %v284 = vld [vmem:[%s2 + $0x10] sm:$0xff]
    %v285 = vld [vmem:[%s2 + $0x18] sm:$0xff]
    %287 = vset.pattern.permute.xlu0 0
    %288 = vperm.xlu0 %287, %v282
    %v289 = vpop.permute.xlu0 %288
    %292 = vset.pattern.permute.xlu0 0
    %293 = vperm.xlu0 %292, %v283
    %v294 = vpop.permute.xlu0 %293
    %297 = vset.pattern.permute.xlu0 0
    %298 = vperm.xlu0 %297, %v284
    %v299 = vpop.permute.xlu0 %298
    %302 = vset.pattern.permute.xlu0 0
    %303 = vperm.xlu0 %302, %v285
    %v304 = vpop.permute.xlu0 %303
    %vm306 = vcmask 130048
    %v308 = vsel %vm306, %v252, 0
    %v311 = vsel %vm306, %v253, 0
    %v314 = vsel %vm306, %v254, 0
    %v317 = vsel %vm306, %v255, 0
    %319 = vmatprep.subr.mxu0 %v257
    %320 = vmatpush1.msra.mxu0 %v256
    %321 = vmatprep.subr.mxu0 %v270
    %322 = vmatpush1.msra.mxu0 %v269
    %323 = vmatprep.subr.mxu0 0.0
    %324 = vmatpush1.msra.mxu0 0.0
    %325 = vmatprep.subr.mxu0 0.0
    %326 = vmatpush1.msra.mxu0 0.0
    %327 = vmatprep.subr.mxu0 0.0
    %328 = vmatpush1.msra.mxu0 0.0
    %329 = vmatprep.subr.mxu0 0.0
    %330 = vmatpush1.msra.mxu0 0.0
    %331 = vmatprep.subr.mxu0 0.0
    %332 = vmatpush1.msra.mxu0 0.0
    %333 = vmatprep.subr.mxu0 0.0
    %334 = vmatpush1.msra.mxu0 0.0
    %335 = vmatprep.subr.mxu0 0.0
    %336 = vmatpush1.msra.mxu0 0.0
    %337 = vmatprep.subr.mxu0 0.0
    %338 = vmatpush1.msra.mxu0 0.0
    %339 = vmatprep.subr.mxu0 0.0
    %340 = vmatpush1.msra.mxu0 0.0
    %341 = vmatprep.subr.mxu0 0.0
    %342 = vmatpush1.msra.mxu0 0.0
    %343 = vmatprep.subr.mxu0 0.0
    %344 = vmatpush1.msra.mxu0 0.0
    %345 = vmatprep.subr.mxu0 0.0
    %346 = vmatpush1.msra.mxu0 0.0
    %347 = vmatprep.subr.mxu0 0.0
    %348 = vmatpush1.msra.mxu0 0.0
    %349 = vmatprep.subr.mxu0 0.0
    %350 = vmatpush1.msra.mxu0 0.0
    %351 = vmatprep.subr.mxu0 0.0
    %352 = vmatpush1.msra.mxu0 0.0
    %353 = vmatprep.subr.mxu0 0.0
    %354 = vmatpush1.msra.mxu0 0.0
    %355 = vmatprep.subr.mxu0 0.0
    %356 = vmatpush1.msra.mxu0 0.0
    %357 = vmatprep.subr.mxu0 0.0
    %358 = vmatpush1.msra.mxu0 0.0
    %359 = vmatprep.subr.mxu0 0.0
    %360 = vmatpush1.msra.mxu0 0.0
    %361 = vmatprep.subr.mxu0 0.0
    %362 = vmatpush1.msra.mxu0 0.0
    %363 = vmatprep.subr.mxu0 0.0
    %364 = vmatpush1.msra.mxu0 0.0
    %365 = vmatprep.subr.mxu0 0.0
    %366 = vmatpush1.msra.mxu0 0.0
    %367 = vmatprep.subr.mxu0 0.0
    %368 = vmatpush1.msra.mxu0 0.0
    %369 = vmatprep.subr.mxu0 0.0
    %370 = vmatpush1.msra.mxu0 0.0
    %371 = vmatprep.subr.mxu0 0.0
    %372 = vmatpush1.msra.mxu0 0.0
    %373 = vmatprep.subr.mxu0 0.0
    %374 = vmatpush1.msra.mxu0 0.0
    %375 = vmatprep.subr.mxu0 0.0
    %376 = vmatpush1.msra.mxu0 0.0
    %377 = vmatprep.subr.mxu0 0.0
    %378 = vmatpush1.msra.mxu0 0.0
    %379 = vmatprep.subr.mxu0 0.0
    %380 = vmatpush1.msra.mxu0 0.0
    %381 = vmatprep.subr.mxu0 0.0
    %382 = vmatpush1.msra.mxu0 0.0
    %383 = vmatprep.mubr.f32.mxu0 0.0
    %384 = vmatmul.mubr.f32.gmra.mrb[0].mxu0 %v308
    %v385 = vpop.f32.mrb[0].mxu0
    %v386 = vadd.f32 %v289, %v385
    %v387 = vpop.f32.mrb[0].mxu0
    %v388 = vadd.f32 %v289, %v387
    %389 = vmatprep.mubr.f32.mxu0 0.0
    %390 = vmatmul.mubr.f32.gmra.mrb[0].mxu0 %v311
    %v391 = vpop.f32.mrb[0].mxu0
    %v392 = vadd.f32 %v294, %v391
    %v393 = vpop.f32.mrb[0].mxu0
    %v394 = vadd.f32 %v294, %v393
    %395 = vmatprep.mubr.f32.mxu0 0.0
    %396 = vmatmul.mubr.f32.gmra.mrb[0].mxu0 %v314
    %v397 = vpop.f32.mrb[0].mxu0
    %v398 = vadd.f32 %v299, %v397
    %v399 = vpop.f32.mrb[0].mxu0
    %v400 = vadd.f32 %v299, %v399
    %401 = vmatprep.mubr.f32.mxu0 0.0
    %402 = vmatmul.mubr.f32.gmra.mrb[0].mxu0 %v317
    %v403 = vpop.f32.mrb[0].mxu0
    %v404 = vadd.f32 %v304, %v403
    %v405 = vpop.f32.mrb[0].mxu0
    %v406 = vadd.f32 %v304, %v405
    %407 = vdwg.mxu0
    %408 = vmatprep.subr.mxu0 %v259
    %409 = vmatpush1.msra.mxu0 %v258
    %410 = vmatprep.subr.mxu0 %v272
    %411 = vmatpush1.msra.mxu0 %v271
    %412 = vmatprep.subr.mxu0 0.0
    %413 = vmatpush1.msra.mxu0 0.0
    %414 = vmatprep.subr.mxu0 0.0
    %415 = vmatpush1.msra.mxu0 0.0
    %416 = vmatprep.subr.mxu0 0.0
    %417 = vmatpush1.msra.mxu0 0.0
    %418 = vmatprep.subr.mxu0 0.0
    %419 = vmatpush1.msra.mxu0 0.0
    %420 = vmatprep.subr.mxu0 0.0
    %421 = vmatpush1.msra.mxu0 0.0
    %422 = vmatprep.subr.mxu0 0.0
    %423 = vmatpush1.msra.mxu0 0.0
    %424 = vmatprep.subr.mxu0 0.0
    %425 = vmatpush1.msra.mxu0 0.0
    %426 = vmatprep.subr.mxu0 0.0
    %427 = vmatpush1.msra.mxu0 0.0
    %428 = vmatprep.subr.mxu0 0.0
    %429 = vmatpush1.msra.mxu0 0.0
    %430 = vmatprep.subr.mxu0 0.0
    %431 = vmatpush1.msra.mxu0 0.0
    %432 = vmatprep.subr.mxu0 0.0
    %433 = vmatpush1.msra.mxu0 0.0
    %434 = vmatprep.subr.mxu0 0.0
    %435 = vmatpush1.msra.mxu0 0.0
    %436 = vmatprep.subr.mxu0 0.0
    %437 = vmatpush1.msra.mxu0 0.0
    %438 = vmatprep.subr.mxu0 0.0
    %439 = vmatpush1.msra.mxu0 0.0
    %440 = vmatprep.subr.mxu0 0.0
    %441 = vmatpush1.msra.mxu0 0.0
    %442 = vmatprep.subr.mxu0 0.0
    %443 = vmatpush1.msra.mxu0 0.0
    %444 = vmatprep.subr.mxu0 0.0
    %445 = vmatpush1.msra.mxu0 0.0
    %446 = vmatprep.subr.mxu0 0.0
    %447 = vmatpush1.msra.mxu0 0.0
    %448 = vmatprep.subr.mxu0 0.0
    %449 = vmatpush1.msra.mxu0 0.0
    %450 = vmatprep.subr.mxu0 0.0
    %451 = vmatpush1.msra.mxu0 0.0
    %452 = vmatprep.subr.mxu0 0.0
    %453 = vmatpush1.msra.mxu0 0.0
    %454 = vmatprep.subr.mxu0 0.0
    %455 = vmatpush1.msra.mxu0 0.0
    %456 = vmatprep.subr.mxu0 0.0
    %457 = vmatpush1.msra.mxu0 0.0
    %458 = vmatprep.subr.mxu0 0.0
    %459 = vmatpush1.msra.mxu0 0.0
    %460 = vmatprep.subr.mxu0 0.0
    %461 = vmatpush1.msra.mxu0 0.0
    %462 = vmatprep.subr.mxu0 0.0
    %463 = vmatpush1.msra.mxu0 0.0
    %464 = vmatprep.subr.mxu0 0.0
    %465 = vmatpush1.msra.mxu0 0.0
    %466 = vmatprep.subr.mxu0 0.0
    %467 = vmatpush1.msra.mxu0 0.0
    %468 = vmatprep.subr.mxu0 0.0
    %469 = vmatpush1.msra.mxu0 0.0
    %470 = vmatprep.subr.mxu0 0.0
    %471 = vmatpush1.msra.mxu0 0.0
    %472 = vmatprep.mubr.f32.mxu0 0.0
    %473 = vmatmul.mubr.f32.gmra.mrb[0].mxu0 %v308
    %v474 = vpop.f32.mrb[0].mxu0
    %v475 = vadd.f32 %v289, %v474
    %v476 = vpop.f32.mrb[0].mxu0
    %v477 = vadd.f32 %v289, %v476
    %478 = vmatprep.mubr.f32.mxu0 0.0
    %479 = vmatmul.mubr.f32.gmra.mrb[0].mxu0 %v311
    %v480 = vpop.f32.mrb[0].mxu0
    %v481 = vadd.f32 %v294, %v480
    %v482 = vpop.f32.mrb[0].mxu0
    %v483 = vadd.f32 %v294, %v482
    %484 = vmatprep.mubr.f32.mxu0 0.0
    %485 = vmatmul.mubr.f32.gmra.mrb[0].mxu0 %v314
    %v486 = vpop.f32.mrb[0].mxu0
    %v487 = vadd.f32 %v299, %v486
    %v488 = vpop.f32.mrb[0].mxu0
    %v489 = vadd.f32 %v299, %v488
    %490 = vmatprep.mubr.f32.mxu0 0.0
    %491 = vmatmul.mubr.f32.gmra.mrb[0].mxu0 %v317
    %v492 = vpop.f32.mrb[0].mxu0
    %v493 = vadd.f32 %v304, %v492
    %v494 = vpop.f32.mrb[0].mxu0
    %v495 = vadd.f32 %v304, %v494
    %496 = vdwg.mxu0
    %497 = vmatprep.subr.mxu0 %v261
    %498 = vmatpush1.msra.mxu0 %v260
    %499 = vmatprep.subr.mxu0 %v274
    %500 = vmatpush1.msra.mxu0 %v273
    %501 = vmatprep.subr.mxu0 0.0
    %502 = vmatpush1.msra.mxu0 0.0
    %503 = vmatprep.subr.mxu0 0.0
    %504 = vmatpush1.msra.mxu0 0.0
    %505 = vmatprep.subr.mxu0 0.0
    %506 = vmatpush1.msra.mxu0 0.0
    %507 = vmatprep.subr.mxu0 0.0
    %508 = vmatpush1.msra.mxu0 0.0
    %509 = vmatprep.subr.mxu0 0.0
    %510 = vmatpush1.msra.mxu0 0.0
    %511 = vmatprep.subr.mxu0 0.0
    %512 = vmatpush1.msra.mxu0 0.0
    %513 = vmatprep.subr.mxu0 0.0
    %514 = vmatpush1.msra.mxu0 0.0
    %515 = vmatprep.subr.mxu0 0.0
    %516 = vmatpush1.msra.mxu0 0.0
    %517 = vmatprep.subr.mxu0 0.0
    %518 = vmatpush1.msra.mxu0 0.0
    %519 = vmatprep.subr.mxu0 0.0
    %520 = vmatpush1.msra.mxu0 0.0
    %521 = vmatprep.subr.mxu0 0.0
    %522 = vmatpush1.msra.mxu0 0.0
    %523 = vmatprep.subr.mxu0 0.0
    %524 = vmatpush1.msra.mxu0 0.0
    %525 = vmatprep.subr.mxu0 0.0
    %526 = vmatpush1.msra.mxu0 0.0
    %527 = vmatprep.subr.mxu0 0.0
    %528 = vmatpush1.msra.mxu0 0.0
    %529 = vmatprep.subr.mxu0 0.0
    %530 = vmatpush1.msra.mxu0 0.0
    %531 = vmatprep.subr.mxu0 0.0
    %532 = vmatpush1.msra.mxu0 0.0
    %533 = vmatprep.subr.mxu0 0.0
    %534 = vmatpush1.msra.mxu0 0.0
    %535 = vmatprep.subr.mxu0 0.0
    %536 = vmatpush1.msra.mxu0 0.0
    %537 = vmatprep.subr.mxu0 0.0
    %538 = vmatpush1.msra.mxu0 0.0
    %539 = vmatprep.subr.mxu0 0.0
    %540 = vmatpush1.msra.mxu0 0.0
    %541 = vmatprep.subr.mxu0 0.0
    %542 = vmatpush1.msra.mxu0 0.0
    %543 = vmatprep.subr.mxu0 0.0
    %544 = vmatpush1.msra.mxu0 0.0
    %545 = vmatprep.subr.mxu0 0.0
    %546 = vmatpush1.msra.mxu0 0.0
    %547 = vmatprep.subr.mxu0 0.0
    %548 = vmatpush1.msra.mxu0 0.0
    %549 = vmatprep.subr.mxu0 0.0
    %550 = vmatpush1.msra.mxu0 0.0
    %551 = vmatprep.subr.mxu0 0.0
    %552 = vmatpush1.msra.mxu0 0.0
    %553 = vmatprep.subr.mxu0 0.0
    %554 = vmatpush1.msra.mxu0 0.0
    %555 = vmatprep.subr.mxu0 0.0
    %556 = vmatpush1.msra.mxu0 0.0
    %557 = vmatprep.subr.mxu0 0.0
    %558 = vmatpush1.msra.mxu0 0.0
    %559 = vmatprep.subr.mxu0 0.0
    %560 = vmatpush1.msra.mxu0 0.0
    %561 = vmatprep.mubr.f32.mxu0 0.0
    %562 = vmatmul.mubr.f32.gmra.mrb[0].mxu0 %v308
    %v563 = vpop.f32.mrb[0].mxu0
    %v564 = vadd.f32 %v289, %v563
    %v565 = vpop.f32.mrb[0].mxu0
    %v566 = vadd.f32 %v289, %v565
    %567 = vmatprep.mubr.f32.mxu0 0.0
    %568 = vmatmul.mubr.f32.gmra.mrb[0].mxu0 %v311
    %v569 = vpop.f32.mrb[0].mxu0
    %v570 = vadd.f32 %v294, %v569
    %v571 = vpop.f32.mrb[0].mxu0
    %v572 = vadd.f32 %v294, %v571
    %573 = vmatprep.mubr.f32.mxu0 0.0
    %574 = vmatmul.mubr.f32.gmra.mrb[0].mxu0 %v314
    %v575 = vpop.f32.mrb[0].mxu0
    %v576 = vadd.f32 %v299, %v575
    %v577 = vpop.f32.mrb[0].mxu0
    %v578 = vadd.f32 %v299, %v577
    %579 = vmatprep.mubr.f32.mxu0 0.0
    %580 = vmatmul.mubr.f32.gmra.mrb[0].mxu0 %v317
    %v581 = vpop.f32.mrb[0].mxu0
    %v582 = vadd.f32 %v304, %v581
    %v583 = vpop.f32.mrb[0].mxu0
    %v584 = vadd.f32 %v304, %v583
    %585 = vdwg.mxu0
    %586 = vmatprep.subr.mxu0 %v263
    %587 = vmatpush1.msra.mxu0 %v262
    %588 = vmatprep.subr.mxu0 %v276
    %589 = vmatpush1.msra.mxu0 %v275
    %590 = vmatprep.subr.mxu0 0.0
    %591 = vmatpush1.msra.mxu0 0.0
    %592 = vmatprep.subr.mxu0 0.0
    %593 = vmatpush1.msra.mxu0 0.0
    %594 = vmatprep.subr.mxu0 0.0
    %595 = vmatpush1.msra.mxu0 0.0
    %596 = vmatprep.subr.mxu0 0.0
    %597 = vmatpush1.msra.mxu0 0.0
    %598 = vmatprep.subr.mxu0 0.0
    %599 = vmatpush1.msra.mxu0 0.0
    %600 = vmatprep.subr.mxu0 0.0
    %601 = vmatpush1.msra.mxu0 0.0
    %602 = vmatprep.subr.mxu0 0.0
    %603 = vmatpush1.msra.mxu0 0.0
    %604 = vmatprep.subr.mxu0 0.0
    %605 = vmatpush1.msra.mxu0 0.0
    %606 = vmatprep.subr.mxu0 0.0
    %607 = vmatpush1.msra.mxu0 0.0
    %608 = vmatprep.subr.mxu0 0.0
    %609 = vmatpush1.msra.mxu0 0.0
    %610 = vmatprep.subr.mxu0 0.0
    %611 = vmatpush1.msra.mxu0 0.0
    %612 = vmatprep.subr.mxu0 0.0
    %613 = vmatpush1.msra.mxu0 0.0
    %614 = vmatprep.subr.mxu0 0.0
    %615 = vmatpush1.msra.mxu0 0.0
    %616 = vmatprep.subr.mxu0 0.0
    %617 = vmatpush1.msra.mxu0 0.0
    %618 = vmatprep.subr.mxu0 0.0
    %619 = vmatpush1.msra.mxu0 0.0
    %620 = vmatprep.subr.mxu0 0.0
    %621 = vmatpush1.msra.mxu0 0.0
    %622 = vmatprep.subr.mxu0 0.0
    %623 = vmatpush1.msra.mxu0 0.0
    %624 = vmatprep.subr.mxu0 0.0
    %625 = vmatpush1.msra.mxu0 0.0
    %626 = vmatprep.subr.mxu0 0.0
    %627 = vmatpush1.msra.mxu0 0.0
    %628 = vmatprep.subr.mxu0 0.0
    %629 = vmatpush1.msra.mxu0 0.0
    %630 = vmatprep.subr.mxu0 0.0
    %631 = vmatpush1.msra.mxu0 0.0
    %632 = vmatprep.subr.mxu0 0.0
    %633 = vmatpush1.msra.mxu0 0.0
    %634 = vmatprep.subr.mxu0 0.0
    %635 = vmatpush1.msra.mxu0 0.0
    %636 = vmatprep.subr.mxu0 0.0
    %637 = vmatpush1.msra.mxu0 0.0
    %638 = vmatprep.subr.mxu0 0.0
    %639 = vmatpush1.msra.mxu0 0.0
    %640 = vmatprep.subr.mxu0 0.0
    %641 = vmatpush1.msra.mxu0 0.0
    %642 = vmatprep.subr.mxu0 0.0
    %643 = vmatpush1.msra.mxu0 0.0
    %644 = vmatprep.subr.mxu0 0.0
    %645 = vmatpush1.msra.mxu0 0.0
    %646 = vmatprep.subr.mxu0 0.0
    %647 = vmatpush1.msra.mxu0 0.0
    %648 = vmatprep.subr.mxu0 0.0
    %649 = vmatpush1.msra.mxu0 0.0
    %650 = vmatprep.mubr.f32.mxu0 0.0
    %651 = vmatmul.mubr.f32.gmra.mrb[0].mxu0 %v308
    %v652 = vpop.f32.mrb[0].mxu0
    %v653 = vadd.f32 %v289, %v652
    %v654 = vpop.f32.mrb[0].mxu0
    %v655 = vadd.f32 %v289, %v654
    %656 = vmatprep.mubr.f32.mxu0 0.0
    %657 = vmatmul.mubr.f32.gmra.mrb[0].mxu0 %v311
    %v658 = vpop.f32.mrb[0].mxu0
    %v659 = vadd.f32 %v294, %v658
    %v660 = vpop.f32.mrb[0].mxu0
    %v661 = vadd.f32 %v294, %v660
    %662 = vmatprep.mubr.f32.mxu0 0.0
    %663 = vmatmul.mubr.f32.gmra.mrb[0].mxu0 %v314
    %v664 = vpop.f32.mrb[0].mxu0
    %v665 = vadd.f32 %v299, %v664
    %v666 = vpop.f32.mrb[0].mxu0
    %v667 = vadd.f32 %v299, %v666
    %668 = vmatprep.mubr.f32.mxu0 0.0
    %669 = vmatmul.mubr.f32.gmra.mrb[0].mxu0 %v317
    %v670 = vpop.f32.mrb[0].mxu0
    %v671 = vadd.f32 %v304, %v670
    %v672 = vpop.f32.mrb[0].mxu0
    %v673 = vadd.f32 %v304, %v672
    %674 = vdwg.mxu0
    %675 = vmatprep.subr.mxu0 %v265
    %676 = vmatpush1.msra.mxu0 %v264
    %677 = vmatprep.subr.mxu0 %v278
    %678 = vmatpush1.msra.mxu0 %v277
    %679 = vmatprep.subr.mxu0 0.0
    %680 = vmatpush1.msra.mxu0 0.0
    %681 = vmatprep.subr.mxu0 0.0
    %682 = vmatpush1.msra.mxu0 0.0
    %683 = vmatprep.subr.mxu0 0.0
    %684 = vmatpush1.msra.mxu0 0.0
    %685 = vmatprep.subr.mxu0 0.0
    %686 = vmatpush1.msra.mxu0 0.0
    %687 = vmatprep.subr.mxu0 0.0
    %688 = vmatpush1.msra.mxu0 0.0
    %689 = vmatprep.subr.mxu0 0.0
    %690 = vmatpush1.msra.mxu0 0.0
    %691 = vmatprep.subr.mxu0 0.0
    %692 = vmatpush1.msra.mxu0 0.0
    %693 = vmatprep.subr.mxu0 0.0
    %694 = vmatpush1.msra.mxu0 0.0
    %695 = vmatprep.subr.mxu0 0.0
    %696 = vmatpush1.msra.mxu0 0.0
    %697 = vmatprep.subr.mxu0 0.0
    %698 = vmatpush1.msra.mxu0 0.0
    %699 = vmatprep.subr.mxu0 0.0
    %700 = vmatpush1.msra.mxu0 0.0
    %701 = vmatprep.subr.mxu0 0.0
    %702 = vmatpush1.msra.mxu0 0.0
    %703 = vmatprep.subr.mxu0 0.0
    %704 = vmatpush1.msra.mxu0 0.0
    %705 = vmatprep.subr.mxu0 0.0
    %706 = vmatpush1.msra.mxu0 0.0
    %707 = vmatprep.subr.mxu0 0.0
    %708 = vmatpush1.msra.mxu0 0.0
    %709 = vmatprep.subr.mxu0 0.0
    %710 = vmatpush1.msra.mxu0 0.0
    %711 = vmatprep.subr.mxu0 0.0
    %712 = vmatpush1.msra.mxu0 0.0
    %713 = vmatprep.subr.mxu0 0.0
    %714 = vmatpush1.msra.mxu0 0.0
    %715 = vmatprep.subr.mxu0 0.0
    %716 = vmatpush1.msra.mxu0 0.0
    %717 = vmatprep.subr.mxu0 0.0
    %718 = vmatpush1.msra.mxu0 0.0
    %719 = vmatprep.subr.mxu0 0.0
    %720 = vmatpush1.msra.mxu0 0.0
    %721 = vmatprep.subr.mxu0 0.0
    %722 = vmatpush1.msra.mxu0 0.0
    %723 = vmatprep.subr.mxu0 0.0
    %724 = vmatpush1.msra.mxu0 0.0
    %725 = vmatprep.subr.mxu0 0.0
    %726 = vmatpush1.msra.mxu0 0.0
    %727 = vmatprep.subr.mxu0 0.0
    %728 = vmatpush1.msra.mxu0 0.0
    %729 = vmatprep.subr.mxu0 0.0
    %730 = vmatpush1.msra.mxu0 0.0
    %731 = vmatprep.subr.mxu0 0.0
    %732 = vmatpush1.msra.mxu0 0.0
    %733 = vmatprep.subr.mxu0 0.0
    %734 = vmatpush1.msra.mxu0 0.0
    %735 = vmatprep.subr.mxu0 0.0
    %736 = vmatpush1.msra.mxu0 0.0
    %737 = vmatprep.subr.mxu0 0.0
    %738 = vmatpush1.msra.mxu0 0.0
    %739 = vmatprep.mubr.f32.mxu0 0.0
    %740 = vmatmul.mubr.f32.gmra.mrb[0].mxu0 %v308
    %v741 = vpop.f32.mrb[0].mxu0
    %v742 = vadd.f32 %v289, %v741
    %v743 = vpop.f32.mrb[0].mxu0
    %v744 = vadd.f32 %v289, %v743
    %745 = vmatprep.mubr.f32.mxu0 0.0
    %746 = vmatmul.mubr.f32.gmra.mrb[0].mxu0 %v311
    %v747 = vpop.f32.mrb[0].mxu0
    %v748 = vadd.f32 %v294, %v747
    %v749 = vpop.f32.mrb[0].mxu0
    %v750 = vadd.f32 %v294, %v749
    %751 = vmatprep.mubr.f32.mxu0 0.0
    %752 = vmatmul.mubr.f32.gmra.mrb[0].mxu0 %v314
    %v753 = vpop.f32.mrb[0].mxu0
    %v754 = vadd.f32 %v299, %v753
    %v755 = vpop.f32.mrb[0].mxu0
    %v756 = vadd.f32 %v299, %v755
    %757 = vmatprep.mubr.f32.mxu0 0.0
    %758 = vmatmul.mubr.f32.gmra.mrb[0].mxu0 %v317
    %v759 = vpop.f32.mrb[0].mxu0
    %v760 = vadd.f32 %v304, %v759
    %v761 = vpop.f32.mrb[0].mxu0
    %v762 = vadd.f32 %v304, %v761
    %763 = vdwg.mxu0
    %764 = vmatprep.subr.mxu0 %v267
    %765 = vmatpush1.msra.mxu0 %v266
    %766 = vmatprep.subr.mxu0 %v280
    %767 = vmatpush1.msra.mxu0 %v279
    %768 = vmatprep.subr.mxu0 0.0
    %769 = vmatpush1.msra.mxu0 0.0
    %770 = vmatprep.subr.mxu0 0.0
    %771 = vmatpush1.msra.mxu0 0.0
    %772 = vmatprep.subr.mxu0 0.0
    %773 = vmatpush1.msra.mxu0 0.0
    %774 = vmatprep.subr.mxu0 0.0
    %775 = vmatpush1.msra.mxu0 0.0
    %776 = vmatprep.subr.mxu0 0.0
    %777 = vmatpush1.msra.mxu0 0.0
    %778 = vmatprep.subr.mxu0 0.0
    %779 = vmatpush1.msra.mxu0 0.0
    %780 = vmatprep.subr.mxu0 0.0
    %781 = vmatpush1.msra.mxu0 0.0
    %782 = vmatprep.subr.mxu0 0.0
    %783 = vmatpush1.msra.mxu0 0.0
    %784 = vmatprep.subr.mxu0 0.0
    %785 = vmatpush1.msra.mxu0 0.0
    %786 = vmatprep.subr.mxu0 0.0
    %787 = vmatpush1.msra.mxu0 0.0
    %788 = vmatprep.subr.mxu0 0.0
    %789 = vmatpush1.msra.mxu0 0.0
    %790 = vmatprep.subr.mxu0 0.0
    %791 = vmatpush1.msra.mxu0 0.0
    %792 = vmatprep.subr.mxu0 0.0
    %793 = vmatpush1.msra.mxu0 0.0
    %794 = vmatprep.subr.mxu0 0.0
    %795 = vmatpush1.msra.mxu0 0.0
    %796 = vmatprep.subr.mxu0 0.0
    %797 = vmatpush1.msra.mxu0 0.0
    %798 = vmatprep.subr.mxu0 0.0
    %799 = vmatpush1.msra.mxu0 0.0
    %800 = vmatprep.subr.mxu0 0.0
    %801 = vmatpush1.msra.mxu0 0.0
    %802 = vmatprep.subr.mxu0 0.0
    %803 = vmatpush1.msra.mxu0 0.0
    %804 = vmatprep.subr.mxu0 0.0
    %805 = vmatpush1.msra.mxu0 0.0
    %806 = vmatprep.subr.mxu0 0.0
    %807 = vmatpush1.msra.mxu0 0.0
    %808 = vmatprep.subr.mxu0 0.0
    %809 = vmatpush1.msra.mxu0 0.0
    %810 = vmatprep.subr.mxu0 0.0
    %811 = vmatpush1.msra.mxu0 0.0
    %812 = vmatprep.subr.mxu0 0.0
    %813 = vmatpush1.msra.mxu0 0.0
    %814 = vmatprep.subr.mxu0 0.0
    %815 = vmatpush1.msra.mxu0 0.0
    %816 = vmatprep.subr.mxu0 0.0
    %817 = vmatpush1.msra.mxu0 0.0
    %818 = vmatprep.subr.mxu0 0.0
    %819 = vmatpush1.msra.mxu0 0.0
    %820 = vmatprep.subr.mxu0 0.0
    %821 = vmatpush1.msra.mxu0 0.0
    %822 = vmatprep.subr.mxu0 0.0
    %823 = vmatpush1.msra.mxu0 0.0
    %824 = vmatprep.subr.mxu0 0.0
    %825 = vmatpush1.msra.mxu0 0.0
    %826 = vmatprep.subr.mxu0 0.0
    %827 = vmatpush1.msra.mxu0 0.0
    %828 = vmatprep.mubr.f32.mxu0 0.0
    %829 = vmatmul.mubr.f32.gmra.mrb[0].mxu0 %v308
    %v830 = vpop.f32.mrb[0].mxu0
    %v831 = vadd.f32 %v289, %v830
    %v832 = vpop.f32.mrb[0].mxu0
    %v833 = vadd.f32 %v289, %v832
    %834 = vmatprep.mubr.f32.mxu0 0.0
    %835 = vmatmul.mubr.f32.gmra.mrb[0].mxu0 %v311
    %v836 = vpop.f32.mrb[0].mxu0
    %v837 = vadd.f32 %v294, %v836
    %v838 = vpop.f32.mrb[0].mxu0
    %v839 = vadd.f32 %v294, %v838
    %840 = vmatprep.mubr.f32.mxu0 0.0
    %841 = vmatmul.mubr.f32.gmra.mrb[0].mxu0 %v314
    %v842 = vpop.f32.mrb[0].mxu0
    %v843 = vadd.f32 %v299, %v842
    %v844 = vpop.f32.mrb[0].mxu0
    %v845 = vadd.f32 %v299, %v844
    %846 = vmatprep.mubr.f32.mxu0 0.0
    %847 = vmatmul.mubr.f32.gmra.mrb[0].mxu0 %v317
    %v848 = vpop.f32.mrb[0].mxu0
    %v849 = vadd.f32 %v304, %v848
    %v850 = vpop.f32.mrb[0].mxu0
    %v851 = vadd.f32 %v304, %v850
    %852 = vdwg.mxu0
    %853 = vmatprep.subr.mxu0 0.0
    %854 = vmatpush1.msra.mxu0 %v268
    %855 = vmatprep.subr.mxu0 0.0
    %856 = vmatpush1.msra.mxu0 %v281
    %857 = vmatprep.subr.mxu0 0.0
    %858 = vmatpush1.msra.mxu0 0.0
    %859 = vmatprep.subr.mxu0 0.0
    %860 = vmatpush1.msra.mxu0 0.0
    %861 = vmatprep.subr.mxu0 0.0
    %862 = vmatpush1.msra.mxu0 0.0
    %863 = vmatprep.subr.mxu0 0.0
    %864 = vmatpush1.msra.mxu0 0.0
    %865 = vmatprep.subr.mxu0 0.0
    %866 = vmatpush1.msra.mxu0 0.0
    %867 = vmatprep.subr.mxu0 0.0
    %868 = vmatpush1.msra.mxu0 0.0
    %869 = vmatprep.subr.mxu0 0.0
    %870 = vmatpush1.msra.mxu0 0.0
    %871 = vmatprep.subr.mxu0 0.0
    %872 = vmatpush1.msra.mxu0 0.0
    %873 = vmatprep.subr.mxu0 0.0
    %874 = vmatpush1.msra.mxu0 0.0
    %875 = vmatprep.subr.mxu0 0.0
    %876 = vmatpush1.msra.mxu0 0.0
    %877 = vmatprep.subr.mxu0 0.0
    %878 = vmatpush1.msra.mxu0 0.0
    %879 = vmatprep.subr.mxu0 0.0
    %880 = vmatpush1.msra.mxu0 0.0
    %881 = vmatprep.subr.mxu0 0.0
    %882 = vmatpush1.msra.mxu0 0.0
    %883 = vmatprep.subr.mxu0 0.0
    %884 = vmatpush1.msra.mxu0 0.0
    %885 = vmatprep.subr.mxu0 0.0
    %886 = vmatpush1.msra.mxu0 0.0
    %887 = vmatprep.subr.mxu0 0.0
    %888 = vmatpush1.msra.mxu0 0.0
    %889 = vmatprep.subr.mxu0 0.0
    %890 = vmatpush1.msra.mxu0 0.0
    %891 = vmatprep.subr.mxu0 0.0
    %892 = vmatpush1.msra.mxu0 0.0
    %893 = vmatprep.subr.mxu0 0.0
    %894 = vmatpush1.msra.mxu0 0.0
    %895 = vmatprep.subr.mxu0 0.0
    %896 = vmatpush1.msra.mxu0 0.0
    %897 = vmatprep.subr.mxu0 0.0
    %898 = vmatpush1.msra.mxu0 0.0
    %899 = vmatprep.subr.mxu0 0.0
    %900 = vmatpush1.msra.mxu0 0.0
    %901 = vmatprep.subr.mxu0 0.0
    %902 = vmatpush1.msra.mxu0 0.0
    %903 = vmatprep.subr.mxu0 0.0
    %904 = vmatpush1.msra.mxu0 0.0
    %905 = vmatprep.subr.mxu0 0.0
    %906 = vmatpush1.msra.mxu0 0.0
    %907 = vmatprep.subr.mxu0 0.0
    %908 = vmatpush1.msra.mxu0 0.0
    %909 = vmatprep.subr.mxu0 0.0
    %910 = vmatpush1.msra.mxu0 0.0
    %911 = vmatprep.subr.mxu0 0.0
    %912 = vmatpush1.msra.mxu0 0.0
    %913 = vmatprep.subr.mxu0 0.0
    %914 = vmatpush1.msra.mxu0 0.0
    %915 = vmatprep.subr.mxu0 0.0
    %916 = vmatpush1.msra.mxu0 0.0
    %917 = vmatprep.mubr.f32.mxu0 0.0
    %918 = vmatmul.mubr.f32.gmra.mrb[0].mxu0 %v308
    %v919 = vpop.f32.mrb[0].mxu0
    %v920 = vadd.f32 %v289, %v919
    %v921 = vpop.f32.mrb[0].mxu0
    %922 = vmatprep.mubr.f32.mxu0 0.0
    %923 = vmatmul.mubr.f32.gmra.mrb[0].mxu0 %v311
    %v924 = vpop.f32.mrb[0].mxu0
    %v925 = vadd.f32 %v294, %v924
    %v926 = vpop.f32.mrb[0].mxu0
    %927 = vmatprep.mubr.f32.mxu0 0.0
    %928 = vmatmul.mubr.f32.gmra.mrb[0].mxu0 %v314
    %v929 = vpop.f32.mrb[0].mxu0
    %v930 = vadd.f32 %v299, %v929
    %v931 = vpop.f32.mrb[0].mxu0
    %932 = vmatprep.mubr.f32.mxu0 0.0
    %933 = vmatmul.mubr.f32.gmra.mrb[0].mxu0 %v317
    %v934 = vpop.f32.mrb[0].mxu0
    %v935 = vadd.f32 %v304, %v934
    %v936 = vpop.f32.mrb[0].mxu0
    %937 = vdwg.mxu0
    %v938 = vmax.f32 %v386, 0.0
    %v939 = vmax.f32 %v388, 0.0
    %v940 = vmax.f32 %v475, 0.0
    %v941 = vmax.f32 %v477, 0.0
    %v942 = vmax.f32 %v564, 0.0
    %v943 = vmax.f32 %v566, 0.0
    %v944 = vmax.f32 %v653, 0.0
    %v945 = vmax.f32 %v655, 0.0
    %v946 = vmax.f32 %v742, 0.0
    %v947 = vmax.f32 %v744, 0.0
    %v948 = vmax.f32 %v831, 0.0
    %v949 = vmax.f32 %v833, 0.0
    %v950 = vmax.f32 %v920, 0.0
    %v951 = vmax.f32 %v392, 0.0
    %v952 = vmax.f32 %v394, 0.0
    %v953 = vmax.f32 %v481, 0.0
    %v954 = vmax.f32 %v483, 0.0
    %v955 = vmax.f32 %v570, 0.0
    %v956 = vmax.f32 %v572, 0.0
    %v957 = vmax.f32 %v659, 0.0
    %v958 = vmax.f32 %v661, 0.0
    %v959 = vmax.f32 %v748, 0.0
    %v960 = vmax.f32 %v750, 0.0
    %v961 = vmax.f32 %v837, 0.0
    %v962 = vmax.f32 %v839, 0.0
    %v963 = vmax.f32 %v925, 0.0
    %v964 = vmax.f32 %v398, 0.0
    %v965 = vmax.f32 %v400, 0.0
    %v966 = vmax.f32 %v487, 0.0
    %v967 = vmax.f32 %v489, 0.0
    %v968 = vmax.f32 %v576, 0.0
    %v969 = vmax.f32 %v578, 0.0
    %v970 = vmax.f32 %v665, 0.0
    %v971 = vmax.f32 %v667, 0.0
    %v972 = vmax.f32 %v754, 0.0
    %v973 = vmax.f32 %v756, 0.0
    %v974 = vmax.f32 %v843, 0.0
    %v975 = vmax.f32 %v845, 0.0
    %v976 = vmax.f32 %v930, 0.0
    %v977 = vmax.f32 %v404, 0.0
    %v978 = vmax.f32 %v406, 0.0
    %v979 = vmax.f32 %v493, 0.0
    %v980 = vmax.f32 %v495, 0.0
    %v981 = vmax.f32 %v582, 0.0
    %v982 = vmax.f32 %v584, 0.0
    %v983 = vmax.f32 %v671, 0.0
    %v984 = vmax.f32 %v673, 0.0
    %v985 = vmax.f32 %v760, 0.0
    %v986 = vmax.f32 %v762, 0.0
    %v987 = vmax.f32 %v849, 0.0
    %v988 = vmax.f32 %v851, 0.0
    %v989 = vmax.f32 %v935, 0.0
    %v990 = vpack.c.bf16 %v951, %v938
    %v991 = vpack.c.bf16 %v952, %v939
    %v992 = vpack.c.bf16 %v953, %v940
    %v993 = vpack.c.bf16 %v954, %v941
    %v994 = vpack.c.bf16 %v955, %v942
    %v995 = vpack.c.bf16 %v956, %v943
    %v996 = vpack.c.bf16 %v957, %v944
    %v997 = vpack.c.bf16 %v958, %v945
    %v998 = vpack.c.bf16 %v959, %v946
    %v999 = vpack.c.bf16 %v960, %v947
    %v1000 = vpack.c.bf16 %v961, %v948
    %v1001 = vpack.c.bf16 %v962, %v949
    %v1002 = vpack.c.bf16 %v963, %v950
    %v1003 = vpack.c.bf16 %v977, %v964
    %v1004 = vpack.c.bf16 %v978, %v965
    %v1005 = vpack.c.bf16 %v979, %v966
    %v1006 = vpack.c.bf16 %v980, %v967
    %v1007 = vpack.c.bf16 %v981, %v968
    %v1008 = vpack.c.bf16 %v982, %v969
    %v1009 = vpack.c.bf16 %v983, %v970
    %v1010 = vpack.c.bf16 %v984, %v971
    %v1011 = vpack.c.bf16 %v985, %v972
    %v1012 = vpack.c.bf16 %v986, %v973
    %v1013 = vpack.c.bf16 %v987, %v974
    %v1014 = vpack.c.bf16 %v988, %v975
    %v1015 = vpack.c.bf16 %v989, %v976
    %1016 = vst [vmem:[#allocation3] sm:$0xff] %v990
    %1017 = vst [vmem:[#allocation3 + $0x8] sm:$0xff] %v991
    %1018 = vst [vmem:[#allocation3 + $0x10] sm:$0xff] %v992
    %1019 = vst [vmem:[#allocation3 + $0x18] sm:$0xff] %v993
    %1020 = vst [vmem:[#allocation3 + $0x20] sm:$0xff] %v994
    %1021 = vst [vmem:[#allocation3 + $0x28] sm:$0xff] %v995
    %1022 = vst [vmem:[#allocation3 + $0x30] sm:$0xff] %v996
    %1023 = vst [vmem:[#allocation3 + $0x38] sm:$0xff] %v997
    %1024 = vst [vmem:[#allocation3 + $0x40] sm:$0xff] %v998
    %1025 = vst [vmem:[#allocation3 + $0x48] sm:$0xff] %v999
    %1026 = vst [vmem:[#allocation3 + $0x50] sm:$0xff] %v1000
    %1027 = vst [vmem:[#allocation3 + $0x58] sm:$0xff] %v1001
    %1028 = vst [vmem:[#allocation3 + $0x60] sm:$0xff] %v1002
    %1029 = vst [vmem:[#allocation3 + $0x68] sm:$0xff] %v1003
    %1030 = vst [vmem:[#allocation3 + $0x70] sm:$0xff] %v1004
    %1031 = vst [vmem:[#allocation3 + $0x78] sm:$0xff] %v1005
    %1032 = vst [vmem:[#allocation3 + $0x80] sm:$0xff] %v1006
    %1033 = vst [vmem:[#allocation3 + $0x88] sm:$0xff] %v1007
    %1034 = vst [vmem:[#allocation3 + $0x90] sm:$0xff] %v1008
    %1035 = vst [vmem:[#allocation3 + $0x98] sm:$0xff] %v1009
    %1036 = vst [vmem:[#allocation3 + $0xa0] sm:$0xff] %v1010
    %1037 = vst [vmem:[#allocation3 + $0xa8] sm:$0xff] %v1011
    %1038 = vst [vmem:[#allocation3 + $0xb0] sm:$0xff] %v1012
    %1039 = vst [vmem:[#allocation3 + $0xb8] sm:$0xff] %v1013
    %1040 = vst [vmem:[#allocation3 + $0xc0] sm:$0xff] %v1014
    %1041 = vst [vmem:[#allocation3 + $0xc8] sm:$0xff] %v1015
    %v1042 = vld [vmem:[#allocation3] sm:$0xff]
    %v1043 = vld [vmem:[#allocation3 + $0x8] sm:$0xff]
    %v1044 = vld [vmem:[#allocation3 + $0x10] sm:$0xff]
    %v1045 = vld [vmem:[#allocation3 + $0x18] sm:$0xff]
    %v1046 = vld [vmem:[#allocation3 + $0x20] sm:$0xff]
    %v1047 = vld [vmem:[#allocation3 + $0x28] sm:$0xff]
    %v1048 = vld [vmem:[#allocation3 + $0x30] sm:$0xff]
    %v1049 = vld [vmem:[#allocation3 + $0x38] sm:$0xff]
    %v1050 = vld [vmem:[#allocation3 + $0x40] sm:$0xff]
    %v1051 = vld [vmem:[#allocation3 + $0x48] sm:$0xff]
    %v1052 = vld [vmem:[#allocation3 + $0x50] sm:$0xff]
    %v1053 = vld [vmem:[#allocation3 + $0x58] sm:$0xff]
    %v1054 = vld [vmem:[#allocation3 + $0x68] sm:$0xff]
    %v1055 = vld [vmem:[#allocation3 + $0x70] sm:$0xff]
    %v1056 = vld [vmem:[#allocation3 + $0x78] sm:$0xff]
    %v1057 = vld [vmem:[#allocation3 + $0x80] sm:$0xff]
    %v1058 = vld [vmem:[#allocation3 + $0x88] sm:$0xff]
    %v1059 = vld [vmem:[#allocation3 + $0x90] sm:$0xff]
    %v1060 = vld [vmem:[#allocation3 + $0x98] sm:$0xff]
    %v1061 = vld [vmem:[#allocation3 + $0xa0] sm:$0xff]
    %v1062 = vld [vmem:[#allocation3 + $0xa8] sm:$0xff]
    %v1063 = vld [vmem:[#allocation3 + $0xb0] sm:$0xff]
    %v1064 = vld [vmem:[#allocation3 + $0xb8] sm:$0xff]
    %v1065 = vld [vmem:[#allocation3 + $0xc0] sm:$0xff]
    %1066 = vst [vmem:[#allocation4] sm:$0xff] %v1042
    %1067 = vst [vmem:[#allocation4 + $0x8] sm:$0xff] %v1043
    %1068 = vst [vmem:[#allocation4 + $0x10] sm:$0xff] %v1044
    %1069 = vst [vmem:[#allocation4 + $0x18] sm:$0xff] %v1045
    %1070 = vst [vmem:[#allocation4 + $0x20] sm:$0xff] %v1046
    %1071 = vst [vmem:[#allocation4 + $0x28] sm:$0xff] %v1047
    %1072 = vst [vmem:[#allocation4 + $0x30] sm:$0xff] %v1048
    %1073 = vst [vmem:[#allocation4 + $0x38] sm:$0xff] %v1049
    %1074 = vst [vmem:[#allocation4 + $0x40] sm:$0xff] %v1050
    %1075 = vst [vmem:[#allocation4 + $0x48] sm:$0xff] %v1051
    %1076 = vst [vmem:[#allocation4 + $0x50] sm:$0xff] %v1052
    %1077 = vst [vmem:[#allocation4 + $0x58] sm:$0xff] %v1053
    %1078 = vst [vmem:[#allocation4 + $0x60] sm:$0xff] %v1054
    %1079 = vst [vmem:[#allocation4 + $0x68] sm:$0xff] %v1055
    %1080 = vst [vmem:[#allocation4 + $0x70] sm:$0xff] %v1056
    %1081 = vst [vmem:[#allocation4 + $0x78] sm:$0xff] %v1057
    %1082 = vst [vmem:[#allocation4 + $0x80] sm:$0xff] %v1058
    %1083 = vst [vmem:[#allocation4 + $0x88] sm:$0xff] %v1059
    %1084 = vst [vmem:[#allocation4 + $0x90] sm:$0xff] %v1060
    %1085 = vst [vmem:[#allocation4 + $0x98] sm:$0xff] %v1061
    %1086 = vst [vmem:[#allocation4 + $0xa0] sm:$0xff] %v1062
    %1087 = vst [vmem:[#allocation4 + $0xa8] sm:$0xff] %v1063
    %1088 = vst [vmem:[#allocation4 + $0xb0] sm:$0xff] %v1064
    %1089 = vst [vmem:[#allocation4 + $0xb8] sm:$0xff] %v1065
    %v1090 = vld [vmem:[#allocation3] sm:$0xff]
    %v1091 = vld [vmem:[#allocation3 + $0x8] sm:$0xff]
    %v1092 = vld [vmem:[#allocation3 + $0x10] sm:$0xff]
    %v1093 = vld [vmem:[#allocation3 + $0x18] sm:$0xff]
    %v1094 = vld [vmem:[#allocation3 + $0x20] sm:$0xff]
    %v1095 = vld [vmem:[#allocation3 + $0x28] sm:$0xff]
    %v1096 = vld [vmem:[#allocation3 + $0x30] sm:$0xff]
    %v1097 = vld [vmem:[#allocation3 + $0x38] sm:$0xff]
    %v1098 = vld [vmem:[#allocation3 + $0x40] sm:$0xff]
    %v1099 = vld [vmem:[#allocation3 + $0x48] sm:$0xff]
    %v1100 = vld [vmem:[#allocation3 + $0x50] sm:$0xff]
    %v1101 = vld [vmem:[#allocation3 + $0x58] sm:$0xff]
    %v1102 = vld [vmem:[#allocation3 + $0x60] sm:$0xff]
    %v1103 = vld [vmem:[#allocation3 + $0x68] sm:$0xff]
    %v1104 = vld [vmem:[#allocation3 + $0x70] sm:$0xff]
    %v1105 = vld [vmem:[#allocation3 + $0x78] sm:$0xff]
    %v1106 = vld [vmem:[#allocation3 + $0x80] sm:$0xff]
    %v1107 = vld [vmem:[#allocation3 + $0x88] sm:$0xff]
    %v1108 = vld [vmem:[#allocation3 + $0x90] sm:$0xff]
    %v1109 = vld [vmem:[#allocation3 + $0x98] sm:$0xff]
    %v1110 = vld [vmem:[#allocation3 + $0xa0] sm:$0xff]
    %v1111 = vld [vmem:[#allocation3 + $0xa8] sm:$0xff]
    %v1112 = vld [vmem:[#allocation3 + $0xb0] sm:$0xff]
    %v1113 = vld [vmem:[#allocation3 + $0xb8] sm:$0xff]
    %v1114 = vld [vmem:[#allocation3 + $0xc0] sm:$0xff]
    %v1115 = vld [vmem:[#allocation3 + $0xc8] sm:$0xff]
    %1142 = vrot.lane.b32.xlu0 %v1090, 127
    %v1143 = vpop.permute.xlu0 %1142
    %1144 = vrot.lane.b32.xlu0 %v1091, 127
    %v1145 = vpop.permute.xlu0 %1144
    %1146 = vrot.lane.b32.xlu0 %v1092, 127
    %v1147 = vpop.permute.xlu0 %1146
    %1148 = vrot.lane.b32.xlu0 %v1093, 127
    %v1149 = vpop.permute.xlu0 %1148
    %1150 = vrot.lane.b32.xlu0 %v1094, 127
    %v1151 = vpop.permute.xlu0 %1150
    %1152 = vrot.lane.b32.xlu0 %v1095, 127
    %v1153 = vpop.permute.xlu0 %1152
    %1154 = vrot.lane.b32.xlu0 %v1096, 127
    %v1155 = vpop.permute.xlu0 %1154
    %1156 = vrot.lane.b32.xlu0 %v1097, 127
    %v1157 = vpop.permute.xlu0 %1156
    %1158 = vrot.lane.b32.xlu0 %v1098, 127
    %v1159 = vpop.permute.xlu0 %1158
    %1160 = vrot.lane.b32.xlu0 %v1099, 127
    %v1161 = vpop.permute.xlu0 %1160
    %1162 = vrot.lane.b32.xlu0 %v1100, 127
    %v1163 = vpop.permute.xlu0 %1162
    %1164 = vrot.lane.b32.xlu0 %v1101, 127
    %v1165 = vpop.permute.xlu0 %1164
    %1166 = vrot.lane.b32.xlu0 %v1102, 127
    %v1167 = vpop.permute.xlu0 %1166
    %1168 = vrot.lane.b32.xlu0 %v1103, 127
    %v1169 = vpop.permute.xlu0 %1168
    %1170 = vrot.lane.b32.xlu0 %v1104, 127
    %v1171 = vpop.permute.xlu0 %1170
    %1172 = vrot.lane.b32.xlu0 %v1105, 127
    %v1173 = vpop.permute.xlu0 %1172
    %1174 = vrot.lane.b32.xlu0 %v1106, 127
    %v1175 = vpop.permute.xlu0 %1174
    %1176 = vrot.lane.b32.xlu0 %v1107, 127
    %v1177 = vpop.permute.xlu0 %1176
    %1178 = vrot.lane.b32.xlu0 %v1108, 127
    %v1179 = vpop.permute.xlu0 %1178
    %1180 = vrot.lane.b32.xlu0 %v1109, 127
    %v1181 = vpop.permute.xlu0 %1180
    %1182 = vrot.lane.b32.xlu0 %v1110, 127
    %v1183 = vpop.permute.xlu0 %1182
    %1184 = vrot.lane.b32.xlu0 %v1111, 127
    %v1185 = vpop.permute.xlu0 %1184
    %1186 = vrot.lane.b32.xlu0 %v1112, 127
    %v1187 = vpop.permute.xlu0 %1186
    %1188 = vrot.lane.b32.xlu0 %v1113, 127
    %v1189 = vpop.permute.xlu0 %1188
    %1190 = vrot.lane.b32.xlu0 %v1114, 127
    %v1191 = vpop.permute.xlu0 %1190
    %1192 = vrot.lane.b32.xlu0 %v1115, 127
    %v1193 = vpop.permute.xlu0 %1192
    %vm1194 = vcmask 1039360
    %v1195 = vsel %vm1194, %v1143, %v1145
    %v1196 = vsel %vm1194, %v1145, %v1147
    %v1197 = vsel %vm1194, %v1147, %v1149
    %v1198 = vsel %vm1194, %v1149, %v1151
    %v1199 = vsel %vm1194, %v1151, %v1153
    %v1200 = vsel %vm1194, %v1153, %v1155
    %v1201 = vsel %vm1194, %v1155, %v1157
    %v1202 = vsel %vm1194, %v1157, %v1159
    %v1203 = vsel %vm1194, %v1159, %v1161
    %v1204 = vsel %vm1194, %v1161, %v1163
    %v1205 = vsel %vm1194, %v1163, %v1165
    %v1206 = vsel %vm1194, %v1165, %v1167
    %v1207 = vsel %vm1194, %v1169, %v1171
    %v1208 = vsel %vm1194, %v1171, %v1173
    %v1209 = vsel %vm1194, %v1173, %v1175
    %v1210 = vsel %vm1194, %v1175, %v1177
    %v1211 = vsel %vm1194, %v1177, %v1179
    %v1212 = vsel %vm1194, %v1179, %v1181
    %v1213 = vsel %vm1194, %v1181, %v1183
    %v1214 = vsel %vm1194, %v1183, %v1185
    %v1215 = vsel %vm1194, %v1185, %v1187
    %v1216 = vsel %vm1194, %v1187, %v1189
    %v1217 = vsel %vm1194, %v1189, %v1191
    %v1218 = vsel %vm1194, %v1191, %v1193
    %1243 = vst [vmem:[#allocation4 + $0xc0] sm:$0xff] %v1195
    %1244 = vst [vmem:[#allocation4 + $0xc8] sm:$0xff] %v1196
    %1245 = vst [vmem:[#allocation4 + $0xd0] sm:$0xff] %v1197
    %1246 = vst [vmem:[#allocation4 + $0xd8] sm:$0xff] %v1198
    %1247 = vst [vmem:[#allocation4 + $0xe0] sm:$0xff] %v1199
    %1248 = vst [vmem:[#allocation4 + $0xe8] sm:$0xff] %v1200
    %1249 = vst [vmem:[#allocation4 + $0xf0] sm:$0xff] %v1201
    %1250 = vst [vmem:[#allocation4 + $0xf8] sm:$0xff] %v1202
    %1251 = vst [vmem:[#allocation4 + $0x100] sm:$0xff] %v1203
    %1252 = vst [vmem:[#allocation4 + $0x108] sm:$0xff] %v1204
    %1253 = vst [vmem:[#allocation4 + $0x110] sm:$0xff] %v1205
    %1254 = vst [vmem:[#allocation4 + $0x118] sm:$0xff] %v1206
    %1255 = vst [vmem:[#allocation4 + $0x120] sm:$0xff] %v1207
    %1256 = vst [vmem:[#allocation4 + $0x128] sm:$0xff] %v1208
    %1257 = vst [vmem:[#allocation4 + $0x130] sm:$0xff] %v1209
    %1258 = vst [vmem:[#allocation4 + $0x138] sm:$0xff] %v1210
    %1259 = vst [vmem:[#allocation4 + $0x140] sm:$0xff] %v1211
    %1260 = vst [vmem:[#allocation4 + $0x148] sm:$0xff] %v1212
    %1261 = vst [vmem:[#allocation4 + $0x150] sm:$0xff] %v1213
    %1262 = vst [vmem:[#allocation4 + $0x158] sm:$0xff] %v1214
    %1263 = vst [vmem:[#allocation4 + $0x160] sm:$0xff] %v1215
    %1264 = vst [vmem:[#allocation4 + $0x168] sm:$0xff] %v1216
    %1265 = vst [vmem:[#allocation4 + $0x170] sm:$0xff] %v1217
    %1266 = vst [vmem:[#allocation4 + $0x178] sm:$0xff] %v1218
    %v1267 = vld [vmem:[#allocation3] sm:$0xff]
    %v1268 = vld [vmem:[#allocation3 + $0x8] sm:$0xff]
    %v1269 = vld [vmem:[#allocation3 + $0x10] sm:$0xff]
    %v1270 = vld [vmem:[#allocation3 + $0x18] sm:$0xff]
    %v1271 = vld [vmem:[#allocation3 + $0x20] sm:$0xff]
    %v1272 = vld [vmem:[#allocation3 + $0x28] sm:$0xff]
    %v1273 = vld [vmem:[#allocation3 + $0x30] sm:$0xff]
    %v1274 = vld [vmem:[#allocation3 + $0x38] sm:$0xff]
    %v1275 = vld [vmem:[#allocation3 + $0x40] sm:$0xff]
    %v1276 = vld [vmem:[#allocation3 + $0x48] sm:$0xff]
    %v1277 = vld [vmem:[#allocation3 + $0x50] sm:$0xff]
    %v1278 = vld [vmem:[#allocation3 + $0x58] sm:$0xff]
    %v1279 = vld [vmem:[#allocation3 + $0x60] sm:$0xff]
    %v1280 = vld [vmem:[#allocation3 + $0x68] sm:$0xff]
    %v1281 = vld [vmem:[#allocation3 + $0x70] sm:$0xff]
    %v1282 = vld [vmem:[#allocation3 + $0x78] sm:$0xff]
    %v1283 = vld [vmem:[#allocation3 + $0x80] sm:$0xff]
    %v1284 = vld [vmem:[#allocation3 + $0x88] sm:$0xff]
    %v1285 = vld [vmem:[#allocation3 + $0x90] sm:$0xff]
    %v1286 = vld [vmem:[#allocation3 + $0x98] sm:$0xff]
    %v1287 = vld [vmem:[#allocation3 + $0xa0] sm:$0xff]
    %v1288 = vld [vmem:[#allocation3 + $0xa8] sm:$0xff]
    %v1289 = vld [vmem:[#allocation3 + $0xb0] sm:$0xff]
    %v1290 = vld [vmem:[#allocation3 + $0xb8] sm:$0xff]
    %v1291 = vld [vmem:[#allocation3 + $0xc0] sm:$0xff]
    %v1292 = vld [vmem:[#allocation3 + $0xc8] sm:$0xff]
    %1319 = vrot.lane.b32.xlu0 %v1267, 126
    %v1320 = vpop.permute.xlu0 %1319
    %1321 = vrot.lane.b32.xlu0 %v1268, 126
    %v1322 = vpop.permute.xlu0 %1321
    %1323 = vrot.lane.b32.xlu0 %v1269, 126
    %v1324 = vpop.permute.xlu0 %1323
    %1325 = vrot.lane.b32.xlu0 %v1270, 126
    %v1326 = vpop.permute.xlu0 %1325
    %1327 = vrot.lane.b32.xlu0 %v1271, 126
    %v1328 = vpop.permute.xlu0 %1327
    %1329 = vrot.lane.b32.xlu0 %v1272, 126
    %v1330 = vpop.permute.xlu0 %1329
    %1331 = vrot.lane.b32.xlu0 %v1273, 126
    %v1332 = vpop.permute.xlu0 %1331
    %1333 = vrot.lane.b32.xlu0 %v1274, 126
    %v1334 = vpop.permute.xlu0 %1333
    %1335 = vrot.lane.b32.xlu0 %v1275, 126
    %v1336 = vpop.permute.xlu0 %1335
    %1337 = vrot.lane.b32.xlu0 %v1276, 126
    %v1338 = vpop.permute.xlu0 %1337
    %1339 = vrot.lane.b32.xlu0 %v1277, 126
    %v1340 = vpop.permute.xlu0 %1339
    %1341 = vrot.lane.b32.xlu0 %v1278, 126
    %v1342 = vpop.permute.xlu0 %1341
    %1343 = vrot.lane.b32.xlu0 %v1279, 126
    %v1344 = vpop.permute.xlu0 %1343
    %1345 = vrot.lane.b32.xlu0 %v1280, 126
    %v1346 = vpop.permute.xlu0 %1345
    %1347 = vrot.lane.b32.xlu0 %v1281, 126
    %v1348 = vpop.permute.xlu0 %1347
    %1349 = vrot.lane.b32.xlu0 %v1282, 126
    %v1350 = vpop.permute.xlu0 %1349
    %1351 = vrot.lane.b32.xlu0 %v1283, 126
    %v1352 = vpop.permute.xlu0 %1351
    %1353 = vrot.lane.b32.xlu0 %v1284, 126
    %v1354 = vpop.permute.xlu0 %1353
    %1355 = vrot.lane.b32.xlu0 %v1285, 126
    %v1356 = vpop.permute.xlu0 %1355
    %1357 = vrot.lane.b32.xlu0 %v1286, 126
    %v1358 = vpop.permute.xlu0 %1357
    %1359 = vrot.lane.b32.xlu0 %v1287, 126
    %v1360 = vpop.permute.xlu0 %1359
    %1361 = vrot.lane.b32.xlu0 %v1288, 126
    %v1362 = vpop.permute.xlu0 %1361
    %1363 = vrot.lane.b32.xlu0 %v1289, 126
    %v1364 = vpop.permute.xlu0 %1363
    %1365 = vrot.lane.b32.xlu0 %v1290, 126
    %v1366 = vpop.permute.xlu0 %1365
    %1367 = vrot.lane.b32.xlu0 %v1291, 126
    %v1368 = vpop.permute.xlu0 %1367
    %1369 = vrot.lane.b32.xlu0 %v1292, 126
    %v1370 = vpop.permute.xlu0 %1369
    %vm1371 = vcmask 1031168
    %v1372 = vsel %vm1371, %v1320, %v1322
    %v1373 = vsel %vm1371, %v1322, %v1324
    %v1374 = vsel %vm1371, %v1324, %v1326
    %v1375 = vsel %vm1371, %v1326, %v1328
    %v1376 = vsel %vm1371, %v1328, %v1330
    %v1377 = vsel %vm1371, %v1330, %v1332
    %v1378 = vsel %vm1371, %v1332, %v1334
    %v1379 = vsel %vm1371, %v1334, %v1336
    %v1380 = vsel %vm1371, %v1336, %v1338
    %v1381 = vsel %vm1371, %v1338, %v1340
    %v1382 = vsel %vm1371, %v1340, %v1342
    %v1383 = vsel %vm1371, %v1342, %v1344
    %v1384 = vsel %vm1371, %v1346, %v1348
    %v1385 = vsel %vm1371, %v1348, %v1350
    %v1386 = vsel %vm1371, %v1350, %v1352
    %v1387 = vsel %vm1371, %v1352, %v1354
    %v1388 = vsel %vm1371, %v1354, %v1356
    %v1389 = vsel %vm1371, %v1356, %v1358
    %v1390 = vsel %vm1371, %v1358, %v1360
    %v1391 = vsel %vm1371, %v1360, %v1362
    %v1392 = vsel %vm1371, %v1362, %v1364
    %v1393 = vsel %vm1371, %v1364, %v1366
    %v1394 = vsel %vm1371, %v1366, %v1368
    %v1395 = vsel %vm1371, %v1368, %v1370
    %1420 = vst [vmem:[#allocation4 + $0x180] sm:$0xff] %v1372
    %1421 = vst [vmem:[#allocation4 + $0x188] sm:$0xff] %v1373
    %1422 = vst [vmem:[#allocation4 + $0x190] sm:$0xff] %v1374
    %1423 = vst [vmem:[#allocation4 + $0x198] sm:$0xff] %v1375
    %1424 = vst [vmem:[#allocation4 + $0x1a0] sm:$0xff] %v1376
    %1425 = vst [vmem:[#allocation4 + $0x1a8] sm:$0xff] %v1377
    %1426 = vst [vmem:[#allocation4 + $0x1b0] sm:$0xff] %v1378
    %1427 = vst [vmem:[#allocation4 + $0x1b8] sm:$0xff] %v1379
    %1428 = vst [vmem:[#allocation4 + $0x1c0] sm:$0xff] %v1380
    %1429 = vst [vmem:[#allocation4 + $0x1c8] sm:$0xff] %v1381
    %1430 = vst [vmem:[#allocation4 + $0x1d0] sm:$0xff] %v1382
    %1431 = vst [vmem:[#allocation4 + $0x1d8] sm:$0xff] %v1383
    %1432 = vst [vmem:[#allocation4 + $0x1e0] sm:$0xff] %v1384
    %1433 = vst [vmem:[#allocation4 + $0x1e8] sm:$0xff] %v1385
    %1434 = vst [vmem:[#allocation4 + $0x1f0] sm:$0xff] %v1386
    %1435 = vst [vmem:[#allocation4 + $0x1f8] sm:$0xff] %v1387
    %1436 = vst [vmem:[#allocation4 + $0x200] sm:$0xff] %v1388
    %1437 = vst [vmem:[#allocation4 + $0x208] sm:$0xff] %v1389
    %1438 = vst [vmem:[#allocation4 + $0x210] sm:$0xff] %v1390
    %1439 = vst [vmem:[#allocation4 + $0x218] sm:$0xff] %v1391
    %1440 = vst [vmem:[#allocation4 + $0x220] sm:$0xff] %v1392
    %1441 = vst [vmem:[#allocation4 + $0x228] sm:$0xff] %v1393
    %1442 = vst [vmem:[#allocation4 + $0x230] sm:$0xff] %v1394
    %1443 = vst [vmem:[#allocation4 + $0x238] sm:$0xff] %v1395
    %v1444 = vld [vmem:[#allocation3] sm:$0xff]
    %v1445 = vld [vmem:[#allocation3 + $0x8] sm:$0xff]
    %v1446 = vld [vmem:[#allocation3 + $0x10] sm:$0xff]
    %v1447 = vld [vmem:[#allocation3 + $0x18] sm:$0xff]
    %v1448 = vld [vmem:[#allocation3 + $0x20] sm:$0xff]
    %v1449 = vld [vmem:[#allocation3 + $0x28] sm:$0xff]
    %v1450 = vld [vmem:[#allocation3 + $0x30] sm:$0xff]
    %v1451 = vld [vmem:[#allocation3 + $0x38] sm:$0xff]
    %v1452 = vld [vmem:[#allocation3 + $0x40] sm:$0xff]
    %v1453 = vld [vmem:[#allocation3 + $0x48] sm:$0xff]
    %v1454 = vld [vmem:[#allocation3 + $0x50] sm:$0xff]
    %v1455 = vld [vmem:[#allocation3 + $0x58] sm:$0xff]
    %v1456 = vld [vmem:[#allocation3 + $0x60] sm:$0xff]
    %v1457 = vld [vmem:[#allocation3 + $0x68] sm:$0xff]
    %v1458 = vld [vmem:[#allocation3 + $0x70] sm:$0xff]
    %v1459 = vld [vmem:[#allocation3 + $0x78] sm:$0xff]
    %v1460 = vld [vmem:[#allocation3 + $0x80] sm:$0xff]
    %v1461 = vld [vmem:[#allocation3 + $0x88] sm:$0xff]
    %v1462 = vld [vmem:[#allocation3 + $0x90] sm:$0xff]
    %v1463 = vld [vmem:[#allocation3 + $0x98] sm:$0xff]
    %v1464 = vld [vmem:[#allocation3 + $0xa0] sm:$0xff]
    %v1465 = vld [vmem:[#allocation3 + $0xa8] sm:$0xff]
    %v1466 = vld [vmem:[#allocation3 + $0xb0] sm:$0xff]
    %v1467 = vld [vmem:[#allocation3 + $0xb8] sm:$0xff]
    %v1468 = vld [vmem:[#allocation3 + $0xc0] sm:$0xff]
    %v1469 = vld [vmem:[#allocation3 + $0xc8] sm:$0xff]
    %1496 = vrot.lane.b32.xlu0 %v1444, 100
    %v1497 = vpop.permute.xlu0 %1496
    %1498 = vrot.lane.b32.xlu0 %v1445, 100
    %v1499 = vpop.permute.xlu0 %1498
    %1500 = vrot.lane.b32.xlu0 %v1446, 100
    %v1501 = vpop.permute.xlu0 %1500
    %1502 = vrot.lane.b32.xlu0 %v1447, 100
    %v1503 = vpop.permute.xlu0 %1502
    %1504 = vrot.lane.b32.xlu0 %v1448, 100
    %v1505 = vpop.permute.xlu0 %1504
    %1506 = vrot.lane.b32.xlu0 %v1449, 100
    %v1507 = vpop.permute.xlu0 %1506
    %1508 = vrot.lane.b32.xlu0 %v1450, 100
    %v1509 = vpop.permute.xlu0 %1508
    %1510 = vrot.lane.b32.xlu0 %v1451, 100
    %v1511 = vpop.permute.xlu0 %1510
    %1512 = vrot.lane.b32.xlu0 %v1452, 100
    %v1513 = vpop.permute.xlu0 %1512
    %1514 = vrot.lane.b32.xlu0 %v1453, 100
    %v1515 = vpop.permute.xlu0 %1514
    %1516 = vrot.lane.b32.xlu0 %v1454, 100
    %v1517 = vpop.permute.xlu0 %1516
    %1518 = vrot.lane.b32.xlu0 %v1455, 100
    %v1519 = vpop.permute.xlu0 %1518
    %1520 = vrot.lane.b32.xlu0 %v1456, 100
    %v1521 = vpop.permute.xlu0 %1520
    %1522 = vrot.lane.b32.xlu0 %v1457, 100
    %v1523 = vpop.permute.xlu0 %1522
    %1524 = vrot.lane.b32.xlu0 %v1458, 100
    %v1525 = vpop.permute.xlu0 %1524
    %1526 = vrot.lane.b32.xlu0 %v1459, 100
    %v1527 = vpop.permute.xlu0 %1526
    %1528 = vrot.lane.b32.xlu0 %v1460, 100
    %v1529 = vpop.permute.xlu0 %1528
    %1530 = vrot.lane.b32.xlu0 %v1461, 100
    %v1531 = vpop.permute.xlu0 %1530
    %1532 = vrot.lane.b32.xlu0 %v1462, 100
    %v1533 = vpop.permute.xlu0 %1532
    %1534 = vrot.lane.b32.xlu0 %v1463, 100
    %v1535 = vpop.permute.xlu0 %1534
    %1536 = vrot.lane.b32.xlu0 %v1464, 100
    %v1537 = vpop.permute.xlu0 %1536
    %1538 = vrot.lane.b32.xlu0 %v1465, 100
    %v1539 = vpop.permute.xlu0 %1538
    %1540 = vrot.lane.b32.xlu0 %v1466, 100
    %v1541 = vpop.permute.xlu0 %1540
    %1542 = vrot.lane.b32.xlu0 %v1467, 100
    %v1543 = vpop.permute.xlu0 %1542
    %1544 = vrot.lane.b32.xlu0 %v1468, 100
    %v1545 = vpop.permute.xlu0 %1544
    %1546 = vrot.lane.b32.xlu0 %v1469, 100
    %v1547 = vpop.permute.xlu0 %1546
    %vm1548 = vcmask 818176
    %v1549 = vsel %vm1548, %v1497, %v1499
    %v1550 = vsel %vm1548, %v1499, %v1501
    %v1551 = vsel %vm1548, %v1501, %v1503
    %v1552 = vsel %vm1548, %v1503, %v1505
    %v1553 = vsel %vm1548, %v1505, %v1507
    %v1554 = vsel %vm1548, %v1507, %v1509
    %v1555 = vsel %vm1548, %v1509, %v1511
    %v1556 = vsel %vm1548, %v1511, %v1513
    %v1557 = vsel %vm1548, %v1513, %v1515
    %v1558 = vsel %vm1548, %v1515, %v1517
    %v1559 = vsel %vm1548, %v1517, %v1519
    %v1560 = vsel %vm1548, %v1519, %v1521
    %v1561 = vsel %vm1548, %v1523, %v1525
    %v1562 = vsel %vm1548, %v1525, %v1527
    %v1563 = vsel %vm1548, %v1527, %v1529
    %v1564 = vsel %vm1548, %v1529, %v1531
    %v1565 = vsel %vm1548, %v1531, %v1533
    %v1566 = vsel %vm1548, %v1533, %v1535
    %v1567 = vsel %vm1548, %v1535, %v1537
    %v1568 = vsel %vm1548, %v1537, %v1539
    %v1569 = vsel %vm1548, %v1539, %v1541
    %v1570 = vsel %vm1548, %v1541, %v1543
    %v1571 = vsel %vm1548, %v1543, %v1545
    %v1572 = vsel %vm1548, %v1545, %v1547
    %1597 = vst [vmem:[#allocation4 + $0x240] sm:$0xff] %v1549
    %1598 = vst [vmem:[#allocation4 + $0x248] sm:$0xff] %v1550
    %1599 = vst [vmem:[#allocation4 + $0x250] sm:$0xff] %v1551
    %1600 = vst [vmem:[#allocation4 + $0x258] sm:$0xff] %v1552
    %1601 = vst [vmem:[#allocation4 + $0x260] sm:$0xff] %v1553
    %1602 = vst [vmem:[#allocation4 + $0x268] sm:$0xff] %v1554
    %1603 = vst [vmem:[#allocation4 + $0x270] sm:$0xff] %v1555
    %1604 = vst [vmem:[#allocation4 + $0x278] sm:$0xff] %v1556
    %1605 = vst [vmem:[#allocation4 + $0x280] sm:$0xff] %v1557
    %1606 = vst [vmem:[#allocation4 + $0x288] sm:$0xff] %v1558
    %1607 = vst [vmem:[#allocation4 + $0x290] sm:$0xff] %v1559
    %1608 = vst [vmem:[#allocation4 + $0x298] sm:$0xff] %v1560
    %1609 = vst [vmem:[#allocation4 + $0x2a0] sm:$0xff] %v1561
    %1610 = vst [vmem:[#allocation4 + $0x2a8] sm:$0xff] %v1562
    %1611 = vst [vmem:[#allocation4 + $0x2b0] sm:$0xff] %v1563
    %1612 = vst [vmem:[#allocation4 + $0x2b8] sm:$0xff] %v1564
    %1613 = vst [vmem:[#allocation4 + $0x2c0] sm:$0xff] %v1565
    %1614 = vst [vmem:[#allocation4 + $0x2c8] sm:$0xff] %v1566
    %1615 = vst [vmem:[#allocation4 + $0x2d0] sm:$0xff] %v1567
    %1616 = vst [vmem:[#allocation4 + $0x2d8] sm:$0xff] %v1568
    %1617 = vst [vmem:[#allocation4 + $0x2e0] sm:$0xff] %v1569
    %1618 = vst [vmem:[#allocation4 + $0x2e8] sm:$0xff] %v1570
    %1619 = vst [vmem:[#allocation4 + $0x2f0] sm:$0xff] %v1571
    %1620 = vst [vmem:[#allocation4 + $0x2f8] sm:$0xff] %v1572
    %v1621 = vld [vmem:[#allocation3] sm:$0xff]
    %v1622 = vld [vmem:[#allocation3 + $0x8] sm:$0xff]
    %v1623 = vld [vmem:[#allocation3 + $0x10] sm:$0xff]
    %v1624 = vld [vmem:[#allocation3 + $0x18] sm:$0xff]
    %v1625 = vld [vmem:[#allocation3 + $0x20] sm:$0xff]
    %v1626 = vld [vmem:[#allocation3 + $0x28] sm:$0xff]
    %v1627 = vld [vmem:[#allocation3 + $0x30] sm:$0xff]
    %v1628 = vld [vmem:[#allocation3 + $0x38] sm:$0xff]
    %v1629 = vld [vmem:[#allocation3 + $0x40] sm:$0xff]
    %v1630 = vld [vmem:[#allocation3 + $0x48] sm:$0xff]
    %v1631 = vld [vmem:[#allocation3 + $0x50] sm:$0xff]
    %v1632 = vld [vmem:[#allocation3 + $0x58] sm:$0xff]
    %v1633 = vld [vmem:[#allocation3 + $0x60] sm:$0xff]
    %v1634 = vld [vmem:[#allocation3 + $0x68] sm:$0xff]
    %v1635 = vld [vmem:[#allocation3 + $0x70] sm:$0xff]
    %v1636 = vld [vmem:[#allocation3 + $0x78] sm:$0xff]
    %v1637 = vld [vmem:[#allocation3 + $0x80] sm:$0xff]
    %v1638 = vld [vmem:[#allocation3 + $0x88] sm:$0xff]
    %v1639 = vld [vmem:[#allocation3 + $0x90] sm:$0xff]
    %v1640 = vld [vmem:[#allocation3 + $0x98] sm:$0xff]
    %v1641 = vld [vmem:[#allocation3 + $0xa0] sm:$0xff]
    %v1642 = vld [vmem:[#allocation3 + $0xa8] sm:$0xff]
    %v1643 = vld [vmem:[#allocation3 + $0xb0] sm:$0xff]
    %v1644 = vld [vmem:[#allocation3 + $0xb8] sm:$0xff]
    %v1645 = vld [vmem:[#allocation3 + $0xc0] sm:$0xff]
    %v1646 = vld [vmem:[#allocation3 + $0xc8] sm:$0xff]
    %1673 = vrot.lane.b32.xlu0 %v1621, 99
    %v1674 = vpop.permute.xlu0 %1673
    %1675 = vrot.lane.b32.xlu0 %v1622, 99
    %v1676 = vpop.permute.xlu0 %1675
    %1677 = vrot.lane.b32.xlu0 %v1623, 99
    %v1678 = vpop.permute.xlu0 %1677
    %1679 = vrot.lane.b32.xlu0 %v1624, 99
    %v1680 = vpop.permute.xlu0 %1679
    %1681 = vrot.lane.b32.xlu0 %v1625, 99
    %v1682 = vpop.permute.xlu0 %1681
    %1683 = vrot.lane.b32.xlu0 %v1626, 99
    %v1684 = vpop.permute.xlu0 %1683
    %1685 = vrot.lane.b32.xlu0 %v1627, 99
    %v1686 = vpop.permute.xlu0 %1685
    %1687 = vrot.lane.b32.xlu0 %v1628, 99
    %v1688 = vpop.permute.xlu0 %1687
    %1689 = vrot.lane.b32.xlu0 %v1629, 99
    %v1690 = vpop.permute.xlu0 %1689
    %1691 = vrot.lane.b32.xlu0 %v1630, 99
    %v1692 = vpop.permute.xlu0 %1691
    %1693 = vrot.lane.b32.xlu0 %v1631, 99
    %v1694 = vpop.permute.xlu0 %1693
    %1695 = vrot.lane.b32.xlu0 %v1632, 99
    %v1696 = vpop.permute.xlu0 %1695
    %1697 = vrot.lane.b32.xlu0 %v1633, 99
    %v1698 = vpop.permute.xlu0 %1697
    %1699 = vrot.lane.b32.xlu0 %v1634, 99
    %v1700 = vpop.permute.xlu0 %1699
    %1701 = vrot.lane.b32.xlu0 %v1635, 99
    %v1702 = vpop.permute.xlu0 %1701
    %1703 = vrot.lane.b32.xlu0 %v1636, 99
    %v1704 = vpop.permute.xlu0 %1703
    %1705 = vrot.lane.b32.xlu0 %v1637, 99
    %v1706 = vpop.permute.xlu0 %1705
    %1707 = vrot.lane.b32.xlu0 %v1638, 99
    %v1708 = vpop.permute.xlu0 %1707
    %1709 = vrot.lane.b32.xlu0 %v1639, 99
    %v1710 = vpop.permute.xlu0 %1709
    %1711 = vrot.lane.b32.xlu0 %v1640, 99
    %v1712 = vpop.permute.xlu0 %1711
    %1713 = vrot.lane.b32.xlu0 %v1641, 99
    %v1714 = vpop.permute.xlu0 %1713
    %1715 = vrot.lane.b32.xlu0 %v1642, 99
    %v1716 = vpop.permute.xlu0 %1715
    %1717 = vrot.lane.b32.xlu0 %v1643, 99
    %v1718 = vpop.permute.xlu0 %1717
    %1719 = vrot.lane.b32.xlu0 %v1644, 99
    %v1720 = vpop.permute.xlu0 %1719
    %1721 = vrot.lane.b32.xlu0 %v1645, 99
    %v1722 = vpop.permute.xlu0 %1721
    %1723 = vrot.lane.b32.xlu0 %v1646, 99
    %v1724 = vpop.permute.xlu0 %1723
    %vm1725 = vcmask 809984
    %v1726 = vsel %vm1725, %v1674, %v1676
    %v1727 = vsel %vm1725, %v1676, %v1678
    %v1728 = vsel %vm1725, %v1678, %v1680
    %v1729 = vsel %vm1725, %v1680, %v1682
    %v1730 = vsel %vm1725, %v1682, %v1684
    %v1731 = vsel %vm1725, %v1684, %v1686
    %v1732 = vsel %vm1725, %v1686, %v1688
    %v1733 = vsel %vm1725, %v1688, %v1690
    %v1734 = vsel %vm1725, %v1690, %v1692
    %v1735 = vsel %vm1725, %v1692, %v1694
    %v1736 = vsel %vm1725, %v1694, %v1696
    %v1737 = vsel %vm1725, %v1696, %v1698
    %v1738 = vsel %vm1725, %v1700, %v1702
    %v1739 = vsel %vm1725, %v1702, %v1704
    %v1740 = vsel %vm1725, %v1704, %v1706
    %v1741 = vsel %vm1725, %v1706, %v1708
    %v1742 = vsel %vm1725, %v1708, %v1710
    %v1743 = vsel %vm1725, %v1710, %v1712
    %v1744 = vsel %vm1725, %v1712, %v1714
    %v1745 = vsel %vm1725, %v1714, %v1716
    %v1746 = vsel %vm1725, %v1716, %v1718
    %v1747 = vsel %vm1725, %v1718, %v1720
    %v1748 = vsel %vm1725, %v1720, %v1722
    %v1749 = vsel %vm1725, %v1722, %v1724
    %1774 = vst [vmem:[#allocation4 + $0x300] sm:$0xff] %v1726
    %1775 = vst [vmem:[#allocation4 + $0x308] sm:$0xff] %v1727
    %1776 = vst [vmem:[#allocation4 + $0x310] sm:$0xff] %v1728
    %1777 = vst [vmem:[#allocation4 + $0x318] sm:$0xff] %v1729
    %1778 = vst [vmem:[#allocation4 + $0x320] sm:$0xff] %v1730
    %1779 = vst [vmem:[#allocation4 + $0x328] sm:$0xff] %v1731
    %1780 = vst [vmem:[#allocation4 + $0x330] sm:$0xff] %v1732
    %1781 = vst [vmem:[#allocation4 + $0x338] sm:$0xff] %v1733
    %1782 = vst [vmem:[#allocation4 + $0x340] sm:$0xff] %v1734
    %1783 = vst [vmem:[#allocation4 + $0x348] sm:$0xff] %v1735
    %1784 = vst [vmem:[#allocation4 + $0x350] sm:$0xff] %v1736
    %1785 = vst [vmem:[#allocation4 + $0x358] sm:$0xff] %v1737
    %1786 = vst [vmem:[#allocation4 + $0x360] sm:$0xff] %v1738
    %1787 = vst [vmem:[#allocation4 + $0x368] sm:$0xff] %v1739
    %1788 = vst [vmem:[#allocation4 + $0x370] sm:$0xff] %v1740
    %1789 = vst [vmem:[#allocation4 + $0x378] sm:$0xff] %v1741
    %1790 = vst [vmem:[#allocation4 + $0x380] sm:$0xff] %v1742
    %1791 = vst [vmem:[#allocation4 + $0x388] sm:$0xff] %v1743
    %1792 = vst [vmem:[#allocation4 + $0x390] sm:$0xff] %v1744
    %1793 = vst [vmem:[#allocation4 + $0x398] sm:$0xff] %v1745
    %1794 = vst [vmem:[#allocation4 + $0x3a0] sm:$0xff] %v1746
    %1795 = vst [vmem:[#allocation4 + $0x3a8] sm:$0xff] %v1747
    %1796 = vst [vmem:[#allocation4 + $0x3b0] sm:$0xff] %v1748
    %1797 = vst [vmem:[#allocation4 + $0x3b8] sm:$0xff] %v1749
    %v1798 = vld [vmem:[#allocation3] sm:$0xff]
    %v1799 = vld [vmem:[#allocation3 + $0x8] sm:$0xff]
    %v1800 = vld [vmem:[#allocation3 + $0x10] sm:$0xff]
    %v1801 = vld [vmem:[#allocation3 + $0x18] sm:$0xff]
    %v1802 = vld [vmem:[#allocation3 + $0x20] sm:$0xff]
    %v1803 = vld [vmem:[#allocation3 + $0x28] sm:$0xff]
    %v1804 = vld [vmem:[#allocation3 + $0x30] sm:$0xff]
    %v1805 = vld [vmem:[#allocation3 + $0x38] sm:$0xff]
    %v1806 = vld [vmem:[#allocation3 + $0x40] sm:$0xff]
    %v1807 = vld [vmem:[#allocation3 + $0x48] sm:$0xff]
    %v1808 = vld [vmem:[#allocation3 + $0x50] sm:$0xff]
    %v1809 = vld [vmem:[#allocation3 + $0x58] sm:$0xff]
    %v1810 = vld [vmem:[#allocation3 + $0x60] sm:$0xff]
    %v1811 = vld [vmem:[#allocation3 + $0x68] sm:$0xff]
    %v1812 = vld [vmem:[#allocation3 + $0x70] sm:$0xff]
    %v1813 = vld [vmem:[#allocation3 + $0x78] sm:$0xff]
    %v1814 = vld [vmem:[#allocation3 + $0x80] sm:$0xff]
    %v1815 = vld [vmem:[#allocation3 + $0x88] sm:$0xff]
    %v1816 = vld [vmem:[#allocation3 + $0x90] sm:$0xff]
    %v1817 = vld [vmem:[#allocation3 + $0x98] sm:$0xff]
    %v1818 = vld [vmem:[#allocation3 + $0xa0] sm:$0xff]
    %v1819 = vld [vmem:[#allocation3 + $0xa8] sm:$0xff]
    %v1820 = vld [vmem:[#allocation3 + $0xb0] sm:$0xff]
    %v1821 = vld [vmem:[#allocation3 + $0xb8] sm:$0xff]
    %v1822 = vld [vmem:[#allocation3 + $0xc0] sm:$0xff]
    %v1823 = vld [vmem:[#allocation3 + $0xc8] sm:$0xff]
    %1850 = vrot.lane.b32.xlu0 %v1798, 98
    %v1851 = vpop.permute.xlu0 %1850
    %1852 = vrot.lane.b32.xlu0 %v1799, 98
    %v1853 = vpop.permute.xlu0 %1852
    %1854 = vrot.lane.b32.xlu0 %v1800, 98
    %v1855 = vpop.permute.xlu0 %1854
    %1856 = vrot.lane.b32.xlu0 %v1801, 98
    %v1857 = vpop.permute.xlu0 %1856
    %1858 = vrot.lane.b32.xlu0 %v1802, 98
    %v1859 = vpop.permute.xlu0 %1858
    %1860 = vrot.lane.b32.xlu0 %v1803, 98
    %v1861 = vpop.permute.xlu0 %1860
    %1862 = vrot.lane.b32.xlu0 %v1804, 98
    %v1863 = vpop.permute.xlu0 %1862
    %1864 = vrot.lane.b32.xlu0 %v1805, 98
    %v1865 = vpop.permute.xlu0 %1864
    %1866 = vrot.lane.b32.xlu0 %v1806, 98
    %v1867 = vpop.permute.xlu0 %1866
    %1868 = vrot.lane.b32.xlu0 %v1807, 98
    %v1869 = vpop.permute.xlu0 %1868
    %1870 = vrot.lane.b32.xlu0 %v1808, 98
    %v1871 = vpop.permute.xlu0 %1870
    %1872 = vrot.lane.b32.xlu0 %v1809, 98
    %v1873 = vpop.permute.xlu0 %1872
    %1874 = vrot.lane.b32.xlu0 %v1810, 98
    %v1875 = vpop.permute.xlu0 %1874
    %1876 = vrot.lane.b32.xlu0 %v1811, 98
    %v1877 = vpop.permute.xlu0 %1876
    %1878 = vrot.lane.b32.xlu0 %v1812, 98
    %v1879 = vpop.permute.xlu0 %1878
    %1880 = vrot.lane.b32.xlu0 %v1813, 98
    %v1881 = vpop.permute.xlu0 %1880
    %1882 = vrot.lane.b32.xlu0 %v1814, 98
    %v1883 = vpop.permute.xlu0 %1882
    %1884 = vrot.lane.b32.xlu0 %v1815, 98
    %v1885 = vpop.permute.xlu0 %1884
    %1886 = vrot.lane.b32.xlu0 %v1816, 98
    %v1887 = vpop.permute.xlu0 %1886
    %1888 = vrot.lane.b32.xlu0 %v1817, 98
    %v1889 = vpop.permute.xlu0 %1888
    %1890 = vrot.lane.b32.xlu0 %v1818, 98
    %v1891 = vpop.permute.xlu0 %1890
    %1892 = vrot.lane.b32.xlu0 %v1819, 98
    %v1893 = vpop.permute.xlu0 %1892
    %1894 = vrot.lane.b32.xlu0 %v1820, 98
    %v1895 = vpop.permute.xlu0 %1894
    %1896 = vrot.lane.b32.xlu0 %v1821, 98
    %v1897 = vpop.permute.xlu0 %1896
    %1898 = vrot.lane.b32.xlu0 %v1822, 98
    %v1899 = vpop.permute.xlu0 %1898
    %1900 = vrot.lane.b32.xlu0 %v1823, 98
    %v1901 = vpop.permute.xlu0 %1900
    %vm1902 = vcmask 801792
    %v1903 = vsel %vm1902, %v1851, %v1853
    %v1904 = vsel %vm1902, %v1853, %v1855
    %v1905 = vsel %vm1902, %v1855, %v1857
    %v1906 = vsel %vm1902, %v1857, %v1859
    %v1907 = vsel %vm1902, %v1859, %v1861
    %v1908 = vsel %vm1902, %v1861, %v1863
    %v1909 = vsel %vm1902, %v1863, %v1865
    %v1910 = vsel %vm1902, %v1865, %v1867
    %v1911 = vsel %vm1902, %v1867, %v1869
    %v1912 = vsel %vm1902, %v1869, %v1871
    %v1913 = vsel %vm1902, %v1871, %v1873
    %v1914 = vsel %vm1902, %v1873, %v1875
    %v1915 = vsel %vm1902, %v1877, %v1879
    %v1916 = vsel %vm1902, %v1879, %v1881
    %v1917 = vsel %vm1902, %v1881, %v1883
    %v1918 = vsel %vm1902, %v1883, %v1885
    %v1919 = vsel %vm1902, %v1885, %v1887
    %v1920 = vsel %vm1902, %v1887, %v1889
    %v1921 = vsel %vm1902, %v1889, %v1891
    %v1922 = vsel %vm1902, %v1891, %v1893
    %v1923 = vsel %vm1902, %v1893, %v1895
    %v1924 = vsel %vm1902, %v1895, %v1897
    %v1925 = vsel %vm1902, %v1897, %v1899
    %v1926 = vsel %vm1902, %v1899, %v1901
    %1951 = vst [vmem:[#allocation4 + $0x3c0] sm:$0xff] %v1903
    %1952 = vst [vmem:[#allocation4 + $0x3c8] sm:$0xff] %v1904
    %1953 = vst [vmem:[#allocation4 + $0x3d0] sm:$0xff] %v1905
    %1954 = vst [vmem:[#allocation4 + $0x3d8] sm:$0xff] %v1906
    %1955 = vst [vmem:[#allocation4 + $0x3e0] sm:$0xff] %v1907
    %1956 = vst [vmem:[#allocation4 + $0x3e8] sm:$0xff] %v1908
    %1957 = vst [vmem:[#allocation4 + $0x3f0] sm:$0xff] %v1909
    %1958 = vst [vmem:[#allocation4 + $0x3f8] sm:$0xff] %v1910
    %1959 = vst [vmem:[#allocation4 + $0x400] sm:$0xff] %v1911
    %1960 = vst [vmem:[#allocation4 + $0x408] sm:$0xff] %v1912
    %1961 = vst [vmem:[#allocation4 + $0x410] sm:$0xff] %v1913
    %1962 = vst [vmem:[#allocation4 + $0x418] sm:$0xff] %v1914
    %1963 = vst [vmem:[#allocation4 + $0x420] sm:$0xff] %v1915
    %1964 = vst [vmem:[#allocation4 + $0x428] sm:$0xff] %v1916
    %1965 = vst [vmem:[#allocation4 + $0x430] sm:$0xff] %v1917
    %1966 = vst [vmem:[#allocation4 + $0x438] sm:$0xff] %v1918
    %1967 = vst [vmem:[#allocation4 + $0x440] sm:$0xff] %v1919
    %1968 = vst [vmem:[#allocation4 + $0x448] sm:$0xff] %v1920
    %1969 = vst [vmem:[#allocation4 + $0x450] sm:$0xff] %v1921
    %1970 = vst [vmem:[#allocation4 + $0x458] sm:$0xff] %v1922
    %1971 = vst [vmem:[#allocation4 + $0x460] sm:$0xff] %v1923
    %1972 = vst [vmem:[#allocation4 + $0x468] sm:$0xff] %v1924
    %1973 = vst [vmem:[#allocation4 + $0x470] sm:$0xff] %v1925
    %1974 = vst [vmem:[#allocation4 + $0x478] sm:$0xff] %v1926
    %v1975 = vld [vmem:[#allocation3] sm:$0xff]
    %v1976 = vld [vmem:[#allocation3 + $0x8] sm:$0xff]
    %v1977 = vld [vmem:[#allocation3 + $0x10] sm:$0xff]
    %v1978 = vld [vmem:[#allocation3 + $0x18] sm:$0xff]
    %v1979 = vld [vmem:[#allocation3 + $0x20] sm:$0xff]
    %v1980 = vld [vmem:[#allocation3 + $0x28] sm:$0xff]
    %v1981 = vld [vmem:[#allocation3 + $0x30] sm:$0xff]
    %v1982 = vld [vmem:[#allocation3 + $0x38] sm:$0xff]
    %v1983 = vld [vmem:[#allocation3 + $0x40] sm:$0xff]
    %v1984 = vld [vmem:[#allocation3 + $0x48] sm:$0xff]
    %v1985 = vld [vmem:[#allocation3 + $0x50] sm:$0xff]
    %v1986 = vld [vmem:[#allocation3 + $0x58] sm:$0xff]
    %v1987 = vld [vmem:[#allocation3 + $0x60] sm:$0xff]
    %v1988 = vld [vmem:[#allocation3 + $0x68] sm:$0xff]
    %v1989 = vld [vmem:[#allocation3 + $0x70] sm:$0xff]
    %v1990 = vld [vmem:[#allocation3 + $0x78] sm:$0xff]
    %v1991 = vld [vmem:[#allocation3 + $0x80] sm:$0xff]
    %v1992 = vld [vmem:[#allocation3 + $0x88] sm:$0xff]
    %v1993 = vld [vmem:[#allocation3 + $0x90] sm:$0xff]
    %v1994 = vld [vmem:[#allocation3 + $0x98] sm:$0xff]
    %v1995 = vld [vmem:[#allocation3 + $0xa0] sm:$0xff]
    %v1996 = vld [vmem:[#allocation3 + $0xa8] sm:$0xff]
    %v1997 = vld [vmem:[#allocation3 + $0xb0] sm:$0xff]
    %v1998 = vld [vmem:[#allocation3 + $0xb8] sm:$0xff]
    %v1999 = vld [vmem:[#allocation3 + $0xc0] sm:$0xff]
    %v2000 = vld [vmem:[#allocation3 + $0xc8] sm:$0xff]
    %2027 = vrot.lane.b32.xlu0 %v1975, 72
    %v2028 = vpop.permute.xlu0 %2027
    %2029 = vrot.lane.b32.xlu0 %v1976, 72
    %v2030 = vpop.permute.xlu0 %2029
    %2031 = vrot.lane.b32.xlu0 %v1977, 72
    %v2032 = vpop.permute.xlu0 %2031
    %2033 = vrot.lane.b32.xlu0 %v1978, 72
    %v2034 = vpop.permute.xlu0 %2033
    %2035 = vrot.lane.b32.xlu0 %v1979, 72
    %v2036 = vpop.permute.xlu0 %2035
    %2037 = vrot.lane.b32.xlu0 %v1980, 72
    %v2038 = vpop.permute.xlu0 %2037
    %2039 = vrot.lane.b32.xlu0 %v1981, 72
    %v2040 = vpop.permute.xlu0 %2039
    %2041 = vrot.lane.b32.xlu0 %v1982, 72
    %v2042 = vpop.permute.xlu0 %2041
    %2043 = vrot.lane.b32.xlu0 %v1983, 72
    %v2044 = vpop.permute.xlu0 %2043
    %2045 = vrot.lane.b32.xlu0 %v1984, 72
    %v2046 = vpop.permute.xlu0 %2045
    %2047 = vrot.lane.b32.xlu0 %v1985, 72
    %v2048 = vpop.permute.xlu0 %2047
    %2049 = vrot.lane.b32.xlu0 %v1986, 72
    %v2050 = vpop.permute.xlu0 %2049
    %2051 = vrot.lane.b32.xlu0 %v1987, 72
    %v2052 = vpop.permute.xlu0 %2051
    %2053 = vrot.lane.b32.xlu0 %v1988, 72
    %v2054 = vpop.permute.xlu0 %2053
    %2055 = vrot.lane.b32.xlu0 %v1989, 72
    %v2056 = vpop.permute.xlu0 %2055
    %2057 = vrot.lane.b32.xlu0 %v1990, 72
    %v2058 = vpop.permute.xlu0 %2057
    %2059 = vrot.lane.b32.xlu0 %v1991, 72
    %v2060 = vpop.permute.xlu0 %2059
    %2061 = vrot.lane.b32.xlu0 %v1992, 72
    %v2062 = vpop.permute.xlu0 %2061
    %2063 = vrot.lane.b32.xlu0 %v1993, 72
    %v2064 = vpop.permute.xlu0 %2063
    %2065 = vrot.lane.b32.xlu0 %v1994, 72
    %v2066 = vpop.permute.xlu0 %2065
    %2067 = vrot.lane.b32.xlu0 %v1995, 72
    %v2068 = vpop.permute.xlu0 %2067
    %2069 = vrot.lane.b32.xlu0 %v1996, 72
    %v2070 = vpop.permute.xlu0 %2069
    %2071 = vrot.lane.b32.xlu0 %v1997, 72
    %v2072 = vpop.permute.xlu0 %2071
    %2073 = vrot.lane.b32.xlu0 %v1998, 72
    %v2074 = vpop.permute.xlu0 %2073
    %2075 = vrot.lane.b32.xlu0 %v1999, 72
    %v2076 = vpop.permute.xlu0 %2075
    %2077 = vrot.lane.b32.xlu0 %v2000, 72
    %v2078 = vpop.permute.xlu0 %2077
    %vm2079 = vcmask 588800
    %v2080 = vsel %vm2079, %v2028, %v2030
    %v2081 = vsel %vm2079, %v2030, %v2032
    %v2082 = vsel %vm2079, %v2032, %v2034
    %v2083 = vsel %vm2079, %v2034, %v2036
    %v2084 = vsel %vm2079, %v2036, %v2038
    %v2085 = vsel %vm2079, %v2038, %v2040
    %v2086 = vsel %vm2079, %v2040, %v2042
    %v2087 = vsel %vm2079, %v2042, %v2044
    %v2088 = vsel %vm2079, %v2044, %v2046
    %v2089 = vsel %vm2079, %v2046, %v2048
    %v2090 = vsel %vm2079, %v2048, %v2050
    %v2091 = vsel %vm2079, %v2050, %v2052
    %v2092 = vsel %vm2079, %v2054, %v2056
    %v2093 = vsel %vm2079, %v2056, %v2058
    %v2094 = vsel %vm2079, %v2058, %v2060
    %v2095 = vsel %vm2079, %v2060, %v2062
    %v2096 = vsel %vm2079, %v2062, %v2064
    %v2097 = vsel %vm2079, %v2064, %v2066
    %v2098 = vsel %vm2079, %v2066, %v2068
    %v2099 = vsel %vm2079, %v2068, %v2070
    %v2100 = vsel %vm2079, %v2070, %v2072
    %v2101 = vsel %vm2079, %v2072, %v2074
    %v2102 = vsel %vm2079, %v2074, %v2076
    %v2103 = vsel %vm2079, %v2076, %v2078
    %2128 = vst [vmem:[#allocation4 + $0x480] sm:$0xff] %v2080
    %2129 = vst [vmem:[#allocation4 + $0x488] sm:$0xff] %v2081
    %2130 = vst [vmem:[#allocation4 + $0x490] sm:$0xff] %v2082
    %2131 = vst [vmem:[#allocation4 + $0x498] sm:$0xff] %v2083
    %2132 = vst [vmem:[#allocation4 + $0x4a0] sm:$0xff] %v2084
    %2133 = vst [vmem:[#allocation4 + $0x4a8] sm:$0xff] %v2085
    %2134 = vst [vmem:[#allocation4 + $0x4b0] sm:$0xff] %v2086
    %2135 = vst [vmem:[#allocation4 + $0x4b8] sm:$0xff] %v2087
    %2136 = vst [vmem:[#allocation4 + $0x4c0] sm:$0xff] %v2088
    %2137 = vst [vmem:[#allocation4 + $0x4c8] sm:$0xff] %v2089
    %2138 = vst [vmem:[#allocation4 + $0x4d0] sm:$0xff] %v2090
    %2139 = vst [vmem:[#allocation4 + $0x4d8] sm:$0xff] %v2091
    %2140 = vst [vmem:[#allocation4 + $0x4e0] sm:$0xff] %v2092
    %2141 = vst [vmem:[#allocation4 + $0x4e8] sm:$0xff] %v2093
    %2142 = vst [vmem:[#allocation4 + $0x4f0] sm:$0xff] %v2094
    %2143 = vst [vmem:[#allocation4 + $0x4f8] sm:$0xff] %v2095
    %2144 = vst [vmem:[#allocation4 + $0x500] sm:$0xff] %v2096
    %2145 = vst [vmem:[#allocation4 + $0x508] sm:$0xff] %v2097
    %2146 = vst [vmem:[#allocation4 + $0x510] sm:$0xff] %v2098
    %2147 = vst [vmem:[#allocation4 + $0x518] sm:$0xff] %v2099
    %2148 = vst [vmem:[#allocation4 + $0x520] sm:$0xff] %v2100
    %2149 = vst [vmem:[#allocation4 + $0x528] sm:$0xff] %v2101
    %2150 = vst [vmem:[#allocation4 + $0x530] sm:$0xff] %v2102
    %2151 = vst [vmem:[#allocation4 + $0x538] sm:$0xff] %v2103
    %v2152 = vld [vmem:[#allocation3] sm:$0xff]
    %v2153 = vld [vmem:[#allocation3 + $0x8] sm:$0xff]
    %v2154 = vld [vmem:[#allocation3 + $0x10] sm:$0xff]
    %v2155 = vld [vmem:[#allocation3 + $0x18] sm:$0xff]
    %v2156 = vld [vmem:[#allocation3 + $0x20] sm:$0xff]
    %v2157 = vld [vmem:[#allocation3 + $0x28] sm:$0xff]
    %v2158 = vld [vmem:[#allocation3 + $0x30] sm:$0xff]
    %v2159 = vld [vmem:[#allocation3 + $0x38] sm:$0xff]
    %v2160 = vld [vmem:[#allocation3 + $0x40] sm:$0xff]
    %v2161 = vld [vmem:[#allocation3 + $0x48] sm:$0xff]
    %v2162 = vld [vmem:[#allocation3 + $0x50] sm:$0xff]
    %v2163 = vld [vmem:[#allocation3 + $0x58] sm:$0xff]
    %v2164 = vld [vmem:[#allocation3 + $0x60] sm:$0xff]
    %v2165 = vld [vmem:[#allocation3 + $0x68] sm:$0xff]
    %v2166 = vld [vmem:[#allocation3 + $0x70] sm:$0xff]
    %v2167 = vld [vmem:[#allocation3 + $0x78] sm:$0xff]
    %v2168 = vld [vmem:[#allocation3 + $0x80] sm:$0xff]
    %v2169 = vld [vmem:[#allocation3 + $0x88] sm:$0xff]
    %v2170 = vld [vmem:[#allocation3 + $0x90] sm:$0xff]
    %v2171 = vld [vmem:[#allocation3 + $0x98] sm:$0xff]
    %v2172 = vld [vmem:[#allocation3 + $0xa0] sm:$0xff]
    %v2173 = vld [vmem:[#allocation3 + $0xa8] sm:$0xff]
    %v2174 = vld [vmem:[#allocation3 + $0xb0] sm:$0xff]
    %v2175 = vld [vmem:[#allocation3 + $0xb8] sm:$0xff]
    %v2176 = vld [vmem:[#allocation3 + $0xc0] sm:$0xff]
    %v2177 = vld [vmem:[#allocation3 + $0xc8] sm:$0xff]
    %2204 = vrot.lane.b32.xlu0 %v2152, 71
    %v2205 = vpop.permute.xlu0 %2204
    %2206 = vrot.lane.b32.xlu0 %v2153, 71
    %v2207 = vpop.permute.xlu0 %2206
    %2208 = vrot.lane.b32.xlu0 %v2154, 71
    %v2209 = vpop.permute.xlu0 %2208
    %2210 = vrot.lane.b32.xlu0 %v2155, 71
    %v2211 = vpop.permute.xlu0 %2210
    %2212 = vrot.lane.b32.xlu0 %v2156, 71
    %v2213 = vpop.permute.xlu0 %2212
    %2214 = vrot.lane.b32.xlu0 %v2157, 71
    %v2215 = vpop.permute.xlu0 %2214
    %2216 = vrot.lane.b32.xlu0 %v2158, 71
    %v2217 = vpop.permute.xlu0 %2216
    %2218 = vrot.lane.b32.xlu0 %v2159, 71
    %v2219 = vpop.permute.xlu0 %2218
    %2220 = vrot.lane.b32.xlu0 %v2160, 71
    %v2221 = vpop.permute.xlu0 %2220
    %2222 = vrot.lane.b32.xlu0 %v2161, 71
    %v2223 = vpop.permute.xlu0 %2222
    %2224 = vrot.lane.b32.xlu0 %v2162, 71
    %v2225 = vpop.permute.xlu0 %2224
    %2226 = vrot.lane.b32.xlu0 %v2163, 71
    %v2227 = vpop.permute.xlu0 %2226
    %2228 = vrot.lane.b32.xlu0 %v2164, 71
    %v2229 = vpop.permute.xlu0 %2228
    %2230 = vrot.lane.b32.xlu0 %v2165, 71
    %v2231 = vpop.permute.xlu0 %2230
    %2232 = vrot.lane.b32.xlu0 %v2166, 71
    %v2233 = vpop.permute.xlu0 %2232
    %2234 = vrot.lane.b32.xlu0 %v2167, 71
    %v2235 = vpop.permute.xlu0 %2234
    %2236 = vrot.lane.b32.xlu0 %v2168, 71
    %v2237 = vpop.permute.xlu0 %2236
    %2238 = vrot.lane.b32.xlu0 %v2169, 71
    %v2239 = vpop.permute.xlu0 %2238
    %2240 = vrot.lane.b32.xlu0 %v2170, 71
    %v2241 = vpop.permute.xlu0 %2240
    %2242 = vrot.lane.b32.xlu0 %v2171, 71
    %v2243 = vpop.permute.xlu0 %2242
    %2244 = vrot.lane.b32.xlu0 %v2172, 71
    %v2245 = vpop.permute.xlu0 %2244
    %2246 = vrot.lane.b32.xlu0 %v2173, 71
    %v2247 = vpop.permute.xlu0 %2246
    %2248 = vrot.lane.b32.xlu0 %v2174, 71
    %v2249 = vpop.permute.xlu0 %2248
    %2250 = vrot.lane.b32.xlu0 %v2175, 71
    %v2251 = vpop.permute.xlu0 %2250
    %2252 = vrot.lane.b32.xlu0 %v2176, 71
    %v2253 = vpop.permute.xlu0 %2252
    %2254 = vrot.lane.b32.xlu0 %v2177, 71
    %v2255 = vpop.permute.xlu0 %2254
    %vm2256 = vcmask 580608
    %v2257 = vsel %vm2256, %v2205, %v2207
    %v2258 = vsel %vm2256, %v2207, %v2209
    %v2259 = vsel %vm2256, %v2209, %v2211
    %v2260 = vsel %vm2256, %v2211, %v2213
    %v2261 = vsel %vm2256, %v2213, %v2215
    %v2262 = vsel %vm2256, %v2215, %v2217
    %v2263 = vsel %vm2256, %v2217, %v2219
    %v2264 = vsel %vm2256, %v2219, %v2221
    %v2265 = vsel %vm2256, %v2221, %v2223
    %v2266 = vsel %vm2256, %v2223, %v2225
    %v2267 = vsel %vm2256, %v2225, %v2227
    %v2268 = vsel %vm2256, %v2227, %v2229
    %v2269 = vsel %vm2256, %v2231, %v2233
    %v2270 = vsel %vm2256, %v2233, %v2235
    %v2271 = vsel %vm2256, %v2235, %v2237
    %v2272 = vsel %vm2256, %v2237, %v2239
    %v2273 = vsel %vm2256, %v2239, %v2241
    %v2274 = vsel %vm2256, %v2241, %v2243
    %v2275 = vsel %vm2256, %v2243, %v2245
    %v2276 = vsel %vm2256, %v2245, %v2247
    %v2277 = vsel %vm2256, %v2247, %v2249
    %v2278 = vsel %vm2256, %v2249, %v2251
    %v2279 = vsel %vm2256, %v2251, %v2253
    %v2280 = vsel %vm2256, %v2253, %v2255
    %2305 = vst [vmem:[#allocation4 + $0x540] sm:$0xff] %v2257
    %2306 = vst [vmem:[#allocation4 + $0x548] sm:$0xff] %v2258
    %2307 = vst [vmem:[#allocation4 + $0x550] sm:$0xff] %v2259
    %2308 = vst [vmem:[#allocation4 + $0x558] sm:$0xff] %v2260
    %2309 = vst [vmem:[#allocation4 + $0x560] sm:$0xff] %v2261
    %2310 = vst [vmem:[#allocation4 + $0x568] sm:$0xff] %v2262
    %2311 = vst [vmem:[#allocation4 + $0x570] sm:$0xff] %v2263
    %2312 = vst [vmem:[#allocation4 + $0x578] sm:$0xff] %v2264
    %2313 = vst [vmem:[#allocation4 + $0x580] sm:$0xff] %v2265
    %2314 = vst [vmem:[#allocation4 + $0x588] sm:$0xff] %v2266
    %2315 = vst [vmem:[#allocation4 + $0x590] sm:$0xff] %v2267
    %2316 = vst [vmem:[#allocation4 + $0x598] sm:$0xff] %v2268
    %2317 = vst [vmem:[#allocation4 + $0x5a0] sm:$0xff] %v2269
    %2318 = vst [vmem:[#allocation4 + $0x5a8] sm:$0xff] %v2270
    %2319 = vst [vmem:[#allocation4 + $0x5b0] sm:$0xff] %v2271
    %2320 = vst [vmem:[#allocation4 + $0x5b8] sm:$0xff] %v2272
    %2321 = vst [vmem:[#allocation4 + $0x5c0] sm:$0xff] %v2273
    %2322 = vst [vmem:[#allocation4 + $0x5c8] sm:$0xff] %v2274
    %2323 = vst [vmem:[#allocation4 + $0x5d0] sm:$0xff] %v2275
    %2324 = vst [vmem:[#allocation4 + $0x5d8] sm:$0xff] %v2276
    %2325 = vst [vmem:[#allocation4 + $0x5e0] sm:$0xff] %v2277
    %2326 = vst [vmem:[#allocation4 + $0x5e8] sm:$0xff] %v2278
    %2327 = vst [vmem:[#allocation4 + $0x5f0] sm:$0xff] %v2279
    %2328 = vst [vmem:[#allocation4 + $0x5f8] sm:$0xff] %v2280
    %v2329 = vld [vmem:[#allocation3] sm:$0xff]
    %v2330 = vld [vmem:[#allocation3 + $0x8] sm:$0xff]
    %v2331 = vld [vmem:[#allocation3 + $0x10] sm:$0xff]
    %v2332 = vld [vmem:[#allocation3 + $0x18] sm:$0xff]
    %v2333 = vld [vmem:[#allocation3 + $0x20] sm:$0xff]
    %v2334 = vld [vmem:[#allocation3 + $0x28] sm:$0xff]
    %v2335 = vld [vmem:[#allocation3 + $0x30] sm:$0xff]
    %v2336 = vld [vmem:[#allocation3 + $0x38] sm:$0xff]
    %v2337 = vld [vmem:[#allocation3 + $0x40] sm:$0xff]
    %v2338 = vld [vmem:[#allocation3 + $0x48] sm:$0xff]
    %v2339 = vld [vmem:[#allocation3 + $0x50] sm:$0xff]
    %v2340 = vld [vmem:[#allocation3 + $0x58] sm:$0xff]
    %v2341 = vld [vmem:[#allocation3 + $0x60] sm:$0xff]
    %v2342 = vld [vmem:[#allocation3 + $0x68] sm:$0xff]
    %v2343 = vld [vmem:[#allocation3 + $0x70] sm:$0xff]
    %v2344 = vld [vmem:[#allocation3 + $0x78] sm:$0xff]
    %v2345 = vld [vmem:[#allocation3 + $0x80] sm:$0xff]
    %v2346 = vld [vmem:[#allocation3 + $0x88] sm:$0xff]
    %v2347 = vld [vmem:[#allocation3 + $0x90] sm:$0xff]
    %v2348 = vld [vmem:[#allocation3 + $0x98] sm:$0xff]
    %v2349 = vld [vmem:[#allocation3 + $0xa0] sm:$0xff]
    %v2350 = vld [vmem:[#allocation3 + $0xa8] sm:$0xff]
    %v2351 = vld [vmem:[#allocation3 + $0xb0] sm:$0xff]
    %v2352 = vld [vmem:[#allocation3 + $0xb8] sm:$0xff]
    %v2353 = vld [vmem:[#allocation3 + $0xc0] sm:$0xff]
    %v2354 = vld [vmem:[#allocation3 + $0xc8] sm:$0xff]
    %2381 = vrot.lane.b32.xlu0 %v2329, 70
    %v2382 = vpop.permute.xlu0 %2381
    %2383 = vrot.lane.b32.xlu0 %v2330, 70
    %v2384 = vpop.permute.xlu0 %2383
    %2385 = vrot.lane.b32.xlu0 %v2331, 70
    %v2386 = vpop.permute.xlu0 %2385
    %2387 = vrot.lane.b32.xlu0 %v2332, 70
    %v2388 = vpop.permute.xlu0 %2387
    %2389 = vrot.lane.b32.xlu0 %v2333, 70
    %v2390 = vpop.permute.xlu0 %2389
    %2391 = vrot.lane.b32.xlu0 %v2334, 70
    %v2392 = vpop.permute.xlu0 %2391
    %2393 = vrot.lane.b32.xlu0 %v2335, 70
    %v2394 = vpop.permute.xlu0 %2393
    %2395 = vrot.lane.b32.xlu0 %v2336, 70
    %v2396 = vpop.permute.xlu0 %2395
    %2397 = vrot.lane.b32.xlu0 %v2337, 70
    %v2398 = vpop.permute.xlu0 %2397
    %2399 = vrot.lane.b32.xlu0 %v2338, 70
    %v2400 = vpop.permute.xlu0 %2399
    %2401 = vrot.lane.b32.xlu0 %v2339, 70
    %v2402 = vpop.permute.xlu0 %2401
    %2403 = vrot.lane.b32.xlu0 %v2340, 70
    %v2404 = vpop.permute.xlu0 %2403
    %2405 = vrot.lane.b32.xlu0 %v2341, 70
    %v2406 = vpop.permute.xlu0 %2405
    %2407 = vrot.lane.b32.xlu0 %v2342, 70
    %v2408 = vpop.permute.xlu0 %2407
    %2409 = vrot.lane.b32.xlu0 %v2343, 70
    %v2410 = vpop.permute.xlu0 %2409
    %2411 = vrot.lane.b32.xlu0 %v2344, 70
    %v2412 = vpop.permute.xlu0 %2411
    %2413 = vrot.lane.b32.xlu0 %v2345, 70
    %v2414 = vpop.permute.xlu0 %2413
    %2415 = vrot.lane.b32.xlu0 %v2346, 70
    %v2416 = vpop.permute.xlu0 %2415
    %2417 = vrot.lane.b32.xlu0 %v2347, 70
    %v2418 = vpop.permute.xlu0 %2417
    %2419 = vrot.lane.b32.xlu0 %v2348, 70
    %v2420 = vpop.permute.xlu0 %2419
    %2421 = vrot.lane.b32.xlu0 %v2349, 70
    %v2422 = vpop.permute.xlu0 %2421
    %2423 = vrot.lane.b32.xlu0 %v2350, 70
    %v2424 = vpop.permute.xlu0 %2423
    %2425 = vrot.lane.b32.xlu0 %v2351, 70
    %v2426 = vpop.permute.xlu0 %2425
    %2427 = vrot.lane.b32.xlu0 %v2352, 70
    %v2428 = vpop.permute.xlu0 %2427
    %2429 = vrot.lane.b32.xlu0 %v2353, 70
    %v2430 = vpop.permute.xlu0 %2429
    %2431 = vrot.lane.b32.xlu0 %v2354, 70
    %v2432 = vpop.permute.xlu0 %2431
    %vm2433 = vcmask 572416
    %v2434 = vsel %vm2433, %v2382, %v2384
    %v2435 = vsel %vm2433, %v2384, %v2386
    %v2436 = vsel %vm2433, %v2386, %v2388
    %v2437 = vsel %vm2433, %v2388, %v2390
    %v2438 = vsel %vm2433, %v2390, %v2392
    %v2439 = vsel %vm2433, %v2392, %v2394
    %v2440 = vsel %vm2433, %v2394, %v2396
    %v2441 = vsel %vm2433, %v2396, %v2398
    %v2442 = vsel %vm2433, %v2398, %v2400
    %v2443 = vsel %vm2433, %v2400, %v2402
    %v2444 = vsel %vm2433, %v2402, %v2404
    %v2445 = vsel %vm2433, %v2404, %v2406
    %v2446 = vsel %vm2433, %v2408, %v2410
    %v2447 = vsel %vm2433, %v2410, %v2412
    %v2448 = vsel %vm2433, %v2412, %v2414
    %v2449 = vsel %vm2433, %v2414, %v2416
    %v2450 = vsel %vm2433, %v2416, %v2418
    %v2451 = vsel %vm2433, %v2418, %v2420
    %v2452 = vsel %vm2433, %v2420, %v2422
    %v2453 = vsel %vm2433, %v2422, %v2424
    %v2454 = vsel %vm2433, %v2424, %v2426
    %v2455 = vsel %vm2433, %v2426, %v2428
    %v2456 = vsel %vm2433, %v2428, %v2430
    %v2457 = vsel %vm2433, %v2430, %v2432
    %2482 = vst [vmem:[#allocation4 + $0x600] sm:$0xff] %v2434
    %2483 = vst [vmem:[#allocation4 + $0x608] sm:$0xff] %v2435
    %2484 = vst [vmem:[#allocation4 + $0x610] sm:$0xff] %v2436
    %2485 = vst [vmem:[#allocation4 + $0x618] sm:$0xff] %v2437
    %2486 = vst [vmem:[#allocation4 + $0x620] sm:$0xff] %v2438
    %2487 = vst [vmem:[#allocation4 + $0x628] sm:$0xff] %v2439
    %2488 = vst [vmem:[#allocation4 + $0x630] sm:$0xff] %v2440
    %2489 = vst [vmem:[#allocation4 + $0x638] sm:$0xff] %v2441
    %2490 = vst [vmem:[#allocation4 + $0x640] sm:$0xff] %v2442
    %2491 = vst [vmem:[#allocation4 + $0x648] sm:$0xff] %v2443
    %2492 = vst [vmem:[#allocation4 + $0x650] sm:$0xff] %v2444
    %2493 = vst [vmem:[#allocation4 + $0x658] sm:$0xff] %v2445
    %2494 = vst [vmem:[#allocation4 + $0x660] sm:$0xff] %v2446
    %2495 = vst [vmem:[#allocation4 + $0x668] sm:$0xff] %v2447
    %2496 = vst [vmem:[#allocation4 + $0x670] sm:$0xff] %v2448
    %2497 = vst [vmem:[#allocation4 + $0x678] sm:$0xff] %v2449
    %2498 = vst [vmem:[#allocation4 + $0x680] sm:$0xff] %v2450
    %2499 = vst [vmem:[#allocation4 + $0x688] sm:$0xff] %v2451
    %2500 = vst [vmem:[#allocation4 + $0x690] sm:$0xff] %v2452
    %2501 = vst [vmem:[#allocation4 + $0x698] sm:$0xff] %v2453
    %2502 = vst [vmem:[#allocation4 + $0x6a0] sm:$0xff] %v2454
    %2503 = vst [vmem:[#allocation4 + $0x6a8] sm:$0xff] %v2455
    %2504 = vst [vmem:[#allocation4 + $0x6b0] sm:$0xff] %v2456
    %2505 = vst [vmem:[#allocation4 + $0x6b8] sm:$0xff] %v2457
    %v2506 = vld [vmem:[#allocation5] sm:$0xff]
    %v2507 = vld [vmem:[#allocation5 + $0x8] sm:$0xf]
    %v2508 = vld [vmem:[#allocation5 + $0xc] sm:$0xff]
    %v2509 = vld [vmem:[#allocation5 + $0x14] sm:$0xf]
    %v2510 = vld [vmem:[#allocation5 + $0x18] sm:$0xff]
    %v2511 = vld [vmem:[#allocation5 + $0x20] sm:$0xf]
    %v2512 = vld [vmem:[#allocation5 + $0x24] sm:$0xff]
    %v2513 = vld [vmem:[#allocation5 + $0x2c] sm:$0xf]
    %v2514 = vld [vmem:[#allocation5 + $0x30] sm:$0xff]
    %v2515 = vld [vmem:[#allocation5 + $0x38] sm:$0xf]
    %v2516 = vld [vmem:[#allocation5 + $0x3c] sm:$0xff]
    %v2517 = vld [vmem:[#allocation5 + $0x44] sm:$0xf]
    %v2518 = vld [vmem:[#allocation5 + $0x48] sm:$0xff]
    %v2519 = vld [vmem:[#allocation5 + $0x50] sm:$0xf]
    %v2520 = vld [vmem:[#allocation5 + $0x54] sm:$0xff]
    %v2521 = vld [vmem:[#allocation5 + $0x5c] sm:$0xf]
    %v2522 = vld [vmem:[#allocation4] sm:$0xff]
    %v2523 = vld [vmem:[#allocation4 + $0x8] sm:$0xff]
    %v2524 = vld [vmem:[#allocation4 + $0x10] sm:$0xff]
    %v2525 = vld [vmem:[#allocation4 + $0x18] sm:$0xff]
    %v2526 = vld [vmem:[#allocation4 + $0x20] sm:$0xff]
    %v2527 = vld [vmem:[#allocation4 + $0x28] sm:$0xff]
    %v2528 = vld [vmem:[#allocation4 + $0x30] sm:$0xff]
    %v2529 = vld [vmem:[#allocation4 + $0x38] sm:$0xff]
    %v2530 = vld [vmem:[#allocation4 + $0x40] sm:$0xff]
    %v2531 = vld [vmem:[#allocation4 + $0x48] sm:$0xff]
    %v2532 = vld [vmem:[#allocation4 + $0x50] sm:$0xff]
    %v2533 = vld [vmem:[#allocation4 + $0x58] sm:$0xff]
    %v2534 = vld [vmem:[#allocation4 + $0x60] sm:$0xff]
    %v2535 = vld [vmem:[#allocation4 + $0x68] sm:$0xff]
    %v2536 = vld [vmem:[#allocation4 + $0x70] sm:$0xff]
    %v2537 = vld [vmem:[#allocation4 + $0x78] sm:$0xff]
    %v2538 = vld [vmem:[#allocation4 + $0x80] sm:$0xff]
    %v2539 = vld [vmem:[#allocation4 + $0x88] sm:$0xff]
    %v2540 = vld [vmem:[#allocation4 + $0x90] sm:$0xff]
    %v2541 = vld [vmem:[#allocation4 + $0x98] sm:$0xff]
    %v2542 = vld [vmem:[#allocation4 + $0xa0] sm:$0xff]
    %v2543 = vld [vmem:[#allocation4 + $0xa8] sm:$0xff]
    %v2544 = vld [vmem:[#allocation4 + $0xb0] sm:$0xff]
    %v2545 = vld [vmem:[#allocation4 + $0xb8] sm:$0xff]
    %v2546 = vld [vmem:[#allocation4 + $0xc0] sm:$0xff]
    %v2547 = vld [vmem:[#allocation4 + $0xc8] sm:$0xff]
    %v2548 = vld [vmem:[#allocation4 + $0xd0] sm:$0xff]
    %v2549 = vld [vmem:[#allocation4 + $0xd8] sm:$0xff]
    %v2550 = vld [vmem:[#allocation4 + $0xe0] sm:$0xff]
    %v2551 = vld [vmem:[#allocation4 + $0xe8] sm:$0xff]
    %v2552 = vld [vmem:[#allocation4 + $0xf0] sm:$0xff]
    %v2553 = vld [vmem:[#allocation4 + $0xf8] sm:$0xff]
    %v2554 = vld [vmem:[#allocation4 + $0x100] sm:$0xff]
    %v2555 = vld [vmem:[#allocation4 + $0x108] sm:$0xff]
    %v2556 = vld [vmem:[#allocation4 + $0x110] sm:$0xff]
    %v2557 = vld [vmem:[#allocation4 + $0x118] sm:$0xff]
    %v2558 = vld [vmem:[#allocation4 + $0x120] sm:$0xff]
    %v2559 = vld [vmem:[#allocation4 + $0x128] sm:$0xff]
    %v2560 = vld [vmem:[#allocation4 + $0x130] sm:$0xff]
    %v2561 = vld [vmem:[#allocation4 + $0x138] sm:$0xff]
    %v2562 = vld [vmem:[#allocation4 + $0x140] sm:$0xff]
    %v2563 = vld [vmem:[#allocation4 + $0x148] sm:$0xff]
    %v2564 = vld [vmem:[#allocation4 + $0x150] sm:$0xff]
    %v2565 = vld [vmem:[#allocation4 + $0x158] sm:$0xff]
    %v2566 = vld [vmem:[#allocation4 + $0x160] sm:$0xff]
    %v2567 = vld [vmem:[#allocation4 + $0x168] sm:$0xff]
    %v2568 = vld [vmem:[#allocation4 + $0x170] sm:$0xff]
    %v2569 = vld [vmem:[#allocation4 + $0x178] sm:$0xff]
    %v2570 = vld [vmem:[#allocation4 + $0x180] sm:$0xff]
    %v2571 = vld [vmem:[#allocation4 + $0x188] sm:$0xff]
    %v2572 = vld [vmem:[#allocation4 + $0x190] sm:$0xff]
    %v2573 = vld [vmem:[#allocation4 + $0x198] sm:$0xff]
    %v2574 = vld [vmem:[#allocation4 + $0x1a0] sm:$0xff]
    %v2575 = vld [vmem:[#allocation4 + $0x1a8] sm:$0xff]
    %v2576 = vld [vmem:[#allocation4 + $0x1b0] sm:$0xff]
    %v2577 = vld [vmem:[#allocation4 + $0x1b8] sm:$0xff]
    %v2578 = vld [vmem:[#allocation4 + $0x1c0] sm:$0xff]
    %v2579 = vld [vmem:[#allocation4 + $0x1c8] sm:$0xff]
    %v2580 = vld [vmem:[#allocation4 + $0x1d0] sm:$0xff]
    %v2581 = vld [vmem:[#allocation4 + $0x1d8] sm:$0xff]
    %v2582 = vld [vmem:[#allocation4 + $0x1e0] sm:$0xff]
    %v2583 = vld [vmem:[#allocation4 + $0x1e8] sm:$0xff]
    %v2584 = vld [vmem:[#allocation4 + $0x1f0] sm:$0xff]
    %v2585 = vld [vmem:[#allocation4 + $0x1f8] sm:$0xff]
    %v2586 = vld [vmem:[#allocation4 + $0x200] sm:$0xff]
    %v2587 = vld [vmem:[#allocation4 + $0x208] sm:$0xff]
    %v2588 = vld [vmem:[#allocation4 + $0x210] sm:$0xff]
    %v2589 = vld [vmem:[#allocation4 + $0x218] sm:$0xff]
    %v2590 = vld [vmem:[#allocation4 + $0x220] sm:$0xff]
    %v2591 = vld [vmem:[#allocation4 + $0x228] sm:$0xff]
    %v2592 = vld [vmem:[#allocation4 + $0x230] sm:$0xff]
    %v2593 = vld [vmem:[#allocation4 + $0x238] sm:$0xff]
    %v2594 = vld [vmem:[#allocation4 + $0x240] sm:$0xff]
    %v2595 = vld [vmem:[#allocation4 + $0x248] sm:$0xff]
    %v2596 = vld [vmem:[#allocation4 + $0x250] sm:$0xff]
    %v2597 = vld [vmem:[#allocation4 + $0x258] sm:$0xff]
    %v2598 = vld [vmem:[#allocation4 + $0x260] sm:$0xff]
    %v2599 = vld [vmem:[#allocation4 + $0x268] sm:$0xff]
    %v2600 = vld [vmem:[#allocation4 + $0x270] sm:$0xff]
    %v2601 = vld [vmem:[#allocation4 + $0x278] sm:$0xff]
    %v2602 = vld [vmem:[#allocation4 + $0x280] sm:$0xff]
    %v2603 = vld [vmem:[#allocation4 + $0x288] sm:$0xff]
    %v2604 = vld [vmem:[#allocation4 + $0x290] sm:$0xff]
    %v2605 = vld [vmem:[#allocation4 + $0x298] sm:$0xff]
    %v2606 = vld [vmem:[#allocation4 + $0x2a0] sm:$0xff]
    %v2607 = vld [vmem:[#allocation4 + $0x2a8] sm:$0xff]
    %v2608 = vld [vmem:[#allocation4 + $0x2b0] sm:$0xff]
    %v2609 = vld [vmem:[#allocation4 + $0x2b8] sm:$0xff]
    %v2610 = vld [vmem:[#allocation4 + $0x2c0] sm:$0xff]
    %v2611 = vld [vmem:[#allocation4 + $0x2c8] sm:$0xff]
    %v2612 = vld [vmem:[#allocation4 + $0x2d0] sm:$0xff]
    %v2613 = vld [vmem:[#allocation4 + $0x2d8] sm:$0xff]
    %v2614 = vld [vmem:[#allocation4 + $0x2e0] sm:$0xff]
    %v2615 = vld [vmem:[#allocation4 + $0x2e8] sm:$0xff]
    %v2616 = vld [vmem:[#allocation4 + $0x2f0] sm:$0xff]
    %v2617 = vld [vmem:[#allocation4 + $0x2f8] sm:$0xff]
    %v2618 = vld [vmem:[#allocation4 + $0x300] sm:$0xff]
    %v2619 = vld [vmem:[#allocation4 + $0x308] sm:$0xff]
    %v2620 = vld [vmem:[#allocation4 + $0x310] sm:$0xff]
    %v2621 = vld [vmem:[#allocation4 + $0x318] sm:$0xff]
    %v2622 = vld [vmem:[#allocation4 + $0x320] sm:$0xff]
    %v2623 = vld [vmem:[#allocation4 + $0x328] sm:$0xff]
    %v2624 = vld [vmem:[#allocation4 + $0x330] sm:$0xff]
    %v2625 = vld [vmem:[#allocation4 + $0x338] sm:$0xff]
    %v2626 = vld [vmem:[#allocation4 + $0x340] sm:$0xff]
    %v2627 = vld [vmem:[#allocation4 + $0x348] sm:$0xff]
    %v2628 = vld [vmem:[#allocation4 + $0x350] sm:$0xff]
    %v2629 = vld [vmem:[#allocation4 + $0x358] sm:$0xff]
    %v2630 = vld [vmem:[#allocation4 + $0x360] sm:$0xff]
    %v2631 = vld [vmem:[#allocation4 + $0x368] sm:$0xff]
    %v2632 = vld [vmem:[#allocation4 + $0x370] sm:$0xff]
    %v2633 = vld [vmem:[#allocation4 + $0x378] sm:$0xff]
    %v2634 = vld [vmem:[#allocation4 + $0x380] sm:$0xff]
    %v2635 = vld [vmem:[#allocation4 + $0x388] sm:$0xff]
    %v2636 = vld [vmem:[#allocation4 + $0x390] sm:$0xff]
    %v2637 = vld [vmem:[#allocation4 + $0x398] sm:$0xff]
    %v2638 = vld [vmem:[#allocation4 + $0x3a0] sm:$0xff]
    %v2639 = vld [vmem:[#allocation4 + $0x3a8] sm:$0xff]
    %v2640 = vld [vmem:[#allocation4 + $0x3b0] sm:$0xff]
    %v2641 = vld [vmem:[#allocation4 + $0x3b8] sm:$0xff]
    %v2642 = vld [vmem:[#allocation4 + $0x3c0] sm:$0xff]
    %v2643 = vld [vmem:[#allocation4 + $0x3c8] sm:$0xff]
    %v2644 = vld [vmem:[#allocation4 + $0x3d0] sm:$0xff]
    %v2645 = vld [vmem:[#allocation4 + $0x3d8] sm:$0xff]
    %v2646 = vld [vmem:[#allocation4 + $0x3e0] sm:$0xff]
    %v2647 = vld [vmem:[#allocation4 + $0x3e8] sm:$0xff]
    %v2648 = vld [vmem:[#allocation4 + $0x3f0] sm:$0xff]
    %v2649 = vld [vmem:[#allocation4 + $0x3f8] sm:$0xff]
    %v2650 = vld [vmem:[#allocation4 + $0x400] sm:$0xff]
    %v2651 = vld [vmem:[#allocation4 + $0x408] sm:$0xff]
    %v2652 = vld [vmem:[#allocation4 + $0x410] sm:$0xff]
    %v2653 = vld [vmem:[#allocation4 + $0x418] sm:$0xff]
    %v2654 = vld [vmem:[#allocation4 + $0x420] sm:$0xff]
    %v2655 = vld [vmem:[#allocation4 + $0x428] sm:$0xff]
    %v2656 = vld [vmem:[#allocation4 + $0x430] sm:$0xff]
    %v2657 = vld [vmem:[#allocation4 + $0x438] sm:$0xff]
    %v2658 = vld [vmem:[#allocation4 + $0x440] sm:$0xff]
    %v2659 = vld [vmem:[#allocation4 + $0x448] sm:$0xff]
    %v2660 = vld [vmem:[#allocation4 + $0x450] sm:$0xff]
    %v2661 = vld [vmem:[#allocation4 + $0x458] sm:$0xff]
    %v2662 = vld [vmem:[#allocation4 + $0x460] sm:$0xff]
    %v2663 = vld [vmem:[#allocation4 + $0x468] sm:$0xff]
    %v2664 = vld [vmem:[#allocation4 + $0x470] sm:$0xff]
    %v2665 = vld [vmem:[#allocation4 + $0x478] sm:$0xff]
    %v2666 = vld [vmem:[#allocation4 + $0x480] sm:$0xff]
    %v2667 = vld [vmem:[#allocation4 + $0x488] sm:$0xff]
    %v2668 = vld [vmem:[#allocation4 + $0x490] sm:$0xff]
    %v2669 = vld [vmem:[#allocation4 + $0x498] sm:$0xff]
    %v2670 = vld [vmem:[#allocation4 + $0x4a0] sm:$0xff]
    %v2671 = vld [vmem:[#allocation4 + $0x4a8] sm:$0xff]
    %v2672 = vld [vmem:[#allocation4 + $0x4b0] sm:$0xff]
    %v2673 = vld [vmem:[#allocation4 + $0x4b8] sm:$0xff]
    %v2674 = vld [vmem:[#allocation4 + $0x4c0] sm:$0xff]
    %v2675 = vld [vmem:[#allocation4 + $0x4c8] sm:$0xff]
    %v2676 = vld [vmem:[#allocation4 + $0x4d0] sm:$0xff]
    %v2677 = vld [vmem:[#allocation4 + $0x4d8] sm:$0xff]
    %v2678 = vld [vmem:[#allocation4 + $0x4e0] sm:$0xff]
    %v2679 = vld [vmem:[#allocation4 + $0x4e8] sm:$0xff]
    %v2680 = vld [vmem:[#allocation4 + $0x4f0] sm:$0xff]
    %v2681 = vld [vmem:[#allocation4 + $0x4f8] sm:$0xff]
    %v2682 = vld [vmem:[#allocation4 + $0x500] sm:$0xff]
    %v2683 = vld [vmem:[#allocation4 + $0x508] sm:$0xff]
    %v2684 = vld [vmem:[#allocation4 + $0x510] sm:$0xff]
    %v2685 = vld [vmem:[#allocation4 + $0x518] sm:$0xff]
    %v2686 = vld [vmem:[#allocation4 + $0x520] sm:$0xff]
    %v2687 = vld [vmem:[#allocation4 + $0x528] sm:$0xff]
    %v2688 = vld [vmem:[#allocation4 + $0x530] sm:$0xff]
    %v2689 = vld [vmem:[#allocation4 + $0x538] sm:$0xff]
    %v2690 = vld [vmem:[#allocation4 + $0x540] sm:$0xff]
    %v2691 = vld [vmem:[#allocation4 + $0x548] sm:$0xff]
    %v2692 = vld [vmem:[#allocation4 + $0x550] sm:$0xff]
    %v2693 = vld [vmem:[#allocation4 + $0x558] sm:$0xff]
    %v2694 = vld [vmem:[#allocation4 + $0x560] sm:$0xff]
    %v2695 = vld [vmem:[#allocation4 + $0x568] sm:$0xff]
    %v2696 = vld [vmem:[#allocation4 + $0x570] sm:$0xff]
    %v2697 = vld [vmem:[#allocation4 + $0x578] sm:$0xff]
    %v2698 = vld [vmem:[#allocation4 + $0x580] sm:$0xff]
    %v2699 = vld [vmem:[#allocation4 + $0x588] sm:$0xff]
    %v2700 = vld [vmem:[#allocation4 + $0x590] sm:$0xff]
    %v2701 = vld [vmem:[#allocation4 + $0x598] sm:$0xff]
    %v2702 = vld [vmem:[#allocation4 + $0x5a0] sm:$0xff]
    %v2703 = vld [vmem:[#allocation4 + $0x5a8] sm:$0xff]
    %v2704 = vld [vmem:[#allocation4 + $0x5b0] sm:$0xff]
    %v2705 = vld [vmem:[#allocation4 + $0x5b8] sm:$0xff]
    %v2706 = vld [vmem:[#allocation4 + $0x5c0] sm:$0xff]
    %v2707 = vld [vmem:[#allocation4 + $0x5c8] sm:$0xff]
    %v2708 = vld [vmem:[#allocation4 + $0x5d0] sm:$0xff]
    %v2709 = vld [vmem:[#allocation4 + $0x5d8] sm:$0xff]
    %v2710 = vld [vmem:[#allocation4 + $0x5e0] sm:$0xff]
    %v2711 = vld [vmem:[#allocation4 + $0x5e8] sm:$0xff]
    %v2712 = vld [vmem:[#allocation4 + $0x5f0] sm:$0xff]
    %v2713 = vld [vmem:[#allocation4 + $0x5f8] sm:$0xff]
    %v2714 = vld [vmem:[#allocation4 + $0x600] sm:$0xff]
    %v2715 = vld [vmem:[#allocation4 + $0x608] sm:$0xff]
    %v2716 = vld [vmem:[#allocation4 + $0x610] sm:$0xff]
    %v2717 = vld [vmem:[#allocation4 + $0x618] sm:$0xff]
    %v2718 = vld [vmem:[#allocation4 + $0x620] sm:$0xff]
    %v2719 = vld [vmem:[#allocation4 + $0x628] sm:$0xff]
    %v2720 = vld [vmem:[#allocation4 + $0x630] sm:$0xff]
    %v2721 = vld [vmem:[#allocation4 + $0x638] sm:$0xff]
    %v2722 = vld [vmem:[#allocation4 + $0x640] sm:$0xff]
    %v2723 = vld [vmem:[#allocation4 + $0x648] sm:$0xff]
    %v2724 = vld [vmem:[#allocation4 + $0x650] sm:$0xff]
    %v2725 = vld [vmem:[#allocation4 + $0x658] sm:$0xff]
    %v2726 = vld [vmem:[#allocation4 + $0x660] sm:$0xff]
    %v2727 = vld [vmem:[#allocation4 + $0x668] sm:$0xff]
    %v2728 = vld [vmem:[#allocation4 + $0x670] sm:$0xff]
    %v2729 = vld [vmem:[#allocation4 + $0x678] sm:$0xff]
    %v2730 = vld [vmem:[#allocation4 + $0x680] sm:$0xff]
    %v2731 = vld [vmem:[#allocation4 + $0x688] sm:$0xff]
    %v2732 = vld [vmem:[#allocation4 + $0x690] sm:$0xff]
    %v2733 = vld [vmem:[#allocation4 + $0x698] sm:$0xff]
    %v2734 = vld [vmem:[#allocation4 + $0x6a0] sm:$0xff]
    %v2735 = vld [vmem:[#allocation4 + $0x6a8] sm:$0xff]
    %v2736 = vld [vmem:[#allocation4 + $0x6b0] sm:$0xff]
    %v2737 = vld [vmem:[#allocation4 + $0x6b8] sm:$0xff]
    %v2738 = vld [vmem:[%s4] sm:$0xff]
    %v2739 = vld [vmem:[%s4 + $0x8] sm:$0xff]
    %v2740 = vld [vmem:[%s4 + $0x10] sm:$0xff]
    %v2741 = vld [vmem:[%s4 + $0x18] sm:$0xff]
    %v2742 = vld [vmem:[%s4 + $0x20] sm:$0xff]
    %v2743 = vld [vmem:[%s4 + $0x28] sm:$0xff]
    %v2744 = vld [vmem:[%s4 + $0x30] sm:$0xff]
    %v2745 = vld [vmem:[%s4 + $0x38] sm:$0xff]
    %2747 = vset.pattern.permute.xlu0 0
    %2748 = vperm.xlu0 %2747, %v2738
    %v2749 = vpop.permute.xlu0 %2748
    %2752 = vset.pattern.permute.xlu0 0
    %2753 = vperm.xlu0 %2752, %v2739
    %v2754 = vpop.permute.xlu0 %2753
    %2757 = vset.pattern.permute.xlu0 0
    %2758 = vperm.xlu0 %2757, %v2740
    %v2759 = vpop.permute.xlu0 %2758
    %2762 = vset.pattern.permute.xlu0 0
    %2763 = vperm.xlu0 %2762, %v2741
    %v2764 = vpop.permute.xlu0 %2763
    %2767 = vset.pattern.permute.xlu0 0
    %2768 = vperm.xlu0 %2767, %v2742
    %v2769 = vpop.permute.xlu0 %2768
    %2772 = vset.pattern.permute.xlu0 0
    %2773 = vperm.xlu0 %2772, %v2743
    %v2774 = vpop.permute.xlu0 %2773
    %2777 = vset.pattern.permute.xlu0 0
    %2778 = vperm.xlu0 %2777, %v2744
    %v2779 = vpop.permute.xlu0 %2778
    %2782 = vset.pattern.permute.xlu0 0
    %2783 = vperm.xlu0 %2782, %v2745
    %v2784 = vpop.permute.xlu0 %2783
    %v2802 = vunpack.c.l.b16 %v2506
    %v2803 = vunpack.c.h.b16 %v2506
    %v2804 = vunpack.c.l.b16 %v2507
    %v2805 = vunpack.c.l.b16 %v2508
    %v2806 = vunpack.c.h.b16 %v2508
    %v2807 = vunpack.c.l.b16 %v2509
    %v2808 = vunpack.c.l.b16 %v2510
    %v2809 = vunpack.c.h.b16 %v2510
    %v2810 = vunpack.c.l.b16 %v2511
    %v2811 = vunpack.c.l.b16 %v2512
    %v2812 = vunpack.c.h.b16 %v2512
    %v2813 = vunpack.c.l.b16 %v2513
    %v2814 = vunpack.c.l.b16 %v2514
    %v2815 = vunpack.c.h.b16 %v2514
    %v2816 = vunpack.c.l.b16 %v2515
    %v2817 = vunpack.c.l.b16 %v2516
    %v2818 = vunpack.c.h.b16 %v2516
    %v2819 = vunpack.c.l.b16 %v2517
    %v2820 = vunpack.c.l.b16 %v2518
    %v2821 = vunpack.c.h.b16 %v2518
    %v2822 = vunpack.c.l.b16 %v2519
    %v2823 = vunpack.c.l.b16 %v2520
    %v2824 = vunpack.c.h.b16 %v2520
    %v2825 = vunpack.c.l.b16 %v2521
    %v2826 = vpack.c.b16 %v2805, %v2802
    %v2827 = vpack.c.b16 %v2806, %v2803
    %v2828 = vpack.c.b16 %v2807, %v2804
    %v2829 = vpack.c.b16 %v2811, %v2808
    %v2830 = vpack.c.b16 %v2812, %v2809
    %v2831 = vpack.c.b16 %v2813, %v2810
    %v2832 = vpack.c.b16 %v2817, %v2814
    %v2833 = vpack.c.b16 %v2818, %v2815
    %v2834 = vpack.c.b16 %v2819, %v2816
    %v2835 = vpack.c.b16 %v2823, %v2820
    %v2836 = vpack.c.b16 %v2824, %v2821
    %v2837 = vpack.c.b16 %v2825, %v2822
    %vm2846 = vcmask 261120
    %v2848 = vsel %vm2846, %v2828, 0
    %v2851 = vsel %vm2846, %v2831, 0
    %v2854 = vsel %vm2846, %v2834, 0
    %v2857 = vsel %vm2846, %v2837, 0
    %2859 = vmatprep.subr.bf16.mxu0 %v2523
    %2860 = vmatpush1.bf16.msra.mxu0 %v2522
    %2861 = vmatprep.subr.bf16.mxu0 %v2535
    %2862 = vmatpush1.bf16.msra.mxu0 %v2534
    %2863 = vmatprep.subr.bf16.mxu0 %v2547
    %2864 = vmatpush1.bf16.msra.mxu0 %v2546
    %2865 = vmatprep.subr.bf16.mxu0 %v2559
    %2866 = vmatpush1.bf16.msra.mxu0 %v2558
    %2867 = vmatprep.subr.bf16.mxu0 %v2571
    %2868 = vmatpush1.bf16.msra.mxu0 %v2570
    %2869 = vmatprep.subr.bf16.mxu0 %v2583
    %2870 = vmatpush1.bf16.msra.mxu0 %v2582
    %2871 = vmatprep.subr.bf16.mxu0 %v2595
    %2872 = vmatpush1.bf16.msra.mxu0 %v2594
    %2873 = vmatprep.subr.bf16.mxu0 %v2607
    %2874 = vmatpush1.bf16.msra.mxu0 %v2606
    %2875 = vmatprep.subr.bf16.mxu0 %v2619
    %2876 = vmatpush1.bf16.msra.mxu0 %v2618
    %2877 = vmatprep.subr.bf16.mxu0 %v2631
    %2878 = vmatpush1.bf16.msra.mxu0 %v2630
    %2879 = vmatprep.subr.bf16.mxu0 %v2643
    %2880 = vmatpush1.bf16.msra.mxu0 %v2642
    %2881 = vmatprep.subr.bf16.mxu0 %v2655
    %2882 = vmatpush1.bf16.msra.mxu0 %v2654
    %2883 = vmatprep.subr.bf16.mxu0 %v2667
    %2884 = vmatpush1.bf16.msra.mxu0 %v2666
    %2885 = vmatprep.subr.bf16.mxu0 %v2679
    %2886 = vmatpush1.bf16.msra.mxu0 %v2678
    %2887 = vmatprep.subr.bf16.mxu0 %v2691
    %2888 = vmatpush1.bf16.msra.mxu0 %v2690
    %2889 = vmatprep.subr.bf16.mxu0 %v2703
    %2890 = vmatpush1.bf16.msra.mxu0 %v2702
    %2891 = vmatprep.mubr.bf16.mxu0 %v2827
    %2892 = vmatmul.mubr.bf16.gmra.mrb[0].mxu0 %v2826
    %v2893 = vpop.f32.mrb[0].mxu0
    %v2894 = vadd.f32 %v2749, %v2893
    %v2895 = vpop.f32.mrb[0].mxu0
    %v2896 = vadd.f32 %v2749, %v2895
    %v2897 = vpop.f32.mrb[0].mxu0
    %v2898 = vadd.f32 %v2754, %v2897
    %v2899 = vpop.f32.mrb[0].mxu0
    %v2900 = vadd.f32 %v2754, %v2899
    %2901 = vmatprep.mubr.bf16.mxu0 %v2830
    %2902 = vmatmul.mubr.bf16.gmra.mrb[0].mxu0 %v2829
    %v2903 = vpop.f32.mrb[0].mxu0
    %v2904 = vadd.f32 %v2759, %v2903
    %v2905 = vpop.f32.mrb[0].mxu0
    %v2906 = vadd.f32 %v2759, %v2905
    %v2907 = vpop.f32.mrb[0].mxu0
    %v2908 = vadd.f32 %v2764, %v2907
    %v2909 = vpop.f32.mrb[0].mxu0
    %v2910 = vadd.f32 %v2764, %v2909
    %2911 = vmatprep.mubr.bf16.mxu0 %v2833
    %2912 = vmatmul.mubr.bf16.gmra.mrb[0].mxu0 %v2832
    %v2913 = vpop.f32.mrb[0].mxu0
    %v2914 = vadd.f32 %v2769, %v2913
    %v2915 = vpop.f32.mrb[0].mxu0
    %v2916 = vadd.f32 %v2769, %v2915
    %v2917 = vpop.f32.mrb[0].mxu0
    %v2918 = vadd.f32 %v2774, %v2917
    %v2919 = vpop.f32.mrb[0].mxu0
    %v2920 = vadd.f32 %v2774, %v2919
    %2921 = vmatprep.mubr.bf16.mxu0 %v2836
    %2922 = vmatmul.mubr.bf16.gmra.mrb[0].mxu0 %v2835
    %v2923 = vpop.f32.mrb[0].mxu0
    %v2924 = vadd.f32 %v2779, %v2923
    %v2925 = vpop.f32.mrb[0].mxu0
    %v2926 = vadd.f32 %v2779, %v2925
    %v2927 = vpop.f32.mrb[0].mxu0
    %v2928 = vadd.f32 %v2784, %v2927
    %v2929 = vpop.f32.mrb[0].mxu0
    %v2930 = vadd.f32 %v2784, %v2929
    %2931 = vdwg.mxu0
    %2932 = vmatprep.subr.bf16.mxu0 %v2715
    %2933 = vmatpush1.bf16.msra.mxu0 %v2714
    %2934 = vmatprep.subr.bf16.mxu0 %v2727
    %2935 = vmatpush1.bf16.msra.mxu0 %v2726
    %2936 = vmatprep.subr.bf16.mxu0 0
    %2937 = vmatpush1.bf16.msra.mxu0 0
    %2938 = vmatprep.subr.bf16.mxu0 0
    %2939 = vmatpush1.bf16.msra.mxu0 0
    %2940 = vmatprep.subr.bf16.mxu0 0
    %2941 = vmatpush1.bf16.msra.mxu0 0
    %2942 = vmatprep.subr.bf16.mxu0 0
    %2943 = vmatpush1.bf16.msra.mxu0 0
    %2944 = vmatprep.subr.bf16.mxu0 0
    %2945 = vmatpush1.bf16.msra.mxu0 0
    %2946 = vmatprep.subr.bf16.mxu0 0
    %2947 = vmatpush1.bf16.msra.mxu0 0
    %2948 = vmatprep.subr.bf16.mxu0 0
    %2949 = vmatpush1.bf16.msra.mxu0 0
    %2950 = vmatprep.subr.bf16.mxu0 0
    %2951 = vmatpush1.bf16.msra.mxu0 0
    %2952 = vmatprep.subr.bf16.mxu0 0
    %2953 = vmatpush1.bf16.msra.mxu0 0
    %2954 = vmatprep.subr.bf16.mxu0 0
    %2955 = vmatpush1.bf16.msra.mxu0 0
    %2956 = vmatprep.subr.bf16.mxu0 0
    %2957 = vmatpush1.bf16.msra.mxu0 0
    %2958 = vmatprep.subr.bf16.mxu0 0
    %2959 = vmatpush1.bf16.msra.mxu0 0
    %2960 = vmatprep.subr.bf16.mxu0 0
    %2961 = vmatpush1.bf16.msra.mxu0 0
    %2962 = vmatprep.subr.bf16.mxu0 0
    %2963 = vmatpush1.bf16.msra.mxu0 0
    %2964 = vmatprep.mubr.bf16.mxu0 0
    %2965 = vmatmul.mubr.bf16.gmra.mrb[0].mxu0 %v2848
    %v2966 = vpop.f32.mrb[0].mxu0
    %v2967 = vadd.f32 %v2894, %v2966
    %v2968 = vpop.f32.mrb[0].mxu0
    %v2969 = vadd.f32 %v2896, %v2968
    %v2970 = vpop.f32.mrb[0].mxu0
    %v2971 = vadd.f32 %v2898, %v2970
    %v2972 = vpop.f32.mrb[0].mxu0
    %v2973 = vadd.f32 %v2900, %v2972
    %2974 = vmatprep.mubr.bf16.mxu0 0
    %2975 = vmatmul.mubr.bf16.gmra.mrb[0].mxu0 %v2851
    %v2976 = vpop.f32.mrb[0].mxu0
    %v2977 = vadd.f32 %v2904, %v2976
    %v2978 = vpop.f32.mrb[0].mxu0
    %v2979 = vadd.f32 %v2906, %v2978
    %v2980 = vpop.f32.mrb[0].mxu0
    %v2981 = vadd.f32 %v2908, %v2980
    %v2982 = vpop.f32.mrb[0].mxu0
    %v2983 = vadd.f32 %v2910, %v2982
    %2984 = vmatprep.mubr.bf16.mxu0 0
    %2985 = vmatmul.mubr.bf16.gmra.mrb[0].mxu0 %v2854
    %v2986 = vpop.f32.mrb[0].mxu0
    %v2987 = vadd.f32 %v2914, %v2986
    %v2988 = vpop.f32.mrb[0].mxu0
    %v2989 = vadd.f32 %v2916, %v2988
    %v2990 = vpop.f32.mrb[0].mxu0
    %v2991 = vadd.f32 %v2918, %v2990
    %v2992 = vpop.f32.mrb[0].mxu0
    %v2993 = vadd.f32 %v2920, %v2992
    %2994 = vmatprep.mubr.bf16.mxu0 0
    %2995 = vmatmul.mubr.bf16.gmra.mrb[0].mxu0 %v2857
    %v2996 = vpop.f32.mrb[0].mxu0
    %v2997 = vadd.f32 %v2924, %v2996
    %v2998 = vpop.f32.mrb[0].mxu0
    %v2999 = vadd.f32 %v2926, %v2998
    %v3000 = vpop.f32.mrb[0].mxu0
    %v3001 = vadd.f32 %v2928, %v3000
    %v3002 = vpop.f32.mrb[0].mxu0
    %v3003 = vadd.f32 %v2930, %v3002
    %3004 = vdwg.mxu0
    %3005 = vmatprep.subr.bf16.mxu0 %v2525
    %3006 = vmatpush1.bf16.msra.mxu0 %v2524
    %3007 = vmatprep.subr.bf16.mxu0 %v2537
    %3008 = vmatpush1.bf16.msra.mxu0 %v2536
    %3009 = vmatprep.subr.bf16.mxu0 %v2549
    %3010 = vmatpush1.bf16.msra.mxu0 %v2548
    %3011 = vmatprep.subr.bf16.mxu0 %v2561
    %3012 = vmatpush1.bf16.msra.mxu0 %v2560
    %3013 = vmatprep.subr.bf16.mxu0 %v2573
    %3014 = vmatpush1.bf16.msra.mxu0 %v2572
    %3015 = vmatprep.subr.bf16.mxu0 %v2585
    %3016 = vmatpush1.bf16.msra.mxu0 %v2584
    %3017 = vmatprep.subr.bf16.mxu0 %v2597
    %3018 = vmatpush1.bf16.msra.mxu0 %v2596
    %3019 = vmatprep.subr.bf16.mxu0 %v2609
    %3020 = vmatpush1.bf16.msra.mxu0 %v2608
    %3021 = vmatprep.subr.bf16.mxu0 %v2621
    %3022 = vmatpush1.bf16.msra.mxu0 %v2620
    %3023 = vmatprep.subr.bf16.mxu0 %v2633
    %3024 = vmatpush1.bf16.msra.mxu0 %v2632
    %3025 = vmatprep.subr.bf16.mxu0 %v2645
    %3026 = vmatpush1.bf16.msra.mxu0 %v2644
    %3027 = vmatprep.subr.bf16.mxu0 %v2657
    %3028 = vmatpush1.bf16.msra.mxu0 %v2656
    %3029 = vmatprep.subr.bf16.mxu0 %v2669
    %3030 = vmatpush1.bf16.msra.mxu0 %v2668
    %3031 = vmatprep.subr.bf16.mxu0 %v2681
    %3032 = vmatpush1.bf16.msra.mxu0 %v2680
    %3033 = vmatprep.subr.bf16.mxu0 %v2693
    %3034 = vmatpush1.bf16.msra.mxu0 %v2692
    %3035 = vmatprep.subr.bf16.mxu0 %v2705
    %3036 = vmatpush1.bf16.msra.mxu0 %v2704
    %3037 = vmatprep.mubr.bf16.mxu0 %v2827
    %3038 = vmatmul.mubr.bf16.gmra.mrb[0].mxu0 %v2826
    %v3039 = vpop.f32.mrb[0].mxu0
    %v3040 = vadd.f32 %v2749, %v3039
    %v3041 = vpop.f32.mrb[0].mxu0
    %v3042 = vadd.f32 %v2749, %v3041
    %v3043 = vpop.f32.mrb[0].mxu0
    %v3044 = vadd.f32 %v2754, %v3043
    %v3045 = vpop.f32.mrb[0].mxu0
    %v3046 = vadd.f32 %v2754, %v3045
    %3047 = vmatprep.mubr.bf16.mxu0 %v2830
    %3048 = vmatmul.mubr.bf16.gmra.mrb[0].mxu0 %v2829
    %v3049 = vpop.f32.mrb[0].mxu0
    %v3050 = vadd.f32 %v2759, %v3049
    %v3051 = vpop.f32.mrb[0].mxu0
    %v3052 = vadd.f32 %v2759, %v3051
    %v3053 = vpop.f32.mrb[0].mxu0
    %v3054 = vadd.f32 %v2764, %v3053
    %v3055 = vpop.f32.mrb[0].mxu0
    %v3056 = vadd.f32 %v2764, %v3055
    %3057 = vmatprep.mubr.bf16.mxu0 %v2833
    %3058 = vmatmul.mubr.bf16.gmra.mrb[0].mxu0 %v2832
    %v3059 = vpop.f32.mrb[0].mxu0
    %v3060 = vadd.f32 %v2769, %v3059
    %v3061 = vpop.f32.mrb[0].mxu0
    %v3062 = vadd.f32 %v2769, %v3061
    %v3063 = vpop.f32.mrb[0].mxu0
    %v3064 = vadd.f32 %v2774, %v3063
    %v3065 = vpop.f32.mrb[0].mxu0
    %v3066 = vadd.f32 %v2774, %v3065
    %3067 = vmatprep.mubr.bf16.mxu0 %v2836
    %3068 = vmatmul.mubr.bf16.gmra.mrb[0].mxu0 %v2835
    %v3069 = vpop.f32.mrb[0].mxu0
    %v3070 = vadd.f32 %v2779, %v3069
    %v3071 = vpop.f32.mrb[0].mxu0
    %v3072 = vadd.f32 %v2779, %v3071
    %v3073 = vpop.f32.mrb[0].mxu0
    %v3074 = vadd.f32 %v2784, %v3073
    %v3075 = vpop.f32.mrb[0].mxu0
    %v3076 = vadd.f32 %v2784, %v3075
    %3077 = vdwg.mxu0
    %3078 = vmatprep.subr.bf16.mxu0 %v2717
    %3079 = vmatpush1.bf16.msra.mxu0 %v2716
    %3080 = vmatprep.subr.bf16.mxu0 %v2729
    %3081 = vmatpush1.bf16.msra.mxu0 %v2728
    %3082 = vmatprep.subr.bf16.mxu0 0
    %3083 = vmatpush1.bf16.msra.mxu0 0
    %3084 = vmatprep.subr.bf16.mxu0 0
    %3085 = vmatpush1.bf16.msra.mxu0 0
    %3086 = vmatprep.subr.bf16.mxu0 0
    %3087 = vmatpush1.bf16.msra.mxu0 0
    %3088 = vmatprep.subr.bf16.mxu0 0
    %3089 = vmatpush1.bf16.msra.mxu0 0
    %3090 = vmatprep.subr.bf16.mxu0 0
    %3091 = vmatpush1.bf16.msra.mxu0 0
    %3092 = vmatprep.subr.bf16.mxu0 0
    %3093 = vmatpush1.bf16.msra.mxu0 0
    %3094 = vmatprep.subr.bf16.mxu0 0
    %3095 = vmatpush1.bf16.msra.mxu0 0
    %3096 = vmatprep.subr.bf16.mxu0 0
    %3097 = vmatpush1.bf16.msra.mxu0 0
    %3098 = vmatprep.subr.bf16.mxu0 0
    %3099 = vmatpush1.bf16.msra.mxu0 0
    %3100 = vmatprep.subr.bf16.mxu0 0
    %3101 = vmatpush1.bf16.msra.mxu0 0
    %3102 = vmatprep.subr.bf16.mxu0 0
    %3103 = vmatpush1.bf16.msra.mxu0 0
    %3104 = vmatprep.subr.bf16.mxu0 0
    %3105 = vmatpush1.bf16.msra.mxu0 0
    %3106 = vmatprep.subr.bf16.mxu0 0
    %3107 = vmatpush1.bf16.msra.mxu0 0
    %3108 = vmatprep.subr.bf16.mxu0 0
    %3109 = vmatpush1.bf16.msra.mxu0 0
    %3110 = vmatprep.mubr.bf16.mxu0 0
    %3111 = vmatmul.mubr.bf16.gmra.mrb[0].mxu0 %v2848
    %v3112 = vpop.f32.mrb[0].mxu0
    %v3113 = vadd.f32 %v3040, %v3112
    %v3114 = vpop.f32.mrb[0].mxu0
    %v3115 = vadd.f32 %v3042, %v3114
    %v3116 = vpop.f32.mrb[0].mxu0
    %v3117 = vadd.f32 %v3044, %v3116
    %v3118 = vpop.f32.mrb[0].mxu0
    %v3119 = vadd.f32 %v3046, %v3118
    %3120 = vmatprep.mubr.bf16.mxu0 0
    %3121 = vmatmul.mubr.bf16.gmra.mrb[0].mxu0 %v2851
    %v3122 = vpop.f32.mrb[0].mxu0
    %v3123 = vadd.f32 %v3050, %v3122
    %v3124 = vpop.f32.mrb[0].mxu0
    %v3125 = vadd.f32 %v3052, %v3124
    %v3126 = vpop.f32.mrb[0].mxu0
    %v3127 = vadd.f32 %v3054, %v3126
    %v3128 = vpop.f32.mrb[0].mxu0
    %v3129 = vadd.f32 %v3056, %v3128
    %3130 = vmatprep.mubr.bf16.mxu0 0
    %3131 = vmatmul.mubr.bf16.gmra.mrb[0].mxu0 %v2854
    %v3132 = vpop.f32.mrb[0].mxu0
    %v3133 = vadd.f32 %v3060, %v3132
    %v3134 = vpop.f32.mrb[0].mxu0
    %v3135 = vadd.f32 %v3062, %v3134
    %v3136 = vpop.f32.mrb[0].mxu0
    %v3137 = vadd.f32 %v3064, %v3136
    %v3138 = vpop.f32.mrb[0].mxu0
    %v3139 = vadd.f32 %v3066, %v3138
    %3140 = vmatprep.mubr.bf16.mxu0 0
    %3141 = vmatmul.mubr.bf16.gmra.mrb[0].mxu0 %v2857
    %v3142 = vpop.f32.mrb[0].mxu0
    %v3143 = vadd.f32 %v3070, %v3142
    %v3144 = vpop.f32.mrb[0].mxu0
    %v3145 = vadd.f32 %v3072, %v3144
    %v3146 = vpop.f32.mrb[0].mxu0
    %v3147 = vadd.f32 %v3074, %v3146
    %v3148 = vpop.f32.mrb[0].mxu0
    %v3149 = vadd.f32 %v3076, %v3148
    %3150 = vdwg.mxu0
    %3151 = vmatprep.subr.bf16.mxu0 %v2527
    %3152 = vmatpush1.bf16.msra.mxu0 %v2526
    %3153 = vmatprep.subr.bf16.mxu0 %v2539
    %3154 = vmatpush1.bf16.msra.mxu0 %v2538
    %3155 = vmatprep.subr.bf16.mxu0 %v2551
    %3156 = vmatpush1.bf16.msra.mxu0 %v2550
    %3157 = vmatprep.subr.bf16.mxu0 %v2563
    %3158 = vmatpush1.bf16.msra.mxu0 %v2562
    %3159 = vmatprep.subr.bf16.mxu0 %v2575
    %3160 = vmatpush1.bf16.msra.mxu0 %v2574
    %3161 = vmatprep.subr.bf16.mxu0 %v2587
    %3162 = vmatpush1.bf16.msra.mxu0 %v2586
    %3163 = vmatprep.subr.bf16.mxu0 %v2599
    %3164 = vmatpush1.bf16.msra.mxu0 %v2598
    %3165 = vmatprep.subr.bf16.mxu0 %v2611
    %3166 = vmatpush1.bf16.msra.mxu0 %v2610
    %3167 = vmatprep.subr.bf16.mxu0 %v2623
    %3168 = vmatpush1.bf16.msra.mxu0 %v2622
    %3169 = vmatprep.subr.bf16.mxu0 %v2635
    %3170 = vmatpush1.bf16.msra.mxu0 %v2634
    %3171 = vmatprep.subr.bf16.mxu0 %v2647
    %3172 = vmatpush1.bf16.msra.mxu0 %v2646
    %3173 = vmatprep.subr.bf16.mxu0 %v2659
    %3174 = vmatpush1.bf16.msra.mxu0 %v2658
    %3175 = vmatprep.subr.bf16.mxu0 %v2671
    %3176 = vmatpush1.bf16.msra.mxu0 %v2670
    %3177 = vmatprep.subr.bf16.mxu0 %v2683
    %3178 = vmatpush1.bf16.msra.mxu0 %v2682
    %3179 = vmatprep.subr.bf16.mxu0 %v2695
    %3180 = vmatpush1.bf16.msra.mxu0 %v2694
    %3181 = vmatprep.subr.bf16.mxu0 %v2707
    %3182 = vmatpush1.bf16.msra.mxu0 %v2706
    %3183 = vmatprep.mubr.bf16.mxu0 %v2827
    %3184 = vmatmul.mubr.bf16.gmra.mrb[0].mxu0 %v2826
    %v3185 = vpop.f32.mrb[0].mxu0
    %v3186 = vadd.f32 %v2749, %v3185
    %v3187 = vpop.f32.mrb[0].mxu0
    %v3188 = vadd.f32 %v2749, %v3187
    %v3189 = vpop.f32.mrb[0].mxu0
    %v3190 = vadd.f32 %v2754, %v3189
    %v3191 = vpop.f32.mrb[0].mxu0
    %v3192 = vadd.f32 %v2754, %v3191
    %3193 = vmatprep.mubr.bf16.mxu0 %v2830
    %3194 = vmatmul.mubr.bf16.gmra.mrb[0].mxu0 %v2829
    %v3195 = vpop.f32.mrb[0].mxu0
    %v3196 = vadd.f32 %v2759, %v3195
    %v3197 = vpop.f32.mrb[0].mxu0
    %v3198 = vadd.f32 %v2759, %v3197
    %v3199 = vpop.f32.mrb[0].mxu0
    %v3200 = vadd.f32 %v2764, %v3199
    %v3201 = vpop.f32.mrb[0].mxu0
    %v3202 = vadd.f32 %v2764, %v3201
    %3203 = vmatprep.mubr.bf16.mxu0 %v2833
    %3204 = vmatmul.mubr.bf16.gmra.mrb[0].mxu0 %v2832
    %v3205 = vpop.f32.mrb[0].mxu0
    %v3206 = vadd.f32 %v2769, %v3205
    %v3207 = vpop.f32.mrb[0].mxu0
    %v3208 = vadd.f32 %v2769, %v3207
    %v3209 = vpop.f32.mrb[0].mxu0
    %v3210 = vadd.f32 %v2774, %v3209
    %v3211 = vpop.f32.mrb[0].mxu0
    %v3212 = vadd.f32 %v2774, %v3211
    %3213 = vmatprep.mubr.bf16.mxu0 %v2836
    %3214 = vmatmul.mubr.bf16.gmra.mrb[0].mxu0 %v2835
    %v3215 = vpop.f32.mrb[0].mxu0
    %v3216 = vadd.f32 %v2779, %v3215
    %v3217 = vpop.f32.mrb[0].mxu0
    %v3218 = vadd.f32 %v2779, %v3217
    %v3219 = vpop.f32.mrb[0].mxu0
    %v3220 = vadd.f32 %v2784, %v3219
    %v3221 = vpop.f32.mrb[0].mxu0
    %v3222 = vadd.f32 %v2784, %v3221
    %3223 = vdwg.mxu0
    %3224 = vmatprep.subr.bf16.mxu0 %v2719
    %3225 = vmatpush1.bf16.msra.mxu0 %v2718
    %3226 = vmatprep.subr.bf16.mxu0 %v2731
    %3227 = vmatpush1.bf16.msra.mxu0 %v2730
    %3228 = vmatprep.subr.bf16.mxu0 0
    %3229 = vmatpush1.bf16.msra.mxu0 0
    %3230 = vmatprep.subr.bf16.mxu0 0
    %3231 = vmatpush1.bf16.msra.mxu0 0
    %3232 = vmatprep.subr.bf16.mxu0 0
    %3233 = vmatpush1.bf16.msra.mxu0 0
    %3234 = vmatprep.subr.bf16.mxu0 0
    %3235 = vmatpush1.bf16.msra.mxu0 0
    %3236 = vmatprep.subr.bf16.mxu0 0
    %3237 = vmatpush1.bf16.msra.mxu0 0
    %3238 = vmatprep.subr.bf16.mxu0 0
    %3239 = vmatpush1.bf16.msra.mxu0 0
    %3240 = vmatprep.subr.bf16.mxu0 0
    %3241 = vmatpush1.bf16.msra.mxu0 0
    %3242 = vmatprep.subr.bf16.mxu0 0
    %3243 = vmatpush1.bf16.msra.mxu0 0
    %3244 = vmatprep.subr.bf16.mxu0 0
    %3245 = vmatpush1.bf16.msra.mxu0 0
    %3246 = vmatprep.subr.bf16.mxu0 0
    %3247 = vmatpush1.bf16.msra.mxu0 0
    %3248 = vmatprep.subr.bf16.mxu0 0
    %3249 = vmatpush1.bf16.msra.mxu0 0
    %3250 = vmatprep.subr.bf16.mxu0 0
    %3251 = vmatpush1.bf16.msra.mxu0 0
    %3252 = vmatprep.subr.bf16.mxu0 0
    %3253 = vmatpush1.bf16.msra.mxu0 0
    %3254 = vmatprep.subr.bf16.mxu0 0
    %3255 = vmatpush1.bf16.msra.mxu0 0
    %3256 = vmatprep.mubr.bf16.mxu0 0
    %3257 = vmatmul.mubr.bf16.gmra.mrb[0].mxu0 %v2848
    %v3258 = vpop.f32.mrb[0].mxu0
    %v3259 = vadd.f32 %v3186, %v3258
    %v3260 = vpop.f32.mrb[0].mxu0
    %v3261 = vadd.f32 %v3188, %v3260
    %v3262 = vpop.f32.mrb[0].mxu0
    %v3263 = vadd.f32 %v3190, %v3262
    %v3264 = vpop.f32.mrb[0].mxu0
    %v3265 = vadd.f32 %v3192, %v3264
    %3266 = vmatprep.mubr.bf16.mxu0 0
    %3267 = vmatmul.mubr.bf16.gmra.mrb[0].mxu0 %v2851
    %v3268 = vpop.f32.mrb[0].mxu0
    %v3269 = vadd.f32 %v3196, %v3268
    %v3270 = vpop.f32.mrb[0].mxu0
    %v3271 = vadd.f32 %v3198, %v3270
    %v3272 = vpop.f32.mrb[0].mxu0
    %v3273 = vadd.f32 %v3200, %v3272
    %v3274 = vpop.f32.mrb[0].mxu0
    %v3275 = vadd.f32 %v3202, %v3274
    %3276 = vmatprep.mubr.bf16.mxu0 0
    %3277 = vmatmul.mubr.bf16.gmra.mrb[0].mxu0 %v2854
    %v3278 = vpop.f32.mrb[0].mxu0
    %v3279 = vadd.f32 %v3206, %v3278
    %v3280 = vpop.f32.mrb[0].mxu0
    %v3281 = vadd.f32 %v3208, %v3280
    %v3282 = vpop.f32.mrb[0].mxu0
    %v3283 = vadd.f32 %v3210, %v3282
    %v3284 = vpop.f32.mrb[0].mxu0
    %v3285 = vadd.f32 %v3212, %v3284
    %3286 = vmatprep.mubr.bf16.mxu0 0
    %3287 = vmatmul.mubr.bf16.gmra.mrb[0].mxu0 %v2857
    %v3288 = vpop.f32.mrb[0].mxu0
    %v3289 = vadd.f32 %v3216, %v3288
    %v3290 = vpop.f32.mrb[0].mxu0
    %v3291 = vadd.f32 %v3218, %v3290
    %v3292 = vpop.f32.mrb[0].mxu0
    %v3293 = vadd.f32 %v3220, %v3292
    %v3294 = vpop.f32.mrb[0].mxu0
    %v3295 = vadd.f32 %v3222, %v3294
    %3296 = vdwg.mxu0
    %3297 = vmatprep.subr.bf16.mxu0 %v2529
    %3298 = vmatpush1.bf16.msra.mxu0 %v2528
    %3299 = vmatprep.subr.bf16.mxu0 %v2541
    %3300 = vmatpush1.bf16.msra.mxu0 %v2540
    %3301 = vmatprep.subr.bf16.mxu0 %v2553
    %3302 = vmatpush1.bf16.msra.mxu0 %v2552
    %3303 = vmatprep.subr.bf16.mxu0 %v2565
    %3304 = vmatpush1.bf16.msra.mxu0 %v2564
    %3305 = vmatprep.subr.bf16.mxu0 %v2577
    %3306 = vmatpush1.bf16.msra.mxu0 %v2576
    %3307 = vmatprep.subr.bf16.mxu0 %v2589
    %3308 = vmatpush1.bf16.msra.mxu0 %v2588
    %3309 = vmatprep.subr.bf16.mxu0 %v2601
    %3310 = vmatpush1.bf16.msra.mxu0 %v2600
    %3311 = vmatprep.subr.bf16.mxu0 %v2613
    %3312 = vmatpush1.bf16.msra.mxu0 %v2612
    %3313 = vmatprep.subr.bf16.mxu0 %v2625
    %3314 = vmatpush1.bf16.msra.mxu0 %v2624
    %3315 = vmatprep.subr.bf16.mxu0 %v2637
    %3316 = vmatpush1.bf16.msra.mxu0 %v2636
    %3317 = vmatprep.subr.bf16.mxu0 %v2649
    %3318 = vmatpush1.bf16.msra.mxu0 %v2648
    %3319 = vmatprep.subr.bf16.mxu0 %v2661
    %3320 = vmatpush1.bf16.msra.mxu0 %v2660
    %3321 = vmatprep.subr.bf16.mxu0 %v2673
    %3322 = vmatpush1.bf16.msra.mxu0 %v2672
    %3323 = vmatprep.subr.bf16.mxu0 %v2685
    %3324 = vmatpush1.bf16.msra.mxu0 %v2684
    %3325 = vmatprep.subr.bf16.mxu0 %v2697
    %3326 = vmatpush1.bf16.msra.mxu0 %v2696
    %3327 = vmatprep.subr.bf16.mxu0 %v2709
    %3328 = vmatpush1.bf16.msra.mxu0 %v2708
    %3329 = vmatprep.mubr.bf16.mxu0 %v2827
    %3330 = vmatmul.mubr.bf16.gmra.mrb[0].mxu0 %v2826
    %v3331 = vpop.f32.mrb[0].mxu0
    %v3332 = vadd.f32 %v2749, %v3331
    %v3333 = vpop.f32.mrb[0].mxu0
    %v3334 = vadd.f32 %v2749, %v3333
    %v3335 = vpop.f32.mrb[0].mxu0
    %v3336 = vadd.f32 %v2754, %v3335
    %v3337 = vpop.f32.mrb[0].mxu0
    %v3338 = vadd.f32 %v2754, %v3337
    %3339 = vmatprep.mubr.bf16.mxu0 %v2830
    %3340 = vmatmul.mubr.bf16.gmra.mrb[0].mxu0 %v2829
    %v3341 = vpop.f32.mrb[0].mxu0
    %v3342 = vadd.f32 %v2759, %v3341
    %v3343 = vpop.f32.mrb[0].mxu0
    %v3344 = vadd.f32 %v2759, %v3343
    %v3345 = vpop.f32.mrb[0].mxu0
    %v3346 = vadd.f32 %v2764, %v3345
    %v3347 = vpop.f32.mrb[0].mxu0
    %v3348 = vadd.f32 %v2764, %v3347
    %3349 = vmatprep.mubr.bf16.mxu0 %v2833
    %3350 = vmatmul.mubr.bf16.gmra.mrb[0].mxu0 %v2832
    %v3351 = vpop.f32.mrb[0].mxu0
    %v3352 = vadd.f32 %v2769, %v3351
    %v3353 = vpop.f32.mrb[0].mxu0
    %v3354 = vadd.f32 %v2769, %v3353
    %v3355 = vpop.f32.mrb[0].mxu0
    %v3356 = vadd.f32 %v2774, %v3355
    %v3357 = vpop.f32.mrb[0].mxu0
    %v3358 = vadd.f32 %v2774, %v3357
    %3359 = vmatprep.mubr.bf16.mxu0 %v2836
    %3360 = vmatmul.mubr.bf16.gmra.mrb[0].mxu0 %v2835
    %v3361 = vpop.f32.mrb[0].mxu0
    %v3362 = vadd.f32 %v2779, %v3361
    %v3363 = vpop.f32.mrb[0].mxu0
    %v3364 = vadd.f32 %v2779, %v3363
    %v3365 = vpop.f32.mrb[0].mxu0
    %v3366 = vadd.f32 %v2784, %v3365
    %v3367 = vpop.f32.mrb[0].mxu0
    %v3368 = vadd.f32 %v2784, %v3367
    %3369 = vdwg.mxu0
    %3370 = vmatprep.subr.bf16.mxu0 %v2721
    %3371 = vmatpush1.bf16.msra.mxu0 %v2720
    %3372 = vmatprep.subr.bf16.mxu0 %v2733
    %3373 = vmatpush1.bf16.msra.mxu0 %v2732
    %3374 = vmatprep.subr.bf16.mxu0 0
    %3375 = vmatpush1.bf16.msra.mxu0 0
    %3376 = vmatprep.subr.bf16.mxu0 0
    %3377 = vmatpush1.bf16.msra.mxu0 0
    %3378 = vmatprep.subr.bf16.mxu0 0
    %3379 = vmatpush1.bf16.msra.mxu0 0
    %3380 = vmatprep.subr.bf16.mxu0 0
    %3381 = vmatpush1.bf16.msra.mxu0 0
    %3382 = vmatprep.subr.bf16.mxu0 0
    %3383 = vmatpush1.bf16.msra.mxu0 0
    %3384 = vmatprep.subr.bf16.mxu0 0
    %3385 = vmatpush1.bf16.msra.mxu0 0
    %3386 = vmatprep.subr.bf16.mxu0 0
    %3387 = vmatpush1.bf16.msra.mxu0 0
    %3388 = vmatprep.subr.bf16.mxu0 0
    %3389 = vmatpush1.bf16.msra.mxu0 0
    %3390 = vmatprep.subr.bf16.mxu0 0
    %3391 = vmatpush1.bf16.msra.mxu0 0
    %3392 = vmatprep.subr.bf16.mxu0 0
    %3393 = vmatpush1.bf16.msra.mxu0 0
    %3394 = vmatprep.subr.bf16.mxu0 0
    %3395 = vmatpush1.bf16.msra.mxu0 0
    %3396 = vmatprep.subr.bf16.mxu0 0
    %3397 = vmatpush1.bf16.msra.mxu0 0
    %3398 = vmatprep.subr.bf16.mxu0 0
    %3399 = vmatpush1.bf16.msra.mxu0 0
    %3400 = vmatprep.subr.bf16.mxu0 0
    %3401 = vmatpush1.bf16.msra.mxu0 0
    %3402 = vmatprep.mubr.bf16.mxu0 0
    %3403 = vmatmul.mubr.bf16.gmra.mrb[0].mxu0 %v2848
    %v3404 = vpop.f32.mrb[0].mxu0
    %v3405 = vadd.f32 %v3332, %v3404
    %v3406 = vpop.f32.mrb[0].mxu0
    %v3407 = vadd.f32 %v3334, %v3406
    %v3408 = vpop.f32.mrb[0].mxu0
    %v3409 = vadd.f32 %v3336, %v3408
    %v3410 = vpop.f32.mrb[0].mxu0
    %v3411 = vadd.f32 %v3338, %v3410
    %3412 = vmatprep.mubr.bf16.mxu0 0
    %3413 = vmatmul.mubr.bf16.gmra.mrb[0].mxu0 %v2851
    %v3414 = vpop.f32.mrb[0].mxu0
    %v3415 = vadd.f32 %v3342, %v3414
    %v3416 = vpop.f32.mrb[0].mxu0
    %v3417 = vadd.f32 %v3344, %v3416
    %v3418 = vpop.f32.mrb[0].mxu0
    %v3419 = vadd.f32 %v3346, %v3418
    %v3420 = vpop.f32.mrb[0].mxu0
    %v3421 = vadd.f32 %v3348, %v3420
    %3422 = vmatprep.mubr.bf16.mxu0 0
    %3423 = vmatmul.mubr.bf16.gmra.mrb[0].mxu0 %v2854
    %v3424 = vpop.f32.mrb[0].mxu0
    %v3425 = vadd.f32 %v3352, %v3424
    %v3426 = vpop.f32.mrb[0].mxu0
    %v3427 = vadd.f32 %v3354, %v3426
    %v3428 = vpop.f32.mrb[0].mxu0
    %v3429 = vadd.f32 %v3356, %v3428
    %v3430 = vpop.f32.mrb[0].mxu0
    %v3431 = vadd.f32 %v3358, %v3430
    %3432 = vmatprep.mubr.bf16.mxu0 0
    %3433 = vmatmul.mubr.bf16.gmra.mrb[0].mxu0 %v2857
    %v3434 = vpop.f32.mrb[0].mxu0
    %v3435 = vadd.f32 %v3362, %v3434
    %v3436 = vpop.f32.mrb[0].mxu0
    %v3437 = vadd.f32 %v3364, %v3436
    %v3438 = vpop.f32.mrb[0].mxu0
    %v3439 = vadd.f32 %v3366, %v3438
    %v3440 = vpop.f32.mrb[0].mxu0
    %v3441 = vadd.f32 %v3368, %v3440
    %3442 = vdwg.mxu0
    %3443 = vmatprep.subr.bf16.mxu0 %v2531
    %3444 = vmatpush1.bf16.msra.mxu0 %v2530
    %3445 = vmatprep.subr.bf16.mxu0 %v2543
    %3446 = vmatpush1.bf16.msra.mxu0 %v2542
    %3447 = vmatprep.subr.bf16.mxu0 %v2555
    %3448 = vmatpush1.bf16.msra.mxu0 %v2554
    %3449 = vmatprep.subr.bf16.mxu0 %v2567
    %3450 = vmatpush1.bf16.msra.mxu0 %v2566
    %3451 = vmatprep.subr.bf16.mxu0 %v2579
    %3452 = vmatpush1.bf16.msra.mxu0 %v2578
    %3453 = vmatprep.subr.bf16.mxu0 %v2591
    %3454 = vmatpush1.bf16.msra.mxu0 %v2590
    %3455 = vmatprep.subr.bf16.mxu0 %v2603
    %3456 = vmatpush1.bf16.msra.mxu0 %v2602
    %3457 = vmatprep.subr.bf16.mxu0 %v2615
    %3458 = vmatpush1.bf16.msra.mxu0 %v2614
    %3459 = vmatprep.subr.bf16.mxu0 %v2627
    %3460 = vmatpush1.bf16.msra.mxu0 %v2626
    %3461 = vmatprep.subr.bf16.mxu0 %v2639
    %3462 = vmatpush1.bf16.msra.mxu0 %v2638
    %3463 = vmatprep.subr.bf16.mxu0 %v2651
    %3464 = vmatpush1.bf16.msra.mxu0 %v2650
    %3465 = vmatprep.subr.bf16.mxu0 %v2663
    %3466 = vmatpush1.bf16.msra.mxu0 %v2662
    %3467 = vmatprep.subr.bf16.mxu0 %v2675
    %3468 = vmatpush1.bf16.msra.mxu0 %v2674
    %3469 = vmatprep.subr.bf16.mxu0 %v2687
    %3470 = vmatpush1.bf16.msra.mxu0 %v2686
    %3471 = vmatprep.subr.bf16.mxu0 %v2699
    %3472 = vmatpush1.bf16.msra.mxu0 %v2698
    %3473 = vmatprep.subr.bf16.mxu0 %v2711
    %3474 = vmatpush1.bf16.msra.mxu0 %v2710
    %3475 = vmatprep.mubr.bf16.mxu0 %v2827
    %3476 = vmatmul.mubr.bf16.gmra.mrb[0].mxu0 %v2826
    %v3477 = vpop.f32.mrb[0].mxu0
    %v3478 = vadd.f32 %v2749, %v3477
    %v3479 = vpop.f32.mrb[0].mxu0
    %v3480 = vadd.f32 %v2749, %v3479
    %v3481 = vpop.f32.mrb[0].mxu0
    %v3482 = vadd.f32 %v2754, %v3481
    %v3483 = vpop.f32.mrb[0].mxu0
    %v3484 = vadd.f32 %v2754, %v3483
    %3485 = vmatprep.mubr.bf16.mxu0 %v2830
    %3486 = vmatmul.mubr.bf16.gmra.mrb[0].mxu0 %v2829
    %v3487 = vpop.f32.mrb[0].mxu0
    %v3488 = vadd.f32 %v2759, %v3487
    %v3489 = vpop.f32.mrb[0].mxu0
    %v3490 = vadd.f32 %v2759, %v3489
    %v3491 = vpop.f32.mrb[0].mxu0
    %v3492 = vadd.f32 %v2764, %v3491
    %v3493 = vpop.f32.mrb[0].mxu0
    %v3494 = vadd.f32 %v2764, %v3493
    %3495 = vmatprep.mubr.bf16.mxu0 %v2833
    %3496 = vmatmul.mubr.bf16.gmra.mrb[0].mxu0 %v2832
    %v3497 = vpop.f32.mrb[0].mxu0
    %v3498 = vadd.f32 %v2769, %v3497
    %v3499 = vpop.f32.mrb[0].mxu0
    %v3500 = vadd.f32 %v2769, %v3499
    %v3501 = vpop.f32.mrb[0].mxu0
    %v3502 = vadd.f32 %v2774, %v3501
    %v3503 = vpop.f32.mrb[0].mxu0
    %v3504 = vadd.f32 %v2774, %v3503
    %3505 = vmatprep.mubr.bf16.mxu0 %v2836
    %3506 = vmatmul.mubr.bf16.gmra.mrb[0].mxu0 %v2835
    %v3507 = vpop.f32.mrb[0].mxu0
    %v3508 = vadd.f32 %v2779, %v3507
    %v3509 = vpop.f32.mrb[0].mxu0
    %v3510 = vadd.f32 %v2779, %v3509
    %v3511 = vpop.f32.mrb[0].mxu0
    %v3512 = vadd.f32 %v2784, %v3511
    %v3513 = vpop.f32.mrb[0].mxu0
    %v3514 = vadd.f32 %v2784, %v3513
    %3515 = vdwg.mxu0
    %3516 = vmatprep.subr.bf16.mxu0 %v2723
    %3517 = vmatpush1.bf16.msra.mxu0 %v2722
    %3518 = vmatprep.subr.bf16.mxu0 %v2735
    %3519 = vmatpush1.bf16.msra.mxu0 %v2734
    %3520 = vmatprep.subr.bf16.mxu0 0
    %3521 = vmatpush1.bf16.msra.mxu0 0
    %3522 = vmatprep.subr.bf16.mxu0 0
    %3523 = vmatpush1.bf16.msra.mxu0 0
    %3524 = vmatprep.subr.bf16.mxu0 0
    %3525 = vmatpush1.bf16.msra.mxu0 0
    %3526 = vmatprep.subr.bf16.mxu0 0
    %3527 = vmatpush1.bf16.msra.mxu0 0
    %3528 = vmatprep.subr.bf16.mxu0 0
    %3529 = vmatpush1.bf16.msra.mxu0 0
    %3530 = vmatprep.subr.bf16.mxu0 0
    %3531 = vmatpush1.bf16.msra.mxu0 0
    %3532 = vmatprep.subr.bf16.mxu0 0
    %3533 = vmatpush1.bf16.msra.mxu0 0
    %3534 = vmatprep.subr.bf16.mxu0 0
    %3535 = vmatpush1.bf16.msra.mxu0 0
    %3536 = vmatprep.subr.bf16.mxu0 0
    %3537 = vmatpush1.bf16.msra.mxu0 0
    %3538 = vmatprep.subr.bf16.mxu0 0
    %3539 = vmatpush1.bf16.msra.mxu0 0
    %3540 = vmatprep.subr.bf16.mxu0 0
    %3541 = vmatpush1.bf16.msra.mxu0 0
    %3542 = vmatprep.subr.bf16.mxu0 0
    %3543 = vmatpush1.bf16.msra.mxu0 0
    %3544 = vmatprep.subr.bf16.mxu0 0
    %3545 = vmatpush1.bf16.msra.mxu0 0
    %3546 = vmatprep.subr.bf16.mxu0 0
    %3547 = vmatpush1.bf16.msra.mxu0 0
    %3548 = vmatprep.mubr.bf16.mxu0 0
    %3549 = vmatmul.mubr.bf16.gmra.mrb[0].mxu0 %v2848
    %v3550 = vpop.f32.mrb[0].mxu0
    %v3551 = vadd.f32 %v3478, %v3550
    %v3552 = vpop.f32.mrb[0].mxu0
    %v3553 = vadd.f32 %v3480, %v3552
    %v3554 = vpop.f32.mrb[0].mxu0
    %v3555 = vadd.f32 %v3482, %v3554
    %v3556 = vpop.f32.mrb[0].mxu0
    %v3557 = vadd.f32 %v3484, %v3556
    %3558 = vmatprep.mubr.bf16.mxu0 0
    %3559 = vmatmul.mubr.bf16.gmra.mrb[0].mxu0 %v2851
    %v3560 = vpop.f32.mrb[0].mxu0
    %v3561 = vadd.f32 %v3488, %v3560
    %v3562 = vpop.f32.mrb[0].mxu0
    %v3563 = vadd.f32 %v3490, %v3562
    %v3564 = vpop.f32.mrb[0].mxu0
    %v3565 = vadd.f32 %v3492, %v3564
    %v3566 = vpop.f32.mrb[0].mxu0
    %v3567 = vadd.f32 %v3494, %v3566
    %3568 = vmatprep.mubr.bf16.mxu0 0
    %3569 = vmatmul.mubr.bf16.gmra.mrb[0].mxu0 %v2854
    %v3570 = vpop.f32.mrb[0].mxu0
    %v3571 = vadd.f32 %v3498, %v3570
    %v3572 = vpop.f32.mrb[0].mxu0
    %v3573 = vadd.f32 %v3500, %v3572
    %v3574 = vpop.f32.mrb[0].mxu0
    %v3575 = vadd.f32 %v3502, %v3574
    %v3576 = vpop.f32.mrb[0].mxu0
    %v3577 = vadd.f32 %v3504, %v3576
    %3578 = vmatprep.mubr.bf16.mxu0 0
    %3579 = vmatmul.mubr.bf16.gmra.mrb[0].mxu0 %v2857
    %v3580 = vpop.f32.mrb[0].mxu0
    %v3581 = vadd.f32 %v3508, %v3580
    %v3582 = vpop.f32.mrb[0].mxu0
    %v3583 = vadd.f32 %v3510, %v3582
    %v3584 = vpop.f32.mrb[0].mxu0
    %v3585 = vadd.f32 %v3512, %v3584
    %v3586 = vpop.f32.mrb[0].mxu0
    %v3587 = vadd.f32 %v3514, %v3586
    %3588 = vdwg.mxu0
    %3589 = vmatprep.subr.bf16.mxu0 %v2533
    %3590 = vmatpush1.bf16.msra.mxu0 %v2532
    %3591 = vmatprep.subr.bf16.mxu0 %v2545
    %3592 = vmatpush1.bf16.msra.mxu0 %v2544
    %3593 = vmatprep.subr.bf16.mxu0 %v2557
    %3594 = vmatpush1.bf16.msra.mxu0 %v2556
    %3595 = vmatprep.subr.bf16.mxu0 %v2569
    %3596 = vmatpush1.bf16.msra.mxu0 %v2568
    %3597 = vmatprep.subr.bf16.mxu0 %v2581
    %3598 = vmatpush1.bf16.msra.mxu0 %v2580
    %3599 = vmatprep.subr.bf16.mxu0 %v2593
    %3600 = vmatpush1.bf16.msra.mxu0 %v2592
    %3601 = vmatprep.subr.bf16.mxu0 %v2605
    %3602 = vmatpush1.bf16.msra.mxu0 %v2604
    %3603 = vmatprep.subr.bf16.mxu0 %v2617
    %3604 = vmatpush1.bf16.msra.mxu0 %v2616
    %3605 = vmatprep.subr.bf16.mxu0 %v2629
    %3606 = vmatpush1.bf16.msra.mxu0 %v2628
    %3607 = vmatprep.subr.bf16.mxu0 %v2641
    %3608 = vmatpush1.bf16.msra.mxu0 %v2640
    %3609 = vmatprep.subr.bf16.mxu0 %v2653
    %3610 = vmatpush1.bf16.msra.mxu0 %v2652
    %3611 = vmatprep.subr.bf16.mxu0 %v2665
    %3612 = vmatpush1.bf16.msra.mxu0 %v2664
    %3613 = vmatprep.subr.bf16.mxu0 %v2677
    %3614 = vmatpush1.bf16.msra.mxu0 %v2676
    %3615 = vmatprep.subr.bf16.mxu0 %v2689
    %3616 = vmatpush1.bf16.msra.mxu0 %v2688
    %3617 = vmatprep.subr.bf16.mxu0 %v2701
    %3618 = vmatpush1.bf16.msra.mxu0 %v2700
    %3619 = vmatprep.subr.bf16.mxu0 %v2713
    %3620 = vmatpush1.bf16.msra.mxu0 %v2712
    %3621 = vmatprep.mubr.bf16.mxu0 %v2827
    %3622 = vmatmul.mubr.bf16.gmra.mrb[0].mxu0 %v2826
    %v3623 = vpop.f32.mrb[0].mxu0
    %v3624 = vadd.f32 %v2749, %v3623
    %v3625 = vpop.f32.mrb[0].mxu0
    %v3626 = vadd.f32 %v2749, %v3625
    %v3627 = vpop.f32.mrb[0].mxu0
    %v3628 = vadd.f32 %v2754, %v3627
    %v3629 = vpop.f32.mrb[0].mxu0
    %v3630 = vadd.f32 %v2754, %v3629
    %3631 = vmatprep.mubr.bf16.mxu0 %v2830
    %3632 = vmatmul.mubr.bf16.gmra.mrb[0].mxu0 %v2829
    %v3633 = vpop.f32.mrb[0].mxu0
    %v3634 = vadd.f32 %v2759, %v3633
    %v3635 = vpop.f32.mrb[0].mxu0
    %v3636 = vadd.f32 %v2759, %v3635
    %v3637 = vpop.f32.mrb[0].mxu0
    %v3638 = vadd.f32 %v2764, %v3637
    %v3639 = vpop.f32.mrb[0].mxu0
    %v3640 = vadd.f32 %v2764, %v3639
    %3641 = vmatprep.mubr.bf16.mxu0 %v2833
    %3642 = vmatmul.mubr.bf16.gmra.mrb[0].mxu0 %v2832
    %v3643 = vpop.f32.mrb[0].mxu0
    %v3644 = vadd.f32 %v2769, %v3643
    %v3645 = vpop.f32.mrb[0].mxu0
    %v3646 = vadd.f32 %v2769, %v3645
    %v3647 = vpop.f32.mrb[0].mxu0
    %v3648 = vadd.f32 %v2774, %v3647
    %v3649 = vpop.f32.mrb[0].mxu0
    %v3650 = vadd.f32 %v2774, %v3649
    %3651 = vmatprep.mubr.bf16.mxu0 %v2836
    %3652 = vmatmul.mubr.bf16.gmra.mrb[0].mxu0 %v2835
    %v3653 = vpop.f32.mrb[0].mxu0
    %v3654 = vadd.f32 %v2779, %v3653
    %v3655 = vpop.f32.mrb[0].mxu0
    %v3656 = vadd.f32 %v2779, %v3655
    %v3657 = vpop.f32.mrb[0].mxu0
    %v3658 = vadd.f32 %v2784, %v3657
    %v3659 = vpop.f32.mrb[0].mxu0
    %v3660 = vadd.f32 %v2784, %v3659
    %3661 = vdwg.mxu0
    %3662 = vmatprep.subr.bf16.mxu0 %v2725
    %3663 = vmatpush1.bf16.msra.mxu0 %v2724
    %3664 = vmatprep.subr.bf16.mxu0 %v2737
    %3665 = vmatpush1.bf16.msra.mxu0 %v2736
    %3666 = vmatprep.subr.bf16.mxu0 0
    %3667 = vmatpush1.bf16.msra.mxu0 0
    %3668 = vmatprep.subr.bf16.mxu0 0
    %3669 = vmatpush1.bf16.msra.mxu0 0
    %3670 = vmatprep.subr.bf16.mxu0 0
    %3671 = vmatpush1.bf16.msra.mxu0 0
    %3672 = vmatprep.subr.bf16.mxu0 0
    %3673 = vmatpush1.bf16.msra.mxu0 0
    %3674 = vmatprep.subr.bf16.mxu0 0
    %3675 = vmatpush1.bf16.msra.mxu0 0
    %3676 = vmatprep.subr.bf16.mxu0 0
    %3677 = vmatpush1.bf16.msra.mxu0 0
    %3678 = vmatprep.subr.bf16.mxu0 0
    %3679 = vmatpush1.bf16.msra.mxu0 0
    %3680 = vmatprep.subr.bf16.mxu0 0
    %3681 = vmatpush1.bf16.msra.mxu0 0
    %3682 = vmatprep.subr.bf16.mxu0 0
    %3683 = vmatpush1.bf16.msra.mxu0 0
    %3684 = vmatprep.subr.bf16.mxu0 0
    %3685 = vmatpush1.bf16.msra.mxu0 0
    %3686 = vmatprep.subr.bf16.mxu0 0
    %3687 = vmatpush1.bf16.msra.mxu0 0
    %3688 = vmatprep.subr.bf16.mxu0 0
    %3689 = vmatpush1.bf16.msra.mxu0 0
    %3690 = vmatprep.subr.bf16.mxu0 0
    %3691 = vmatpush1.bf16.msra.mxu0 0
    %3692 = vmatprep.subr.bf16.mxu0 0
    %3693 = vmatpush1.bf16.msra.mxu0 0
    %3694 = vmatprep.mubr.bf16.mxu0 0
    %3695 = vmatmul.mubr.bf16.gmra.mrb[0].mxu0 %v2848
    %v3696 = vpop.f32.mrb[0].mxu0
    %v3697 = vadd.f32 %v3624, %v3696
    %v3698 = vpop.f32.mrb[0].mxu0
    %v3699 = vadd.f32 %v3626, %v3698
    %v3700 = vpop.f32.mrb[0].mxu0
    %v3701 = vadd.f32 %v3628, %v3700
    %v3702 = vpop.f32.mrb[0].mxu0
    %v3703 = vadd.f32 %v3630, %v3702
    %3704 = vmatprep.mubr.bf16.mxu0 0
    %3705 = vmatmul.mubr.bf16.gmra.mrb[0].mxu0 %v2851
    %v3706 = vpop.f32.mrb[0].mxu0
    %v3707 = vadd.f32 %v3634, %v3706
    %v3708 = vpop.f32.mrb[0].mxu0
    %v3709 = vadd.f32 %v3636, %v3708
    %v3710 = vpop.f32.mrb[0].mxu0
    %v3711 = vadd.f32 %v3638, %v3710
    %v3712 = vpop.f32.mrb[0].mxu0
    %v3713 = vadd.f32 %v3640, %v3712
    %3714 = vmatprep.mubr.bf16.mxu0 0
    %3715 = vmatmul.mubr.bf16.gmra.mrb[0].mxu0 %v2854
    %v3716 = vpop.f32.mrb[0].mxu0
    %v3717 = vadd.f32 %v3644, %v3716
    %v3718 = vpop.f32.mrb[0].mxu0
    %v3719 = vadd.f32 %v3646, %v3718
    %v3720 = vpop.f32.mrb[0].mxu0
    %v3721 = vadd.f32 %v3648, %v3720
    %v3722 = vpop.f32.mrb[0].mxu0
    %v3723 = vadd.f32 %v3650, %v3722
    %3724 = vmatprep.mubr.bf16.mxu0 0
    %3725 = vmatmul.mubr.bf16.gmra.mrb[0].mxu0 %v2857
    %v3726 = vpop.f32.mrb[0].mxu0
    %v3727 = vadd.f32 %v3654, %v3726
    %v3728 = vpop.f32.mrb[0].mxu0
    %v3729 = vadd.f32 %v3656, %v3728
    %v3730 = vpop.f32.mrb[0].mxu0
    %v3731 = vadd.f32 %v3658, %v3730
    %v3732 = vpop.f32.mrb[0].mxu0
    %v3733 = vadd.f32 %v3660, %v3732
    %3734 = vdwg.mxu0
    %v3735 = vmax.f32 %v2967, 0.0
    %v3736 = vmax.f32 %v2969, 0.0
    %v3737 = vmax.f32 %v3113, 0.0
    %v3738 = vmax.f32 %v3115, 0.0
    %v3739 = vmax.f32 %v3259, 0.0
    %v3740 = vmax.f32 %v3261, 0.0
    %v3741 = vmax.f32 %v3405, 0.0
    %v3742 = vmax.f32 %v3407, 0.0
    %v3743 = vmax.f32 %v3551, 0.0
    %v3744 = vmax.f32 %v3553, 0.0
    %v3745 = vmax.f32 %v3697, 0.0
    %v3746 = vmax.f32 %v3699, 0.0
    %v3747 = vmax.f32 %v2971, 0.0
    %v3748 = vmax.f32 %v2973, 0.0
    %v3749 = vmax.f32 %v3117, 0.0
    %v3750 = vmax.f32 %v3119, 0.0
    %v3751 = vmax.f32 %v3263, 0.0
    %v3752 = vmax.f32 %v3265, 0.0
    %v3753 = vmax.f32 %v3409, 0.0
    %v3754 = vmax.f32 %v3411, 0.0
    %v3755 = vmax.f32 %v3555, 0.0
    %v3756 = vmax.f32 %v3557, 0.0
    %v3757 = vmax.f32 %v3701, 0.0
    %v3758 = vmax.f32 %v3703, 0.0
    %v3759 = vmax.f32 %v2977, 0.0
    %v3760 = vmax.f32 %v2979, 0.0
    %v3761 = vmax.f32 %v3123, 0.0
    %v3762 = vmax.f32 %v3125, 0.0
    %v3763 = vmax.f32 %v3269, 0.0
    %v3764 = vmax.f32 %v3271, 0.0
    %v3765 = vmax.f32 %v3415, 0.0
    %v3766 = vmax.f32 %v3417, 0.0
    %v3767 = vmax.f32 %v3561, 0.0
    %v3768 = vmax.f32 %v3563, 0.0
    %v3769 = vmax.f32 %v3707, 0.0
    %v3770 = vmax.f32 %v3709, 0.0
    %v3771 = vmax.f32 %v2981, 0.0
    %v3772 = vmax.f32 %v2983, 0.0
    %v3773 = vmax.f32 %v3127, 0.0
    %v3774 = vmax.f32 %v3129, 0.0
    %v3775 = vmax.f32 %v3273, 0.0
    %v3776 = vmax.f32 %v3275, 0.0
    %v3777 = vmax.f32 %v3419, 0.0
    %v3778 = vmax.f32 %v3421, 0.0
    %v3779 = vmax.f32 %v3565, 0.0
    %v3780 = vmax.f32 %v3567, 0.0
    %v3781 = vmax.f32 %v3711, 0.0
    %v3782 = vmax.f32 %v3713, 0.0
    %v3783 = vmax.f32 %v2987, 0.0
    %v3784 = vmax.f32 %v2989, 0.0
    %v3785 = vmax.f32 %v3133, 0.0
    %v3786 = vmax.f32 %v3135, 0.0
    %v3787 = vmax.f32 %v3279, 0.0
    %v3788 = vmax.f32 %v3281, 0.0
    %v3789 = vmax.f32 %v3425, 0.0
    %v3790 = vmax.f32 %v3427, 0.0
    %v3791 = vmax.f32 %v3571, 0.0
    %v3792 = vmax.f32 %v3573, 0.0
    %v3793 = vmax.f32 %v3717, 0.0
    %v3794 = vmax.f32 %v3719, 0.0
    %v3795 = vmax.f32 %v2991, 0.0
    %v3796 = vmax.f32 %v2993, 0.0
    %v3797 = vmax.f32 %v3137, 0.0
    %v3798 = vmax.f32 %v3139, 0.0
    %v3799 = vmax.f32 %v3283, 0.0
    %v3800 = vmax.f32 %v3285, 0.0
    %v3801 = vmax.f32 %v3429, 0.0
    %v3802 = vmax.f32 %v3431, 0.0
    %v3803 = vmax.f32 %v3575, 0.0
    %v3804 = vmax.f32 %v3577, 0.0
    %v3805 = vmax.f32 %v3721, 0.0
    %v3806 = vmax.f32 %v3723, 0.0
    %v3807 = vmax.f32 %v2997, 0.0
    %v3808 = vmax.f32 %v2999, 0.0
    %v3809 = vmax.f32 %v3143, 0.0
    %v3810 = vmax.f32 %v3145, 0.0
    %v3811 = vmax.f32 %v3289, 0.0
    %v3812 = vmax.f32 %v3291, 0.0
    %v3813 = vmax.f32 %v3435, 0.0
    %v3814 = vmax.f32 %v3437, 0.0
    %v3815 = vmax.f32 %v3581, 0.0
    %v3816 = vmax.f32 %v3583, 0.0
    %v3817 = vmax.f32 %v3727, 0.0
    %v3818 = vmax.f32 %v3729, 0.0
    %v3819 = vmax.f32 %v3001, 0.0
    %v3820 = vmax.f32 %v3003, 0.0
    %v3821 = vmax.f32 %v3147, 0.0
    %v3822 = vmax.f32 %v3149, 0.0
    %v3823 = vmax.f32 %v3293, 0.0
    %v3824 = vmax.f32 %v3295, 0.0
    %v3825 = vmax.f32 %v3439, 0.0
    %v3826 = vmax.f32 %v3441, 0.0
    %v3827 = vmax.f32 %v3585, 0.0
    %v3828 = vmax.f32 %v3587, 0.0
    %v3829 = vmax.f32 %v3731, 0.0
    %v3830 = vmax.f32 %v3733, 0.0
    %3927 = vrot.lane.b32.xlu0 %v3735, 127
    %v3928 = vpop.permute.xlu0 %3927
    %3929 = vrot.lane.b32.xlu0 %v3736, 127
    %v3930 = vpop.permute.xlu0 %3929
    %3931 = vrot.lane.b32.xlu0 %v3737, 127
    %v3932 = vpop.permute.xlu0 %3931
    %3933 = vrot.lane.b32.xlu0 %v3738, 127
    %v3934 = vpop.permute.xlu0 %3933
    %3935 = vrot.lane.b32.xlu0 %v3739, 127
    %v3936 = vpop.permute.xlu0 %3935
    %3937 = vrot.lane.b32.xlu0 %v3740, 127
    %v3938 = vpop.permute.xlu0 %3937
    %3939 = vrot.lane.b32.xlu0 %v3741, 127
    %v3940 = vpop.permute.xlu0 %3939
    %3941 = vrot.lane.b32.xlu0 %v3742, 127
    %v3942 = vpop.permute.xlu0 %3941
    %3943 = vrot.lane.b32.xlu0 %v3743, 127
    %v3944 = vpop.permute.xlu0 %3943
    %3945 = vrot.lane.b32.xlu0 %v3744, 127
    %v3946 = vpop.permute.xlu0 %3945
    %3947 = vrot.lane.b32.xlu0 %v3745, 127
    %v3948 = vpop.permute.xlu0 %3947
    %3949 = vrot.lane.b32.xlu0 %v3746, 127
    %v3950 = vpop.permute.xlu0 %3949
    %3951 = vrot.lane.b32.xlu0 %v3747, 127
    %v3952 = vpop.permute.xlu0 %3951
    %3953 = vrot.lane.b32.xlu0 %v3748, 127
    %v3954 = vpop.permute.xlu0 %3953
    %3955 = vrot.lane.b32.xlu0 %v3749, 127
    %v3956 = vpop.permute.xlu0 %3955
    %3957 = vrot.lane.b32.xlu0 %v3750, 127
    %v3958 = vpop.permute.xlu0 %3957
    %3959 = vrot.lane.b32.xlu0 %v3751, 127
    %v3960 = vpop.permute.xlu0 %3959
    %3961 = vrot.lane.b32.xlu0 %v3752, 127
    %v3962 = vpop.permute.xlu0 %3961
    %3963 = vrot.lane.b32.xlu0 %v3753, 127
    %v3964 = vpop.permute.xlu0 %3963
    %3965 = vrot.lane.b32.xlu0 %v3754, 127
    %v3966 = vpop.permute.xlu0 %3965
    %3967 = vrot.lane.b32.xlu0 %v3755, 127
    %v3968 = vpop.permute.xlu0 %3967
    %3969 = vrot.lane.b32.xlu0 %v3756, 127
    %v3970 = vpop.permute.xlu0 %3969
    %3971 = vrot.lane.b32.xlu0 %v3757, 127
    %v3972 = vpop.permute.xlu0 %3971
    %3973 = vrot.lane.b32.xlu0 %v3758, 127
    %v3974 = vpop.permute.xlu0 %3973
    %3975 = vrot.lane.b32.xlu0 %v3759, 127
    %v3976 = vpop.permute.xlu0 %3975
    %3977 = vrot.lane.b32.xlu0 %v3760, 127
    %v3978 = vpop.permute.xlu0 %3977
    %3979 = vrot.lane.b32.xlu0 %v3761, 127
    %v3980 = vpop.permute.xlu0 %3979
    %3981 = vrot.lane.b32.xlu0 %v3762, 127
    %v3982 = vpop.permute.xlu0 %3981
    %3983 = vrot.lane.b32.xlu0 %v3763, 127
    %v3984 = vpop.permute.xlu0 %3983
    %3985 = vrot.lane.b32.xlu0 %v3764, 127
    %v3986 = vpop.permute.xlu0 %3985
    %3987 = vrot.lane.b32.xlu0 %v3765, 127
    %v3988 = vpop.permute.xlu0 %3987
    %3989 = vrot.lane.b32.xlu0 %v3766, 127
    %v3990 = vpop.permute.xlu0 %3989
    %3991 = vrot.lane.b32.xlu0 %v3767, 127
    %v3992 = vpop.permute.xlu0 %3991
    %3993 = vrot.lane.b32.xlu0 %v3768, 127
    %v3994 = vpop.permute.xlu0 %3993
    %3995 = vrot.lane.b32.xlu0 %v3769, 127
    %v3996 = vpop.permute.xlu0 %3995
    %3997 = vrot.lane.b32.xlu0 %v3770, 127
    %v3998 = vpop.permute.xlu0 %3997
    %3999 = vrot.lane.b32.xlu0 %v3771, 127
    %v4000 = vpop.permute.xlu0 %3999
    %4001 = vrot.lane.b32.xlu0 %v3772, 127
    %v4002 = vpop.permute.xlu0 %4001
    %4003 = vrot.lane.b32.xlu0 %v3773, 127
    %v4004 = vpop.permute.xlu0 %4003
    %4005 = vrot.lane.b32.xlu0 %v3774, 127
    %v4006 = vpop.permute.xlu0 %4005
    %4007 = vrot.lane.b32.xlu0 %v3775, 127
    %v4008 = vpop.permute.xlu0 %4007
    %4009 = vrot.lane.b32.xlu0 %v3776, 127
    %v4010 = vpop.permute.xlu0 %4009
    %4011 = vrot.lane.b32.xlu0 %v3777, 127
    %v4012 = vpop.permute.xlu0 %4011
    %4013 = vrot.lane.b32.xlu0 %v3778, 127
    %v4014 = vpop.permute.xlu0 %4013
    %4015 = vrot.lane.b32.xlu0 %v3779, 127
    %v4016 = vpop.permute.xlu0 %4015
    %4017 = vrot.lane.b32.xlu0 %v3780, 127
    %v4018 = vpop.permute.xlu0 %4017
    %4019 = vrot.lane.b32.xlu0 %v3781, 127
    %v4020 = vpop.permute.xlu0 %4019
    %4021 = vrot.lane.b32.xlu0 %v3782, 127
    %v4022 = vpop.permute.xlu0 %4021
    %4023 = vrot.lane.b32.xlu0 %v3783, 127
    %v4024 = vpop.permute.xlu0 %4023
    %4025 = vrot.lane.b32.xlu0 %v3784, 127
    %v4026 = vpop.permute.xlu0 %4025
    %4027 = vrot.lane.b32.xlu0 %v3785, 127
    %v4028 = vpop.permute.xlu0 %4027
    %4029 = vrot.lane.b32.xlu0 %v3786, 127
    %v4030 = vpop.permute.xlu0 %4029
    %4031 = vrot.lane.b32.xlu0 %v3787, 127
    %v4032 = vpop.permute.xlu0 %4031
    %4033 = vrot.lane.b32.xlu0 %v3788, 127
    %v4034 = vpop.permute.xlu0 %4033
    %4035 = vrot.lane.b32.xlu0 %v3789, 127
    %v4036 = vpop.permute.xlu0 %4035
    %4037 = vrot.lane.b32.xlu0 %v3790, 127
    %v4038 = vpop.permute.xlu0 %4037
    %4039 = vrot.lane.b32.xlu0 %v3791, 127
    %v4040 = vpop.permute.xlu0 %4039
    %4041 = vrot.lane.b32.xlu0 %v3792, 127
    %v4042 = vpop.permute.xlu0 %4041
    %4043 = vrot.lane.b32.xlu0 %v3793, 127
    %v4044 = vpop.permute.xlu0 %4043
    %4045 = vrot.lane.b32.xlu0 %v3794, 127
    %v4046 = vpop.permute.xlu0 %4045
    %4047 = vrot.lane.b32.xlu0 %v3795, 127
    %v4048 = vpop.permute.xlu0 %4047
    %4049 = vrot.lane.b32.xlu0 %v3796, 127
    %v4050 = vpop.permute.xlu0 %4049
    %4051 = vrot.lane.b32.xlu0 %v3797, 127
    %v4052 = vpop.permute.xlu0 %4051
    %4053 = vrot.lane.b32.xlu0 %v3798, 127
    %v4054 = vpop.permute.xlu0 %4053
    %4055 = vrot.lane.b32.xlu0 %v3799, 127
    %v4056 = vpop.permute.xlu0 %4055
    %4057 = vrot.lane.b32.xlu0 %v3800, 127
    %v4058 = vpop.permute.xlu0 %4057
    %4059 = vrot.lane.b32.xlu0 %v3801, 127
    %v4060 = vpop.permute.xlu0 %4059
    %4061 = vrot.lane.b32.xlu0 %v3802, 127
    %v4062 = vpop.permute.xlu0 %4061
    %4063 = vrot.lane.b32.xlu0 %v3803, 127
    %v4064 = vpop.permute.xlu0 %4063
    %4065 = vrot.lane.b32.xlu0 %v3804, 127
    %v4066 = vpop.permute.xlu0 %4065
    %4067 = vrot.lane.b32.xlu0 %v3805, 127
    %v4068 = vpop.permute.xlu0 %4067
    %4069 = vrot.lane.b32.xlu0 %v3806, 127
    %v4070 = vpop.permute.xlu0 %4069
    %4071 = vrot.lane.b32.xlu0 %v3807, 127
    %v4072 = vpop.permute.xlu0 %4071
    %4073 = vrot.lane.b32.xlu0 %v3808, 127
    %v4074 = vpop.permute.xlu0 %4073
    %4075 = vrot.lane.b32.xlu0 %v3809, 127
    %v4076 = vpop.permute.xlu0 %4075
    %4077 = vrot.lane.b32.xlu0 %v3810, 127
    %v4078 = vpop.permute.xlu0 %4077
    %4079 = vrot.lane.b32.xlu0 %v3811, 127
    %v4080 = vpop.permute.xlu0 %4079
    %4081 = vrot.lane.b32.xlu0 %v3812, 127
    %v4082 = vpop.permute.xlu0 %4081
    %4083 = vrot.lane.b32.xlu0 %v3813, 127
    %v4084 = vpop.permute.xlu0 %4083
    %4085 = vrot.lane.b32.xlu0 %v3814, 127
    %v4086 = vpop.permute.xlu0 %4085
    %4087 = vrot.lane.b32.xlu0 %v3815, 127
    %v4088 = vpop.permute.xlu0 %4087
    %4089 = vrot.lane.b32.xlu0 %v3816, 127
    %v4090 = vpop.permute.xlu0 %4089
    %4091 = vrot.lane.b32.xlu0 %v3817, 127
    %v4092 = vpop.permute.xlu0 %4091
    %4093 = vrot.lane.b32.xlu0 %v3818, 127
    %v4094 = vpop.permute.xlu0 %4093
    %4095 = vrot.lane.b32.xlu0 %v3819, 127
    %v4096 = vpop.permute.xlu0 %4095
    %4097 = vrot.lane.b32.xlu0 %v3820, 127
    %v4098 = vpop.permute.xlu0 %4097
    %4099 = vrot.lane.b32.xlu0 %v3821, 127
    %v4100 = vpop.permute.xlu0 %4099
    %4101 = vrot.lane.b32.xlu0 %v3822, 127
    %v4102 = vpop.permute.xlu0 %4101
    %4103 = vrot.lane.b32.xlu0 %v3823, 127
    %v4104 = vpop.permute.xlu0 %4103
    %4105 = vrot.lane.b32.xlu0 %v3824, 127
    %v4106 = vpop.permute.xlu0 %4105
    %4107 = vrot.lane.b32.xlu0 %v3825, 127
    %v4108 = vpop.permute.xlu0 %4107
    %4109 = vrot.lane.b32.xlu0 %v3826, 127
    %v4110 = vpop.permute.xlu0 %4109
    %4111 = vrot.lane.b32.xlu0 %v3827, 127
    %v4112 = vpop.permute.xlu0 %4111
    %4113 = vrot.lane.b32.xlu0 %v3828, 127
    %v4114 = vpop.permute.xlu0 %4113
    %4115 = vrot.lane.b32.xlu0 %v3829, 127
    %v4116 = vpop.permute.xlu0 %4115
    %4117 = vrot.lane.b32.xlu0 %v3830, 127
    %v4118 = vpop.permute.xlu0 %4117
    %v4119 = vsel %vm87, %v3928, %v3930
    %v4120 = vsel %vm87, %v3930, %v3932
    %v4121 = vsel %vm87, %v3932, %v3934
    %v4122 = vsel %vm87, %v3934, %v3936
    %v4123 = vsel %vm87, %v3936, %v3938
    %v4124 = vsel %vm87, %v3938, %v3940
    %v4125 = vsel %vm87, %v3940, %v3942
    %v4126 = vsel %vm87, %v3942, %v3944
    %v4127 = vsel %vm87, %v3944, %v3946
    %v4128 = vsel %vm87, %v3946, %v3948
    %v4129 = vsel %vm87, %v3948, %v3950
    %v4130 = vsel %vm87, %v3952, %v3954
    %v4131 = vsel %vm87, %v3954, %v3956
    %v4132 = vsel %vm87, %v3956, %v3958
    %v4133 = vsel %vm87, %v3958, %v3960
    %v4134 = vsel %vm87, %v3960, %v3962
    %v4135 = vsel %vm87, %v3962, %v3964
    %v4136 = vsel %vm87, %v3964, %v3966
    %v4137 = vsel %vm87, %v3966, %v3968
    %v4138 = vsel %vm87, %v3968, %v3970
    %v4139 = vsel %vm87, %v3970, %v3972
    %v4140 = vsel %vm87, %v3972, %v3974
    %v4141 = vsel %vm87, %v3976, %v3978
    %v4142 = vsel %vm87, %v3978, %v3980
    %v4143 = vsel %vm87, %v3980, %v3982
    %v4144 = vsel %vm87, %v3982, %v3984
    %v4145 = vsel %vm87, %v3984, %v3986
    %v4146 = vsel %vm87, %v3986, %v3988
    %v4147 = vsel %vm87, %v3988, %v3990
    %v4148 = vsel %vm87, %v3990, %v3992
    %v4149 = vsel %vm87, %v3992, %v3994
    %v4150 = vsel %vm87, %v3994, %v3996
    %v4151 = vsel %vm87, %v3996, %v3998
    %v4152 = vsel %vm87, %v4000, %v4002
    %v4153 = vsel %vm87, %v4002, %v4004
    %v4154 = vsel %vm87, %v4004, %v4006
    %v4155 = vsel %vm87, %v4006, %v4008
    %v4156 = vsel %vm87, %v4008, %v4010
    %v4157 = vsel %vm87, %v4010, %v4012
    %v4158 = vsel %vm87, %v4012, %v4014
    %v4159 = vsel %vm87, %v4014, %v4016
    %v4160 = vsel %vm87, %v4016, %v4018
    %v4161 = vsel %vm87, %v4018, %v4020
    %v4162 = vsel %vm87, %v4020, %v4022
    %v4163 = vsel %vm87, %v4024, %v4026
    %v4164 = vsel %vm87, %v4026, %v4028
    %v4165 = vsel %vm87, %v4028, %v4030
    %v4166 = vsel %vm87, %v4030, %v4032
    %v4167 = vsel %vm87, %v4032, %v4034
    %v4168 = vsel %vm87, %v4034, %v4036
    %v4169 = vsel %vm87, %v4036, %v4038
    %v4170 = vsel %vm87, %v4038, %v4040
    %v4171 = vsel %vm87, %v4040, %v4042
    %v4172 = vsel %vm87, %v4042, %v4044
    %v4173 = vsel %vm87, %v4044, %v4046
    %v4174 = vsel %vm87, %v4048, %v4050
    %v4175 = vsel %vm87, %v4050, %v4052
    %v4176 = vsel %vm87, %v4052, %v4054
    %v4177 = vsel %vm87, %v4054, %v4056
    %v4178 = vsel %vm87, %v4056, %v4058
    %v4179 = vsel %vm87, %v4058, %v4060
    %v4180 = vsel %vm87, %v4060, %v4062
    %v4181 = vsel %vm87, %v4062, %v4064
    %v4182 = vsel %vm87, %v4064, %v4066
    %v4183 = vsel %vm87, %v4066, %v4068
    %v4184 = vsel %vm87, %v4068, %v4070
    %v4185 = vsel %vm87, %v4072, %v4074
    %v4186 = vsel %vm87, %v4074, %v4076
    %v4187 = vsel %vm87, %v4076, %v4078
    %v4188 = vsel %vm87, %v4078, %v4080
    %v4189 = vsel %vm87, %v4080, %v4082
    %v4190 = vsel %vm87, %v4082, %v4084
    %v4191 = vsel %vm87, %v4084, %v4086
    %v4192 = vsel %vm87, %v4086, %v4088
    %v4193 = vsel %vm87, %v4088, %v4090
    %v4194 = vsel %vm87, %v4090, %v4092
    %v4195 = vsel %vm87, %v4092, %v4094
    %v4196 = vsel %vm87, %v4096, %v4098
    %v4197 = vsel %vm87, %v4098, %v4100
    %v4198 = vsel %vm87, %v4100, %v4102
    %v4199 = vsel %vm87, %v4102, %v4104
    %v4200 = vsel %vm87, %v4104, %v4106
    %v4201 = vsel %vm87, %v4106, %v4108
    %v4202 = vsel %vm87, %v4108, %v4110
    %v4203 = vsel %vm87, %v4110, %v4112
    %v4204 = vsel %vm87, %v4112, %v4114
    %v4205 = vsel %vm87, %v4114, %v4116
    %v4206 = vsel %vm87, %v4116, %v4118
    %v4303 = vmax.f32 %v3735, %v4119
    %v4304 = vmax.f32 %v3736, %v4120
    %v4305 = vmax.f32 %v3737, %v4121
    %v4306 = vmax.f32 %v3738, %v4122
    %v4307 = vmax.f32 %v3739, %v4123
    %v4308 = vmax.f32 %v3740, %v4124
    %v4309 = vmax.f32 %v3741, %v4125
    %v4310 = vmax.f32 %v3742, %v4126
    %v4311 = vmax.f32 %v3743, %v4127
    %v4312 = vmax.f32 %v3744, %v4128
    %v4313 = vmax.f32 %v3745, %v4129
    %v4314 = vmax.f32 %v3746, %v3950
    %v4315 = vmax.f32 %v3747, %v4130
    %v4316 = vmax.f32 %v3748, %v4131
    %v4317 = vmax.f32 %v3749, %v4132
    %v4318 = vmax.f32 %v3750, %v4133
    %v4319 = vmax.f32 %v3751, %v4134
    %v4320 = vmax.f32 %v3752, %v4135
    %v4321 = vmax.f32 %v3753, %v4136
    %v4322 = vmax.f32 %v3754, %v4137
    %v4323 = vmax.f32 %v3755, %v4138
    %v4324 = vmax.f32 %v3756, %v4139
    %v4325 = vmax.f32 %v3757, %v4140
    %v4326 = vmax.f32 %v3758, %v3974
    %v4327 = vmax.f32 %v3759, %v4141
    %v4328 = vmax.f32 %v3760, %v4142
    %v4329 = vmax.f32 %v3761, %v4143
    %v4330 = vmax.f32 %v3762, %v4144
    %v4331 = vmax.f32 %v3763, %v4145
    %v4332 = vmax.f32 %v3764, %v4146
    %v4333 = vmax.f32 %v3765, %v4147
    %v4334 = vmax.f32 %v3766, %v4148
    %v4335 = vmax.f32 %v3767, %v4149
    %v4336 = vmax.f32 %v3768, %v4150
    %v4337 = vmax.f32 %v3769, %v4151
    %v4338 = vmax.f32 %v3770, %v3998
    %v4339 = vmax.f32 %v3771, %v4152
    %v4340 = vmax.f32 %v3772, %v4153
    %v4341 = vmax.f32 %v3773, %v4154
    %v4342 = vmax.f32 %v3774, %v4155
    %v4343 = vmax.f32 %v3775, %v4156
    %v4344 = vmax.f32 %v3776, %v4157
    %v4345 = vmax.f32 %v3777, %v4158
    %v4346 = vmax.f32 %v3778, %v4159
    %v4347 = vmax.f32 %v3779, %v4160
    %v4348 = vmax.f32 %v3780, %v4161
    %v4349 = vmax.f32 %v3781, %v4162
    %v4350 = vmax.f32 %v3782, %v4022
    %v4351 = vmax.f32 %v3783, %v4163
    %v4352 = vmax.f32 %v3784, %v4164
    %v4353 = vmax.f32 %v3785, %v4165
    %v4354 = vmax.f32 %v3786, %v4166
    %v4355 = vmax.f32 %v3787, %v4167
    %v4356 = vmax.f32 %v3788, %v4168
    %v4357 = vmax.f32 %v3789, %v4169
    %v4358 = vmax.f32 %v3790, %v4170
    %v4359 = vmax.f32 %v3791, %v4171
    %v4360 = vmax.f32 %v3792, %v4172
    %v4361 = vmax.f32 %v3793, %v4173
    %v4362 = vmax.f32 %v3794, %v4046
    %v4363 = vmax.f32 %v3795, %v4174
    %v4364 = vmax.f32 %v3796, %v4175
    %v4365 = vmax.f32 %v3797, %v4176
    %v4366 = vmax.f32 %v3798, %v4177
    %v4367 = vmax.f32 %v3799, %v4178
    %v4368 = vmax.f32 %v3800, %v4179
    %v4369 = vmax.f32 %v3801, %v4180
    %v4370 = vmax.f32 %v3802, %v4181
    %v4371 = vmax.f32 %v3803, %v4182
    %v4372 = vmax.f32 %v3804, %v4183
    %v4373 = vmax.f32 %v3805, %v4184
    %v4374 = vmax.f32 %v3806, %v4070
    %v4375 = vmax.f32 %v3807, %v4185
    %v4376 = vmax.f32 %v3808, %v4186
    %v4377 = vmax.f32 %v3809, %v4187
    %v4378 = vmax.f32 %v3810, %v4188
    %v4379 = vmax.f32 %v3811, %v4189
    %v4380 = vmax.f32 %v3812, %v4190
    %v4381 = vmax.f32 %v3813, %v4191
    %v4382 = vmax.f32 %v3814, %v4192
    %v4383 = vmax.f32 %v3815, %v4193
    %v4384 = vmax.f32 %v3816, %v4194
    %v4385 = vmax.f32 %v3817, %v4195
    %v4386 = vmax.f32 %v3818, %v4094
    %v4387 = vmax.f32 %v3819, %v4196
    %v4388 = vmax.f32 %v3820, %v4197
    %v4389 = vmax.f32 %v3821, %v4198
    %v4390 = vmax.f32 %v3822, %v4199
    %v4391 = vmax.f32 %v3823, %v4200
    %v4392 = vmax.f32 %v3824, %v4201
    %v4393 = vmax.f32 %v3825, %v4202
    %v4394 = vmax.f32 %v3826, %v4203
    %v4395 = vmax.f32 %v3827, %v4204
    %v4396 = vmax.f32 %v3828, %v4205
    %v4397 = vmax.f32 %v3829, %v4206
    %v4398 = vmax.f32 %v3830, %v4118
    %4495 = vrot.lane.b32.xlu0 %v4303, 100
    %v4496 = vpop.permute.xlu0 %4495
    %4497 = vrot.lane.b32.xlu0 %v4304, 100
    %v4498 = vpop.permute.xlu0 %4497
    %4499 = vrot.lane.b32.xlu0 %v4305, 100
    %v4500 = vpop.permute.xlu0 %4499
    %4501 = vrot.lane.b32.xlu0 %v4306, 100
    %v4502 = vpop.permute.xlu0 %4501
    %4503 = vrot.lane.b32.xlu0 %v4307, 100
    %v4504 = vpop.permute.xlu0 %4503
    %4505 = vrot.lane.b32.xlu0 %v4308, 100
    %v4506 = vpop.permute.xlu0 %4505
    %4507 = vrot.lane.b32.xlu0 %v4309, 100
    %v4508 = vpop.permute.xlu0 %4507
    %4509 = vrot.lane.b32.xlu0 %v4310, 100
    %v4510 = vpop.permute.xlu0 %4509
    %4511 = vrot.lane.b32.xlu0 %v4311, 100
    %v4512 = vpop.permute.xlu0 %4511
    %4513 = vrot.lane.b32.xlu0 %v4312, 100
    %v4514 = vpop.permute.xlu0 %4513
    %4515 = vrot.lane.b32.xlu0 %v4313, 100
    %v4516 = vpop.permute.xlu0 %4515
    %4517 = vrot.lane.b32.xlu0 %v4314, 100
    %v4518 = vpop.permute.xlu0 %4517
    %4519 = vrot.lane.b32.xlu0 %v4315, 100
    %v4520 = vpop.permute.xlu0 %4519
    %4521 = vrot.lane.b32.xlu0 %v4316, 100
    %v4522 = vpop.permute.xlu0 %4521
    %4523 = vrot.lane.b32.xlu0 %v4317, 100
    %v4524 = vpop.permute.xlu0 %4523
    %4525 = vrot.lane.b32.xlu0 %v4318, 100
    %v4526 = vpop.permute.xlu0 %4525
    %4527 = vrot.lane.b32.xlu0 %v4319, 100
    %v4528 = vpop.permute.xlu0 %4527
    %4529 = vrot.lane.b32.xlu0 %v4320, 100
    %v4530 = vpop.permute.xlu0 %4529
    %4531 = vrot.lane.b32.xlu0 %v4321, 100
    %v4532 = vpop.permute.xlu0 %4531
    %4533 = vrot.lane.b32.xlu0 %v4322, 100
    %v4534 = vpop.permute.xlu0 %4533
    %4535 = vrot.lane.b32.xlu0 %v4323, 100
    %v4536 = vpop.permute.xlu0 %4535
    %4537 = vrot.lane.b32.xlu0 %v4324, 100
    %v4538 = vpop.permute.xlu0 %4537
    %4539 = vrot.lane.b32.xlu0 %v4325, 100
    %v4540 = vpop.permute.xlu0 %4539
    %4541 = vrot.lane.b32.xlu0 %v4326, 100
    %v4542 = vpop.permute.xlu0 %4541
    %4543 = vrot.lane.b32.xlu0 %v4327, 100
    %v4544 = vpop.permute.xlu0 %4543
    %4545 = vrot.lane.b32.xlu0 %v4328, 100
    %v4546 = vpop.permute.xlu0 %4545
    %4547 = vrot.lane.b32.xlu0 %v4329, 100
    %v4548 = vpop.permute.xlu0 %4547
    %4549 = vrot.lane.b32.xlu0 %v4330, 100
    %v4550 = vpop.permute.xlu0 %4549
    %4551 = vrot.lane.b32.xlu0 %v4331, 100
    %v4552 = vpop.permute.xlu0 %4551
    %4553 = vrot.lane.b32.xlu0 %v4332, 100
    %v4554 = vpop.permute.xlu0 %4553
    %4555 = vrot.lane.b32.xlu0 %v4333, 100
    %v4556 = vpop.permute.xlu0 %4555
    %4557 = vrot.lane.b32.xlu0 %v4334, 100
    %v4558 = vpop.permute.xlu0 %4557
    %4559 = vrot.lane.b32.xlu0 %v4335, 100
    %v4560 = vpop.permute.xlu0 %4559
    %4561 = vrot.lane.b32.xlu0 %v4336, 100
    %v4562 = vpop.permute.xlu0 %4561
    %4563 = vrot.lane.b32.xlu0 %v4337, 100
    %v4564 = vpop.permute.xlu0 %4563
    %4565 = vrot.lane.b32.xlu0 %v4338, 100
    %v4566 = vpop.permute.xlu0 %4565
    %4567 = vrot.lane.b32.xlu0 %v4339, 100
    %v4568 = vpop.permute.xlu0 %4567
    %4569 = vrot.lane.b32.xlu0 %v4340, 100
    %v4570 = vpop.permute.xlu0 %4569
    %4571 = vrot.lane.b32.xlu0 %v4341, 100
    %v4572 = vpop.permute.xlu0 %4571
    %4573 = vrot.lane.b32.xlu0 %v4342, 100
    %v4574 = vpop.permute.xlu0 %4573
    %4575 = vrot.lane.b32.xlu0 %v4343, 100
    %v4576 = vpop.permute.xlu0 %4575
    %4577 = vrot.lane.b32.xlu0 %v4344, 100
    %v4578 = vpop.permute.xlu0 %4577
    %4579 = vrot.lane.b32.xlu0 %v4345, 100
    %v4580 = vpop.permute.xlu0 %4579
    %4581 = vrot.lane.b32.xlu0 %v4346, 100
    %v4582 = vpop.permute.xlu0 %4581
    %4583 = vrot.lane.b32.xlu0 %v4347, 100
    %v4584 = vpop.permute.xlu0 %4583
    %4585 = vrot.lane.b32.xlu0 %v4348, 100
    %v4586 = vpop.permute.xlu0 %4585
    %4587 = vrot.lane.b32.xlu0 %v4349, 100
    %v4588 = vpop.permute.xlu0 %4587
    %4589 = vrot.lane.b32.xlu0 %v4350, 100
    %v4590 = vpop.permute.xlu0 %4589
    %4591 = vrot.lane.b32.xlu0 %v4351, 100
    %v4592 = vpop.permute.xlu0 %4591
    %4593 = vrot.lane.b32.xlu0 %v4352, 100
    %v4594 = vpop.permute.xlu0 %4593
    %4595 = vrot.lane.b32.xlu0 %v4353, 100
    %v4596 = vpop.permute.xlu0 %4595
    %4597 = vrot.lane.b32.xlu0 %v4354, 100
    %v4598 = vpop.permute.xlu0 %4597
    %4599 = vrot.lane.b32.xlu0 %v4355, 100
    %v4600 = vpop.permute.xlu0 %4599
    %4601 = vrot.lane.b32.xlu0 %v4356, 100
    %v4602 = vpop.permute.xlu0 %4601
    %4603 = vrot.lane.b32.xlu0 %v4357, 100
    %v4604 = vpop.permute.xlu0 %4603
    %4605 = vrot.lane.b32.xlu0 %v4358, 100
    %v4606 = vpop.permute.xlu0 %4605
    %4607 = vrot.lane.b32.xlu0 %v4359, 100
    %v4608 = vpop.permute.xlu0 %4607
    %4609 = vrot.lane.b32.xlu0 %v4360, 100
    %v4610 = vpop.permute.xlu0 %4609
    %4611 = vrot.lane.b32.xlu0 %v4361, 100
    %v4612 = vpop.permute.xlu0 %4611
    %4613 = vrot.lane.b32.xlu0 %v4362, 100
    %v4614 = vpop.permute.xlu0 %4613
    %4615 = vrot.lane.b32.xlu0 %v4363, 100
    %v4616 = vpop.permute.xlu0 %4615
    %4617 = vrot.lane.b32.xlu0 %v4364, 100
    %v4618 = vpop.permute.xlu0 %4617
    %4619 = vrot.lane.b32.xlu0 %v4365, 100
    %v4620 = vpop.permute.xlu0 %4619
    %4621 = vrot.lane.b32.xlu0 %v4366, 100
    %v4622 = vpop.permute.xlu0 %4621
    %4623 = vrot.lane.b32.xlu0 %v4367, 100
    %v4624 = vpop.permute.xlu0 %4623
    %4625 = vrot.lane.b32.xlu0 %v4368, 100
    %v4626 = vpop.permute.xlu0 %4625
    %4627 = vrot.lane.b32.xlu0 %v4369, 100
    %v4628 = vpop.permute.xlu0 %4627
    %4629 = vrot.lane.b32.xlu0 %v4370, 100
    %v4630 = vpop.permute.xlu0 %4629
    %4631 = vrot.lane.b32.xlu0 %v4371, 100
    %v4632 = vpop.permute.xlu0 %4631
    %4633 = vrot.lane.b32.xlu0 %v4372, 100
    %v4634 = vpop.permute.xlu0 %4633
    %4635 = vrot.lane.b32.xlu0 %v4373, 100
    %v4636 = vpop.permute.xlu0 %4635
    %4637 = vrot.lane.b32.xlu0 %v4374, 100
    %v4638 = vpop.permute.xlu0 %4637
    %4639 = vrot.lane.b32.xlu0 %v4375, 100
    %v4640 = vpop.permute.xlu0 %4639
    %4641 = vrot.lane.b32.xlu0 %v4376, 100
    %v4642 = vpop.permute.xlu0 %4641
    %4643 = vrot.lane.b32.xlu0 %v4377, 100
    %v4644 = vpop.permute.xlu0 %4643
    %4645 = vrot.lane.b32.xlu0 %v4378, 100
    %v4646 = vpop.permute.xlu0 %4645
    %4647 = vrot.lane.b32.xlu0 %v4379, 100
    %v4648 = vpop.permute.xlu0 %4647
    %4649 = vrot.lane.b32.xlu0 %v4380, 100
    %v4650 = vpop.permute.xlu0 %4649
    %4651 = vrot.lane.b32.xlu0 %v4381, 100
    %v4652 = vpop.permute.xlu0 %4651
    %4653 = vrot.lane.b32.xlu0 %v4382, 100
    %v4654 = vpop.permute.xlu0 %4653
    %4655 = vrot.lane.b32.xlu0 %v4383, 100
    %v4656 = vpop.permute.xlu0 %4655
    %4657 = vrot.lane.b32.xlu0 %v4384, 100
    %v4658 = vpop.permute.xlu0 %4657
    %4659 = vrot.lane.b32.xlu0 %v4385, 100
    %v4660 = vpop.permute.xlu0 %4659
    %4661 = vrot.lane.b32.xlu0 %v4386, 100
    %v4662 = vpop.permute.xlu0 %4661
    %4663 = vrot.lane.b32.xlu0 %v4387, 100
    %v4664 = vpop.permute.xlu0 %4663
    %4665 = vrot.lane.b32.xlu0 %v4388, 100
    %v4666 = vpop.permute.xlu0 %4665
    %4667 = vrot.lane.b32.xlu0 %v4389, 100
    %v4668 = vpop.permute.xlu0 %4667
    %4669 = vrot.lane.b32.xlu0 %v4390, 100
    %v4670 = vpop.permute.xlu0 %4669
    %4671 = vrot.lane.b32.xlu0 %v4391, 100
    %v4672 = vpop.permute.xlu0 %4671
    %4673 = vrot.lane.b32.xlu0 %v4392, 100
    %v4674 = vpop.permute.xlu0 %4673
    %4675 = vrot.lane.b32.xlu0 %v4393, 100
    %v4676 = vpop.permute.xlu0 %4675
    %4677 = vrot.lane.b32.xlu0 %v4394, 100
    %v4678 = vpop.permute.xlu0 %4677
    %4679 = vrot.lane.b32.xlu0 %v4395, 100
    %v4680 = vpop.permute.xlu0 %4679
    %4681 = vrot.lane.b32.xlu0 %v4396, 100
    %v4682 = vpop.permute.xlu0 %4681
    %4683 = vrot.lane.b32.xlu0 %v4397, 100
    %v4684 = vpop.permute.xlu0 %4683
    %4685 = vrot.lane.b32.xlu0 %v4398, 100
    %v4686 = vpop.permute.xlu0 %4685
    %v4687 = vsel %vm131, %v4496, %v4498
    %v4688 = vsel %vm131, %v4498, %v4500
    %v4689 = vsel %vm131, %v4500, %v4502
    %v4690 = vsel %vm131, %v4502, %v4504
    %v4691 = vsel %vm131, %v4504, %v4506
    %v4692 = vsel %vm131, %v4506, %v4508
    %v4693 = vsel %vm131, %v4508, %v4510
    %v4694 = vsel %vm131, %v4510, %v4512
    %v4695 = vsel %vm131, %v4512, %v4514
    %v4696 = vsel %vm131, %v4514, %v4516
    %v4697 = vsel %vm131, %v4516, %v4518
    %v4698 = vsel %vm131, %v4520, %v4522
    %v4699 = vsel %vm131, %v4522, %v4524
    %v4700 = vsel %vm131, %v4524, %v4526
    %v4701 = vsel %vm131, %v4526, %v4528
    %v4702 = vsel %vm131, %v4528, %v4530
    %v4703 = vsel %vm131, %v4530, %v4532
    %v4704 = vsel %vm131, %v4532, %v4534
    %v4705 = vsel %vm131, %v4534, %v4536
    %v4706 = vsel %vm131, %v4536, %v4538
    %v4707 = vsel %vm131, %v4538, %v4540
    %v4708 = vsel %vm131, %v4540, %v4542
    %v4709 = vsel %vm131, %v4544, %v4546
    %v4710 = vsel %vm131, %v4546, %v4548
    %v4711 = vsel %vm131, %v4548, %v4550
    %v4712 = vsel %vm131, %v4550, %v4552
    %v4713 = vsel %vm131, %v4552, %v4554
    %v4714 = vsel %vm131, %v4554, %v4556
    %v4715 = vsel %vm131, %v4556, %v4558
    %v4716 = vsel %vm131, %v4558, %v4560
    %v4717 = vsel %vm131, %v4560, %v4562
    %v4718 = vsel %vm131, %v4562, %v4564
    %v4719 = vsel %vm131, %v4564, %v4566
    %v4720 = vsel %vm131, %v4568, %v4570
    %v4721 = vsel %vm131, %v4570, %v4572
    %v4722 = vsel %vm131, %v4572, %v4574
    %v4723 = vsel %vm131, %v4574, %v4576
    %v4724 = vsel %vm131, %v4576, %v4578
    %v4725 = vsel %vm131, %v4578, %v4580
    %v4726 = vsel %vm131, %v4580, %v4582
    %v4727 = vsel %vm131, %v4582, %v4584
    %v4728 = vsel %vm131, %v4584, %v4586
    %v4729 = vsel %vm131, %v4586, %v4588
    %v4730 = vsel %vm131, %v4588, %v4590
    %v4731 = vsel %vm131, %v4592, %v4594
    %v4732 = vsel %vm131, %v4594, %v4596
    %v4733 = vsel %vm131, %v4596, %v4598
    %v4734 = vsel %vm131, %v4598, %v4600
    %v4735 = vsel %vm131, %v4600, %v4602
    %v4736 = vsel %vm131, %v4602, %v4604
    %v4737 = vsel %vm131, %v4604, %v4606
    %v4738 = vsel %vm131, %v4606, %v4608
    %v4739 = vsel %vm131, %v4608, %v4610
    %v4740 = vsel %vm131, %v4610, %v4612
    %v4741 = vsel %vm131, %v4612, %v4614
    %v4742 = vsel %vm131, %v4616, %v4618
    %v4743 = vsel %vm131, %v4618, %v4620
    %v4744 = vsel %vm131, %v4620, %v4622
    %v4745 = vsel %vm131, %v4622, %v4624
    %v4746 = vsel %vm131, %v4624, %v4626
    %v4747 = vsel %vm131, %v4626, %v4628
    %v4748 = vsel %vm131, %v4628, %v4630
    %v4749 = vsel %vm131, %v4630, %v4632
    %v4750 = vsel %vm131, %v4632, %v4634
    %v4751 = vsel %vm131, %v4634, %v4636
    %v4752 = vsel %vm131, %v4636, %v4638
    %v4753 = vsel %vm131, %v4640, %v4642
    %v4754 = vsel %vm131, %v4642, %v4644
    %v4755 = vsel %vm131, %v4644, %v4646
    %v4756 = vsel %vm131, %v4646, %v4648
    %v4757 = vsel %vm131, %v4648, %v4650
    %v4758 = vsel %vm131, %v4650, %v4652
    %v4759 = vsel %vm131, %v4652, %v4654
    %v4760 = vsel %vm131, %v4654, %v4656
    %v4761 = vsel %vm131, %v4656, %v4658
    %v4762 = vsel %vm131, %v4658, %v4660
    %v4763 = vsel %vm131, %v4660, %v4662
    %v4764 = vsel %vm131, %v4664, %v4666
    %v4765 = vsel %vm131, %v4666, %v4668
    %v4766 = vsel %vm131, %v4668, %v4670
    %v4767 = vsel %vm131, %v4670, %v4672
    %v4768 = vsel %vm131, %v4672, %v4674
    %v4769 = vsel %vm131, %v4674, %v4676
    %v4770 = vsel %vm131, %v4676, %v4678
    %v4771 = vsel %vm131, %v4678, %v4680
    %v4772 = vsel %vm131, %v4680, %v4682
    %v4773 = vsel %vm131, %v4682, %v4684
    %v4774 = vsel %vm131, %v4684, %v4686
    %v4871 = vmax.f32 %v4303, %v4687
    %v4872 = vmax.f32 %v4304, %v4688
    %v4873 = vmax.f32 %v4305, %v4689
    %v4874 = vmax.f32 %v4306, %v4690
    %v4875 = vmax.f32 %v4307, %v4691
    %v4876 = vmax.f32 %v4308, %v4692
    %v4877 = vmax.f32 %v4309, %v4693
    %v4878 = vmax.f32 %v4310, %v4694
    %v4879 = vmax.f32 %v4311, %v4695
    %v4880 = vmax.f32 %v4312, %v4696
    %v4881 = vmax.f32 %v4313, %v4697
    %v4882 = vmax.f32 %v4314, %v4518
    %v4883 = vmax.f32 %v4315, %v4698
    %v4884 = vmax.f32 %v4316, %v4699
    %v4885 = vmax.f32 %v4317, %v4700
    %v4886 = vmax.f32 %v4318, %v4701
    %v4887 = vmax.f32 %v4319, %v4702
    %v4888 = vmax.f32 %v4320, %v4703
    %v4889 = vmax.f32 %v4321, %v4704
    %v4890 = vmax.f32 %v4322, %v4705
    %v4891 = vmax.f32 %v4323, %v4706
    %v4892 = vmax.f32 %v4324, %v4707
    %v4893 = vmax.f32 %v4325, %v4708
    %v4894 = vmax.f32 %v4326, %v4542
    %v4895 = vmax.f32 %v4327, %v4709
    %v4896 = vmax.f32 %v4328, %v4710
    %v4897 = vmax.f32 %v4329, %v4711
    %v4898 = vmax.f32 %v4330, %v4712
    %v4899 = vmax.f32 %v4331, %v4713
    %v4900 = vmax.f32 %v4332, %v4714
    %v4901 = vmax.f32 %v4333, %v4715
    %v4902 = vmax.f32 %v4334, %v4716
    %v4903 = vmax.f32 %v4335, %v4717
    %v4904 = vmax.f32 %v4336, %v4718
    %v4905 = vmax.f32 %v4337, %v4719
    %v4906 = vmax.f32 %v4338, %v4566
    %v4907 = vmax.f32 %v4339, %v4720
    %v4908 = vmax.f32 %v4340, %v4721
    %v4909 = vmax.f32 %v4341, %v4722
    %v4910 = vmax.f32 %v4342, %v4723
    %v4911 = vmax.f32 %v4343, %v4724
    %v4912 = vmax.f32 %v4344, %v4725
    %v4913 = vmax.f32 %v4345, %v4726
    %v4914 = vmax.f32 %v4346, %v4727
    %v4915 = vmax.f32 %v4347, %v4728
    %v4916 = vmax.f32 %v4348, %v4729
    %v4917 = vmax.f32 %v4349, %v4730
    %v4918 = vmax.f32 %v4350, %v4590
    %v4919 = vmax.f32 %v4351, %v4731
    %v4920 = vmax.f32 %v4352, %v4732
    %v4921 = vmax.f32 %v4353, %v4733
    %v4922 = vmax.f32 %v4354, %v4734
    %v4923 = vmax.f32 %v4355, %v4735
    %v4924 = vmax.f32 %v4356, %v4736
    %v4925 = vmax.f32 %v4357, %v4737
    %v4926 = vmax.f32 %v4358, %v4738
    %v4927 = vmax.f32 %v4359, %v4739
    %v4928 = vmax.f32 %v4360, %v4740
    %v4929 = vmax.f32 %v4361, %v4741
    %v4930 = vmax.f32 %v4362, %v4614
    %v4931 = vmax.f32 %v4363, %v4742
    %v4932 = vmax.f32 %v4364, %v4743
    %v4933 = vmax.f32 %v4365, %v4744
    %v4934 = vmax.f32 %v4366, %v4745
    %v4935 = vmax.f32 %v4367, %v4746
    %v4936 = vmax.f32 %v4368, %v4747
    %v4937 = vmax.f32 %v4369, %v4748
    %v4938 = vmax.f32 %v4370, %v4749
    %v4939 = vmax.f32 %v4371, %v4750
    %v4940 = vmax.f32 %v4372, %v4751
    %v4941 = vmax.f32 %v4373, %v4752
    %v4942 = vmax.f32 %v4374, %v4638
    %v4943 = vmax.f32 %v4375, %v4753
    %v4944 = vmax.f32 %v4376, %v4754
    %v4945 = vmax.f32 %v4377, %v4755
    %v4946 = vmax.f32 %v4378, %v4756
    %v4947 = vmax.f32 %v4379, %v4757
    %v4948 = vmax.f32 %v4380, %v4758
    %v4949 = vmax.f32 %v4381, %v4759
    %v4950 = vmax.f32 %v4382, %v4760
    %v4951 = vmax.f32 %v4383, %v4761
    %v4952 = vmax.f32 %v4384, %v4762
    %v4953 = vmax.f32 %v4385, %v4763
    %v4954 = vmax.f32 %v4386, %v4662
    %v4955 = vmax.f32 %v4387, %v4764
    %v4956 = vmax.f32 %v4388, %v4765
    %v4957 = vmax.f32 %v4389, %v4766
    %v4958 = vmax.f32 %v4390, %v4767
    %v4959 = vmax.f32 %v4391, %v4768
    %v4960 = vmax.f32 %v4392, %v4769
    %v4961 = vmax.f32 %v4393, %v4770
    %v4962 = vmax.f32 %v4394, %v4771
    %v4963 = vmax.f32 %v4395, %v4772
    %v4964 = vmax.f32 %v4396, %v4773
    %v4965 = vmax.f32 %v4397, %v4774
    %v4966 = vmax.f32 %v4398, %v4686
    %v4967 = vpack.c.bf16 %v4883, %v4871
    %v4968 = vpack.c.bf16 %v4884, %v4872
    %v4969 = vpack.c.bf16 %v4885, %v4873
    %v4970 = vpack.c.bf16 %v4886, %v4874
    %v4971 = vpack.c.bf16 %v4887, %v4875
    %v4972 = vpack.c.bf16 %v4888, %v4876
    %v4973 = vpack.c.bf16 %v4889, %v4877
    %v4974 = vpack.c.bf16 %v4890, %v4878
    %v4975 = vpack.c.bf16 %v4891, %v4879
    %v4976 = vpack.c.bf16 %v4892, %v4880
    %v4977 = vpack.c.bf16 %v4893, %v4881
    %v4978 = vpack.c.bf16 %v4894, %v4882
    %v4979 = vpack.c.bf16 %v4907, %v4895
    %v4980 = vpack.c.bf16 %v4908, %v4896
    %v4981 = vpack.c.bf16 %v4909, %v4897
    %v4982 = vpack.c.bf16 %v4910, %v4898
    %v4983 = vpack.c.bf16 %v4911, %v4899
    %v4984 = vpack.c.bf16 %v4912, %v4900
    %v4985 = vpack.c.bf16 %v4913, %v4901
    %v4986 = vpack.c.bf16 %v4914, %v4902
    %v4987 = vpack.c.bf16 %v4915, %v4903
    %v4988 = vpack.c.bf16 %v4916, %v4904
    %v4989 = vpack.c.bf16 %v4917, %v4905
    %v4990 = vpack.c.bf16 %v4918, %v4906
    %v4991 = vpack.c.bf16 %v4931, %v4919
    %v4992 = vpack.c.bf16 %v4932, %v4920
    %v4993 = vpack.c.bf16 %v4933, %v4921
    %v4994 = vpack.c.bf16 %v4934, %v4922
    %v4995 = vpack.c.bf16 %v4935, %v4923
    %v4996 = vpack.c.bf16 %v4936, %v4924
    %v4997 = vpack.c.bf16 %v4937, %v4925
    %v4998 = vpack.c.bf16 %v4938, %v4926
    %v4999 = vpack.c.bf16 %v4939, %v4927
    %v5000 = vpack.c.bf16 %v4940, %v4928
    %v5001 = vpack.c.bf16 %v4941, %v4929
    %v5002 = vpack.c.bf16 %v4942, %v4930
    %v5003 = vpack.c.bf16 %v4955, %v4943
    %v5004 = vpack.c.bf16 %v4956, %v4944
    %v5005 = vpack.c.bf16 %v4957, %v4945
    %v5006 = vpack.c.bf16 %v4958, %v4946
    %v5007 = vpack.c.bf16 %v4959, %v4947
    %v5008 = vpack.c.bf16 %v4960, %v4948
    %v5009 = vpack.c.bf16 %v4961, %v4949
    %v5010 = vpack.c.bf16 %v4962, %v4950
    %v5011 = vpack.c.bf16 %v4963, %v4951
    %v5012 = vpack.c.bf16 %v4964, %v4952
    %v5013 = vpack.c.bf16 %v4965, %v4953
    %v5014 = vpack.c.bf16 %v4966, %v4954
    %v5015 = vld [vmem:[%s5] sm:$0xff]
    %v5016 = vld [vmem:[%s5 + $0x8] sm:$0xf]
    %v5017 = vld [vmem:[%s5 + $0xc] sm:$0xff]
    %v5018 = vld [vmem:[%s5 + $0x14] sm:$0xf]
    %v5019 = vld [vmem:[%s5 + $0x18] sm:$0xff]
    %v5020 = vld [vmem:[%s5 + $0x20] sm:$0xf]
    %v5021 = vld [vmem:[%s5 + $0x24] sm:$0xff]
    %v5022 = vld [vmem:[%s5 + $0x2c] sm:$0xf]
    %v5023 = vld [vmem:[%s5 + $0x30] sm:$0xff]
    %v5024 = vld [vmem:[%s5 + $0x38] sm:$0xf]
    %v5025 = vld [vmem:[%s5 + $0x3c] sm:$0xff]
    %v5026 = vld [vmem:[%s5 + $0x44] sm:$0xf]
    %v5027 = vld [vmem:[%s5 + $0x48] sm:$0xff]
    %v5028 = vld [vmem:[%s5 + $0x50] sm:$0xf]
    %v5029 = vld [vmem:[%s5 + $0x54] sm:$0xff]
    %v5030 = vld [vmem:[%s5 + $0x5c] sm:$0xf]
    %v5031 = vld [vmem:[%s5 + $0x60] sm:$0xff]
    %v5032 = vld [vmem:[%s5 + $0x68] sm:$0xf]
    %v5033 = vld [vmem:[%s5 + $0x6c] sm:$0xff]
    %v5034 = vld [vmem:[%s5 + $0x74] sm:$0xf]
    %v5035 = vld [vmem:[%s5 + $0x78] sm:$0xff]
    %v5036 = vld [vmem:[%s5 + $0x80] sm:$0xf]
    %v5037 = vld [vmem:[%s5 + $0x84] sm:$0xff]
    %v5038 = vld [vmem:[%s5 + $0x8c] sm:$0xf]
    %v5039 = vld [vmem:[%s5 + $0x90] sm:$0xff]
    %v5040 = vld [vmem:[%s5 + $0x98] sm:$0xf]
    %v5041 = vld [vmem:[%s5 + $0x9c] sm:$0xff]
    %v5042 = vld [vmem:[%s5 + $0xa4] sm:$0xf]
    %v5043 = vld [vmem:[%s5 + $0xa8] sm:$0xff]
    %v5044 = vld [vmem:[%s5 + $0xb0] sm:$0xf]
    %v5045 = vld [vmem:[%s5 + $0xb4] sm:$0xff]
    %v5046 = vld [vmem:[%s5 + $0xbc] sm:$0xf]
    %v5047 = vld [vmem:[%s5 + $0xc0] sm:$0xff]
    %v5048 = vld [vmem:[%s5 + $0xc8] sm:$0xf]
    %v5049 = vld [vmem:[%s5 + $0xcc] sm:$0xff]
    %v5050 = vld [vmem:[%s5 + $0xd4] sm:$0xf]
    %v5051 = vld [vmem:[%s5 + $0xd8] sm:$0xff]
    %v5052 = vld [vmem:[%s5 + $0xe0] sm:$0xf]
    %v5053 = vld [vmem:[%s5 + $0xe4] sm:$0xff]
    %v5054 = vld [vmem:[%s5 + $0xec] sm:$0xf]
    %v5055 = vld [vmem:[%s5 + $0xf0] sm:$0xff]
    %v5056 = vld [vmem:[%s5 + $0xf8] sm:$0xf]
    %v5057 = vld [vmem:[%s5 + $0xfc] sm:$0xff]
    %v5058 = vld [vmem:[%s5 + $0x104] sm:$0xf]
    %v5059 = vld [vmem:[%s5 + $0x108] sm:$0xff]
    %v5060 = vld [vmem:[%s5 + $0x110] sm:$0xf]
    %v5061 = vld [vmem:[%s5 + $0x114] sm:$0xff]
    %v5062 = vld [vmem:[%s5 + $0x11c] sm:$0xf]
    %v5063 = vld [vmem:[%s5 + $0x120] sm:$0xff]
    %v5064 = vld [vmem:[%s5 + $0x128] sm:$0xf]
    %v5065 = vld [vmem:[%s5 + $0x12c] sm:$0xff]
    %v5066 = vld [vmem:[%s5 + $0x134] sm:$0xf]
    %v5067 = vld [vmem:[%s5 + $0x138] sm:$0xff]
    %v5068 = vld [vmem:[%s5 + $0x140] sm:$0xf]
    %v5069 = vld [vmem:[%s5 + $0x144] sm:$0xff]
    %v5070 = vld [vmem:[%s5 + $0x14c] sm:$0xf]
    %v5071 = vld [vmem:[%s5 + $0x150] sm:$0xff]
    %v5072 = vld [vmem:[%s5 + $0x158] sm:$0xf]
    %v5073 = vld [vmem:[%s5 + $0x15c] sm:$0xff]
    %v5074 = vld [vmem:[%s5 + $0x164] sm:$0xf]
    %v5075 = vld [vmem:[%s5 + $0x168] sm:$0xff]
    %v5076 = vld [vmem:[%s5 + $0x170] sm:$0xf]
    %v5077 = vld [vmem:[%s5 + $0x174] sm:$0xff]
    %v5078 = vld [vmem:[%s5 + $0x17c] sm:$0xf]
    %v5079 = vld [vmem:[%s5 + $0x180] sm:$0xff]
    %v5080 = vld [vmem:[%s5 + $0x188] sm:$0xf]
    %v5081 = vld [vmem:[%s5 + $0x18c] sm:$0xff]
    %v5082 = vld [vmem:[%s5 + $0x194] sm:$0xf]
    %v5083 = vld [vmem:[%s5 + $0x198] sm:$0xff]
    %v5084 = vld [vmem:[%s5 + $0x1a0] sm:$0xf]
    %v5085 = vld [vmem:[%s5 + $0x1a4] sm:$0xff]
    %v5086 = vld [vmem:[%s5 + $0x1ac] sm:$0xf]
    %v5087 = vld [vmem:[%s5 + $0x1b0] sm:$0xff]
    %v5088 = vld [vmem:[%s5 + $0x1b8] sm:$0xf]
    %v5089 = vld [vmem:[%s5 + $0x1bc] sm:$0xff]
    %v5090 = vld [vmem:[%s5 + $0x1c4] sm:$0xf]
    %v5091 = vld [vmem:[%s5 + $0x1c8] sm:$0xff]
    %v5092 = vld [vmem:[%s5 + $0x1d0] sm:$0xf]
    %v5093 = vld [vmem:[%s5 + $0x1d4] sm:$0xff]
    %v5094 = vld [vmem:[%s5 + $0x1dc] sm:$0xf]
    %v5095 = vld [vmem:[%s5 + $0x1e0] sm:$0xff]
    %v5096 = vld [vmem:[%s5 + $0x1e8] sm:$0xf]
    %v5097 = vld [vmem:[%s5 + $0x1ec] sm:$0xff]
    %v5098 = vld [vmem:[%s5 + $0x1f4] sm:$0xf]
    %v5099 = vld [vmem:[%s5 + $0x1f8] sm:$0xff]
    %v5100 = vld [vmem:[%s5 + $0x200] sm:$0xf]
    %v5101 = vld [vmem:[%s5 + $0x204] sm:$0xff]
    %v5102 = vld [vmem:[%s5 + $0x20c] sm:$0xf]
    %v5103 = vld [vmem:[%s5 + $0x210] sm:$0xff]
    %v5104 = vld [vmem:[%s5 + $0x218] sm:$0xf]
    %v5105 = vld [vmem:[%s5 + $0x21c] sm:$0xff]
    %v5106 = vld [vmem:[%s5 + $0x224] sm:$0xf]
    %v5107 = vld [vmem:[%s5 + $0x228] sm:$0xff]
    %v5108 = vld [vmem:[%s5 + $0x230] sm:$0xf]
    %v5109 = vld [vmem:[%s5 + $0x234] sm:$0xff]
    %v5110 = vld [vmem:[%s5 + $0x23c] sm:$0xf]
    %v5111 = vld [vmem:[%s5 + $0x240] sm:$0xff]
    %v5112 = vld [vmem:[%s5 + $0x248] sm:$0xf]
    %v5113 = vld [vmem:[%s5 + $0x24c] sm:$0xff]
    %v5114 = vld [vmem:[%s5 + $0x254] sm:$0xf]
    %v5115 = vld [vmem:[%s5 + $0x258] sm:$0xff]
    %v5116 = vld [vmem:[%s5 + $0x260] sm:$0xf]
    %v5117 = vld [vmem:[%s5 + $0x264] sm:$0xff]
    %v5118 = vld [vmem:[%s5 + $0x26c] sm:$0xf]
    %v5119 = vld [vmem:[%s5 + $0x270] sm:$0xff]
    %v5120 = vld [vmem:[%s5 + $0x278] sm:$0xf]
    %v5121 = vld [vmem:[%s5 + $0x27c] sm:$0xff]
    %v5122 = vld [vmem:[%s5 + $0x284] sm:$0xf]
    %v5123 = vld [vmem:[%s5 + $0x288] sm:$0xff]
    %v5124 = vld [vmem:[%s5 + $0x290] sm:$0xf]
    %v5125 = vld [vmem:[%s5 + $0x294] sm:$0xff]
    %v5126 = vld [vmem:[%s5 + $0x29c] sm:$0xf]
    %v5127 = vld [vmem:[%s5 + $0x2a0] sm:$0xff]
    %v5128 = vld [vmem:[%s5 + $0x2a8] sm:$0xf]
    %v5129 = vld [vmem:[%s5 + $0x2ac] sm:$0xff]
    %v5130 = vld [vmem:[%s5 + $0x2b4] sm:$0xf]
    %v5131 = vld [vmem:[%s5 + $0x2b8] sm:$0xff]
    %v5132 = vld [vmem:[%s5 + $0x2c0] sm:$0xf]
    %v5133 = vld [vmem:[%s5 + $0x2c4] sm:$0xff]
    %v5134 = vld [vmem:[%s5 + $0x2cc] sm:$0xf]
    %v5135 = vld [vmem:[%s5 + $0x2d0] sm:$0xff]
    %v5136 = vld [vmem:[%s5 + $0x2d8] sm:$0xf]
    %v5137 = vld [vmem:[%s5 + $0x2dc] sm:$0xff]
    %v5138 = vld [vmem:[%s5 + $0x2e4] sm:$0xf]
    %v5139 = vld [vmem:[%s5 + $0x2e8] sm:$0xff]
    %v5140 = vld [vmem:[%s5 + $0x2f0] sm:$0xf]
    %v5141 = vld [vmem:[%s5 + $0x2f4] sm:$0xff]
    %v5142 = vld [vmem:[%s5 + $0x2fc] sm:$0xf]
    %v5143 = vld [vmem:[%s5 + $0x300] sm:$0xff]
    %v5144 = vld [vmem:[%s5 + $0x308] sm:$0xf]
    %v5145 = vld [vmem:[%s5 + $0x30c] sm:$0xff]
    %v5146 = vld [vmem:[%s5 + $0x314] sm:$0xf]
    %v5147 = vld [vmem:[%s5 + $0x318] sm:$0xff]
    %v5148 = vld [vmem:[%s5 + $0x320] sm:$0xf]
    %v5149 = vld [vmem:[%s5 + $0x324] sm:$0xff]
    %v5150 = vld [vmem:[%s5 + $0x32c] sm:$0xf]
    %v5151 = vld [vmem:[%s5 + $0x330] sm:$0xff]
    %v5152 = vld [vmem:[%s5 + $0x338] sm:$0xf]
    %v5153 = vld [vmem:[%s5 + $0x33c] sm:$0xff]
    %v5154 = vld [vmem:[%s5 + $0x344] sm:$0xf]
    %v5155 = vld [vmem:[%s5 + $0x348] sm:$0xff]
    %v5156 = vld [vmem:[%s5 + $0x350] sm:$0xf]
    %v5157 = vld [vmem:[%s5 + $0x354] sm:$0xff]
    %v5158 = vld [vmem:[%s5 + $0x35c] sm:$0xf]
    %v5159 = vld [vmem:[%s5 + $0x360] sm:$0xff]
    %v5160 = vld [vmem:[%s5 + $0x368] sm:$0xf]
    %v5161 = vld [vmem:[%s5 + $0x36c] sm:$0xff]
    %v5162 = vld [vmem:[%s5 + $0x374] sm:$0xf]
    %v5163 = vld [vmem:[%s5 + $0x378] sm:$0xff]
    %v5164 = vld [vmem:[%s5 + $0x380] sm:$0xf]
    %v5165 = vld [vmem:[%s5 + $0x384] sm:$0xff]
    %v5166 = vld [vmem:[%s5 + $0x38c] sm:$0xf]
    %v5167 = vld [vmem:[%s5 + $0x390] sm:$0xff]
    %v5168 = vld [vmem:[%s5 + $0x398] sm:$0xf]
    %v5169 = vld [vmem:[%s5 + $0x39c] sm:$0xff]
    %v5170 = vld [vmem:[%s5 + $0x3a4] sm:$0xf]
    %v5171 = vld [vmem:[%s5 + $0x3a8] sm:$0xff]
    %v5172 = vld [vmem:[%s5 + $0x3b0] sm:$0xf]
    %v5173 = vld [vmem:[%s5 + $0x3b4] sm:$0xff]
    %v5174 = vld [vmem:[%s5 + $0x3bc] sm:$0xf]
    %v5175 = vld [vmem:[%s5 + $0x3c0] sm:$0xff]
    %v5176 = vld [vmem:[%s5 + $0x3c8] sm:$0xf]
    %v5177 = vld [vmem:[%s5 + $0x3cc] sm:$0xff]
    %v5178 = vld [vmem:[%s5 + $0x3d4] sm:$0xf]
    %v5179 = vld [vmem:[%s5 + $0x3d8] sm:$0xff]
    %v5180 = vld [vmem:[%s5 + $0x3e0] sm:$0xf]
    %v5181 = vld [vmem:[%s5 + $0x3e4] sm:$0xff]
    %v5182 = vld [vmem:[%s5 + $0x3ec] sm:$0xf]
    %v5183 = vld [vmem:[%s5 + $0x3f0] sm:$0xff]
    %v5184 = vld [vmem:[%s5 + $0x3f8] sm:$0xf]
    %v5185 = vld [vmem:[%s5 + $0x3fc] sm:$0xff]
    %v5186 = vld [vmem:[%s5 + $0x404] sm:$0xf]
    %v5187 = vld [vmem:[%s5 + $0x408] sm:$0xff]
    %v5188 = vld [vmem:[%s5 + $0x410] sm:$0xf]
    %v5189 = vld [vmem:[%s5 + $0x414] sm:$0xff]
    %v5190 = vld [vmem:[%s5 + $0x41c] sm:$0xf]
    %v5191 = vld [vmem:[%s5 + $0x420] sm:$0xff]
    %v5192 = vld [vmem:[%s5 + $0x428] sm:$0xf]
    %v5193 = vld [vmem:[%s5 + $0x42c] sm:$0xff]
    %v5194 = vld [vmem:[%s5 + $0x434] sm:$0xf]
    %v5195 = vld [vmem:[%s5 + $0x438] sm:$0xff]
    %v5196 = vld [vmem:[%s5 + $0x440] sm:$0xf]
    %v5197 = vld [vmem:[%s5 + $0x444] sm:$0xff]
    %v5198 = vld [vmem:[%s5 + $0x44c] sm:$0xf]
    %v5199 = vld [vmem:[%s5 + $0x450] sm:$0xff]
    %v5200 = vld [vmem:[%s5 + $0x458] sm:$0xf]
    %v5201 = vld [vmem:[%s5 + $0x45c] sm:$0xff]
    %v5202 = vld [vmem:[%s5 + $0x464] sm:$0xf]
    %v5203 = vld [vmem:[%s5 + $0x468] sm:$0xff]
    %v5204 = vld [vmem:[%s5 + $0x470] sm:$0xf]
    %v5205 = vld [vmem:[%s5 + $0x474] sm:$0xff]
    %v5206 = vld [vmem:[%s5 + $0x47c] sm:$0xf]
    %v5207 = vld [vmem:[%s5 + $0x480] sm:$0xff]
    %v5208 = vld [vmem:[%s5 + $0x488] sm:$0xf]
    %v5209 = vld [vmem:[%s5 + $0x48c] sm:$0xff]
    %v5210 = vld [vmem:[%s5 + $0x494] sm:$0xf]
    %v5211 = vld [vmem:[%s5 + $0x498] sm:$0xff]
    %v5212 = vld [vmem:[%s5 + $0x4a0] sm:$0xf]
    %v5213 = vld [vmem:[%s5 + $0x4a4] sm:$0xff]
    %v5214 = vld [vmem:[%s5 + $0x4ac] sm:$0xf]
    %v5215 = vld [vmem:[%s5 + $0x4b0] sm:$0xff]
    %v5216 = vld [vmem:[%s5 + $0x4b8] sm:$0xf]
    %v5217 = vld [vmem:[%s5 + $0x4bc] sm:$0xff]
    %v5218 = vld [vmem:[%s5 + $0x4c4] sm:$0xf]
    %v5219 = vld [vmem:[%s5 + $0x4c8] sm:$0xff]
    %v5220 = vld [vmem:[%s5 + $0x4d0] sm:$0xf]
    %v5221 = vld [vmem:[%s5 + $0x4d4] sm:$0xff]
    %v5222 = vld [vmem:[%s5 + $0x4dc] sm:$0xf]
    %v5223 = vld [vmem:[%s5 + $0x4e0] sm:$0xff]
    %v5224 = vld [vmem:[%s5 + $0x4e8] sm:$0xf]
    %v5225 = vld [vmem:[%s5 + $0x4ec] sm:$0xff]
    %v5226 = vld [vmem:[%s5 + $0x4f4] sm:$0xf]
    %v5227 = vld [vmem:[%s5 + $0x4f8] sm:$0xff]
    %v5228 = vld [vmem:[%s5 + $0x500] sm:$0xf]
    %v5229 = vld [vmem:[%s5 + $0x504] sm:$0xff]
    %v5230 = vld [vmem:[%s5 + $0x50c] sm:$0xf]
    %v5231 = vld [vmem:[%s5 + $0x510] sm:$0xff]
    %v5232 = vld [vmem:[%s5 + $0x518] sm:$0xf]
    %v5233 = vld [vmem:[%s5 + $0x51c] sm:$0xff]
    %v5234 = vld [vmem:[%s5 + $0x524] sm:$0xf]
    %v5235 = vld [vmem:[%s5 + $0x528] sm:$0xff]
    %v5236 = vld [vmem:[%s5 + $0x530] sm:$0xf]
    %v5237 = vld [vmem:[%s5 + $0x534] sm:$0xff]
    %v5238 = vld [vmem:[%s5 + $0x53c] sm:$0xf]
    %v5239 = vld [vmem:[%s5 + $0x540] sm:$0xff]
    %v5240 = vld [vmem:[%s5 + $0x548] sm:$0xf]
    %v5241 = vld [vmem:[%s5 + $0x54c] sm:$0xff]
    %v5242 = vld [vmem:[%s5 + $0x554] sm:$0xf]
    %v5243 = vld [vmem:[%s5 + $0x558] sm:$0xff]
    %v5244 = vld [vmem:[%s5 + $0x560] sm:$0xf]
    %v5245 = vld [vmem:[%s5 + $0x564] sm:$0xff]
    %v5246 = vld [vmem:[%s5 + $0x56c] sm:$0xf]
    %v5247 = vld [vmem:[%s5 + $0x570] sm:$0xff]
    %v5248 = vld [vmem:[%s5 + $0x578] sm:$0xf]
    %v5249 = vld [vmem:[%s5 + $0x57c] sm:$0xff]
    %v5250 = vld [vmem:[%s5 + $0x584] sm:$0xf]
    %v5251 = vld [vmem:[%s5 + $0x588] sm:$0xff]
    %v5252 = vld [vmem:[%s5 + $0x590] sm:$0xf]
    %v5253 = vld [vmem:[%s5 + $0x594] sm:$0xff]
    %v5254 = vld [vmem:[%s5 + $0x59c] sm:$0xf]
    %v5255 = vld [vmem:[%s5 + $0x5a0] sm:$0xff]
    %v5256 = vld [vmem:[%s5 + $0x5a8] sm:$0xf]
    %v5257 = vld [vmem:[%s5 + $0x5ac] sm:$0xff]
    %v5258 = vld [vmem:[%s5 + $0x5b4] sm:$0xf]
    %v5259 = vld [vmem:[%s5 + $0x5b8] sm:$0xff]
    %v5260 = vld [vmem:[%s5 + $0x5c0] sm:$0xf]
    %v5261 = vld [vmem:[%s5 + $0x5c4] sm:$0xff]
    %v5262 = vld [vmem:[%s5 + $0x5cc] sm:$0xf]
    %v5263 = vld [vmem:[%s5 + $0x5d0] sm:$0xff]
    %v5264 = vld [vmem:[%s5 + $0x5d8] sm:$0xf]
    %v5265 = vld [vmem:[%s5 + $0x5dc] sm:$0xff]
    %v5266 = vld [vmem:[%s5 + $0x5e4] sm:$0xf]
    %v5267 = vld [vmem:[%s5 + $0x5e8] sm:$0xff]
    %v5268 = vld [vmem:[%s5 + $0x5f0] sm:$0xf]
    %v5269 = vld [vmem:[%s5 + $0x5f4] sm:$0xff]
    %v5270 = vld [vmem:[%s5 + $0x5fc] sm:$0xf]
    %v5271 = vld [vmem:[%s5 + $0x600] sm:$0xff]
    %v5272 = vld [vmem:[%s5 + $0x608] sm:$0xf]
    %v5273 = vld [vmem:[%s5 + $0x60c] sm:$0xff]
    %v5274 = vld [vmem:[%s5 + $0x614] sm:$0xf]
    %v5275 = vld [vmem:[%s5 + $0x618] sm:$0xff]
    %v5276 = vld [vmem:[%s5 + $0x620] sm:$0xf]
    %v5277 = vld [vmem:[%s5 + $0x624] sm:$0xff]
    %v5278 = vld [vmem:[%s5 + $0x62c] sm:$0xf]
    %v5279 = vld [vmem:[%s5 + $0x630] sm:$0xff]
    %v5280 = vld [vmem:[%s5 + $0x638] sm:$0xf]
    %v5281 = vld [vmem:[%s5 + $0x63c] sm:$0xff]
    %v5282 = vld [vmem:[%s5 + $0x644] sm:$0xf]
    %v5283 = vld [vmem:[%s5 + $0x648] sm:$0xff]
    %v5284 = vld [vmem:[%s5 + $0x650] sm:$0xf]
    %v5285 = vld [vmem:[%s5 + $0x654] sm:$0xff]
    %v5286 = vld [vmem:[%s5 + $0x65c] sm:$0xf]
    %v5287 = vld [vmem:[%s5 + $0x660] sm:$0xff]
    %v5288 = vld [vmem:[%s5 + $0x668] sm:$0xf]
    %v5289 = vld [vmem:[%s5 + $0x66c] sm:$0xff]
    %v5290 = vld [vmem:[%s5 + $0x674] sm:$0xf]
    %v5291 = vld [vmem:[%s5 + $0x678] sm:$0xff]
    %v5292 = vld [vmem:[%s5 + $0x680] sm:$0xf]
    %v5293 = vld [vmem:[%s5 + $0x684] sm:$0xff]
    %v5294 = vld [vmem:[%s5 + $0x68c] sm:$0xf]
    %v5295 = vld [vmem:[%s5 + $0x690] sm:$0xff]
    %v5296 = vld [vmem:[%s5 + $0x698] sm:$0xf]
    %v5297 = vld [vmem:[%s5 + $0x69c] sm:$0xff]
    %v5298 = vld [vmem:[%s5 + $0x6a4] sm:$0xf]
    %v5299 = vld [vmem:[%s5 + $0x6a8] sm:$0xff]
    %v5300 = vld [vmem:[%s5 + $0x6b0] sm:$0xf]
    %v5301 = vld [vmem:[%s5 + $0x6b4] sm:$0xff]
    %v5302 = vld [vmem:[%s5 + $0x6bc] sm:$0xf]
    %v5303 = vld [vmem:[%s5 + $0x6c0] sm:$0xff]
    %v5304 = vld [vmem:[%s5 + $0x6c8] sm:$0xf]
    %v5305 = vld [vmem:[%s5 + $0x6cc] sm:$0xff]
    %v5306 = vld [vmem:[%s5 + $0x6d4] sm:$0xf]
    %v5307 = vld [vmem:[%s5 + $0x6d8] sm:$0xff]
    %v5308 = vld [vmem:[%s5 + $0x6e0] sm:$0xf]
    %v5309 = vld [vmem:[%s5 + $0x6e4] sm:$0xff]
    %v5310 = vld [vmem:[%s5 + $0x6ec] sm:$0xf]
    %v5311 = vld [vmem:[%s5 + $0x6f0] sm:$0xff]
    %v5312 = vld [vmem:[%s5 + $0x6f8] sm:$0xf]
    %v5313 = vld [vmem:[%s5 + $0x6fc] sm:$0xff]
    %v5314 = vld [vmem:[%s5 + $0x704] sm:$0xf]
    %v5315 = vld [vmem:[%s5 + $0x708] sm:$0xff]
    %v5316 = vld [vmem:[%s5 + $0x710] sm:$0xf]
    %v5317 = vld [vmem:[%s5 + $0x714] sm:$0xff]
    %v5318 = vld [vmem:[%s5 + $0x71c] sm:$0xf]
    %v5319 = vld [vmem:[%s5 + $0x720] sm:$0xff]
    %v5320 = vld [vmem:[%s5 + $0x728] sm:$0xf]
    %v5321 = vld [vmem:[%s5 + $0x72c] sm:$0xff]
    %v5322 = vld [vmem:[%s5 + $0x734] sm:$0xf]
    %v5323 = vld [vmem:[%s5 + $0x738] sm:$0xff]
    %v5324 = vld [vmem:[%s5 + $0x740] sm:$0xf]
    %v5325 = vld [vmem:[%s5 + $0x744] sm:$0xff]
    %v5326 = vld [vmem:[%s5 + $0x74c] sm:$0xf]
    %v5327 = vld [vmem:[%s5 + $0x750] sm:$0xff]
    %v5328 = vld [vmem:[%s5 + $0x758] sm:$0xf]
    %v5329 = vld [vmem:[%s5 + $0x75c] sm:$0xff]
    %v5330 = vld [vmem:[%s5 + $0x764] sm:$0xf]
    %v5331 = vld [vmem:[%s5 + $0x768] sm:$0xff]
    %v5332 = vld [vmem:[%s5 + $0x770] sm:$0xf]
    %v5333 = vld [vmem:[%s5 + $0x774] sm:$0xff]
    %v5334 = vld [vmem:[%s5 + $0x77c] sm:$0xf]
    %v5335 = vld [vmem:[%s5 + $0x780] sm:$0xff]
    %v5336 = vld [vmem:[%s5 + $0x788] sm:$0xf]
    %v5337 = vld [vmem:[%s5 + $0x78c] sm:$0xff]
    %v5338 = vld [vmem:[%s5 + $0x794] sm:$0xf]
    %v5339 = vld [vmem:[%s5 + $0x798] sm:$0xff]
    %v5340 = vld [vmem:[%s5 + $0x7a0] sm:$0xf]
    %v5341 = vld [vmem:[%s5 + $0x7a4] sm:$0xff]
    %v5342 = vld [vmem:[%s5 + $0x7ac] sm:$0xf]
    %v5343 = vld [vmem:[%s5 + $0x7b0] sm:$0xff]
    %v5344 = vld [vmem:[%s5 + $0x7b8] sm:$0xf]
    %v5345 = vld [vmem:[%s5 + $0x7bc] sm:$0xff]
    %v5346 = vld [vmem:[%s5 + $0x7c4] sm:$0xf]
    %v5347 = vld [vmem:[%s5 + $0x7c8] sm:$0xff]
    %v5348 = vld [vmem:[%s5 + $0x7d0] sm:$0xf]
    %v5349 = vld [vmem:[%s5 + $0x7d4] sm:$0xff]
    %v5350 = vld [vmem:[%s5 + $0x7dc] sm:$0xf]
    %v5351 = vld [vmem:[%s5 + $0x7e0] sm:$0xff]
    %v5352 = vld [vmem:[%s5 + $0x7e8] sm:$0xf]
    %v5353 = vld [vmem:[%s5 + $0x7ec] sm:$0xff]
    %v5354 = vld [vmem:[%s5 + $0x7f4] sm:$0xf]
    %v5355 = vld [vmem:[%s5 + $0x7f8] sm:$0xff]
    %v5356 = vld [vmem:[%s5 + $0x800] sm:$0xf]
    %v5357 = vld [vmem:[%s5 + $0x804] sm:$0xff]
    %v5358 = vld [vmem:[%s5 + $0x80c] sm:$0xf]
    %v5359 = vld [vmem:[%s5 + $0x810] sm:$0xff]
    %v5360 = vld [vmem:[%s5 + $0x818] sm:$0xf]
    %v5361 = vld [vmem:[%s5 + $0x81c] sm:$0xff]
    %v5362 = vld [vmem:[%s5 + $0x824] sm:$0xf]
    %v5363 = vld [vmem:[%s5 + $0x828] sm:$0xff]
    %v5364 = vld [vmem:[%s5 + $0x830] sm:$0xf]
    %v5365 = vld [vmem:[%s5 + $0x834] sm:$0xff]
    %v5366 = vld [vmem:[%s5 + $0x83c] sm:$0xf]
    %v5367 = vld [vmem:[%s5 + $0x840] sm:$0xff]
    %v5368 = vld [vmem:[%s5 + $0x848] sm:$0xf]
    %v5369 = vld [vmem:[%s5 + $0x84c] sm:$0xff]
    %v5370 = vld [vmem:[%s5 + $0x854] sm:$0xf]
    %v5727 = vunpack.c.l.b16 %v5015
    %v5728 = vunpack.c.h.b16 %v5015
    %v5729 = vunpack.c.l.b16 %v5016
    %v5730 = vunpack.c.l.b16 %v5017
    %v5731 = vunpack.c.h.b16 %v5017
    %v5732 = vunpack.c.l.b16 %v5018
    %v5733 = vunpack.c.l.b16 %v5019
    %v5734 = vunpack.c.h.b16 %v5019
    %v5735 = vunpack.c.l.b16 %v5020
    %v5736 = vunpack.c.l.b16 %v5021
    %v5737 = vunpack.c.h.b16 %v5021
    %v5738 = vunpack.c.l.b16 %v5022
    %v5739 = vunpack.c.l.b16 %v5023
    %v5740 = vunpack.c.h.b16 %v5023
    %v5741 = vunpack.c.l.b16 %v5024
    %v5742 = vunpack.c.l.b16 %v5025
    %v5743 = vunpack.c.h.b16 %v5025
    %v5744 = vunpack.c.l.b16 %v5026
    %v5745 = vunpack.c.l.b16 %v5027
    %v5746 = vunpack.c.h.b16 %v5027
    %v5747 = vunpack.c.l.b16 %v5028
    %v5748 = vunpack.c.l.b16 %v5029
    %v5749 = vunpack.c.h.b16 %v5029
    %v5750 = vunpack.c.l.b16 %v5030
    %v5751 = vunpack.c.l.b16 %v5031
    %v5752 = vunpack.c.h.b16 %v5031
    %v5753 = vunpack.c.l.b16 %v5032
    %v5754 = vunpack.c.l.b16 %v5033
    %v5755 = vunpack.c.h.b16 %v5033
    %v5756 = vunpack.c.l.b16 %v5034
    %v5757 = vunpack.c.l.b16 %v5035
    %v5758 = vunpack.c.h.b16 %v5035
    %v5759 = vunpack.c.l.b16 %v5036
    %v5760 = vunpack.c.l.b16 %v5037
    %v5761 = vunpack.c.h.b16 %v5037
    %v5762 = vunpack.c.l.b16 %v5038
    %v5763 = vunpack.c.l.b16 %v5039
    %v5764 = vunpack.c.h.b16 %v5039
    %v5765 = vunpack.c.l.b16 %v5040
    %v5766 = vunpack.c.l.b16 %v5041
    %v5767 = vunpack.c.h.b16 %v5041
    %v5768 = vunpack.c.l.b16 %v5042
    %v5769 = vunpack.c.l.b16 %v5043
    %v5770 = vunpack.c.h.b16 %v5043
    %v5771 = vunpack.c.l.b16 %v5044
    %v5772 = vunpack.c.l.b16 %v5045
    %v5773 = vunpack.c.h.b16 %v5045
    %v5774 = vunpack.c.l.b16 %v5046
    %v5775 = vunpack.c.l.b16 %v5047
    %v5776 = vunpack.c.h.b16 %v5047
    %v5777 = vunpack.c.l.b16 %v5048
    %v5778 = vunpack.c.l.b16 %v5049
    %v5779 = vunpack.c.h.b16 %v5049
    %v5780 = vunpack.c.l.b16 %v5050
    %v5781 = vunpack.c.l.b16 %v5051
    %v5782 = vunpack.c.h.b16 %v5051
    %v5783 = vunpack.c.l.b16 %v5052
    %v5784 = vunpack.c.l.b16 %v5053
    %v5785 = vunpack.c.h.b16 %v5053
    %v5786 = vunpack.c.l.b16 %v5054
    %v5787 = vunpack.c.l.b16 %v5055
    %v5788 = vunpack.c.h.b16 %v5055
    %v5789 = vunpack.c.l.b16 %v5056
    %v5790 = vunpack.c.l.b16 %v5057
    %v5791 = vunpack.c.h.b16 %v5057
    %v5792 = vunpack.c.l.b16 %v5058
    %v5793 = vunpack.c.l.b16 %v5059
    %v5794 = vunpack.c.h.b16 %v5059
    %v5795 = vunpack.c.l.b16 %v5060
    %v5796 = vunpack.c.l.b16 %v5061
    %v5797 = vunpack.c.h.b16 %v5061
    %v5798 = vunpack.c.l.b16 %v5062
    %v5799 = vunpack.c.l.b16 %v5063
    %v5800 = vunpack.c.h.b16 %v5063
    %v5801 = vunpack.c.l.b16 %v5064
    %v5802 = vunpack.c.l.b16 %v5065
    %v5803 = vunpack.c.h.b16 %v5065
    %v5804 = vunpack.c.l.b16 %v5066
    %v5805 = vunpack.c.l.b16 %v5067
    %v5806 = vunpack.c.h.b16 %v5067
    %v5807 = vunpack.c.l.b16 %v5068
    %v5808 = vunpack.c.l.b16 %v5069
    %v5809 = vunpack.c.h.b16 %v5069
    %v5810 = vunpack.c.l.b16 %v5070
    %v5811 = vunpack.c.l.b16 %v5071
    %v5812 = vunpack.c.h.b16 %v5071
    %v5813 = vunpack.c.l.b16 %v5072
    %v5814 = vunpack.c.l.b16 %v5073
    %v5815 = vunpack.c.h.b16 %v5073
    %v5816 = vunpack.c.l.b16 %v5074
    %v5817 = vunpack.c.l.b16 %v5075
    %v5818 = vunpack.c.h.b16 %v5075
    %v5819 = vunpack.c.l.b16 %v5076
    %v5820 = vunpack.c.l.b16 %v5077
    %v5821 = vunpack.c.h.b16 %v5077
    %v5822 = vunpack.c.l.b16 %v5078
    %v5823 = vunpack.c.l.b16 %v5079
    %v5824 = vunpack.c.h.b16 %v5079
    %v5825 = vunpack.c.l.b16 %v5080
    %v5826 = vunpack.c.l.b16 %v5081
    %v5827 = vunpack.c.h.b16 %v5081
    %v5828 = vunpack.c.l.b16 %v5082
    %v5829 = vunpack.c.l.b16 %v5083
    %v5830 = vunpack.c.h.b16 %v5083
    %v5831 = vunpack.c.l.b16 %v5084
    %v5832 = vunpack.c.l.b16 %v5085
    %v5833 = vunpack.c.h.b16 %v5085
    %v5834 = vunpack.c.l.b16 %v5086
    %v5835 = vunpack.c.l.b16 %v5087
    %v5836 = vunpack.c.h.b16 %v5087
    %v5837 = vunpack.c.l.b16 %v5088
    %v5838 = vunpack.c.l.b16 %v5089
    %v5839 = vunpack.c.h.b16 %v5089
    %v5840 = vunpack.c.l.b16 %v5090
    %v5841 = vunpack.c.l.b16 %v5091
    %v5842 = vunpack.c.h.b16 %v5091
    %v5843 = vunpack.c.l.b16 %v5092
    %v5844 = vunpack.c.l.b16 %v5093
    %v5845 = vunpack.c.h.b16 %v5093
    %v5846 = vunpack.c.l.b16 %v5094
    %v5847 = vunpack.c.l.b16 %v5095
    %v5848 = vunpack.c.h.b16 %v5095
    %v5849 = vunpack.c.l.b16 %v5096
    %v5850 = vunpack.c.l.b16 %v5097
    %v5851 = vunpack.c.h.b16 %v5097
    %v5852 = vunpack.c.l.b16 %v5098
    %v5853 = vunpack.c.l.b16 %v5099
    %v5854 = vunpack.c.h.b16 %v5099
    %v5855 = vunpack.c.l.b16 %v5100
    %v5856 = vunpack.c.l.b16 %v5101
    %v5857 = vunpack.c.h.b16 %v5101
    %v5858 = vunpack.c.l.b16 %v5102
    %v5859 = vunpack.c.l.b16 %v5103
    %v5860 = vunpack.c.h.b16 %v5103
    %v5861 = vunpack.c.l.b16 %v5104
    %v5862 = vunpack.c.l.b16 %v5105
    %v5863 = vunpack.c.h.b16 %v5105
    %v5864 = vunpack.c.l.b16 %v5106
    %v5865 = vunpack.c.l.b16 %v5107
    %v5866 = vunpack.c.h.b16 %v5107
    %v5867 = vunpack.c.l.b16 %v5108
    %v5868 = vunpack.c.l.b16 %v5109
    %v5869 = vunpack.c.h.b16 %v5109
    %v5870 = vunpack.c.l.b16 %v5110
    %v5871 = vunpack.c.l.b16 %v5111
    %v5872 = vunpack.c.h.b16 %v5111
    %v5873 = vunpack.c.l.b16 %v5112
    %v5874 = vunpack.c.l.b16 %v5113
    %v5875 = vunpack.c.h.b16 %v5113
    %v5876 = vunpack.c.l.b16 %v5114
    %v5877 = vunpack.c.l.b16 %v5115
    %v5878 = vunpack.c.h.b16 %v5115
    %v5879 = vunpack.c.l.b16 %v5116
    %v5880 = vunpack.c.l.b16 %v5117
    %v5881 = vunpack.c.h.b16 %v5117
    %v5882 = vunpack.c.l.b16 %v5118
    %v5883 = vunpack.c.l.b16 %v5119
    %v5884 = vunpack.c.h.b16 %v5119
    %v5885 = vunpack.c.l.b16 %v5120
    %v5886 = vunpack.c.l.b16 %v5121
    %v5887 = vunpack.c.h.b16 %v5121
    %v5888 = vunpack.c.l.b16 %v5122
    %v5889 = vunpack.c.l.b16 %v5123
    %v5890 = vunpack.c.h.b16 %v5123
    %v5891 = vunpack.c.l.b16 %v5124
    %v5892 = vunpack.c.l.b16 %v5125
    %v5893 = vunpack.c.h.b16 %v5125
    %v5894 = vunpack.c.l.b16 %v5126
    %v5895 = vunpack.c.l.b16 %v5127
    %v5896 = vunpack.c.h.b16 %v5127
    %v5897 = vunpack.c.l.b16 %v5128
    %v5898 = vunpack.c.l.b16 %v5129
    %v5899 = vunpack.c.h.b16 %v5129
    %v5900 = vunpack.c.l.b16 %v5130
    %v5901 = vunpack.c.l.b16 %v5131
    %v5902 = vunpack.c.h.b16 %v5131
    %v5903 = vunpack.c.l.b16 %v5132
    %v5904 = vunpack.c.l.b16 %v5133
    %v5905 = vunpack.c.h.b16 %v5133
    %v5906 = vunpack.c.l.b16 %v5134
    %v5907 = vunpack.c.l.b16 %v5135
    %v5908 = vunpack.c.h.b16 %v5135
    %v5909 = vunpack.c.l.b16 %v5136
    %v5910 = vunpack.c.l.b16 %v5137
    %v5911 = vunpack.c.h.b16 %v5137
    %v5912 = vunpack.c.l.b16 %v5138
    %v5913 = vunpack.c.l.b16 %v5139
    %v5914 = vunpack.c.h.b16 %v5139
    %v5915 = vunpack.c.l.b16 %v5140
    %v5916 = vunpack.c.l.b16 %v5141
    %v5917 = vunpack.c.h.b16 %v5141
    %v5918 = vunpack.c.l.b16 %v5142
    %v5919 = vunpack.c.l.b16 %v5143
    %v5920 = vunpack.c.h.b16 %v5143
    %v5921 = vunpack.c.l.b16 %v5144
    %v5922 = vunpack.c.l.b16 %v5145
    %v5923 = vunpack.c.h.b16 %v5145
    %v5924 = vunpack.c.l.b16 %v5146
    %v5925 = vunpack.c.l.b16 %v5147
    %v5926 = vunpack.c.h.b16 %v5147
    %v5927 = vunpack.c.l.b16 %v5148
    %v5928 = vunpack.c.l.b16 %v5149
    %v5929 = vunpack.c.h.b16 %v5149
    %v5930 = vunpack.c.l.b16 %v5150
    %v5931 = vunpack.c.l.b16 %v5151
    %v5932 = vunpack.c.h.b16 %v5151
    %v5933 = vunpack.c.l.b16 %v5152
    %v5934 = vunpack.c.l.b16 %v5153
    %v5935 = vunpack.c.h.b16 %v5153
    %v5936 = vunpack.c.l.b16 %v5154
    %v5937 = vunpack.c.l.b16 %v5155
    %v5938 = vunpack.c.h.b16 %v5155
    %v5939 = vunpack.c.l.b16 %v5156
    %v5940 = vunpack.c.l.b16 %v5157
    %v5941 = vunpack.c.h.b16 %v5157
    %v5942 = vunpack.c.l.b16 %v5158
    %v5943 = vunpack.c.l.b16 %v5159
    %v5944 = vunpack.c.h.b16 %v5159
    %v5945 = vunpack.c.l.b16 %v5160
    %v5946 = vunpack.c.l.b16 %v5161
    %v5947 = vunpack.c.h.b16 %v5161
    %v5948 = vunpack.c.l.b16 %v5162
    %v5949 = vunpack.c.l.b16 %v5163
    %v5950 = vunpack.c.h.b16 %v5163
    %v5951 = vunpack.c.l.b16 %v5164
    %v5952 = vunpack.c.l.b16 %v5165
    %v5953 = vunpack.c.h.b16 %v5165
    %v5954 = vunpack.c.l.b16 %v5166
    %v5955 = vunpack.c.l.b16 %v5167
    %v5956 = vunpack.c.h.b16 %v5167
    %v5957 = vunpack.c.l.b16 %v5168
    %v5958 = vunpack.c.l.b16 %v5169
    %v5959 = vunpack.c.h.b16 %v5169
    %v5960 = vunpack.c.l.b16 %v5170
    %v5961 = vunpack.c.l.b16 %v5171
    %v5962 = vunpack.c.h.b16 %v5171
    %v5963 = vunpack.c.l.b16 %v5172
    %v5964 = vunpack.c.l.b16 %v5173
    %v5965 = vunpack.c.h.b16 %v5173
    %v5966 = vunpack.c.l.b16 %v5174
    %v5967 = vunpack.c.l.b16 %v5175
    %v5968 = vunpack.c.h.b16 %v5175
    %v5969 = vunpack.c.l.b16 %v5176
    %v5970 = vunpack.c.l.b16 %v5177
    %v5971 = vunpack.c.h.b16 %v5177
    %v5972 = vunpack.c.l.b16 %v5178
    %v5973 = vunpack.c.l.b16 %v5179
    %v5974 = vunpack.c.h.b16 %v5179
    %v5975 = vunpack.c.l.b16 %v5180
    %v5976 = vunpack.c.l.b16 %v5181
    %v5977 = vunpack.c.h.b16 %v5181
    %v5978 = vunpack.c.l.b16 %v5182
    %v5979 = vunpack.c.l.b16 %v5183
    %v5980 = vunpack.c.h.b16 %v5183
    %v5981 = vunpack.c.l.b16 %v5184
    %v5982 = vunpack.c.l.b16 %v5185
    %v5983 = vunpack.c.h.b16 %v5185
    %v5984 = vunpack.c.l.b16 %v5186
    %v5985 = vunpack.c.l.b16 %v5187
    %v5986 = vunpack.c.h.b16 %v5187
    %v5987 = vunpack.c.l.b16 %v5188
    %v5988 = vunpack.c.l.b16 %v5189
    %v5989 = vunpack.c.h.b16 %v5189
    %v5990 = vunpack.c.l.b16 %v5190
    %v5991 = vunpack.c.l.b16 %v5191
    %v5992 = vunpack.c.h.b16 %v5191
    %v5993 = vunpack.c.l.b16 %v5192
    %v5994 = vunpack.c.l.b16 %v5193
    %v5995 = vunpack.c.h.b16 %v5193
    %v5996 = vunpack.c.l.b16 %v5194
    %v5997 = vunpack.c.l.b16 %v5195
    %v5998 = vunpack.c.h.b16 %v5195
    %v5999 = vunpack.c.l.b16 %v5196
    %v6000 = vunpack.c.l.b16 %v5197
    %v6001 = vunpack.c.h.b16 %v5197
    %v6002 = vunpack.c.l.b16 %v5198
    %v6003 = vunpack.c.l.b16 %v5199
    %v6004 = vunpack.c.h.b16 %v5199
    %v6005 = vunpack.c.l.b16 %v5200
    %v6006 = vunpack.c.l.b16 %v5201
    %v6007 = vunpack.c.h.b16 %v5201
    %v6008 = vunpack.c.l.b16 %v5202
    %v6009 = vunpack.c.l.b16 %v5203
    %v6010 = vunpack.c.h.b16 %v5203
    %v6011 = vunpack.c.l.b16 %v5204
    %v6012 = vunpack.c.l.b16 %v5205
    %v6013 = vunpack.c.h.b16 %v5205
    %v6014 = vunpack.c.l.b16 %v5206
    %v6015 = vunpack.c.l.b16 %v5207
    %v6016 = vunpack.c.h.b16 %v5207
    %v6017 = vunpack.c.l.b16 %v5208
    %v6018 = vunpack.c.l.b16 %v5209
    %v6019 = vunpack.c.h.b16 %v5209
    %v6020 = vunpack.c.l.b16 %v5210
    %v6021 = vunpack.c.l.b16 %v5211
    %v6022 = vunpack.c.h.b16 %v5211
    %v6023 = vunpack.c.l.b16 %v5212
    %v6024 = vunpack.c.l.b16 %v5213
    %v6025 = vunpack.c.h.b16 %v5213
    %v6026 = vunpack.c.l.b16 %v5214
    %v6027 = vunpack.c.l.b16 %v5215
    %v6028 = vunpack.c.h.b16 %v5215
    %v6029 = vunpack.c.l.b16 %v5216
    %v6030 = vunpack.c.l.b16 %v5217
    %v6031 = vunpack.c.h.b16 %v5217
    %v6032 = vunpack.c.l.b16 %v5218
    %v6033 = vunpack.c.l.b16 %v5219
    %v6034 = vunpack.c.h.b16 %v5219
    %v6035 = vunpack.c.l.b16 %v5220
    %v6036 = vunpack.c.l.b16 %v5221
    %v6037 = vunpack.c.h.b16 %v5221
    %v6038 = vunpack.c.l.b16 %v5222
    %v6039 = vunpack.c.l.b16 %v5223
    %v6040 = vunpack.c.h.b16 %v5223
    %v6041 = vunpack.c.l.b16 %v5224
    %v6042 = vunpack.c.l.b16 %v5225
    %v6043 = vunpack.c.h.b16 %v5225
    %v6044 = vunpack.c.l.b16 %v5226
    %v6045 = vunpack.c.l.b16 %v5227
    %v6046 = vunpack.c.h.b16 %v5227
    %v6047 = vunpack.c.l.b16 %v5228
    %v6048 = vunpack.c.l.b16 %v5229
    %v6049 = vunpack.c.h.b16 %v5229
    %v6050 = vunpack.c.l.b16 %v5230
    %v6051 = vunpack.c.l.b16 %v5231
    %v6052 = vunpack.c.h.b16 %v5231
    %v6053 = vunpack.c.l.b16 %v5232
    %v6054 = vunpack.c.l.b16 %v5233
    %v6055 = vunpack.c.h.b16 %v5233
    %v6056 = vunpack.c.l.b16 %v5234
    %v6057 = vunpack.c.l.b16 %v5235
    %v6058 = vunpack.c.h.b16 %v5235
    %v6059 = vunpack.c.l.b16 %v5236
    %v6060 = vunpack.c.l.b16 %v5237
    %v6061 = vunpack.c.h.b16 %v5237
    %v6062 = vunpack.c.l.b16 %v5238
    %v6063 = vunpack.c.l.b16 %v5239
    %v6064 = vunpack.c.h.b16 %v5239
    %v6065 = vunpack.c.l.b16 %v5240
    %v6066 = vunpack.c.l.b16 %v5241
    %v6067 = vunpack.c.h.b16 %v5241
    %v6068 = vunpack.c.l.b16 %v5242
    %v6069 = vunpack.c.l.b16 %v5243
    %v6070 = vunpack.c.h.b16 %v5243
    %v6071 = vunpack.c.l.b16 %v5244
    %v6072 = vunpack.c.l.b16 %v5245
    %v6073 = vunpack.c.h.b16 %v5245
    %v6074 = vunpack.c.l.b16 %v5246
    %v6075 = vunpack.c.l.b16 %v5247
    %v6076 = vunpack.c.h.b16 %v5247
    %v6077 = vunpack.c.l.b16 %v5248
    %v6078 = vunpack.c.l.b16 %v5249
    %v6079 = vunpack.c.h.b16 %v5249
    %v6080 = vunpack.c.l.b16 %v5250
    %v6081 = vunpack.c.l.b16 %v5251
    %v6082 = vunpack.c.h.b16 %v5251
    %v6083 = vunpack.c.l.b16 %v5252
    %v6084 = vunpack.c.l.b16 %v5253
    %v6085 = vunpack.c.h.b16 %v5253
    %v6086 = vunpack.c.l.b16 %v5254
    %v6087 = vunpack.c.l.b16 %v5255
    %v6088 = vunpack.c.h.b16 %v5255
    %v6089 = vunpack.c.l.b16 %v5256
    %v6090 = vunpack.c.l.b16 %v5257
    %v6091 = vunpack.c.h.b16 %v5257
    %v6092 = vunpack.c.l.b16 %v5258
    %v6093 = vunpack.c.l.b16 %v5259
    %v6094 = vunpack.c.h.b16 %v5259
    %v6095 = vunpack.c.l.b16 %v5260
    %v6096 = vunpack.c.l.b16 %v5261
    %v6097 = vunpack.c.h.b16 %v5261
    %v6098 = vunpack.c.l.b16 %v5262
    %v6099 = vunpack.c.l.b16 %v5263
    %v6100 = vunpack.c.h.b16 %v5263
    %v6101 = vunpack.c.l.b16 %v5264
    %v6102 = vunpack.c.l.b16 %v5265
    %v6103 = vunpack.c.h.b16 %v5265
    %v6104 = vunpack.c.l.b16 %v5266
    %v6105 = vunpack.c.l.b16 %v5267
    %v6106 = vunpack.c.h.b16 %v5267
    %v6107 = vunpack.c.l.b16 %v5268
    %v6108 = vunpack.c.l.b16 %v5269
    %v6109 = vunpack.c.h.b16 %v5269
    %v6110 = vunpack.c.l.b16 %v5270
    %v6111 = vunpack.c.l.b16 %v5271
    %v6112 = vunpack.c.h.b16 %v5271
    %v6113 = vunpack.c.l.b16 %v5272
    %v6114 = vunpack.c.l.b16 %v5273
    %v6115 = vunpack.c.h.b16 %v5273
    %v6116 = vunpack.c.l.b16 %v5274
    %v6117 = vunpack.c.l.b16 %v5275
    %v6118 = vunpack.c.h.b16 %v5275
    %v6119 = vunpack.c.l.b16 %v5276
    %v6120 = vunpack.c.l.b16 %v5277
    %v6121 = vunpack.c.h.b16 %v5277
    %v6122 = vunpack.c.l.b16 %v5278
    %v6123 = vunpack.c.l.b16 %v5279
    %v6124 = vunpack.c.h.b16 %v5279
    %v6125 = vunpack.c.l.b16 %v5280
    %v6126 = vunpack.c.l.b16 %v5281
    %v6127 = vunpack.c.h.b16 %v5281
    %v6128 = vunpack.c.l.b16 %v5282
    %v6129 = vunpack.c.l.b16 %v5283
    %v6130 = vunpack.c.h.b16 %v5283
    %v6131 = vunpack.c.l.b16 %v5284
    %v6132 = vunpack.c.l.b16 %v5285
    %v6133 = vunpack.c.h.b16 %v5285
    %v6134 = vunpack.c.l.b16 %v5286
    %v6135 = vunpack.c.l.b16 %v5287
    %v6136 = vunpack.c.h.b16 %v5287
    %v6137 = vunpack.c.l.b16 %v5288
    %v6138 = vunpack.c.l.b16 %v5289
    %v6139 = vunpack.c.h.b16 %v5289
    %v6140 = vunpack.c.l.b16 %v5290
    %v6141 = vunpack.c.l.b16 %v5291
    %v6142 = vunpack.c.h.b16 %v5291
    %v6143 = vunpack.c.l.b16 %v5292
    %v6144 = vunpack.c.l.b16 %v5293
    %v6145 = vunpack.c.h.b16 %v5293
    %v6146 = vunpack.c.l.b16 %v5294
    %v6147 = vunpack.c.l.b16 %v5295
    %v6148 = vunpack.c.h.b16 %v5295
    %v6149 = vunpack.c.l.b16 %v5296
    %v6150 = vunpack.c.l.b16 %v5297
    %v6151 = vunpack.c.h.b16 %v5297
    %v6152 = vunpack.c.l.b16 %v5298
    %v6153 = vunpack.c.l.b16 %v5299
    %v6154 = vunpack.c.h.b16 %v5299
    %v6155 = vunpack.c.l.b16 %v5300
    %v6156 = vunpack.c.l.b16 %v5301
    %v6157 = vunpack.c.h.b16 %v5301
    %v6158 = vunpack.c.l.b16 %v5302
    %v6159 = vunpack.c.l.b16 %v5303
    %v6160 = vunpack.c.h.b16 %v5303
    %v6161 = vunpack.c.l.b16 %v5304
    %v6162 = vunpack.c.l.b16 %v5305
    %v6163 = vunpack.c.h.b16 %v5305
    %v6164 = vunpack.c.l.b16 %v5306
    %v6165 = vunpack.c.l.b16 %v5307
    %v6166 = vunpack.c.h.b16 %v5307
    %v6167 = vunpack.c.l.b16 %v5308
    %v6168 = vunpack.c.l.b16 %v5309
    %v6169 = vunpack.c.h.b16 %v5309
    %v6170 = vunpack.c.l.b16 %v5310
    %v6171 = vunpack.c.l.b16 %v5311
    %v6172 = vunpack.c.h.b16 %v5311
    %v6173 = vunpack.c.l.b16 %v5312
    %v6174 = vunpack.c.l.b16 %v5313
    %v6175 = vunpack.c.h.b16 %v5313
    %v6176 = vunpack.c.l.b16 %v5314
    %v6177 = vunpack.c.l.b16 %v5315
    %v6178 = vunpack.c.h.b16 %v5315
    %v6179 = vunpack.c.l.b16 %v5316
    %v6180 = vunpack.c.l.b16 %v5317
    %v6181 = vunpack.c.h.b16 %v5317
    %v6182 = vunpack.c.l.b16 %v5318
    %v6183 = vunpack.c.l.b16 %v5319
    %v6184 = vunpack.c.h.b16 %v5319
    %v6185 = vunpack.c.l.b16 %v5320
    %v6186 = vunpack.c.l.b16 %v5321
    %v6187 = vunpack.c.h.b16 %v5321
    %v6188 = vunpack.c.l.b16 %v5322
    %v6189 = vunpack.c.l.b16 %v5323
    %v6190 = vunpack.c.h.b16 %v5323
    %v6191 = vunpack.c.l.b16 %v5324
    %v6192 = vunpack.c.l.b16 %v5325
    %v6193 = vunpack.c.h.b16 %v5325
    %v6194 = vunpack.c.l.b16 %v5326
    %v6195 = vunpack.c.l.b16 %v5327
    %v6196 = vunpack.c.h.b16 %v5327
    %v6197 = vunpack.c.l.b16 %v5328
    %v6198 = vunpack.c.l.b16 %v5329
    %v6199 = vunpack.c.h.b16 %v5329
    %v6200 = vunpack.c.l.b16 %v5330
    %v6201 = vunpack.c.l.b16 %v5331
    %v6202 = vunpack.c.h.b16 %v5331
    %v6203 = vunpack.c.l.b16 %v5332
    %v6204 = vunpack.c.l.b16 %v5333
    %v6205 = vunpack.c.h.b16 %v5333
    %v6206 = vunpack.c.l.b16 %v5334
    %v6207 = vunpack.c.l.b16 %v5335
    %v6208 = vunpack.c.h.b16 %v5335
    %v6209 = vunpack.c.l.b16 %v5336
    %v6210 = vunpack.c.l.b16 %v5337
    %v6211 = vunpack.c.h.b16 %v5337
    %v6212 = vunpack.c.l.b16 %v5338
    %v6213 = vunpack.c.l.b16 %v5339
    %v6214 = vunpack.c.h.b16 %v5339
    %v6215 = vunpack.c.l.b16 %v5340
    %v6216 = vunpack.c.l.b16 %v5341
    %v6217 = vunpack.c.h.b16 %v5341
    %v6218 = vunpack.c.l.b16 %v5342
    %v6219 = vunpack.c.l.b16 %v5343
    %v6220 = vunpack.c.h.b16 %v5343
    %v6221 = vunpack.c.l.b16 %v5344
    %v6222 = vunpack.c.l.b16 %v5345
    %v6223 = vunpack.c.h.b16 %v5345
    %v6224 = vunpack.c.l.b16 %v5346
    %v6225 = vunpack.c.l.b16 %v5347
    %v6226 = vunpack.c.h.b16 %v5347
    %v6227 = vunpack.c.l.b16 %v5348
    %v6228 = vunpack.c.l.b16 %v5349
    %v6229 = vunpack.c.h.b16 %v5349
    %v6230 = vunpack.c.l.b16 %v5350
    %v6231 = vunpack.c.l.b16 %v5351
    %v6232 = vunpack.c.h.b16 %v5351
    %v6233 = vunpack.c.l.b16 %v5352
    %v6234 = vunpack.c.l.b16 %v5353
    %v6235 = vunpack.c.h.b16 %v5353
    %v6236 = vunpack.c.l.b16 %v5354
    %v6237 = vunpack.c.l.b16 %v5355
    %v6238 = vunpack.c.h.b16 %v5355
    %v6239 = vunpack.c.l.b16 %v5356
    %v6240 = vunpack.c.l.b16 %v5357
    %v6241 = vunpack.c.h.b16 %v5357
    %v6242 = vunpack.c.l.b16 %v5358
    %v6243 = vunpack.c.l.b16 %v5359
    %v6244 = vunpack.c.h.b16 %v5359
    %v6245 = vunpack.c.l.b16 %v5360
    %v6246 = vunpack.c.l.b16 %v5361
    %v6247 = vunpack.c.h.b16 %v5361
    %v6248 = vunpack.c.l.b16 %v5362
    %v6249 = vunpack.c.l.b16 %v5363
    %v6250 = vunpack.c.h.b16 %v5363
    %v6251 = vunpack.c.l.b16 %v5364
    %v6252 = vunpack.c.l.b16 %v5365
    %v6253 = vunpack.c.h.b16 %v5365
    %v6254 = vunpack.c.l.b16 %v5366
    %v6255 = vunpack.c.l.b16 %v5367
    %v6256 = vunpack.c.h.b16 %v5367
    %v6257 = vunpack.c.l.b16 %v5368
    %v6258 = vunpack.c.l.b16 %v5369
    %v6259 = vunpack.c.h.b16 %v5369
    %v6260 = vunpack.c.l.b16 %v5370
    %v6261 = vpack.c.b16 %v5730, %v5727
    %v6262 = vpack.c.b16 %v5731, %v5728
    %v6263 = vpack.c.b16 %v5732, %v5729
    %v6264 = vpack.c.b16 %v5736, %v5733
    %v6265 = vpack.c.b16 %v5737, %v5734
    %v6266 = vpack.c.b16 %v5738, %v5735
    %v6267 = vpack.c.b16 %v5742, %v5739
    %v6268 = vpack.c.b16 %v5743, %v5740
    %v6269 = vpack.c.b16 %v5744, %v5741
    %v6270 = vpack.c.b16 %v5748, %v5745
    %v6271 = vpack.c.b16 %v5749, %v5746
    %v6272 = vpack.c.b16 %v5750, %v5747
    %v6273 = vpack.c.b16 %v5754, %v5751
    %v6274 = vpack.c.b16 %v5755, %v5752
    %v6275 = vpack.c.b16 %v5756, %v5753
    %v6276 = vpack.c.b16 %v5760, %v5757
    %v6277 = vpack.c.b16 %v5761, %v5758
    %v6278 = vpack.c.b16 %v5762, %v5759
    %v6279 = vpack.c.b16 %v5766, %v5763
    %v6280 = vpack.c.b16 %v5767, %v5764
    %v6281 = vpack.c.b16 %v5768, %v5765
    %v6282 = vpack.c.b16 %v5772, %v5769
    %v6283 = vpack.c.b16 %v5773, %v5770
    %v6284 = vpack.c.b16 %v5774, %v5771
    %v6285 = vpack.c.b16 %v5778, %v5775
    %v6286 = vpack.c.b16 %v5779, %v5776
    %v6287 = vpack.c.b16 %v5780, %v5777
    %v6288 = vpack.c.b16 %v5784, %v5781
    %v6289 = vpack.c.b16 %v5785, %v5782
    %v6290 = vpack.c.b16 %v5786, %v5783
    %v6291 = vpack.c.b16 %v5790, %v5787
    %v6292 = vpack.c.b16 %v5791, %v5788
    %v6293 = vpack.c.b16 %v5792, %v5789
    %v6294 = vpack.c.b16 %v5796, %v5793
    %v6295 = vpack.c.b16 %v5797, %v5794
    %v6296 = vpack.c.b16 %v5798, %v5795
    %v6297 = vpack.c.b16 %v5802, %v5799
    %v6298 = vpack.c.b16 %v5803, %v5800
    %v6299 = vpack.c.b16 %v5804, %v5801
    %v6300 = vpack.c.b16 %v5808, %v5805
    %v6301 = vpack.c.b16 %v5809, %v5806
    %v6302 = vpack.c.b16 %v5810, %v5807
    %v6303 = vpack.c.b16 %v5814, %v5811
    %v6304 = vpack.c.b16 %v5815, %v5812
    %v6305 = vpack.c.b16 %v5816, %v5813
    %v6306 = vpack.c.b16 %v5820, %v5817
    %v6307 = vpack.c.b16 %v5821, %v5818
    %v6308 = vpack.c.b16 %v5822, %v5819
    %v6309 = vpack.c.b16 %v5826, %v5823
    %v6310 = vpack.c.b16 %v5827, %v5824
    %v6311 = vpack.c.b16 %v5828, %v5825
    %v6312 = vpack.c.b16 %v5832, %v5829
    %v6313 = vpack.c.b16 %v5833, %v5830
    %v6314 = vpack.c.b16 %v5834, %v5831
    %v6315 = vpack.c.b16 %v5838, %v5835
    %v6316 = vpack.c.b16 %v5839, %v5836
    %v6317 = vpack.c.b16 %v5840, %v5837
    %v6318 = vpack.c.b16 %v5844, %v5841
    %v6319 = vpack.c.b16 %v5845, %v5842
    %v6320 = vpack.c.b16 %v5846, %v5843
    %v6321 = vpack.c.b16 %v5850, %v5847
    %v6322 = vpack.c.b16 %v5851, %v5848
    %v6323 = vpack.c.b16 %v5852, %v5849
    %v6324 = vpack.c.b16 %v5856, %v5853
    %v6325 = vpack.c.b16 %v5857, %v5854
    %v6326 = vpack.c.b16 %v5858, %v5855
    %v6327 = vpack.c.b16 %v5862, %v5859
    %v6328 = vpack.c.b16 %v5863, %v5860
    %v6329 = vpack.c.b16 %v5864, %v5861
    %v6330 = vpack.c.b16 %v5868, %v5865
    %v6331 = vpack.c.b16 %v5869, %v5866
    %v6332 = vpack.c.b16 %v5870, %v5867
    %v6333 = vpack.c.b16 %v5874, %v5871
    %v6334 = vpack.c.b16 %v5875, %v5872
    %v6335 = vpack.c.b16 %v5876, %v5873
    %v6336 = vpack.c.b16 %v5880, %v5877
    %v6337 = vpack.c.b16 %v5881, %v5878
    %v6338 = vpack.c.b16 %v5882, %v5879
    %v6339 = vpack.c.b16 %v5886, %v5883
    %v6340 = vpack.c.b16 %v5887, %v5884
    %v6341 = vpack.c.b16 %v5888, %v5885
    %v6342 = vpack.c.b16 %v5892, %v5889
    %v6343 = vpack.c.b16 %v5893, %v5890
    %v6344 = vpack.c.b16 %v5894, %v5891
    %v6345 = vpack.c.b16 %v5898, %v5895
    %v6346 = vpack.c.b16 %v5899, %v5896
    %v6347 = vpack.c.b16 %v5900, %v5897
    %v6348 = vpack.c.b16 %v5904, %v5901
    %v6349 = vpack.c.b16 %v5905, %v5902
    %v6350 = vpack.c.b16 %v5906, %v5903
    %v6351 = vpack.c.b16 %v5910, %v5907
    %v6352 = vpack.c.b16 %v5911, %v5908
    %v6353 = vpack.c.b16 %v5912, %v5909
    %v6354 = vpack.c.b16 %v5916, %v5913
    %v6355 = vpack.c.b16 %v5917, %v5914
    %v6356 = vpack.c.b16 %v5918, %v5915
    %v6357 = vpack.c.b16 %v5922, %v5919
    %v6358 = vpack.c.b16 %v5923, %v5920
    %v6359 = vpack.c.b16 %v5924, %v5921
    %v6360 = vpack.c.b16 %v5928, %v5925
    %v6361 = vpack.c.b16 %v5929, %v5926
    %v6362 = vpack.c.b16 %v5930, %v5927
    %v6363 = vpack.c.b16 %v5934, %v5931
    %v6364 = vpack.c.b16 %v5935, %v5932
    %v6365 = vpack.c.b16 %v5936, %v5933
    %v6366 = vpack.c.b16 %v5940, %v5937
    %v6367 = vpack.c.b16 %v5941, %v5938
    %v6368 = vpack.c.b16 %v5942, %v5939
    %v6369 = vpack.c.b16 %v5946, %v5943
    %v6370 = vpack.c.b16 %v5947, %v5944
    %v6371 = vpack.c.b16 %v5948, %v5945
    %v6372 = vpack.c.b16 %v5952, %v5949
    %v6373 = vpack.c.b16 %v5953, %v5950
    %v6374 = vpack.c.b16 %v5954, %v5951
    %v6375 = vpack.c.b16 %v5958, %v5955
    %v6376 = vpack.c.b16 %v5959, %v5956
    %v6377 = vpack.c.b16 %v5960, %v5957
    %v6378 = vpack.c.b16 %v5964, %v5961
    %v6379 = vpack.c.b16 %v5965, %v5962
    %v6380 = vpack.c.b16 %v5966, %v5963
    %v6381 = vpack.c.b16 %v5970, %v5967
    %v6382 = vpack.c.b16 %v5971, %v5968
    %v6383 = vpack.c.b16 %v5972, %v5969
    %v6384 = vpack.c.b16 %v5976, %v5973
    %v6385 = vpack.c.b16 %v5977, %v5974
    %v6386 = vpack.c.b16 %v5978, %v5975
    %v6387 = vpack.c.b16 %v5982, %v5979
    %v6388 = vpack.c.b16 %v5983, %v5980
    %v6389 = vpack.c.b16 %v5984, %v5981
    %v6390 = vpack.c.b16 %v5988, %v5985
    %v6391 = vpack.c.b16 %v5989, %v5986
    %v6392 = vpack.c.b16 %v5990, %v5987
    %v6393 = vpack.c.b16 %v5994, %v5991
    %v6394 = vpack.c.b16 %v5995, %v5992
    %v6395 = vpack.c.b16 %v5996, %v5993
    %v6396 = vpack.c.b16 %v6000, %v5997
    %v6397 = vpack.c.b16 %v6001, %v5998
    %v6398 = vpack.c.b16 %v6002, %v5999
    %v6399 = vpack.c.b16 %v6006, %v6003
    %v6400 = vpack.c.b16 %v6007, %v6004
    %v6401 = vpack.c.b16 %v6008, %v6005
    %v6402 = vpack.c.b16 %v6012, %v6009
    %v6403 = vpack.c.b16 %v6013, %v6010
    %v6404 = vpack.c.b16 %v6014, %v6011
    %v6405 = vpack.c.b16 %v6018, %v6015
    %v6406 = vpack.c.b16 %v6019, %v6016
    %v6407 = vpack.c.b16 %v6020, %v6017
    %v6408 = vpack.c.b16 %v6024, %v6021
    %v6409 = vpack.c.b16 %v6025, %v6022
    %v6410 = vpack.c.b16 %v6026, %v6023
    %v6411 = vpack.c.b16 %v6030, %v6027
    %v6412 = vpack.c.b16 %v6031, %v6028
    %v6413 = vpack.c.b16 %v6032, %v6029
    %v6414 = vpack.c.b16 %v6036, %v6033
    %v6415 = vpack.c.b16 %v6037, %v6034
    %v6416 = vpack.c.b16 %v6038, %v6035
    %v6417 = vpack.c.b16 %v6042, %v6039
    %v6418 = vpack.c.b16 %v6043, %v6040
    %v6419 = vpack.c.b16 %v6044, %v6041
    %v6420 = vpack.c.b16 %v6048, %v6045
    %v6421 = vpack.c.b16 %v6049, %v6046
    %v6422 = vpack.c.b16 %v6050, %v6047
    %v6423 = vpack.c.b16 %v6054, %v6051
    %v6424 = vpack.c.b16 %v6055, %v6052
    %v6425 = vpack.c.b16 %v6056, %v6053
    %v6426 = vpack.c.b16 %v6060, %v6057
    %v6427 = vpack.c.b16 %v6061, %v6058
    %v6428 = vpack.c.b16 %v6062, %v6059
    %v6429 = vpack.c.b16 %v6066, %v6063
    %v6430 = vpack.c.b16 %v6067, %v6064
    %v6431 = vpack.c.b16 %v6068, %v6065
    %v6432 = vpack.c.b16 %v6072, %v6069
    %v6433 = vpack.c.b16 %v6073, %v6070
    %v6434 = vpack.c.b16 %v6074, %v6071
    %v6435 = vpack.c.b16 %v6078, %v6075
    %v6436 = vpack.c.b16 %v6079, %v6076
    %v6437 = vpack.c.b16 %v6080, %v6077
    %v6438 = vpack.c.b16 %v6084, %v6081
    %v6439 = vpack.c.b16 %v6085, %v6082
    %v6440 = vpack.c.b16 %v6086, %v6083
    %v6441 = vpack.c.b16 %v6090, %v6087
    %v6442 = vpack.c.b16 %v6091, %v6088
    %v6443 = vpack.c.b16 %v6092, %v6089
    %v6444 = vpack.c.b16 %v6096, %v6093
    %v6445 = vpack.c.b16 %v6097, %v6094
    %v6446 = vpack.c.b16 %v6098, %v6095
    %v6447 = vpack.c.b16 %v6102, %v6099
    %v6448 = vpack.c.b16 %v6103, %v6100
    %v6449 = vpack.c.b16 %v6104, %v6101
    %v6450 = vpack.c.b16 %v6108, %v6105
    %v6451 = vpack.c.b16 %v6109, %v6106
    %v6452 = vpack.c.b16 %v6110, %v6107
    %v6453 = vpack.c.b16 %v6114, %v6111
    %v6454 = vpack.c.b16 %v6115, %v6112
    %v6455 = vpack.c.b16 %v6116, %v6113
    %v6456 = vpack.c.b16 %v6120, %v6117
    %v6457 = vpack.c.b16 %v6121, %v6118
    %v6458 = vpack.c.b16 %v6122, %v6119
    %v6459 = vpack.c.b16 %v6126, %v6123
    %v6460 = vpack.c.b16 %v6127, %v6124
    %v6461 = vpack.c.b16 %v6128, %v6125
    %v6462 = vpack.c.b16 %v6132, %v6129
    %v6463 = vpack.c.b16 %v6133, %v6130
    %v6464 = vpack.c.b16 %v6134, %v6131
    %v6465 = vpack.c.b16 %v6138, %v6135
    %v6466 = vpack.c.b16 %v6139, %v6136
    %v6467 = vpack.c.b16 %v6140, %v6137
    %v6468 = vpack.c.b16 %v6144, %v6141
    %v6469 = vpack.c.b16 %v6145, %v6142
    %v6470 = vpack.c.b16 %v6146, %v6143
    %v6471 = vpack.c.b16 %v6150, %v6147
    %v6472 = vpack.c.b16 %v6151, %v6148
    %v6473 = vpack.c.b16 %v6152, %v6149
    %v6474 = vpack.c.b16 %v6156, %v6153
    %v6475 = vpack.c.b16 %v6157, %v6154
    %v6476 = vpack.c.b16 %v6158, %v6155
    %v6477 = vpack.c.b16 %v6162, %v6159
    %v6478 = vpack.c.b16 %v6163, %v6160
    %v6479 = vpack.c.b16 %v6164, %v6161
    %v6480 = vpack.c.b16 %v6168, %v6165
    %v6481 = vpack.c.b16 %v6169, %v6166
    %v6482 = vpack.c.b16 %v6170, %v6167
    %v6483 = vpack.c.b16 %v6174, %v6171
    %v6484 = vpack.c.b16 %v6175, %v6172
    %v6485 = vpack.c.b16 %v6176, %v6173
    %v6486 = vpack.c.b16 %v6180, %v6177
    %v6487 = vpack.c.b16 %v6181, %v6178
    %v6488 = vpack.c.b16 %v6182, %v6179
    %v6489 = vpack.c.b16 %v6186, %v6183
    %v6490 = vpack.c.b16 %v6187, %v6184
    %v6491 = vpack.c.b16 %v6188, %v6185
    %v6492 = vpack.c.b16 %v6192, %v6189
    %v6493 = vpack.c.b16 %v6193, %v6190
    %v6494 = vpack.c.b16 %v6194, %v6191
    %v6495 = vpack.c.b16 %v6198, %v6195
    %v6496 = vpack.c.b16 %v6199, %v6196
    %v6497 = vpack.c.b16 %v6200, %v6197
    %v6498 = vpack.c.b16 %v6204, %v6201
    %v6499 = vpack.c.b16 %v6205, %v6202
    %v6500 = vpack.c.b16 %v6206, %v6203
    %v6501 = vpack.c.b16 %v6210, %v6207
    %v6502 = vpack.c.b16 %v6211, %v6208
    %v6503 = vpack.c.b16 %v6212, %v6209
    %v6504 = vpack.c.b16 %v6216, %v6213
    %v6505 = vpack.c.b16 %v6217, %v6214
    %v6506 = vpack.c.b16 %v6218, %v6215
    %v6507 = vpack.c.b16 %v6222, %v6219
    %v6508 = vpack.c.b16 %v6223, %v6220
    %v6509 = vpack.c.b16 %v6224, %v6221
    %v6510 = vpack.c.b16 %v6228, %v6225
    %v6511 = vpack.c.b16 %v6229, %v6226
    %v6512 = vpack.c.b16 %v6230, %v6227
    %v6513 = vpack.c.b16 %v6234, %v6231
    %v6514 = vpack.c.b16 %v6235, %v6232
    %v6515 = vpack.c.b16 %v6236, %v6233
    %v6516 = vpack.c.b16 %v6240, %v6237
    %v6517 = vpack.c.b16 %v6241, %v6238
    %v6518 = vpack.c.b16 %v6242, %v6239
    %v6519 = vpack.c.b16 %v6246, %v6243
    %v6520 = vpack.c.b16 %v6247, %v6244
    %v6521 = vpack.c.b16 %v6248, %v6245
    %v6522 = vpack.c.b16 %v6252, %v6249
    %v6523 = vpack.c.b16 %v6253, %v6250
    %v6524 = vpack.c.b16 %v6254, %v6251
    %v6525 = vpack.c.b16 %v6258, %v6255
    %v6526 = vpack.c.b16 %v6259, %v6256
    %v6527 = vpack.c.b16 %v6260, %v6257
    %v6796 = vsel %vm306, %v4978, 0
    %v6799 = vsel %vm306, %v4990, 0
    %v6802 = vsel %vm306, %v5002, 0
    %v6805 = vsel %vm306, %v5014, 0
    %6807 = vmatprep.subr.bf16.mxu0 %v6262
    %6808 = vmatpush1.bf16.msra.mxu0 %v6261
    %6809 = vmatprep.subr.bf16.mxu0 %v6265
    %6810 = vmatpush1.bf16.msra.mxu0 %v6264
    %6811 = vmatprep.subr.bf16.mxu0 %v6268
    %6812 = vmatpush1.bf16.msra.mxu0 %v6267
    %6813 = vmatprep.subr.bf16.mxu0 %v6271
    %6814 = vmatpush1.bf16.msra.mxu0 %v6270
    %6815 = vmatprep.subr.bf16.mxu0 %v6274
    %6816 = vmatpush1.bf16.msra.mxu0 %v6273
    %6817 = vmatprep.subr.bf16.mxu0 %v6277
    %6818 = vmatpush1.bf16.msra.mxu0 %v6276
    %6819 = vmatprep.subr.bf16.mxu0 %v6280
    %6820 = vmatpush1.bf16.msra.mxu0 %v6279
    %6821 = vmatprep.subr.bf16.mxu0 %v6283
    %6822 = vmatpush1.bf16.msra.mxu0 %v6282
    %6823 = vmatprep.subr.bf16.mxu0 %v6286
    %6824 = vmatpush1.bf16.msra.mxu0 %v6285
    %6825 = vmatprep.subr.bf16.mxu0 %v6289
    %6826 = vmatpush1.bf16.msra.mxu0 %v6288
    %6827 = vmatprep.subr.bf16.mxu0 %v6292
    %6828 = vmatpush1.bf16.msra.mxu0 %v6291
    %6829 = vmatprep.subr.bf16.mxu0 %v6295
    %6830 = vmatpush1.bf16.msra.mxu0 %v6294
    %6831 = vmatprep.subr.bf16.mxu0 %v6298
    %6832 = vmatpush1.bf16.msra.mxu0 %v6297
    %6833 = vmatprep.subr.bf16.mxu0 %v6301
    %6834 = vmatpush1.bf16.msra.mxu0 %v6300
    %6835 = vmatprep.subr.bf16.mxu0 %v6304
    %6836 = vmatpush1.bf16.msra.mxu0 %v6303
    %6837 = vmatprep.subr.bf16.mxu0 %v6307
    %6838 = vmatpush1.bf16.msra.mxu0 %v6306
    %6839 = vmatprep.mubr.bf16.mxu0 %v4968
    %6840 = vmatmul.mubr.bf16.gmra.mrb[0].mxu0 %v4967
    %v6841 = vpop.f32.mrb[0].mxu0
    %v6842 = vadd.f32 0.0, %v6841
    %v6843 = vpop.f32.mrb[0].mxu0
    %v6844 = vadd.f32 0.0, %v6843
    %v6845 = vpop.f32.mrb[0].mxu0
    %v6846 = vadd.f32 0.0, %v6845
    %v6847 = vpop.f32.mrb[0].mxu0
    %v6848 = vadd.f32 0.0, %v6847
    %6849 = vmatprep.mubr.bf16.mxu0 %v4980
    %6850 = vmatmul.mubr.bf16.gmra.mrb[0].mxu0 %v4979
    %v6851 = vpop.f32.mrb[0].mxu0
    %v6852 = vadd.f32 0.0, %v6851
    %v6853 = vpop.f32.mrb[0].mxu0
    %v6854 = vadd.f32 0.0, %v6853
    %v6855 = vpop.f32.mrb[0].mxu0
    %v6856 = vadd.f32 0.0, %v6855
    %v6857 = vpop.f32.mrb[0].mxu0
    %v6858 = vadd.f32 0.0, %v6857
    %6859 = vmatprep.mubr.bf16.mxu0 %v4992
    %6860 = vmatmul.mubr.bf16.gmra.mrb[0].mxu0 %v4991
    %v6861 = vpop.f32.mrb[0].mxu0
    %v6862 = vadd.f32 0.0, %v6861
    %v6863 = vpop.f32.mrb[0].mxu0
    %v6864 = vadd.f32 0.0, %v6863
    %v6865 = vpop.f32.mrb[0].mxu0
    %v6866 = vadd.f32 0.0, %v6865
    %v6867 = vpop.f32.mrb[0].mxu0
    %v6868 = vadd.f32 0.0, %v6867
    %6869 = vmatprep.mubr.bf16.mxu0 %v5004
    %6870 = vmatmul.mubr.bf16.gmra.mrb[0].mxu0 %v5003
    %v6871 = vpop.f32.mrb[0].mxu0
    %v6872 = vadd.f32 0.0, %v6871
    %v6873 = vpop.f32.mrb[0].mxu0
    %v6874 = vadd.f32 0.0, %v6873
    %v6875 = vpop.f32.mrb[0].mxu0
    %v6876 = vadd.f32 0.0, %v6875
    %v6877 = vpop.f32.mrb[0].mxu0
    %v6878 = vadd.f32 0.0, %v6877
    %6879 = vdwg.mxu0
    %6880 = vmatprep.subr.bf16.mxu0 %v6310
    %6881 = vmatpush1.bf16.msra.mxu0 %v6309
    %6882 = vmatprep.subr.bf16.mxu0 %v6313
    %6883 = vmatpush1.bf16.msra.mxu0 %v6312
    %6884 = vmatprep.subr.bf16.mxu0 %v6316
    %6885 = vmatpush1.bf16.msra.mxu0 %v6315
    %6886 = vmatprep.subr.bf16.mxu0 %v6319
    %6887 = vmatpush1.bf16.msra.mxu0 %v6318
    %6888 = vmatprep.subr.bf16.mxu0 %v6322
    %6889 = vmatpush1.bf16.msra.mxu0 %v6321
    %6890 = vmatprep.subr.bf16.mxu0 %v6325
    %6891 = vmatpush1.bf16.msra.mxu0 %v6324
    %6892 = vmatprep.subr.bf16.mxu0 %v6328
    %6893 = vmatpush1.bf16.msra.mxu0 %v6327
    %6894 = vmatprep.subr.bf16.mxu0 %v6331
    %6895 = vmatpush1.bf16.msra.mxu0 %v6330
    %6896 = vmatprep.subr.bf16.mxu0 %v6334
    %6897 = vmatpush1.bf16.msra.mxu0 %v6333
    %6898 = vmatprep.subr.bf16.mxu0 %v6337
    %6899 = vmatpush1.bf16.msra.mxu0 %v6336
    %6900 = vmatprep.subr.bf16.mxu0 %v6340
    %6901 = vmatpush1.bf16.msra.mxu0 %v6339
    %6902 = vmatprep.subr.bf16.mxu0 %v6343
    %6903 = vmatpush1.bf16.msra.mxu0 %v6342
    %6904 = vmatprep.subr.bf16.mxu0 %v6346
    %6905 = vmatpush1.bf16.msra.mxu0 %v6345
    %6906 = vmatprep.subr.bf16.mxu0 %v6349
    %6907 = vmatpush1.bf16.msra.mxu0 %v6348
    %6908 = vmatprep.subr.bf16.mxu0 %v6352
    %6909 = vmatpush1.bf16.msra.mxu0 %v6351
    %6910 = vmatprep.subr.bf16.mxu0 %v6355
    %6911 = vmatpush1.bf16.msra.mxu0 %v6354
    %6912 = vmatprep.mubr.bf16.mxu0 %v4970
    %6913 = vmatmul.mubr.bf16.gmra.mrb[0].mxu0 %v4969
    %v6914 = vpop.f32.mrb[0].mxu0
    %v6915 = vadd.f32 %v6842, %v6914
    %v6916 = vpop.f32.mrb[0].mxu0
    %v6917 = vadd.f32 %v6844, %v6916
    %v6918 = vpop.f32.mrb[0].mxu0
    %v6919 = vadd.f32 %v6846, %v6918
    %v6920 = vpop.f32.mrb[0].mxu0
    %v6921 = vadd.f32 %v6848, %v6920
    %6922 = vmatprep.mubr.bf16.mxu0 %v4982
    %6923 = vmatmul.mubr.bf16.gmra.mrb[0].mxu0 %v4981
    %v6924 = vpop.f32.mrb[0].mxu0
    %v6925 = vadd.f32 %v6852, %v6924
    %v6926 = vpop.f32.mrb[0].mxu0
    %v6927 = vadd.f32 %v6854, %v6926
    %v6928 = vpop.f32.mrb[0].mxu0
    %v6929 = vadd.f32 %v6856, %v6928
    %v6930 = vpop.f32.mrb[0].mxu0
    %v6931 = vadd.f32 %v6858, %v6930
    %6932 = vmatprep.mubr.bf16.mxu0 %v4994
    %6933 = vmatmul.mubr.bf16.gmra.mrb[0].mxu0 %v4993
    %v6934 = vpop.f32.mrb[0].mxu0
    %v6935 = vadd.f32 %v6862, %v6934
    %v6936 = vpop.f32.mrb[0].mxu0
    %v6937 = vadd.f32 %v6864, %v6936
    %v6938 = vpop.f32.mrb[0].mxu0
    %v6939 = vadd.f32 %v6866, %v6938
    %v6940 = vpop.f32.mrb[0].mxu0
    %v6941 = vadd.f32 %v6868, %v6940
    %6942 = vmatprep.mubr.bf16.mxu0 %v5006
    %6943 = vmatmul.mubr.bf16.gmra.mrb[0].mxu0 %v5005
    %v6944 = vpop.f32.mrb[0].mxu0
    %v6945 = vadd.f32 %v6872, %v6944
    %v6946 = vpop.f32.mrb[0].mxu0
    %v6947 = vadd.f32 %v6874, %v6946
    %v6948 = vpop.f32.mrb[0].mxu0
    %v6949 = vadd.f32 %v6876, %v6948
    %v6950 = vpop.f32.mrb[0].mxu0
    %v6951 = vadd.f32 %v6878, %v6950
    %6952 = vdwg.mxu0
    %6953 = vmatprep.subr.bf16.mxu0 %v6358
    %6954 = vmatpush1.bf16.msra.mxu0 %v6357
    %6955 = vmatprep.subr.bf16.mxu0 %v6361
    %6956 = vmatpush1.bf16.msra.mxu0 %v6360
    %6957 = vmatprep.subr.bf16.mxu0 %v6364
    %6958 = vmatpush1.bf16.msra.mxu0 %v6363
    %6959 = vmatprep.subr.bf16.mxu0 %v6367
    %6960 = vmatpush1.bf16.msra.mxu0 %v6366
    %6961 = vmatprep.subr.bf16.mxu0 %v6370
    %6962 = vmatpush1.bf16.msra.mxu0 %v6369
    %6963 = vmatprep.subr.bf16.mxu0 %v6373
    %6964 = vmatpush1.bf16.msra.mxu0 %v6372
    %6965 = vmatprep.subr.bf16.mxu0 %v6376
    %6966 = vmatpush1.bf16.msra.mxu0 %v6375
    %6967 = vmatprep.subr.bf16.mxu0 %v6379
    %6968 = vmatpush1.bf16.msra.mxu0 %v6378
    %6969 = vmatprep.subr.bf16.mxu0 %v6382
    %6970 = vmatpush1.bf16.msra.mxu0 %v6381
    %6971 = vmatprep.subr.bf16.mxu0 %v6385
    %6972 = vmatpush1.bf16.msra.mxu0 %v6384
    %6973 = vmatprep.subr.bf16.mxu0 %v6388
    %6974 = vmatpush1.bf16.msra.mxu0 %v6387
    %6975 = vmatprep.subr.bf16.mxu0 %v6391
    %6976 = vmatpush1.bf16.msra.mxu0 %v6390
    %6977 = vmatprep.subr.bf16.mxu0 %v6394
    %6978 = vmatpush1.bf16.msra.mxu0 %v6393
    %6979 = vmatprep.subr.bf16.mxu0 %v6397
    %6980 = vmatpush1.bf16.msra.mxu0 %v6396
    %6981 = vmatprep.subr.bf16.mxu0 %v6400
    %6982 = vmatpush1.bf16.msra.mxu0 %v6399
    %6983 = vmatprep.subr.bf16.mxu0 %v6403
    %6984 = vmatpush1.bf16.msra.mxu0 %v6402
    %6985 = vmatprep.mubr.bf16.mxu0 %v4972
    %6986 = vmatmul.mubr.bf16.gmra.mrb[0].mxu0 %v4971
    %v6987 = vpop.f32.mrb[0].mxu0
    %v6988 = vadd.f32 %v6915, %v6987
    %v6989 = vpop.f32.mrb[0].mxu0
    %v6990 = vadd.f32 %v6917, %v6989
    %v6991 = vpop.f32.mrb[0].mxu0
    %v6992 = vadd.f32 %v6919, %v6991
    %v6993 = vpop.f32.mrb[0].mxu0
    %v6994 = vadd.f32 %v6921, %v6993
    %6995 = vmatprep.mubr.bf16.mxu0 %v4984
    %6996 = vmatmul.mubr.bf16.gmra.mrb[0].mxu0 %v4983
    %v6997 = vpop.f32.mrb[0].mxu0
    %v6998 = vadd.f32 %v6925, %v6997
    %v6999 = vpop.f32.mrb[0].mxu0
    %v7000 = vadd.f32 %v6927, %v6999
    %v7001 = vpop.f32.mrb[0].mxu0
    %v7002 = vadd.f32 %v6929, %v7001
    %v7003 = vpop.f32.mrb[0].mxu0
    %v7004 = vadd.f32 %v6931, %v7003
    %7005 = vmatprep.mubr.bf16.mxu0 %v4996
    %7006 = vmatmul.mubr.bf16.gmra.mrb[0].mxu0 %v4995
    %v7007 = vpop.f32.mrb[0].mxu0
    %v7008 = vadd.f32 %v6935, %v7007
    %v7009 = vpop.f32.mrb[0].mxu0
    %v7010 = vadd.f32 %v6937, %v7009
    %v7011 = vpop.f32.mrb[0].mxu0
    %v7012 = vadd.f32 %v6939, %v7011
    %v7013 = vpop.f32.mrb[0].mxu0
    %v7014 = vadd.f32 %v6941, %v7013
    %7015 = vmatprep.mubr.bf16.mxu0 %v5008
    %7016 = vmatmul.mubr.bf16.gmra.mrb[0].mxu0 %v5007
    %v7017 = vpop.f32.mrb[0].mxu0
    %v7018 = vadd.f32 %v6945, %v7017
    %v7019 = vpop.f32.mrb[0].mxu0
    %v7020 = vadd.f32 %v6947, %v7019
    %v7021 = vpop.f32.mrb[0].mxu0
    %v7022 = vadd.f32 %v6949, %v7021
    %v7023 = vpop.f32.mrb[0].mxu0
    %v7024 = vadd.f32 %v6951, %v7023
    %7025 = vdwg.mxu0
    %7026 = vmatprep.subr.bf16.mxu0 %v6406
    %7027 = vmatpush1.bf16.msra.mxu0 %v6405
    %7028 = vmatprep.subr.bf16.mxu0 %v6409
    %7029 = vmatpush1.bf16.msra.mxu0 %v6408
    %7030 = vmatprep.subr.bf16.mxu0 %v6412
    %7031 = vmatpush1.bf16.msra.mxu0 %v6411
    %7032 = vmatprep.subr.bf16.mxu0 %v6415
    %7033 = vmatpush1.bf16.msra.mxu0 %v6414
    %7034 = vmatprep.subr.bf16.mxu0 %v6418
    %7035 = vmatpush1.bf16.msra.mxu0 %v6417
    %7036 = vmatprep.subr.bf16.mxu0 %v6421
    %7037 = vmatpush1.bf16.msra.mxu0 %v6420
    %7038 = vmatprep.subr.bf16.mxu0 %v6424
    %7039 = vmatpush1.bf16.msra.mxu0 %v6423
    %7040 = vmatprep.subr.bf16.mxu0 %v6427
    %7041 = vmatpush1.bf16.msra.mxu0 %v6426
    %7042 = vmatprep.subr.bf16.mxu0 %v6430
    %7043 = vmatpush1.bf16.msra.mxu0 %v6429
    %7044 = vmatprep.subr.bf16.mxu0 %v6433
    %7045 = vmatpush1.bf16.msra.mxu0 %v6432
    %7046 = vmatprep.subr.bf16.mxu0 %v6436
    %7047 = vmatpush1.bf16.msra.mxu0 %v6435
    %7048 = vmatprep.subr.bf16.mxu0 %v6439
    %7049 = vmatpush1.bf16.msra.mxu0 %v6438
    %7050 = vmatprep.subr.bf16.mxu0 %v6442
    %7051 = vmatpush1.bf16.msra.mxu0 %v6441
    %7052 = vmatprep.subr.bf16.mxu0 %v6445
    %7053 = vmatpush1.bf16.msra.mxu0 %v6444
    %7054 = vmatprep.subr.bf16.mxu0 %v6448
    %7055 = vmatpush1.bf16.msra.mxu0 %v6447
    %7056 = vmatprep.subr.bf16.mxu0 %v6451
    %7057 = vmatpush1.bf16.msra.mxu0 %v6450
    %7058 = vmatprep.mubr.bf16.mxu0 %v4974
    %7059 = vmatmul.mubr.bf16.gmra.mrb[0].mxu0 %v4973
    %v7060 = vpop.f32.mrb[0].mxu0
    %v7061 = vadd.f32 %v6988, %v7060
    %v7062 = vpop.f32.mrb[0].mxu0
    %v7063 = vadd.f32 %v6990, %v7062
    %v7064 = vpop.f32.mrb[0].mxu0
    %v7065 = vadd.f32 %v6992, %v7064
    %v7066 = vpop.f32.mrb[0].mxu0
    %v7067 = vadd.f32 %v6994, %v7066
    %7068 = vmatprep.mubr.bf16.mxu0 %v4986
    %7069 = vmatmul.mubr.bf16.gmra.mrb[0].mxu0 %v4985
    %v7070 = vpop.f32.mrb[0].mxu0
    %v7071 = vadd.f32 %v6998, %v7070
    %v7072 = vpop.f32.mrb[0].mxu0
    %v7073 = vadd.f32 %v7000, %v7072
    %v7074 = vpop.f32.mrb[0].mxu0
    %v7075 = vadd.f32 %v7002, %v7074
    %v7076 = vpop.f32.mrb[0].mxu0
    %v7077 = vadd.f32 %v7004, %v7076
    %7078 = vmatprep.mubr.bf16.mxu0 %v4998
    %7079 = vmatmul.mubr.bf16.gmra.mrb[0].mxu0 %v4997
    %v7080 = vpop.f32.mrb[0].mxu0
    %v7081 = vadd.f32 %v7008, %v7080
    %v7082 = vpop.f32.mrb[0].mxu0
    %v7083 = vadd.f32 %v7010, %v7082
    %v7084 = vpop.f32.mrb[0].mxu0
    %v7085 = vadd.f32 %v7012, %v7084
    %v7086 = vpop.f32.mrb[0].mxu0
    %v7087 = vadd.f32 %v7014, %v7086
    %7088 = vmatprep.mubr.bf16.mxu0 %v5010
    %7089 = vmatmul.mubr.bf16.gmra.mrb[0].mxu0 %v5009
    %v7090 = vpop.f32.mrb[0].mxu0
    %v7091 = vadd.f32 %v7018, %v7090
    %v7092 = vpop.f32.mrb[0].mxu0
    %v7093 = vadd.f32 %v7020, %v7092
    %v7094 = vpop.f32.mrb[0].mxu0
    %v7095 = vadd.f32 %v7022, %v7094
    %v7096 = vpop.f32.mrb[0].mxu0
    %v7097 = vadd.f32 %v7024, %v7096
    %7098 = vdwg.mxu0
    %7099 = vmatprep.subr.bf16.mxu0 %v6454
    %7100 = vmatpush1.bf16.msra.mxu0 %v6453
    %7101 = vmatprep.subr.bf16.mxu0 %v6457
    %7102 = vmatpush1.bf16.msra.mxu0 %v6456
    %7103 = vmatprep.subr.bf16.mxu0 %v6460
    %7104 = vmatpush1.bf16.msra.mxu0 %v6459
    %7105 = vmatprep.subr.bf16.mxu0 %v6463
    %7106 = vmatpush1.bf16.msra.mxu0 %v6462
    %7107 = vmatprep.subr.bf16.mxu0 %v6466
    %7108 = vmatpush1.bf16.msra.mxu0 %v6465
    %7109 = vmatprep.subr.bf16.mxu0 %v6469
    %7110 = vmatpush1.bf16.msra.mxu0 %v6468
    %7111 = vmatprep.subr.bf16.mxu0 %v6472
    %7112 = vmatpush1.bf16.msra.mxu0 %v6471
    %7113 = vmatprep.subr.bf16.mxu0 %v6475
    %7114 = vmatpush1.bf16.msra.mxu0 %v6474
    %7115 = vmatprep.subr.bf16.mxu0 %v6478
    %7116 = vmatpush1.bf16.msra.mxu0 %v6477
    %7117 = vmatprep.subr.bf16.mxu0 %v6481
    %7118 = vmatpush1.bf16.msra.mxu0 %v6480
    %7119 = vmatprep.subr.bf16.mxu0 %v6484
    %7120 = vmatpush1.bf16.msra.mxu0 %v6483
    %7121 = vmatprep.subr.bf16.mxu0 %v6487
    %7122 = vmatpush1.bf16.msra.mxu0 %v6486
    %7123 = vmatprep.subr.bf16.mxu0 %v6490
    %7124 = vmatpush1.bf16.msra.mxu0 %v6489
    %7125 = vmatprep.subr.bf16.mxu0 %v6493
    %7126 = vmatpush1.bf16.msra.mxu0 %v6492
    %7127 = vmatprep.subr.bf16.mxu0 %v6496
    %7128 = vmatpush1.bf16.msra.mxu0 %v6495
    %7129 = vmatprep.subr.bf16.mxu0 %v6499
    %7130 = vmatpush1.bf16.msra.mxu0 %v6498
    %7131 = vmatprep.mubr.bf16.mxu0 %v4976
    %7132 = vmatmul.mubr.bf16.gmra.mrb[0].mxu0 %v4975
    %v7133 = vpop.f32.mrb[0].mxu0
    %v7134 = vadd.f32 %v7061, %v7133
    %v7135 = vpop.f32.mrb[0].mxu0
    %v7136 = vadd.f32 %v7063, %v7135
    %v7137 = vpop.f32.mrb[0].mxu0
    %v7138 = vadd.f32 %v7065, %v7137
    %v7139 = vpop.f32.mrb[0].mxu0
    %v7140 = vadd.f32 %v7067, %v7139
    %7141 = vmatprep.mubr.bf16.mxu0 %v4988
    %7142 = vmatmul.mubr.bf16.gmra.mrb[0].mxu0 %v4987
    %v7143 = vpop.f32.mrb[0].mxu0
    %v7144 = vadd.f32 %v7071, %v7143
    %v7145 = vpop.f32.mrb[0].mxu0
    %v7146 = vadd.f32 %v7073, %v7145
    %v7147 = vpop.f32.mrb[0].mxu0
    %v7148 = vadd.f32 %v7075, %v7147
    %v7149 = vpop.f32.mrb[0].mxu0
    %v7150 = vadd.f32 %v7077, %v7149
    %7151 = vmatprep.mubr.bf16.mxu0 %v5000
    %7152 = vmatmul.mubr.bf16.gmra.mrb[0].mxu0 %v4999
    %v7153 = vpop.f32.mrb[0].mxu0
    %v7154 = vadd.f32 %v7081, %v7153
    %v7155 = vpop.f32.mrb[0].mxu0
    %v7156 = vadd.f32 %v7083, %v7155
    %v7157 = vpop.f32.mrb[0].mxu0
    %v7158 = vadd.f32 %v7085, %v7157
    %v7159 = vpop.f32.mrb[0].mxu0
    %v7160 = vadd.f32 %v7087, %v7159
    %7161 = vmatprep.mubr.bf16.mxu0 %v5012
    %7162 = vmatmul.mubr.bf16.gmra.mrb[0].mxu0 %v5011
    %v7163 = vpop.f32.mrb[0].mxu0
    %v7164 = vadd.f32 %v7091, %v7163
    %v7165 = vpop.f32.mrb[0].mxu0
    %v7166 = vadd.f32 %v7093, %v7165
    %v7167 = vpop.f32.mrb[0].mxu0
    %v7168 = vadd.f32 %v7095, %v7167
    %v7169 = vpop.f32.mrb[0].mxu0
    %v7170 = vadd.f32 %v7097, %v7169
    %7171 = vdwg.mxu0
    %7172 = vmatprep.subr.bf16.mxu0 %v6502
    %7173 = vmatpush1.bf16.msra.mxu0 %v6501
    %7174 = vmatprep.subr.bf16.mxu0 %v6505
    %7175 = vmatpush1.bf16.msra.mxu0 %v6504
    %7176 = vmatprep.subr.bf16.mxu0 %v6508
    %7177 = vmatpush1.bf16.msra.mxu0 %v6507
    %7178 = vmatprep.subr.bf16.mxu0 %v6511
    %7179 = vmatpush1.bf16.msra.mxu0 %v6510
    %7180 = vmatprep.subr.bf16.mxu0 %v6514
    %7181 = vmatpush1.bf16.msra.mxu0 %v6513
    %7182 = vmatprep.subr.bf16.mxu0 %v6517
    %7183 = vmatpush1.bf16.msra.mxu0 %v6516
    %7184 = vmatprep.subr.bf16.mxu0 %v6520
    %7185 = vmatpush1.bf16.msra.mxu0 %v6519
    %7186 = vmatprep.subr.bf16.mxu0 %v6523
    %7187 = vmatpush1.bf16.msra.mxu0 %v6522
    %7188 = vmatprep.subr.bf16.mxu0 %v6526
    %7189 = vmatpush1.bf16.msra.mxu0 %v6525
    %7190 = vmatprep.subr.bf16.mxu0 0
    %7191 = vmatpush1.bf16.msra.mxu0 0
    %7192 = vmatprep.subr.bf16.mxu0 0
    %7193 = vmatpush1.bf16.msra.mxu0 0
    %7194 = vmatprep.subr.bf16.mxu0 0
    %7195 = vmatpush1.bf16.msra.mxu0 0
    %7196 = vmatprep.subr.bf16.mxu0 0
    %7197 = vmatpush1.bf16.msra.mxu0 0
    %7198 = vmatprep.subr.bf16.mxu0 0
    %7199 = vmatpush1.bf16.msra.mxu0 0
    %7200 = vmatprep.subr.bf16.mxu0 0
    %7201 = vmatpush1.bf16.msra.mxu0 0
    %7202 = vmatprep.subr.bf16.mxu0 0
    %7203 = vmatpush1.bf16.msra.mxu0 0
    %7204 = vmatprep.mubr.bf16.mxu0 %v6796
    %7205 = vmatmul.mubr.bf16.gmra.mrb[0].mxu0 %v4977
    %v7206 = vpop.f32.mrb[0].mxu0
    %v7207 = vadd.f32 %v7134, %v7206
    %v7208 = vpop.f32.mrb[0].mxu0
    %v7209 = vadd.f32 %v7136, %v7208
    %v7210 = vpop.f32.mrb[0].mxu0
    %v7211 = vadd.f32 %v7138, %v7210
    %v7212 = vpop.f32.mrb[0].mxu0
    %v7213 = vadd.f32 %v7140, %v7212
    %7214 = vmatprep.mubr.bf16.mxu0 %v6799
    %7215 = vmatmul.mubr.bf16.gmra.mrb[0].mxu0 %v4989
    %v7216 = vpop.f32.mrb[0].mxu0
    %v7217 = vadd.f32 %v7144, %v7216
    %v7218 = vpop.f32.mrb[0].mxu0
    %v7219 = vadd.f32 %v7146, %v7218
    %v7220 = vpop.f32.mrb[0].mxu0
    %v7221 = vadd.f32 %v7148, %v7220
    %v7222 = vpop.f32.mrb[0].mxu0
    %v7223 = vadd.f32 %v7150, %v7222
    %7224 = vmatprep.mubr.bf16.mxu0 %v6802
    %7225 = vmatmul.mubr.bf16.gmra.mrb[0].mxu0 %v5001
    %v7226 = vpop.f32.mrb[0].mxu0
    %v7227 = vadd.f32 %v7154, %v7226
    %v7228 = vpop.f32.mrb[0].mxu0
    %v7229 = vadd.f32 %v7156, %v7228
    %v7230 = vpop.f32.mrb[0].mxu0
    %v7231 = vadd.f32 %v7158, %v7230
    %v7232 = vpop.f32.mrb[0].mxu0
    %v7233 = vadd.f32 %v7160, %v7232
    %7234 = vmatprep.mubr.bf16.mxu0 %v6805
    %7235 = vmatmul.mubr.bf16.gmra.mrb[0].mxu0 %v5013
    %v7236 = vpop.f32.mrb[0].mxu0
    %v7237 = vadd.f32 %v7164, %v7236
    %v7238 = vpop.f32.mrb[0].mxu0
    %v7239 = vadd.f32 %v7166, %v7238
    %v7240 = vpop.f32.mrb[0].mxu0
    %v7241 = vadd.f32 %v7168, %v7240
    %v7242 = vpop.f32.mrb[0].mxu0
    %v7243 = vadd.f32 %v7170, %v7242
    %7244 = vdwg.mxu0
    %7245 = vmatprep.subr.bf16.mxu0 0
    %7246 = vmatpush1.bf16.msra.mxu0 %v6263
    %7247 = vmatprep.subr.bf16.mxu0 0
    %7248 = vmatpush1.bf16.msra.mxu0 %v6266
    %7249 = vmatprep.subr.bf16.mxu0 0
    %7250 = vmatpush1.bf16.msra.mxu0 %v6269
    %7251 = vmatprep.subr.bf16.mxu0 0
    %7252 = vmatpush1.bf16.msra.mxu0 %v6272
    %7253 = vmatprep.subr.bf16.mxu0 0
    %7254 = vmatpush1.bf16.msra.mxu0 %v6275
    %7255 = vmatprep.subr.bf16.mxu0 0
    %7256 = vmatpush1.bf16.msra.mxu0 %v6278
    %7257 = vmatprep.subr.bf16.mxu0 0
    %7258 = vmatpush1.bf16.msra.mxu0 %v6281
    %7259 = vmatprep.subr.bf16.mxu0 0
    %7260 = vmatpush1.bf16.msra.mxu0 %v6284
    %7261 = vmatprep.subr.bf16.mxu0 0
    %7262 = vmatpush1.bf16.msra.mxu0 %v6287
    %7263 = vmatprep.subr.bf16.mxu0 0
    %7264 = vmatpush1.bf16.msra.mxu0 %v6290
    %7265 = vmatprep.subr.bf16.mxu0 0
    %7266 = vmatpush1.bf16.msra.mxu0 %v6293
    %7267 = vmatprep.subr.bf16.mxu0 0
    %7268 = vmatpush1.bf16.msra.mxu0 %v6296
    %7269 = vmatprep.subr.bf16.mxu0 0
    %7270 = vmatpush1.bf16.msra.mxu0 %v6299
    %7271 = vmatprep.subr.bf16.mxu0 0
    %7272 = vmatpush1.bf16.msra.mxu0 %v6302
    %7273 = vmatprep.subr.bf16.mxu0 0
    %7274 = vmatpush1.bf16.msra.mxu0 %v6305
    %7275 = vmatprep.subr.bf16.mxu0 0
    %7276 = vmatpush1.bf16.msra.mxu0 %v6308
    %7277 = vmatprep.mubr.bf16.mxu0 %v4968
    %7278 = vmatmul.mubr.bf16.gmra.mrb[0].mxu0 %v4967
    %v7279 = vpop.f32.mrb[0].mxu0
    %v7280 = vadd.f32 0.0, %v7279
    %v7281 = vpop.f32.mrb[0].mxu0
    %v7282 = vpop.f32.mrb[0].mxu0
    %v7283 = vadd.f32 0.0, %v7282
    %v7284 = vpop.f32.mrb[0].mxu0
    %7285 = vmatprep.mubr.bf16.mxu0 %v4980
    %7286 = vmatmul.mubr.bf16.gmra.mrb[0].mxu0 %v4979
    %v7287 = vpop.f32.mrb[0].mxu0
    %v7288 = vadd.f32 0.0, %v7287
    %v7289 = vpop.f32.mrb[0].mxu0
    %v7290 = vpop.f32.mrb[0].mxu0
    %v7291 = vadd.f32 0.0, %v7290
    %v7292 = vpop.f32.mrb[0].mxu0
    %7293 = vmatprep.mubr.bf16.mxu0 %v4992
    %7294 = vmatmul.mubr.bf16.gmra.mrb[0].mxu0 %v4991
    %v7295 = vpop.f32.mrb[0].mxu0
    %v7296 = vadd.f32 0.0, %v7295
    %v7297 = vpop.f32.mrb[0].mxu0
    %v7298 = vpop.f32.mrb[0].mxu0
    %v7299 = vadd.f32 0.0, %v7298
    %v7300 = vpop.f32.mrb[0].mxu0
    %7301 = vmatprep.mubr.bf16.mxu0 %v5004
    %7302 = vmatmul.mubr.bf16.gmra.mrb[0].mxu0 %v5003
    %v7303 = vpop.f32.mrb[0].mxu0
    %v7304 = vadd.f32 0.0, %v7303
    %v7305 = vpop.f32.mrb[0].mxu0
    %v7306 = vpop.f32.mrb[0].mxu0
    %v7307 = vadd.f32 0.0, %v7306
    %v7308 = vpop.f32.mrb[0].mxu0
    %7309 = vdwg.mxu0
    %7310 = vmatprep.subr.bf16.mxu0 0
    %7311 = vmatpush1.bf16.msra.mxu0 %v6311
    %7312 = vmatprep.subr.bf16.mxu0 0
    %7313 = vmatpush1.bf16.msra.mxu0 %v6314
    %7314 = vmatprep.subr.bf16.mxu0 0
    %7315 = vmatpush1.bf16.msra.mxu0 %v6317
    %7316 = vmatprep.subr.bf16.mxu0 0
    %7317 = vmatpush1.bf16.msra.mxu0 %v6320
    %7318 = vmatprep.subr.bf16.mxu0 0
    %7319 = vmatpush1.bf16.msra.mxu0 %v6323
    %7320 = vmatprep.subr.bf16.mxu0 0
    %7321 = vmatpush1.bf16.msra.mxu0 %v6326
    %7322 = vmatprep.subr.bf16.mxu0 0
    %7323 = vmatpush1.bf16.msra.mxu0 %v6329
    %7324 = vmatprep.subr.bf16.mxu0 0
    %7325 = vmatpush1.bf16.msra.mxu0 %v6332
    %7326 = vmatprep.subr.bf16.mxu0 0
    %7327 = vmatpush1.bf16.msra.mxu0 %v6335
    %7328 = vmatprep.subr.bf16.mxu0 0
    %7329 = vmatpush1.bf16.msra.mxu0 %v6338
    %7330 = vmatprep.subr.bf16.mxu0 0
    %7331 = vmatpush1.bf16.msra.mxu0 %v6341
    %7332 = vmatprep.subr.bf16.mxu0 0
    %7333 = vmatpush1.bf16.msra.mxu0 %v6344
    %7334 = vmatprep.subr.bf16.mxu0 0
    %7335 = vmatpush1.bf16.msra.mxu0 %v6347
    %7336 = vmatprep.subr.bf16.mxu0 0
    %7337 = vmatpush1.bf16.msra.mxu0 %v6350
    %7338 = vmatprep.subr.bf16.mxu0 0
    %7339 = vmatpush1.bf16.msra.mxu0 %v6353
    %7340 = vmatprep.subr.bf16.mxu0 0
    %7341 = vmatpush1.bf16.msra.mxu0 %v6356
    %7342 = vmatprep.mubr.bf16.mxu0 %v4970
    %7343 = vmatmul.mubr.bf16.gmra.mrb[0].mxu0 %v4969
    %v7344 = vpop.f32.mrb[0].mxu0
    %v7345 = vadd.f32 %v7280, %v7344
    %v7346 = vpop.f32.mrb[0].mxu0
    %v7347 = vpop.f32.mrb[0].mxu0
    %v7348 = vadd.f32 %v7283, %v7347
    %v7349 = vpop.f32.mrb[0].mxu0
    %7350 = vmatprep.mubr.bf16.mxu0 %v4982
    %7351 = vmatmul.mubr.bf16.gmra.mrb[0].mxu0 %v4981
    %v7352 = vpop.f32.mrb[0].mxu0
    %v7353 = vadd.f32 %v7288, %v7352
    %v7354 = vpop.f32.mrb[0].mxu0
    %v7355 = vpop.f32.mrb[0].mxu0
    %v7356 = vadd.f32 %v7291, %v7355
    %v7357 = vpop.f32.mrb[0].mxu0
    %7358 = vmatprep.mubr.bf16.mxu0 %v4994
    %7359 = vmatmul.mubr.bf16.gmra.mrb[0].mxu0 %v4993
    %v7360 = vpop.f32.mrb[0].mxu0
    %v7361 = vadd.f32 %v7296, %v7360
    %v7362 = vpop.f32.mrb[0].mxu0
    %v7363 = vpop.f32.mrb[0].mxu0
    %v7364 = vadd.f32 %v7299, %v7363
    %v7365 = vpop.f32.mrb[0].mxu0
    %7366 = vmatprep.mubr.bf16.mxu0 %v5006
    %7367 = vmatmul.mubr.bf16.gmra.mrb[0].mxu0 %v5005
    %v7368 = vpop.f32.mrb[0].mxu0
    %v7369 = vadd.f32 %v7304, %v7368
    %v7370 = vpop.f32.mrb[0].mxu0
    %v7371 = vpop.f32.mrb[0].mxu0
    %v7372 = vadd.f32 %v7307, %v7371
    %v7373 = vpop.f32.mrb[0].mxu0
    %7374 = vdwg.mxu0
    %7375 = vmatprep.subr.bf16.mxu0 0
    %7376 = vmatpush1.bf16.msra.mxu0 %v6359
    %7377 = vmatprep.subr.bf16.mxu0 0
    %7378 = vmatpush1.bf16.msra.mxu0 %v6362
    %7379 = vmatprep.subr.bf16.mxu0 0
    %7380 = vmatpush1.bf16.msra.mxu0 %v6365
    %7381 = vmatprep.subr.bf16.mxu0 0
    %7382 = vmatpush1.bf16.msra.mxu0 %v6368
    %7383 = vmatprep.subr.bf16.mxu0 0
    %7384 = vmatpush1.bf16.msra.mxu0 %v6371
    %7385 = vmatprep.subr.bf16.mxu0 0
    %7386 = vmatpush1.bf16.msra.mxu0 %v6374
    %7387 = vmatprep.subr.bf16.mxu0 0
    %7388 = vmatpush1.bf16.msra.mxu0 %v6377
    %7389 = vmatprep.subr.bf16.mxu0 0
    %7390 = vmatpush1.bf16.msra.mxu0 %v6380
    %7391 = vmatprep.subr.bf16.mxu0 0
    %7392 = vmatpush1.bf16.msra.mxu0 %v6383
    %7393 = vmatprep.subr.bf16.mxu0 0
    %7394 = vmatpush1.bf16.msra.mxu0 %v6386
    %7395 = vmatprep.subr.bf16.mxu0 0
    %7396 = vmatpush1.bf16.msra.mxu0 %v6389
    %7397 = vmatprep.subr.bf16.mxu0 0
    %7398 = vmatpush1.bf16.msra.mxu0 %v6392
    %7399 = vmatprep.subr.bf16.mxu0 0
    %7400 = vmatpush1.bf16.msra.mxu0 %v6395
    %7401 = vmatprep.subr.bf16.mxu0 0
    %7402 = vmatpush1.bf16.msra.mxu0 %v6398
    %7403 = vmatprep.subr.bf16.mxu0 0
    %7404 = vmatpush1.bf16.msra.mxu0 %v6401
    %7405 = vmatprep.subr.bf16.mxu0 0
    %7406 = vmatpush1.bf16.msra.mxu0 %v6404
    %7407 = vmatprep.mubr.bf16.mxu0 %v4972
    %7408 = vmatmul.mubr.bf16.gmra.mrb[0].mxu0 %v4971
    %v7409 = vpop.f32.mrb[0].mxu0
    %v7410 = vadd.f32 %v7345, %v7409
    %v7411 = vpop.f32.mrb[0].mxu0
    %v7412 = vpop.f32.mrb[0].mxu0
    %v7413 = vadd.f32 %v7348, %v7412
    %v7414 = vpop.f32.mrb[0].mxu0
    %7415 = vmatprep.mubr.bf16.mxu0 %v4984
    %7416 = vmatmul.mubr.bf16.gmra.mrb[0].mxu0 %v4983
    %v7417 = vpop.f32.mrb[0].mxu0
    %v7418 = vadd.f32 %v7353, %v7417
    %v7419 = vpop.f32.mrb[0].mxu0
    %v7420 = vpop.f32.mrb[0].mxu0
    %v7421 = vadd.f32 %v7356, %v7420
    %v7422 = vpop.f32.mrb[0].mxu0
    %7423 = vmatprep.mubr.bf16.mxu0 %v4996
    %7424 = vmatmul.mubr.bf16.gmra.mrb[0].mxu0 %v4995
    %v7425 = vpop.f32.mrb[0].mxu0
    %v7426 = vadd.f32 %v7361, %v7425
    %v7427 = vpop.f32.mrb[0].mxu0
    %v7428 = vpop.f32.mrb[0].mxu0
    %v7429 = vadd.f32 %v7364, %v7428
    %v7430 = vpop.f32.mrb[0].mxu0
    %7431 = vmatprep.mubr.bf16.mxu0 %v5008
    %7432 = vmatmul.mubr.bf16.gmra.mrb[0].mxu0 %v5007
    %v7433 = vpop.f32.mrb[0].mxu0
    %v7434 = vadd.f32 %v7369, %v7433
    %v7435 = vpop.f32.mrb[0].mxu0
    %v7436 = vpop.f32.mrb[0].mxu0
    %v7437 = vadd.f32 %v7372, %v7436
    %v7438 = vpop.f32.mrb[0].mxu0
    %7439 = vdwg.mxu0
    %7440 = vmatprep.subr.bf16.mxu0 0
    %7441 = vmatpush1.bf16.msra.mxu0 %v6407
    %7442 = vmatprep.subr.bf16.mxu0 0
    %7443 = vmatpush1.bf16.msra.mxu0 %v6410
    %7444 = vmatprep.subr.bf16.mxu0 0
    %7445 = vmatpush1.bf16.msra.mxu0 %v6413
    %7446 = vmatprep.subr.bf16.mxu0 0
    %7447 = vmatpush1.bf16.msra.mxu0 %v6416
    %7448 = vmatprep.subr.bf16.mxu0 0
    %7449 = vmatpush1.bf16.msra.mxu0 %v6419
    %7450 = vmatprep.subr.bf16.mxu0 0
    %7451 = vmatpush1.bf16.msra.mxu0 %v6422
    %7452 = vmatprep.subr.bf16.mxu0 0
    %7453 = vmatpush1.bf16.msra.mxu0 %v6425
    %7454 = vmatprep.subr.bf16.mxu0 0
    %7455 = vmatpush1.bf16.msra.mxu0 %v6428
    %7456 = vmatprep.subr.bf16.mxu0 0
    %7457 = vmatpush1.bf16.msra.mxu0 %v6431
    %7458 = vmatprep.subr.bf16.mxu0 0
    %7459 = vmatpush1.bf16.msra.mxu0 %v6434
    %7460 = vmatprep.subr.bf16.mxu0 0
    %7461 = vmatpush1.bf16.msra.mxu0 %v6437
    %7462 = vmatprep.subr.bf16.mxu0 0
    %7463 = vmatpush1.bf16.msra.mxu0 %v6440
    %7464 = vmatprep.subr.bf16.mxu0 0
    %7465 = vmatpush1.bf16.msra.mxu0 %v6443
    %7466 = vmatprep.subr.bf16.mxu0 0
    %7467 = vmatpush1.bf16.msra.mxu0 %v6446
    %7468 = vmatprep.subr.bf16.mxu0 0
    %7469 = vmatpush1.bf16.msra.mxu0 %v6449
    %7470 = vmatprep.subr.bf16.mxu0 0
    %7471 = vmatpush1.bf16.msra.mxu0 %v6452
    %7472 = vmatprep.mubr.bf16.mxu0 %v4974
    %7473 = vmatmul.mubr.bf16.gmra.mrb[0].mxu0 %v4973
    %v7474 = vpop.f32.mrb[0].mxu0
    %v7475 = vadd.f32 %v7410, %v7474
    %v7476 = vpop.f32.mrb[0].mxu0
    %v7477 = vpop.f32.mrb[0].mxu0
    %v7478 = vadd.f32 %v7413, %v7477
    %v7479 = vpop.f32.mrb[0].mxu0
    %7480 = vmatprep.mubr.bf16.mxu0 %v4986
    %7481 = vmatmul.mubr.bf16.gmra.mrb[0].mxu0 %v4985
    %v7482 = vpop.f32.mrb[0].mxu0
    %v7483 = vadd.f32 %v7418, %v7482
    %v7484 = vpop.f32.mrb[0].mxu0
    %v7485 = vpop.f32.mrb[0].mxu0
    %v7486 = vadd.f32 %v7421, %v7485
    %v7487 = vpop.f32.mrb[0].mxu0
    %7488 = vmatprep.mubr.bf16.mxu0 %v4998
    %7489 = vmatmul.mubr.bf16.gmra.mrb[0].mxu0 %v4997
    %v7490 = vpop.f32.mrb[0].mxu0
    %v7491 = vadd.f32 %v7426, %v7490
    %v7492 = vpop.f32.mrb[0].mxu0
    %v7493 = vpop.f32.mrb[0].mxu0
    %v7494 = vadd.f32 %v7429, %v7493
    %v7495 = vpop.f32.mrb[0].mxu0
    %7496 = vmatprep.mubr.bf16.mxu0 %v5010
    %7497 = vmatmul.mubr.bf16.gmra.mrb[0].mxu0 %v5009
    %v7498 = vpop.f32.mrb[0].mxu0
    %v7499 = vadd.f32 %v7434, %v7498
    %v7500 = vpop.f32.mrb[0].mxu0
    %v7501 = vpop.f32.mrb[0].mxu0
    %v7502 = vadd.f32 %v7437, %v7501
    %v7503 = vpop.f32.mrb[0].mxu0
    %7504 = vdwg.mxu0
    %7505 = vmatprep.subr.bf16.mxu0 0
    %7506 = vmatpush1.bf16.msra.mxu0 %v6455
    %7507 = vmatprep.subr.bf16.mxu0 0
    %7508 = vmatpush1.bf16.msra.mxu0 %v6458
    %7509 = vmatprep.subr.bf16.mxu0 0
    %7510 = vmatpush1.bf16.msra.mxu0 %v6461
    %7511 = vmatprep.subr.bf16.mxu0 0
    %7512 = vmatpush1.bf16.msra.mxu0 %v6464
    %7513 = vmatprep.subr.bf16.mxu0 0
    %7514 = vmatpush1.bf16.msra.mxu0 %v6467
    %7515 = vmatprep.subr.bf16.mxu0 0
    %7516 = vmatpush1.bf16.msra.mxu0 %v6470
    %7517 = vmatprep.subr.bf16.mxu0 0
    %7518 = vmatpush1.bf16.msra.mxu0 %v6473
    %7519 = vmatprep.subr.bf16.mxu0 0
    %7520 = vmatpush1.bf16.msra.mxu0 %v6476
    %7521 = vmatprep.subr.bf16.mxu0 0
    %7522 = vmatpush1.bf16.msra.mxu0 %v6479
    %7523 = vmatprep.subr.bf16.mxu0 0
    %7524 = vmatpush1.bf16.msra.mxu0 %v6482
    %7525 = vmatprep.subr.bf16.mxu0 0
    %7526 = vmatpush1.bf16.msra.mxu0 %v6485
    %7527 = vmatprep.subr.bf16.mxu0 0
    %7528 = vmatpush1.bf16.msra.mxu0 %v6488
    %7529 = vmatprep.subr.bf16.mxu0 0
    %7530 = vmatpush1.bf16.msra.mxu0 %v6491
    %7531 = vmatprep.subr.bf16.mxu0 0
    %7532 = vmatpush1.bf16.msra.mxu0 %v6494
    %7533 = vmatprep.subr.bf16.mxu0 0
    %7534 = vmatpush1.bf16.msra.mxu0 %v6497
    %7535 = vmatprep.subr.bf16.mxu0 0
    %7536 = vmatpush1.bf16.msra.mxu0 %v6500
    %7537 = vmatprep.mubr.bf16.mxu0 %v4976
    %7538 = vmatmul.mubr.bf16.gmra.mrb[0].mxu0 %v4975
    %v7539 = vpop.f32.mrb[0].mxu0
    %v7540 = vadd.f32 %v7475, %v7539
    %v7541 = vpop.f32.mrb[0].mxu0
    %v7542 = vpop.f32.mrb[0].mxu0
    %v7543 = vadd.f32 %v7478, %v7542
    %v7544 = vpop.f32.mrb[0].mxu0
    %7545 = vmatprep.mubr.bf16.mxu0 %v4988
    %7546 = vmatmul.mubr.bf16.gmra.mrb[0].mxu0 %v4987
    %v7547 = vpop.f32.mrb[0].mxu0
    %v7548 = vadd.f32 %v7483, %v7547
    %v7549 = vpop.f32.mrb[0].mxu0
    %v7550 = vpop.f32.mrb[0].mxu0
    %v7551 = vadd.f32 %v7486, %v7550
    %v7552 = vpop.f32.mrb[0].mxu0
    %7553 = vmatprep.mubr.bf16.mxu0 %v5000
    %7554 = vmatmul.mubr.bf16.gmra.mrb[0].mxu0 %v4999
    %v7555 = vpop.f32.mrb[0].mxu0
    %v7556 = vadd.f32 %v7491, %v7555
    %v7557 = vpop.f32.mrb[0].mxu0
    %v7558 = vpop.f32.mrb[0].mxu0
    %v7559 = vadd.f32 %v7494, %v7558
    %v7560 = vpop.f32.mrb[0].mxu0
    %7561 = vmatprep.mubr.bf16.mxu0 %v5012
    %7562 = vmatmul.mubr.bf16.gmra.mrb[0].mxu0 %v5011
    %v7563 = vpop.f32.mrb[0].mxu0
    %v7564 = vadd.f32 %v7499, %v7563
    %v7565 = vpop.f32.mrb[0].mxu0
    %v7566 = vpop.f32.mrb[0].mxu0
    %v7567 = vadd.f32 %v7502, %v7566
    %v7568 = vpop.f32.mrb[0].mxu0
    %7569 = vdwg.mxu0
    %7570 = vmatprep.subr.bf16.mxu0 0
    %7571 = vmatpush1.bf16.msra.mxu0 %v6503
    %7572 = vmatprep.subr.bf16.mxu0 0
    %7573 = vmatpush1.bf16.msra.mxu0 %v6506
    %7574 = vmatprep.subr.bf16.mxu0 0
    %7575 = vmatpush1.bf16.msra.mxu0 %v6509
    %7576 = vmatprep.subr.bf16.mxu0 0
    %7577 = vmatpush1.bf16.msra.mxu0 %v6512
    %7578 = vmatprep.subr.bf16.mxu0 0
    %7579 = vmatpush1.bf16.msra.mxu0 %v6515
    %7580 = vmatprep.subr.bf16.mxu0 0
    %7581 = vmatpush1.bf16.msra.mxu0 %v6518
    %7582 = vmatprep.subr.bf16.mxu0 0
    %7583 = vmatpush1.bf16.msra.mxu0 %v6521
    %7584 = vmatprep.subr.bf16.mxu0 0
    %7585 = vmatpush1.bf16.msra.mxu0 %v6524
    %7586 = vmatprep.subr.bf16.mxu0 0
    %7587 = vmatpush1.bf16.msra.mxu0 %v6527
    %7588 = vmatprep.subr.bf16.mxu0 0
    %7589 = vmatpush1.bf16.msra.mxu0 0
    %7590 = vmatprep.subr.bf16.mxu0 0
    %7591 = vmatpush1.bf16.msra.mxu0 0
    %7592 = vmatprep.subr.bf16.mxu0 0
    %7593 = vmatpush1.bf16.msra.mxu0 0
    %7594 = vmatprep.subr.bf16.mxu0 0
    %7595 = vmatpush1.bf16.msra.mxu0 0
    %7596 = vmatprep.subr.bf16.mxu0 0
    %7597 = vmatpush1.bf16.msra.mxu0 0
    %7598 = vmatprep.subr.bf16.mxu0 0
    %7599 = vmatpush1.bf16.msra.mxu0 0
    %7600 = vmatprep.subr.bf16.mxu0 0
    %7601 = vmatpush1.bf16.msra.mxu0 0
    %7602 = vmatprep.mubr.bf16.mxu0 %v6796
    %7603 = vmatmul.mubr.bf16.gmra.mrb[0].mxu0 %v4977
    %v7604 = vpop.f32.mrb[0].mxu0
    %v7605 = vadd.f32 %v7540, %v7604
    %v7606 = vpop.f32.mrb[0].mxu0
    %v7607 = vpop.f32.mrb[0].mxu0
    %v7608 = vadd.f32 %v7543, %v7607
    %v7609 = vpop.f32.mrb[0].mxu0
    %7610 = vmatprep.mubr.bf16.mxu0 %v6799
    %7611 = vmatmul.mubr.bf16.gmra.mrb[0].mxu0 %v4989
    %v7612 = vpop.f32.mrb[0].mxu0
    %v7613 = vadd.f32 %v7548, %v7612
    %v7614 = vpop.f32.mrb[0].mxu0
    %v7615 = vpop.f32.mrb[0].mxu0
    %v7616 = vadd.f32 %v7551, %v7615
    %v7617 = vpop.f32.mrb[0].mxu0
    %7618 = vmatprep.mubr.bf16.mxu0 %v6802
    %7619 = vmatmul.mubr.bf16.gmra.mrb[0].mxu0 %v5001
    %v7620 = vpop.f32.mrb[0].mxu0
    %v7621 = vadd.f32 %v7556, %v7620
    %v7622 = vpop.f32.mrb[0].mxu0
    %v7623 = vpop.f32.mrb[0].mxu0
    %v7624 = vadd.f32 %v7559, %v7623
    %v7625 = vpop.f32.mrb[0].mxu0
    %7626 = vmatprep.mubr.bf16.mxu0 %v6805
    %7627 = vmatmul.mubr.bf16.gmra.mrb[0].mxu0 %v5013
    %v7628 = vpop.f32.mrb[0].mxu0
    %v7629 = vadd.f32 %v7564, %v7628
    %v7630 = vpop.f32.mrb[0].mxu0
    %v7631 = vpop.f32.mrb[0].mxu0
    %v7632 = vadd.f32 %v7567, %v7631
    %v7633 = vpop.f32.mrb[0].mxu0
    %7634 = vdwg.mxu0
    %v7635 = vpack.c.bf16 %v7211, %v7207
    %v7636 = vpack.c.bf16 %v7213, %v7209
    %v7637 = vpack.c.bf16 %v7608, %v7605
    %v7638 = vpack.c.bf16 %v7221, %v7217
    %v7639 = vpack.c.bf16 %v7223, %v7219
    %v7640 = vpack.c.bf16 %v7616, %v7613
    %v7641 = vpack.c.bf16 %v7231, %v7227
    %v7642 = vpack.c.bf16 %v7233, %v7229
    %v7643 = vpack.c.bf16 %v7624, %v7621
    %v7644 = vpack.c.bf16 %v7241, %v7237
    %v7645 = vpack.c.bf16 %v7243, %v7239
    %v7646 = vpack.c.bf16 %v7632, %v7629
    %v7659 = vunpack.c.l.b16 %v7635
    %v7660 = vunpack.c.l.b16 %v7636
    %v7661 = vunpack.c.l.b16 %v7637
    %v7662 = vunpack.c.h.b16 %v7635
    %v7663 = vunpack.c.h.b16 %v7636
    %v7664 = vunpack.c.h.b16 %v7637
    %v7665 = vunpack.c.l.b16 %v7638
    %v7666 = vunpack.c.l.b16 %v7639
    %v7667 = vunpack.c.l.b16 %v7640
    %v7668 = vunpack.c.h.b16 %v7638
    %v7669 = vunpack.c.h.b16 %v7639
    %v7670 = vunpack.c.h.b16 %v7640
    %v7671 = vunpack.c.l.b16 %v7641
    %v7672 = vunpack.c.l.b16 %v7642
    %v7673 = vunpack.c.l.b16 %v7643
    %v7674 = vunpack.c.h.b16 %v7641
    %v7675 = vunpack.c.h.b16 %v7642
    %v7676 = vunpack.c.h.b16 %v7643
    %v7677 = vunpack.c.l.b16 %v7644
    %v7678 = vunpack.c.l.b16 %v7645
    %v7679 = vunpack.c.l.b16 %v7646
    %v7680 = vunpack.c.h.b16 %v7644
    %v7681 = vunpack.c.h.b16 %v7645
    %v7682 = vunpack.c.h.b16 %v7646
    %v7683 = vpack.c.b16 %v7660, %v7659
    %v7684 = vpack.c.b16 %v7661, %v7661
    %v7685 = vpack.c.b16 %v7663, %v7662
    %v7686 = vpack.c.b16 %v7664, %v7664
    %v7687 = vpack.c.b16 %v7666, %v7665
    %v7688 = vpack.c.b16 %v7667, %v7667
    %v7689 = vpack.c.b16 %v7669, %v7668
    %v7690 = vpack.c.b16 %v7670, %v7670
    %v7691 = vpack.c.b16 %v7672, %v7671
    %v7692 = vpack.c.b16 %v7673, %v7673
    %v7693 = vpack.c.b16 %v7675, %v7674
    %v7694 = vpack.c.b16 %v7676, %v7676
    %v7695 = vpack.c.b16 %v7678, %v7677
    %v7696 = vpack.c.b16 %v7679, %v7679
    %v7697 = vpack.c.b16 %v7681, %v7680
    %v7698 = vpack.c.b16 %v7682, %v7682
    %7715 = vst [vmem:[%s6] sm:$0xff] %v7683
    %7716 = vst [vmem:[%s6 + $0x8] sm:$0xf] %v7684
    %7717 = vst [vmem:[%s6 + $0xc] sm:$0xff] %v7685
    %7718 = vst [vmem:[%s6 + $0x14] sm:$0xf] %v7686
    %7719 = vst [vmem:[%s6 + $0x18] sm:$0xff] %v7687
    %7720 = vst [vmem:[%s6 + $0x20] sm:$0xf] %v7688
    %7721 = vst [vmem:[%s6 + $0x24] sm:$0xff] %v7689
    %7722 = vst [vmem:[%s6 + $0x2c] sm:$0xf] %v7690
    %7723 = vst [vmem:[%s6 + $0x30] sm:$0xff] %v7691
    %7724 = vst [vmem:[%s6 + $0x38] sm:$0xf] %v7692
    %7725 = vst [vmem:[%s6 + $0x3c] sm:$0xff] %v7693
    %7726 = vst [vmem:[%s6 + $0x44] sm:$0xf] %v7694
    %7727 = vst [vmem:[%s6 + $0x48] sm:$0xff] %v7695
    %7728 = vst [vmem:[%s6 + $0x50] sm:$0xf] %v7696
    %7729 = vst [vmem:[%s6 + $0x54] sm:$0xff] %v7697
    %7730 = vst [vmem:[%s6 + $0x5c] sm:$0xf] %v7698
    // Predicated region
    $region30: #{net_forward.2} parent=1 // pred_check
      _
    $region31: #{net_forward.2} parent=1 // pred_check_branch
      %7732 = sbr.rel (0) target = $region33
    $region32: #{net_forward.2} parent=1 // pred_region
      _
    $region33: #{net_forward.2} parent=1 // pred_fallthru
      _
    // Predicated region
    $region34: #{net_forward.2} parent=1 // pred_check
      _
    $region35: #{net_forward.2} parent=1 // pred_check_branch
      %7734 = sbr.rel (0) target = $region37
    $region36: #{net_forward.2} parent=1 // pred_region
      _
    $region37: #{net_forward.2} parent=1 // pred_fallthru
      _
    %7735 = vsyncpa [#allocation6], 1

// kernel: net_forward.3
$region0: #{net_forward.3}
  #allocation0 [shape = 'u32[]', space=smem, size = 0x4, offset = 0x4, fixed_abs, tag = 'smem constant byte address 0x4 - core index']
  #allocation1 [shape = 'u32[144,128]{1,0:T(1,128)}', space=vmem, size = 0x12000, scoped, tag = 'internal scratch']
  %s0 = inlined_call_operand.vmem [shape: bf16[2,9216], index: 0, kind: input, shape index: {}]
  %s1 = inlined_call_operand.vmem [shape: bf16[9216,128], index: 1, kind: input, shape index: {}]
  %s2 = inlined_call_operand.vmem [shape: f32[1,128], index: 2, kind: input, shape index: {}]
  %s3 = inlined_call_operand.vmem [shape: bf16[128,10], index: 3, kind: input, shape index: {}]
  %s4 = inlined_call_operand.vmem [shape: f32[1,10], index: 4, kind: input, shape index: {}]
  %s5 = inlined_call_operand.hbm [shape: f32[2,10], index: 5, kind: output, shape index: {}]
  %s6 = sld [smem:[#allocation0]]
  $region30: #{net_forward.3} parent=0
    _
  %s8 = ssub.s32 1, %s6
  %s9 = scalar_select 0, %s8, %s6
  $region1: #{net_forward.3} parent=0
    #allocation2 [shape = 'u8[1024]{0}', space=vmem, size = 0x400, scoped, tag = 'output window, operand 0, single buffered']
    #allocation3 [shape = 's32[1]{0}', space=sflag, size = 0x4, scoped, tag = 'scoped memory for net_forward.3']
    %10 = vsyncpa [#allocation3], 0
    // Predicated region
    $region2: #{net_forward.3} parent=1 // pred_check
      _
    $region3: #{net_forward.3} parent=1 // pred_check_branch
      %12 = sbr.rel (0) target = $region5
    $region4: #{net_forward.3} parent=1 // pred_region
      _
    $region5: #{net_forward.3} parent=1 // pred_fallthru
      _
    // Predicated region
    $region6: #{net_forward.3} parent=1 // pred_check
      _
    $region7: #{net_forward.3} parent=1 // pred_check_branch
      %14 = sbr.rel (0) target = $region9
    $region8: #{net_forward.3} parent=1 // pred_region
      _
    $region9: #{net_forward.3} parent=1 // pred_fallthru
      _
    // Predicated region
    $region10: #{net_forward.3} parent=1 // pred_check
      _
    $region11: #{net_forward.3} parent=1 // pred_check_branch
      %16 = sbr.rel (0) target = $region13
    $region12: #{net_forward.3} parent=1 // pred_region
      _
    $region13: #{net_forward.3} parent=1 // pred_fallthru
      _
    // Predicated region
    $region14: #{net_forward.3} parent=1 // pred_check
      _
    $region15: #{net_forward.3} parent=1 // pred_check_branch
      %18 = sbr.rel (0) target = $region17
    $region16: #{net_forward.3} parent=1 // pred_region
      _
    $region17: #{net_forward.3} parent=1 // pred_fallthru
      _
    // Predicated region
    $region18: #{net_forward.3} parent=1 // pred_check
      _
    $region19: #{net_forward.3} parent=1 // pred_check_branch
      %20 = sbr.rel (0) target = $region21
    $region20: #{net_forward.3} parent=1 // pred_region
      _
    $region21: #{net_forward.3} parent=1 // pred_fallthru
      _
    %v22 = vld [vmem:[%s0] sm:$0xff]
    %v23 = vld [vmem:[%s0 + $0x8] sm:$0xff]
    %v24 = vld [vmem:[%s0 + $0x10] sm:$0xff]
    %v25 = vld [vmem:[%s0 + $0x18] sm:$0xff]
    %v26 = vld [vmem:[%s0 + $0x20] sm:$0xff]
    %v27 = vld [vmem:[%s0 + $0x28] sm:$0xff]
    %v28 = vld [vmem:[%s0 + $0x30] sm:$0xff]
    %v29 = vld [vmem:[%s0 + $0x38] sm:$0xff]
    %v30 = vld [vmem:[%s0 + $0x40] sm:$0xff]
    %v31 = vld [vmem:[%s1] sm:$0xf]
    %v32 = vld [vmem:[%s1 + $0x4] sm:$0xf]
    %v33 = vld [vmem:[%s1 + $0x8] sm:$0xf]
    %v34 = vld [vmem:[%s1 + $0xc] sm:$0xf]
    %v35 = vld [vmem:[%s1 + $0x10] sm:$0xf]
    %v36 = vld [vmem:[%s1 + $0x14] sm:$0xf]
    %v37 = vld [vmem:[%s1 + $0x18] sm:$0xf]
    %v38 = vld [vmem:[%s1 + $0x1c] sm:$0xf]
    %v39 = vld [vmem:[%s1 + $0x20] sm:$0xf]
    %v40 = vld [vmem:[%s1 + $0x24] sm:$0xf]
    %v41 = vld [vmem:[%s1 + $0x28] sm:$0xf]
    %v42 = vld [vmem:[%s1 + $0x2c] sm:$0xf]
    %v43 = vld [vmem:[%s1 + $0x30] sm:$0xf]
    %v44 = vld [vmem:[%s1 + $0x34] sm:$0xf]
    %v45 = vld [vmem:[%s1 + $0x38] sm:$0xf]
    %v46 = vld [vmem:[%s1 + $0x3c] sm:$0xf]
    %v47 = vld [vmem:[%s1 + $0x40] sm:$0xf]
    %v48 = vld [vmem:[%s1 + $0x44] sm:$0xf]
    %v49 = vld [vmem:[%s1 + $0x48] sm:$0xf]
    %v50 = vld [vmem:[%s1 + $0x4c] sm:$0xf]
    %v51 = vld [vmem:[%s1 + $0x50] sm:$0xf]
    %v52 = vld [vmem:[%s1 + $0x54] sm:$0xf]
    %v53 = vld [vmem:[%s1 + $0x58] sm:$0xf]
    %v54 = vld [vmem:[%s1 + $0x5c] sm:$0xf]
    %v55 = vld [vmem:[%s1 + $0x60] sm:$0xf]
    %v56 = vld [vmem:[%s1 + $0x64] sm:$0xf]
    %v57 = vld [vmem:[%s1 + $0x68] sm:$0xf]
    %v58 = vld [vmem:[%s1 + $0x6c] sm:$0xf]
    %v59 = vld [vmem:[%s1 + $0x70] sm:$0xf]
    %v60 = vld [vmem:[%s1 + $0x74] sm:$0xf]
    %v61 = vld [vmem:[%s1 + $0x78] sm:$0xf]
    %v62 = vld [vmem:[%s1 + $0x7c] sm:$0xf]
    %v63 = vld [vmem:[%s1 + $0x80] sm:$0xf]
    %v64 = vld [vmem:[%s1 + $0x84] sm:$0xf]
    %v65 = vld [vmem:[%s1 + $0x88] sm:$0xf]
    %v66 = vld [vmem:[%s1 + $0x8c] sm:$0xf]
    %v67 = vld [vmem:[%s1 + $0x90] sm:$0xf]
    %v68 = vld [vmem:[%s1 + $0x94] sm:$0xf]
    %v69 = vld [vmem:[%s1 + $0x98] sm:$0xf]
    %v70 = vld [vmem:[%s1 + $0x9c] sm:$0xf]
    %v71 = vld [vmem:[%s1 + $0xa0] sm:$0xf]
    %v72 = vld [vmem:[%s1 + $0xa4] sm:$0xf]
    %v73 = vld [vmem:[%s1 + $0xa8] sm:$0xf]
    %v74 = vld [vmem:[%s1 + $0xac] sm:$0xf]
    %v75 = vld [vmem:[%s1 + $0xb0] sm:$0xf]
    %v76 = vld [vmem:[%s1 + $0xb4] sm:$0xf]
    %v77 = vld [vmem:[%s1 + $0xb8] sm:$0xf]
    %v78 = vld [vmem:[%s1 + $0xbc] sm:$0xf]
    %v79 = vld [vmem:[%s1 + $0xc0] sm:$0xf]
    %v80 = vld [vmem:[%s1 + $0xc4] sm:$0xf]
    %v81 = vld [vmem:[%s1 + $0xc8] sm:$0xf]
    %v82 = vld [vmem:[%s1 + $0xcc] sm:$0xf]
    %v83 = vld [vmem:[%s1 + $0xd0] sm:$0xf]
    %v84 = vld [vmem:[%s1 + $0xd4] sm:$0xf]
    %v85 = vld [vmem:[%s1 + $0xd8] sm:$0xf]
    %v86 = vld [vmem:[%s1 + $0xdc] sm:$0xf]
    %v87 = vld [vmem:[%s1 + $0xe0] sm:$0xf]
    %v88 = vld [vmem:[%s1 + $0xe4] sm:$0xf]
    %v89 = vld [vmem:[%s1 + $0xe8] sm:$0xf]
    %v90 = vld [vmem:[%s1 + $0xec] sm:$0xf]
    %v91 = vld [vmem:[%s1 + $0xf0] sm:$0xf]
    %v92 = vld [vmem:[%s1 + $0xf4] sm:$0xf]
    %v93 = vld [vmem:[%s1 + $0xf8] sm:$0xf]
    %v94 = vld [vmem:[%s1 + $0xfc] sm:$0xf]
    %v95 = vld [vmem:[%s1 + $0x100] sm:$0xf]
    %v96 = vld [vmem:[%s1 + $0x104] sm:$0xf]
    %v97 = vld [vmem:[%s1 + $0x108] sm:$0xf]
    %v98 = vld [vmem:[%s1 + $0x10c] sm:$0xf]
    %v99 = vld [vmem:[%s1 + $0x110] sm:$0xf]
    %v100 = vld [vmem:[%s1 + $0x114] sm:$0xf]
    %v101 = vld [vmem:[%s1 + $0x118] sm:$0xf]
    %v102 = vld [vmem:[%s1 + $0x11c] sm:$0xf]
    %v103 = vld [vmem:[%s1 + $0x120] sm:$0xf]
    %v104 = vld [vmem:[%s1 + $0x124] sm:$0xf]
    %v105 = vld [vmem:[%s1 + $0x128] sm:$0xf]
    %v106 = vld [vmem:[%s1 + $0x12c] sm:$0xf]
    %v107 = vld [vmem:[%s1 + $0x130] sm:$0xf]
    %v108 = vld [vmem:[%s1 + $0x134] sm:$0xf]
    %v109 = vld [vmem:[%s1 + $0x138] sm:$0xf]
    %v110 = vld [vmem:[%s1 + $0x13c] sm:$0xf]
    %v111 = vld [vmem:[%s1 + $0x140] sm:$0xf]
    %v112 = vld [vmem:[%s1 + $0x144] sm:$0xf]
    %v113 = vld [vmem:[%s1 + $0x148] sm:$0xf]
    %v114 = vld [vmem:[%s1 + $0x14c] sm:$0xf]
    %v115 = vld [vmem:[%s1 + $0x150] sm:$0xf]
    %v116 = vld [vmem:[%s1 + $0x154] sm:$0xf]
    %v117 = vld [vmem:[%s1 + $0x158] sm:$0xf]
    %v118 = vld [vmem:[%s1 + $0x15c] sm:$0xf]
    %v119 = vld [vmem:[%s1 + $0x160] sm:$0xf]
    %v120 = vld [vmem:[%s1 + $0x164] sm:$0xf]
    %v121 = vld [vmem:[%s1 + $0x168] sm:$0xf]
    %v122 = vld [vmem:[%s1 + $0x16c] sm:$0xf]
    %v123 = vld [vmem:[%s1 + $0x170] sm:$0xf]
    %v124 = vld [vmem:[%s1 + $0x174] sm:$0xf]
    %v125 = vld [vmem:[%s1 + $0x178] sm:$0xf]
    %v126 = vld [vmem:[%s1 + $0x17c] sm:$0xf]
    %v127 = vld [vmem:[%s1 + $0x180] sm:$0xf]
    %v128 = vld [vmem:[%s1 + $0x184] sm:$0xf]
    %v129 = vld [vmem:[%s1 + $0x188] sm:$0xf]
    %v130 = vld [vmem:[%s1 + $0x18c] sm:$0xf]
    %v131 = vld [vmem:[%s1 + $0x190] sm:$0xf]
    %v132 = vld [vmem:[%s1 + $0x194] sm:$0xf]
    %v133 = vld [vmem:[%s1 + $0x198] sm:$0xf]
    %v134 = vld [vmem:[%s1 + $0x19c] sm:$0xf]
    %v135 = vld [vmem:[%s1 + $0x1a0] sm:$0xf]
    %v136 = vld [vmem:[%s1 + $0x1a4] sm:$0xf]
    %v137 = vld [vmem:[%s1 + $0x1a8] sm:$0xf]
    %v138 = vld [vmem:[%s1 + $0x1ac] sm:$0xf]
    %v139 = vld [vmem:[%s1 + $0x1b0] sm:$0xf]
    %v140 = vld [vmem:[%s1 + $0x1b4] sm:$0xf]
    %v141 = vld [vmem:[%s1 + $0x1b8] sm:$0xf]
    %v142 = vld [vmem:[%s1 + $0x1bc] sm:$0xf]
    %v143 = vld [vmem:[%s1 + $0x1c0] sm:$0xf]
    %v144 = vld [vmem:[%s1 + $0x1c4] sm:$0xf]
    %v145 = vld [vmem:[%s1 + $0x1c8] sm:$0xf]
    %v146 = vld [vmem:[%s1 + $0x1cc] sm:$0xf]
    %v147 = vld [vmem:[%s1 + $0x1d0] sm:$0xf]
    %v148 = vld [vmem:[%s1 + $0x1d4] sm:$0xf]
    %v149 = vld [vmem:[%s1 + $0x1d8] sm:$0xf]
    %v150 = vld [vmem:[%s1 + $0x1dc] sm:$0xf]
    %v151 = vld [vmem:[%s1 + $0x1e0] sm:$0xf]
    %v152 = vld [vmem:[%s1 + $0x1e4] sm:$0xf]
    %v153 = vld [vmem:[%s1 + $0x1e8] sm:$0xf]
    %v154 = vld [vmem:[%s1 + $0x1ec] sm:$0xf]
    %v155 = vld [vmem:[%s1 + $0x1f0] sm:$0xf]
    %v156 = vld [vmem:[%s1 + $0x1f4] sm:$0xf]
    %v157 = vld [vmem:[%s1 + $0x1f8] sm:$0xf]
    %v158 = vld [vmem:[%s1 + $0x1fc] sm:$0xf]
    %v159 = vld [vmem:[%s1 + $0x200] sm:$0xf]
    %v160 = vld [vmem:[%s1 + $0x204] sm:$0xf]
    %v161 = vld [vmem:[%s1 + $0x208] sm:$0xf]
    %v162 = vld [vmem:[%s1 + $0x20c] sm:$0xf]
    %v163 = vld [vmem:[%s1 + $0x210] sm:$0xf]
    %v164 = vld [vmem:[%s1 + $0x214] sm:$0xf]
    %v165 = vld [vmem:[%s1 + $0x218] sm:$0xf]
    %v166 = vld [vmem:[%s1 + $0x21c] sm:$0xf]
    %v167 = vld [vmem:[%s1 + $0x220] sm:$0xf]
    %v168 = vld [vmem:[%s1 + $0x224] sm:$0xf]
    %v169 = vld [vmem:[%s1 + $0x228] sm:$0xf]
    %v170 = vld [vmem:[%s1 + $0x22c] sm:$0xf]
    %v171 = vld [vmem:[%s1 + $0x230] sm:$0xf]
    %v172 = vld [vmem:[%s1 + $0x234] sm:$0xf]
    %v173 = vld [vmem:[%s1 + $0x238] sm:$0xf]
    %v174 = vld [vmem:[%s1 + $0x23c] sm:$0xf]
    %v175 = vld [vmem:[%s1 + $0x240] sm:$0xf]
    %v176 = vld [vmem:[%s1 + $0x244] sm:$0xf]
    %v177 = vld [vmem:[%s1 + $0x248] sm:$0xf]
    %v178 = vld [vmem:[%s1 + $0x24c] sm:$0xf]
    %v179 = vld [vmem:[%s1 + $0x250] sm:$0xf]
    %v180 = vld [vmem:[%s1 + $0x254] sm:$0xf]
    %v181 = vld [vmem:[%s1 + $0x258] sm:$0xf]
    %v182 = vld [vmem:[%s1 + $0x25c] sm:$0xf]
    %v183 = vld [vmem:[%s1 + $0x260] sm:$0xf]
    %v184 = vld [vmem:[%s1 + $0x264] sm:$0xf]
    %v185 = vld [vmem:[%s1 + $0x268] sm:$0xf]
    %v186 = vld [vmem:[%s1 + $0x26c] sm:$0xf]
    %v187 = vld [vmem:[%s1 + $0x270] sm:$0xf]
    %v188 = vld [vmem:[%s1 + $0x274] sm:$0xf]
    %v189 = vld [vmem:[%s1 + $0x278] sm:$0xf]
    %v190 = vld [vmem:[%s1 + $0x27c] sm:$0xf]
    %v191 = vld [vmem:[%s1 + $0x280] sm:$0xf]
    %v192 = vld [vmem:[%s1 + $0x284] sm:$0xf]
    %v193 = vld [vmem:[%s1 + $0x288] sm:$0xf]
    %v194 = vld [vmem:[%s1 + $0x28c] sm:$0xf]
    %v195 = vld [vmem:[%s1 + $0x290] sm:$0xf]
    %v196 = vld [vmem:[%s1 + $0x294] sm:$0xf]
    %v197 = vld [vmem:[%s1 + $0x298] sm:$0xf]
    %v198 = vld [vmem:[%s1 + $0x29c] sm:$0xf]
    %v199 = vld [vmem:[%s1 + $0x2a0] sm:$0xf]
    %v200 = vld [vmem:[%s1 + $0x2a4] sm:$0xf]
    %v201 = vld [vmem:[%s1 + $0x2a8] sm:$0xf]
    %v202 = vld [vmem:[%s1 + $0x2ac] sm:$0xf]
    %v203 = vld [vmem:[%s1 + $0x2b0] sm:$0xf]
    %v204 = vld [vmem:[%s1 + $0x2b4] sm:$0xf]
    %v205 = vld [vmem:[%s1 + $0x2b8] sm:$0xf]
    %v206 = vld [vmem:[%s1 + $0x2bc] sm:$0xf]
    %v207 = vld [vmem:[%s1 + $0x2c0] sm:$0xf]
    %v208 = vld [vmem:[%s1 + $0x2c4] sm:$0xf]
    %v209 = vld [vmem:[%s1 + $0x2c8] sm:$0xf]
    %v210 = vld [vmem:[%s1 + $0x2cc] sm:$0xf]
    %v211 = vld [vmem:[%s1 + $0x2d0] sm:$0xf]
    %v212 = vld [vmem:[%s1 + $0x2d4] sm:$0xf]
    %v213 = vld [vmem:[%s1 + $0x2d8] sm:$0xf]
    %v214 = vld [vmem:[%s1 + $0x2dc] sm:$0xf]
    %v215 = vld [vmem:[%s1 + $0x2e0] sm:$0xf]
    %v216 = vld [vmem:[%s1 + $0x2e4] sm:$0xf]
    %v217 = vld [vmem:[%s1 + $0x2e8] sm:$0xf]
    %v218 = vld [vmem:[%s1 + $0x2ec] sm:$0xf]
    %v219 = vld [vmem:[%s1 + $0x2f0] sm:$0xf]
    %v220 = vld [vmem:[%s1 + $0x2f4] sm:$0xf]
    %v221 = vld [vmem:[%s1 + $0x2f8] sm:$0xf]
    %v222 = vld [vmem:[%s1 + $0x2fc] sm:$0xf]
    %v223 = vld [vmem:[%s1 + $0x300] sm:$0xf]
    %v224 = vld [vmem:[%s1 + $0x304] sm:$0xf]
    %v225 = vld [vmem:[%s1 + $0x308] sm:$0xf]
    %v226 = vld [vmem:[%s1 + $0x30c] sm:$0xf]
    %v227 = vld [vmem:[%s1 + $0x310] sm:$0xf]
    %v228 = vld [vmem:[%s1 + $0x314] sm:$0xf]
    %v229 = vld [vmem:[%s1 + $0x318] sm:$0xf]
    %v230 = vld [vmem:[%s1 + $0x31c] sm:$0xf]
    %v231 = vld [vmem:[%s1 + $0x320] sm:$0xf]
    %v232 = vld [vmem:[%s1 + $0x324] sm:$0xf]
    %v233 = vld [vmem:[%s1 + $0x328] sm:$0xf]
    %v234 = vld [vmem:[%s1 + $0x32c] sm:$0xf]
    %v235 = vld [vmem:[%s1 + $0x330] sm:$0xf]
    %v236 = vld [vmem:[%s1 + $0x334] sm:$0xf]
    %v237 = vld [vmem:[%s1 + $0x338] sm:$0xf]
    %v238 = vld [vmem:[%s1 + $0x33c] sm:$0xf]
    %v239 = vld [vmem:[%s1 + $0x340] sm:$0xf]
    %v240 = vld [vmem:[%s1 + $0x344] sm:$0xf]
    %v241 = vld [vmem:[%s1 + $0x348] sm:$0xf]
    %v242 = vld [vmem:[%s1 + $0x34c] sm:$0xf]
    %v243 = vld [vmem:[%s1 + $0x350] sm:$0xf]
    %v244 = vld [vmem:[%s1 + $0x354] sm:$0xf]
    %v245 = vld [vmem:[%s1 + $0x358] sm:$0xf]
    %v246 = vld [vmem:[%s1 + $0x35c] sm:$0xf]
    %v247 = vld [vmem:[%s1 + $0x360] sm:$0xf]
    %v248 = vld [vmem:[%s1 + $0x364] sm:$0xf]
    %v249 = vld [vmem:[%s1 + $0x368] sm:$0xf]
    %v250 = vld [vmem:[%s1 + $0x36c] sm:$0xf]
    %v251 = vld [vmem:[%s1 + $0x370] sm:$0xf]
    %v252 = vld [vmem:[%s1 + $0x374] sm:$0xf]
    %v253 = vld [vmem:[%s1 + $0x378] sm:$0xf]
    %v254 = vld [vmem:[%s1 + $0x37c] sm:$0xf]
    %v255 = vld [vmem:[%s1 + $0x380] sm:$0xf]
    %v256 = vld [vmem:[%s1 + $0x384] sm:$0xf]
    %v257 = vld [vmem:[%s1 + $0x388] sm:$0xf]
    %v258 = vld [vmem:[%s1 + $0x38c] sm:$0xf]
    %v259 = vld [vmem:[%s1 + $0x390] sm:$0xf]
    %v260 = vld [vmem:[%s1 + $0x394] sm:$0xf]
    %v261 = vld [vmem:[%s1 + $0x398] sm:$0xf]
    %v262 = vld [vmem:[%s1 + $0x39c] sm:$0xf]
    %v263 = vld [vmem:[%s1 + $0x3a0] sm:$0xf]
    %v264 = vld [vmem:[%s1 + $0x3a4] sm:$0xf]
    %v265 = vld [vmem:[%s1 + $0x3a8] sm:$0xf]
    %v266 = vld [vmem:[%s1 + $0x3ac] sm:$0xf]
    %v267 = vld [vmem:[%s1 + $0x3b0] sm:$0xf]
    %v268 = vld [vmem:[%s1 + $0x3b4] sm:$0xf]
    %v269 = vld [vmem:[%s1 + $0x3b8] sm:$0xf]
    %v270 = vld [vmem:[%s1 + $0x3bc] sm:$0xf]
    %v271 = vld [vmem:[%s1 + $0x3c0] sm:$0xf]
    %v272 = vld [vmem:[%s1 + $0x3c4] sm:$0xf]
    %v273 = vld [vmem:[%s1 + $0x3c8] sm:$0xf]
    %v274 = vld [vmem:[%s1 + $0x3cc] sm:$0xf]
    %v275 = vld [vmem:[%s1 + $0x3d0] sm:$0xf]
    %v276 = vld [vmem:[%s1 + $0x3d4] sm:$0xf]
    %v277 = vld [vmem:[%s1 + $0x3d8] sm:$0xf]
    %v278 = vld [vmem:[%s1 + $0x3dc] sm:$0xf]
    %v279 = vld [vmem:[%s1 + $0x3e0] sm:$0xf]
    %v280 = vld [vmem:[%s1 + $0x3e4] sm:$0xf]
    %v281 = vld [vmem:[%s1 + $0x3e8] sm:$0xf]
    %v282 = vld [vmem:[%s1 + $0x3ec] sm:$0xf]
    %v283 = vld [vmem:[%s1 + $0x3f0] sm:$0xf]
    %v284 = vld [vmem:[%s1 + $0x3f4] sm:$0xf]
    %v285 = vld [vmem:[%s1 + $0x3f8] sm:$0xf]
    %v286 = vld [vmem:[%s1 + $0x3fc] sm:$0xf]
    %v287 = vld [vmem:[%s1 + $0x400] sm:$0xf]
    %v288 = vld [vmem:[%s1 + $0x404] sm:$0xf]
    %v289 = vld [vmem:[%s1 + $0x408] sm:$0xf]
    %v290 = vld [vmem:[%s1 + $0x40c] sm:$0xf]
    %v291 = vld [vmem:[%s1 + $0x410] sm:$0xf]
    %v292 = vld [vmem:[%s1 + $0x414] sm:$0xf]
    %v293 = vld [vmem:[%s1 + $0x418] sm:$0xf]
    %v294 = vld [vmem:[%s1 + $0x41c] sm:$0xf]
    %v295 = vld [vmem:[%s1 + $0x420] sm:$0xf]
    %v296 = vld [vmem:[%s1 + $0x424] sm:$0xf]
    %v297 = vld [vmem:[%s1 + $0x428] sm:$0xf]
    %v298 = vld [vmem:[%s1 + $0x42c] sm:$0xf]
    %v299 = vld [vmem:[%s1 + $0x430] sm:$0xf]
    %v300 = vld [vmem:[%s1 + $0x434] sm:$0xf]
    %v301 = vld [vmem:[%s1 + $0x438] sm:$0xf]
    %v302 = vld [vmem:[%s1 + $0x43c] sm:$0xf]
    %v303 = vld [vmem:[%s1 + $0x440] sm:$0xf]
    %v304 = vld [vmem:[%s1 + $0x444] sm:$0xf]
    %v305 = vld [vmem:[%s1 + $0x448] sm:$0xf]
    %v306 = vld [vmem:[%s1 + $0x44c] sm:$0xf]
    %v307 = vld [vmem:[%s1 + $0x450] sm:$0xf]
    %v308 = vld [vmem:[%s1 + $0x454] sm:$0xf]
    %v309 = vld [vmem:[%s1 + $0x458] sm:$0xf]
    %v310 = vld [vmem:[%s1 + $0x45c] sm:$0xf]
    %v311 = vld [vmem:[%s1 + $0x460] sm:$0xf]
    %v312 = vld [vmem:[%s1 + $0x464] sm:$0xf]
    %v313 = vld [vmem:[%s1 + $0x468] sm:$0xf]
    %v314 = vld [vmem:[%s1 + $0x46c] sm:$0xf]
    %v315 = vld [vmem:[%s1 + $0x470] sm:$0xf]
    %v316 = vld [vmem:[%s1 + $0x474] sm:$0xf]
    %v317 = vld [vmem:[%s1 + $0x478] sm:$0xf]
    %v318 = vld [vmem:[%s1 + $0x47c] sm:$0xf]
    %v319 = vld [vmem:[%s1 + $0x480] sm:$0xf]
    %v320 = vld [vmem:[%s1 + $0x484] sm:$0xf]
    %v321 = vld [vmem:[%s1 + $0x488] sm:$0xf]
    %v322 = vld [vmem:[%s1 + $0x48c] sm:$0xf]
    %v323 = vld [vmem:[%s1 + $0x490] sm:$0xf]
    %v324 = vld [vmem:[%s1 + $0x494] sm:$0xf]
    %v325 = vld [vmem:[%s1 + $0x498] sm:$0xf]
    %v326 = vld [vmem:[%s1 + $0x49c] sm:$0xf]
    %v327 = vld [vmem:[%s1 + $0x4a0] sm:$0xf]
    %v328 = vld [vmem:[%s1 + $0x4a4] sm:$0xf]
    %v329 = vld [vmem:[%s1 + $0x4a8] sm:$0xf]
    %v330 = vld [vmem:[%s1 + $0x4ac] sm:$0xf]
    %v331 = vld [vmem:[%s1 + $0x4b0] sm:$0xf]
    %v332 = vld [vmem:[%s1 + $0x4b4] sm:$0xf]
    %v333 = vld [vmem:[%s1 + $0x4b8] sm:$0xf]
    %v334 = vld [vmem:[%s1 + $0x4bc] sm:$0xf]
    %v335 = vld [vmem:[%s1 + $0x4c0] sm:$0xf]
    %v336 = vld [vmem:[%s1 + $0x4c4] sm:$0xf]
    %v337 = vld [vmem:[%s1 + $0x4c8] sm:$0xf]
    %v338 = vld [vmem:[%s1 + $0x4cc] sm:$0xf]
    %v339 = vld [vmem:[%s1 + $0x4d0] sm:$0xf]
    %v340 = vld [vmem:[%s1 + $0x4d4] sm:$0xf]
    %v341 = vld [vmem:[%s1 + $0x4d8] sm:$0xf]
    %v342 = vld [vmem:[%s1 + $0x4dc] sm:$0xf]
    %v343 = vld [vmem:[%s1 + $0x4e0] sm:$0xf]
    %v344 = vld [vmem:[%s1 + $0x4e4] sm:$0xf]
    %v345 = vld [vmem:[%s1 + $0x4e8] sm:$0xf]
    %v346 = vld [vmem:[%s1 + $0x4ec] sm:$0xf]
    %v347 = vld [vmem:[%s1 + $0x4f0] sm:$0xf]
    %v348 = vld [vmem:[%s1 + $0x4f4] sm:$0xf]
    %v349 = vld [vmem:[%s1 + $0x4f8] sm:$0xf]
    %v350 = vld [vmem:[%s1 + $0x4fc] sm:$0xf]
    %v351 = vld [vmem:[%s1 + $0x500] sm:$0xf]
    %v352 = vld [vmem:[%s1 + $0x504] sm:$0xf]
    %v353 = vld [vmem:[%s1 + $0x508] sm:$0xf]
    %v354 = vld [vmem:[%s1 + $0x50c] sm:$0xf]
    %v355 = vld [vmem:[%s1 + $0x510] sm:$0xf]
    %v356 = vld [vmem:[%s1 + $0x514] sm:$0xf]
    %v357 = vld [vmem:[%s1 + $0x518] sm:$0xf]
    %v358 = vld [vmem:[%s1 + $0x51c] sm:$0xf]
    %v359 = vld [vmem:[%s1 + $0x520] sm:$0xf]
    %v360 = vld [vmem:[%s1 + $0x524] sm:$0xf]
    %v361 = vld [vmem:[%s1 + $0x528] sm:$0xf]
    %v362 = vld [vmem:[%s1 + $0x52c] sm:$0xf]
    %v363 = vld [vmem:[%s1 + $0x530] sm:$0xf]
    %v364 = vld [vmem:[%s1 + $0x534] sm:$0xf]
    %v365 = vld [vmem:[%s1 + $0x538] sm:$0xf]
    %v366 = vld [vmem:[%s1 + $0x53c] sm:$0xf]
    %v367 = vld [vmem:[%s1 + $0x540] sm:$0xf]
    %v368 = vld [vmem:[%s1 + $0x544] sm:$0xf]
    %v369 = vld [vmem:[%s1 + $0x548] sm:$0xf]
    %v370 = vld [vmem:[%s1 + $0x54c] sm:$0xf]
    %v371 = vld [vmem:[%s1 + $0x550] sm:$0xf]
    %v372 = vld [vmem:[%s1 + $0x554] sm:$0xf]
    %v373 = vld [vmem:[%s1 + $0x558] sm:$0xf]
    %v374 = vld [vmem:[%s1 + $0x55c] sm:$0xf]
    %v375 = vld [vmem:[%s1 + $0x560] sm:$0xf]
    %v376 = vld [vmem:[%s1 + $0x564] sm:$0xf]
    %v377 = vld [vmem:[%s1 + $0x568] sm:$0xf]
    %v378 = vld [vmem:[%s1 + $0x56c] sm:$0xf]
    %v379 = vld [vmem:[%s1 + $0x570] sm:$0xf]
    %v380 = vld [vmem:[%s1 + $0x574] sm:$0xf]
    %v381 = vld [vmem:[%s1 + $0x578] sm:$0xf]
    %v382 = vld [vmem:[%s1 + $0x57c] sm:$0xf]
    %v383 = vld [vmem:[%s1 + $0x580] sm:$0xf]
    %v384 = vld [vmem:[%s1 + $0x584] sm:$0xf]
    %v385 = vld [vmem:[%s1 + $0x588] sm:$0xf]
    %v386 = vld [vmem:[%s1 + $0x58c] sm:$0xf]
    %v387 = vld [vmem:[%s1 + $0x590] sm:$0xf]
    %v388 = vld [vmem:[%s1 + $0x594] sm:$0xf]
    %v389 = vld [vmem:[%s1 + $0x598] sm:$0xf]
    %v390 = vld [vmem:[%s1 + $0x59c] sm:$0xf]
    %v391 = vld [vmem:[%s1 + $0x5a0] sm:$0xf]
    %v392 = vld [vmem:[%s1 + $0x5a4] sm:$0xf]
    %v393 = vld [vmem:[%s1 + $0x5a8] sm:$0xf]
    %v394 = vld [vmem:[%s1 + $0x5ac] sm:$0xf]
    %v395 = vld [vmem:[%s1 + $0x5b0] sm:$0xf]
    %v396 = vld [vmem:[%s1 + $0x5b4] sm:$0xf]
    %v397 = vld [vmem:[%s1 + $0x5b8] sm:$0xf]
    %v398 = vld [vmem:[%s1 + $0x5bc] sm:$0xf]
    %v399 = vld [vmem:[%s1 + $0x5c0] sm:$0xf]
    %v400 = vld [vmem:[%s1 + $0x5c4] sm:$0xf]
    %v401 = vld [vmem:[%s1 + $0x5c8] sm:$0xf]
    %v402 = vld [vmem:[%s1 + $0x5cc] sm:$0xf]
    %v403 = vld [vmem:[%s1 + $0x5d0] sm:$0xf]
    %v404 = vld [vmem:[%s1 + $0x5d4] sm:$0xf]
    %v405 = vld [vmem:[%s1 + $0x5d8] sm:$0xf]
    %v406 = vld [vmem:[%s1 + $0x5dc] sm:$0xf]
    %v407 = vld [vmem:[%s1 + $0x5e0] sm:$0xf]
    %v408 = vld [vmem:[%s1 + $0x5e4] sm:$0xf]
    %v409 = vld [vmem:[%s1 + $0x5e8] sm:$0xf]
    %v410 = vld [vmem:[%s1 + $0x5ec] sm:$0xf]
    %v411 = vld [vmem:[%s1 + $0x5f0] sm:$0xf]
    %v412 = vld [vmem:[%s1 + $0x5f4] sm:$0xf]
    %v413 = vld [vmem:[%s1 + $0x5f8] sm:$0xf]
    %v414 = vld [vmem:[%s1 + $0x5fc] sm:$0xf]
    %v415 = vld [vmem:[%s1 + $0x600] sm:$0xf]
    %v416 = vld [vmem:[%s1 + $0x604] sm:$0xf]
    %v417 = vld [vmem:[%s1 + $0x608] sm:$0xf]
    %v418 = vld [vmem:[%s1 + $0x60c] sm:$0xf]
    %v419 = vld [vmem:[%s1 + $0x610] sm:$0xf]
    %v420 = vld [vmem:[%s1 + $0x614] sm:$0xf]
    %v421 = vld [vmem:[%s1 + $0x618] sm:$0xf]
    %v422 = vld [vmem:[%s1 + $0x61c] sm:$0xf]
    %v423 = vld [vmem:[%s1 + $0x620] sm:$0xf]
    %v424 = vld [vmem:[%s1 + $0x624] sm:$0xf]
    %v425 = vld [vmem:[%s1 + $0x628] sm:$0xf]
    %v426 = vld [vmem:[%s1 + $0x62c] sm:$0xf]
    %v427 = vld [vmem:[%s1 + $0x630] sm:$0xf]
    %v428 = vld [vmem:[%s1 + $0x634] sm:$0xf]
    %v429 = vld [vmem:[%s1 + $0x638] sm:$0xf]
    %v430 = vld [vmem:[%s1 + $0x63c] sm:$0xf]
    %v431 = vld [vmem:[%s1 + $0x640] sm:$0xf]
    %v432 = vld [vmem:[%s1 + $0x644] sm:$0xf]
    %v433 = vld [vmem:[%s1 + $0x648] sm:$0xf]
    %v434 = vld [vmem:[%s1 + $0x64c] sm:$0xf]
    %v435 = vld [vmem:[%s1 + $0x650] sm:$0xf]
    %v436 = vld [vmem:[%s1 + $0x654] sm:$0xf]
    %v437 = vld [vmem:[%s1 + $0x658] sm:$0xf]
    %v438 = vld [vmem:[%s1 + $0x65c] sm:$0xf]
    %v439 = vld [vmem:[%s1 + $0x660] sm:$0xf]
    %v440 = vld [vmem:[%s1 + $0x664] sm:$0xf]
    %v441 = vld [vmem:[%s1 + $0x668] sm:$0xf]
    %v442 = vld [vmem:[%s1 + $0x66c] sm:$0xf]
    %v443 = vld [vmem:[%s1 + $0x670] sm:$0xf]
    %v444 = vld [vmem:[%s1 + $0x674] sm:$0xf]
    %v445 = vld [vmem:[%s1 + $0x678] sm:$0xf]
    %v446 = vld [vmem:[%s1 + $0x67c] sm:$0xf]
    %v447 = vld [vmem:[%s1 + $0x680] sm:$0xf]
    %v448 = vld [vmem:[%s1 + $0x684] sm:$0xf]
    %v449 = vld [vmem:[%s1 + $0x688] sm:$0xf]
    %v450 = vld [vmem:[%s1 + $0x68c] sm:$0xf]
    %v451 = vld [vmem:[%s1 + $0x690] sm:$0xf]
    %v452 = vld [vmem:[%s1 + $0x694] sm:$0xf]
    %v453 = vld [vmem:[%s1 + $0x698] sm:$0xf]
    %v454 = vld [vmem:[%s1 + $0x69c] sm:$0xf]
    %v455 = vld [vmem:[%s1 + $0x6a0] sm:$0xf]
    %v456 = vld [vmem:[%s1 + $0x6a4] sm:$0xf]
    %v457 = vld [vmem:[%s1 + $0x6a8] sm:$0xf]
    %v458 = vld [vmem:[%s1 + $0x6ac] sm:$0xf]
    %v459 = vld [vmem:[%s1 + $0x6b0] sm:$0xf]
    %v460 = vld [vmem:[%s1 + $0x6b4] sm:$0xf]
    %v461 = vld [vmem:[%s1 + $0x6b8] sm:$0xf]
    %v462 = vld [vmem:[%s1 + $0x6bc] sm:$0xf]
    %v463 = vld [vmem:[%s1 + $0x6c0] sm:$0xf]
    %v464 = vld [vmem:[%s1 + $0x6c4] sm:$0xf]
    %v465 = vld [vmem:[%s1 + $0x6c8] sm:$0xf]
    %v466 = vld [vmem:[%s1 + $0x6cc] sm:$0xf]
    %v467 = vld [vmem:[%s1 + $0x6d0] sm:$0xf]
    %v468 = vld [vmem:[%s1 + $0x6d4] sm:$0xf]
    %v469 = vld [vmem:[%s1 + $0x6d8] sm:$0xf]
    %v470 = vld [vmem:[%s1 + $0x6dc] sm:$0xf]
    %v471 = vld [vmem:[%s1 + $0x6e0] sm:$0xf]
    %v472 = vld [vmem:[%s1 + $0x6e4] sm:$0xf]
    %v473 = vld [vmem:[%s1 + $0x6e8] sm:$0xf]
    %v474 = vld [vmem:[%s1 + $0x6ec] sm:$0xf]
    %v475 = vld [vmem:[%s1 + $0x6f0] sm:$0xf]
    %v476 = vld [vmem:[%s1 + $0x6f4] sm:$0xf]
    %v477 = vld [vmem:[%s1 + $0x6f8] sm:$0xf]
    %v478 = vld [vmem:[%s1 + $0x6fc] sm:$0xf]
    %v479 = vld [vmem:[%s1 + $0x700] sm:$0xf]
    %v480 = vld [vmem:[%s1 + $0x704] sm:$0xf]
    %v481 = vld [vmem:[%s1 + $0x708] sm:$0xf]
    %v482 = vld [vmem:[%s1 + $0x70c] sm:$0xf]
    %v483 = vld [vmem:[%s1 + $0x710] sm:$0xf]
    %v484 = vld [vmem:[%s1 + $0x714] sm:$0xf]
    %v485 = vld [vmem:[%s1 + $0x718] sm:$0xf]
    %v486 = vld [vmem:[%s1 + $0x71c] sm:$0xf]
    %v487 = vld [vmem:[%s1 + $0x720] sm:$0xf]
    %v488 = vld [vmem:[%s1 + $0x724] sm:$0xf]
    %v489 = vld [vmem:[%s1 + $0x728] sm:$0xf]
    %v490 = vld [vmem:[%s1 + $0x72c] sm:$0xf]
    %v491 = vld [vmem:[%s1 + $0x730] sm:$0xf]
    %v492 = vld [vmem:[%s1 + $0x734] sm:$0xf]
    %v493 = vld [vmem:[%s1 + $0x738] sm:$0xf]
    %v494 = vld [vmem:[%s1 + $0x73c] sm:$0xf]
    %v495 = vld [vmem:[%s1 + $0x740] sm:$0xf]
    %v496 = vld [vmem:[%s1 + $0x744] sm:$0xf]
    %v497 = vld [vmem:[%s1 + $0x748] sm:$0xf]
    %v498 = vld [vmem:[%s1 + $0x74c] sm:$0xf]
    %v499 = vld [vmem:[%s1 + $0x750] sm:$0xf]
    %v500 = vld [vmem:[%s1 + $0x754] sm:$0xf]
    %v501 = vld [vmem:[%s1 + $0x758] sm:$0xf]
    %v502 = vld [vmem:[%s1 + $0x75c] sm:$0xf]
    %v503 = vld [vmem:[%s1 + $0x760] sm:$0xf]
    %v504 = vld [vmem:[%s1 + $0x764] sm:$0xf]
    %v505 = vld [vmem:[%s1 + $0x768] sm:$0xf]
    %v506 = vld [vmem:[%s1 + $0x76c] sm:$0xf]
    %v507 = vld [vmem:[%s1 + $0x770] sm:$0xf]
    %v508 = vld [vmem:[%s1 + $0x774] sm:$0xf]
    %v509 = vld [vmem:[%s1 + $0x778] sm:$0xf]
    %v510 = vld [vmem:[%s1 + $0x77c] sm:$0xf]
    %v511 = vld [vmem:[%s1 + $0x780] sm:$0xf]
    %v512 = vld [vmem:[%s1 + $0x784] sm:$0xf]
    %v513 = vld [vmem:[%s1 + $0x788] sm:$0xf]
    %v514 = vld [vmem:[%s1 + $0x78c] sm:$0xf]
    %v515 = vld [vmem:[%s1 + $0x790] sm:$0xf]
    %v516 = vld [vmem:[%s1 + $0x794] sm:$0xf]
    %v517 = vld [vmem:[%s1 + $0x798] sm:$0xf]
    %v518 = vld [vmem:[%s1 + $0x79c] sm:$0xf]
    %v519 = vld [vmem:[%s1 + $0x7a0] sm:$0xf]
    %v520 = vld [vmem:[%s1 + $0x7a4] sm:$0xf]
    %v521 = vld [vmem:[%s1 + $0x7a8] sm:$0xf]
    %v522 = vld [vmem:[%s1 + $0x7ac] sm:$0xf]
    %v523 = vld [vmem:[%s1 + $0x7b0] sm:$0xf]
    %v524 = vld [vmem:[%s1 + $0x7b4] sm:$0xf]
    %v525 = vld [vmem:[%s1 + $0x7b8] sm:$0xf]
    %v526 = vld [vmem:[%s1 + $0x7bc] sm:$0xf]
    %v527 = vld [vmem:[%s1 + $0x7c0] sm:$0xf]
    %v528 = vld [vmem:[%s1 + $0x7c4] sm:$0xf]
    %v529 = vld [vmem:[%s1 + $0x7c8] sm:$0xf]
    %v530 = vld [vmem:[%s1 + $0x7cc] sm:$0xf]
    %v531 = vld [vmem:[%s1 + $0x7d0] sm:$0xf]
    %v532 = vld [vmem:[%s1 + $0x7d4] sm:$0xf]
    %v533 = vld [vmem:[%s1 + $0x7d8] sm:$0xf]
    %v534 = vld [vmem:[%s1 + $0x7dc] sm:$0xf]
    %v535 = vld [vmem:[%s1 + $0x7e0] sm:$0xf]
    %v536 = vld [vmem:[%s1 + $0x7e4] sm:$0xf]
    %v537 = vld [vmem:[%s1 + $0x7e8] sm:$0xf]
    %v538 = vld [vmem:[%s1 + $0x7ec] sm:$0xf]
    %v539 = vld [vmem:[%s1 + $0x7f0] sm:$0xf]
    %v540 = vld [vmem:[%s1 + $0x7f4] sm:$0xf]
    %v541 = vld [vmem:[%s1 + $0x7f8] sm:$0xf]
    %v542 = vld [vmem:[%s1 + $0x7fc] sm:$0xf]
    %v543 = vld [vmem:[%s1 + $0x800] sm:$0xf]
    %v544 = vld [vmem:[%s1 + $0x804] sm:$0xf]
    %v545 = vld [vmem:[%s1 + $0x808] sm:$0xf]
    %v546 = vld [vmem:[%s1 + $0x80c] sm:$0xf]
    %v547 = vld [vmem:[%s1 + $0x810] sm:$0xf]
    %v548 = vld [vmem:[%s1 + $0x814] sm:$0xf]
    %v549 = vld [vmem:[%s1 + $0x818] sm:$0xf]
    %v550 = vld [vmem:[%s1 + $0x81c] sm:$0xf]
    %v551 = vld [vmem:[%s1 + $0x820] sm:$0xf]
    %v552 = vld [vmem:[%s1 + $0x824] sm:$0xf]
    %v553 = vld [vmem:[%s1 + $0x828] sm:$0xf]
    %v554 = vld [vmem:[%s1 + $0x82c] sm:$0xf]
    %v555 = vld [vmem:[%s1 + $0x830] sm:$0xf]
    %v556 = vld [vmem:[%s1 + $0x834] sm:$0xf]
    %v557 = vld [vmem:[%s1 + $0x838] sm:$0xf]
    %v558 = vld [vmem:[%s1 + $0x83c] sm:$0xf]
    %v559 = vld [vmem:[%s1 + $0x840] sm:$0xf]
    %v560 = vld [vmem:[%s1 + $0x844] sm:$0xf]
    %v561 = vld [vmem:[%s1 + $0x848] sm:$0xf]
    %v562 = vld [vmem:[%s1 + $0x84c] sm:$0xf]
    %v563 = vld [vmem:[%s1 + $0x850] sm:$0xf]
    %v564 = vld [vmem:[%s1 + $0x854] sm:$0xf]
    %v565 = vld [vmem:[%s1 + $0x858] sm:$0xf]
    %v566 = vld [vmem:[%s1 + $0x85c] sm:$0xf]
    %v567 = vld [vmem:[%s1 + $0x860] sm:$0xf]
    %v568 = vld [vmem:[%s1 + $0x864] sm:$0xf]
    %v569 = vld [vmem:[%s1 + $0x868] sm:$0xf]
    %v570 = vld [vmem:[%s1 + $0x86c] sm:$0xf]
    %v571 = vld [vmem:[%s1 + $0x870] sm:$0xf]
    %v572 = vld [vmem:[%s1 + $0x874] sm:$0xf]
    %v573 = vld [vmem:[%s1 + $0x878] sm:$0xf]
    %v574 = vld [vmem:[%s1 + $0x87c] sm:$0xf]
    %v575 = vld [vmem:[%s1 + $0x880] sm:$0xf]
    %v576 = vld [vmem:[%s1 + $0x884] sm:$0xf]
    %v577 = vld [vmem:[%s1 + $0x888] sm:$0xf]
    %v578 = vld [vmem:[%s1 + $0x88c] sm:$0xf]
    %v579 = vld [vmem:[%s1 + $0x890] sm:$0xf]
    %v580 = vld [vmem:[%s1 + $0x894] sm:$0xf]
    %v581 = vld [vmem:[%s1 + $0x898] sm:$0xf]
    %v582 = vld [vmem:[%s1 + $0x89c] sm:$0xf]
    %v583 = vld [vmem:[%s1 + $0x8a0] sm:$0xf]
    %v584 = vld [vmem:[%s1 + $0x8a4] sm:$0xf]
    %v585 = vld [vmem:[%s1 + $0x8a8] sm:$0xf]
    %v586 = vld [vmem:[%s1 + $0x8ac] sm:$0xf]
    %v587 = vld [vmem:[%s1 + $0x8b0] sm:$0xf]
    %v588 = vld [vmem:[%s1 + $0x8b4] sm:$0xf]
    %v589 = vld [vmem:[%s1 + $0x8b8] sm:$0xf]
    %v590 = vld [vmem:[%s1 + $0x8bc] sm:$0xf]
    %v591 = vld [vmem:[%s1 + $0x8c0] sm:$0xf]
    %v592 = vld [vmem:[%s1 + $0x8c4] sm:$0xf]
    %v593 = vld [vmem:[%s1 + $0x8c8] sm:$0xf]
    %v594 = vld [vmem:[%s1 + $0x8cc] sm:$0xf]
    %v595 = vld [vmem:[%s1 + $0x8d0] sm:$0xf]
    %v596 = vld [vmem:[%s1 + $0x8d4] sm:$0xf]
    %v597 = vld [vmem:[%s1 + $0x8d8] sm:$0xf]
    %v598 = vld [vmem:[%s1 + $0x8dc] sm:$0xf]
    %v599 = vld [vmem:[%s1 + $0x8e0] sm:$0xf]
    %v600 = vld [vmem:[%s1 + $0x8e4] sm:$0xf]
    %v601 = vld [vmem:[%s1 + $0x8e8] sm:$0xf]
    %v602 = vld [vmem:[%s1 + $0x8ec] sm:$0xf]
    %v603 = vld [vmem:[%s1 + $0x8f0] sm:$0xf]
    %v604 = vld [vmem:[%s1 + $0x8f4] sm:$0xf]
    %v605 = vld [vmem:[%s1 + $0x8f8] sm:$0xf]
    %v606 = vld [vmem:[%s1 + $0x8fc] sm:$0xf]
    %v607 = vld [vmem:[%s1 + $0x900] sm:$0xf]
    %v608 = vld [vmem:[%s1 + $0x904] sm:$0xf]
    %v609 = vld [vmem:[%s1 + $0x908] sm:$0xf]
    %v610 = vld [vmem:[%s1 + $0x90c] sm:$0xf]
    %v611 = vld [vmem:[%s1 + $0x910] sm:$0xf]
    %v612 = vld [vmem:[%s1 + $0x914] sm:$0xf]
    %v613 = vld [vmem:[%s1 + $0x918] sm:$0xf]
    %v614 = vld [vmem:[%s1 + $0x91c] sm:$0xf]
    %v615 = vld [vmem:[%s1 + $0x920] sm:$0xf]
    %v616 = vld [vmem:[%s1 + $0x924] sm:$0xf]
    %v617 = vld [vmem:[%s1 + $0x928] sm:$0xf]
    %v618 = vld [vmem:[%s1 + $0x92c] sm:$0xf]
    %v619 = vld [vmem:[%s1 + $0x930] sm:$0xf]
    %v620 = vld [vmem:[%s1 + $0x934] sm:$0xf]
    %v621 = vld [vmem:[%s1 + $0x938] sm:$0xf]
    %v622 = vld [vmem:[%s1 + $0x93c] sm:$0xf]
    %v623 = vld [vmem:[%s1 + $0x940] sm:$0xf]
    %v624 = vld [vmem:[%s1 + $0x944] sm:$0xf]
    %v625 = vld [vmem:[%s1 + $0x948] sm:$0xf]
    %v626 = vld [vmem:[%s1 + $0x94c] sm:$0xf]
    %v627 = vld [vmem:[%s1 + $0x950] sm:$0xf]
    %v628 = vld [vmem:[%s1 + $0x954] sm:$0xf]
    %v629 = vld [vmem:[%s1 + $0x958] sm:$0xf]
    %v630 = vld [vmem:[%s1 + $0x95c] sm:$0xf]
    %v631 = vld [vmem:[%s1 + $0x960] sm:$0xf]
    %v632 = vld [vmem:[%s1 + $0x964] sm:$0xf]
    %v633 = vld [vmem:[%s1 + $0x968] sm:$0xf]
    %v634 = vld [vmem:[%s1 + $0x96c] sm:$0xf]
    %v635 = vld [vmem:[%s1 + $0x970] sm:$0xf]
    %v636 = vld [vmem:[%s1 + $0x974] sm:$0xf]
    %v637 = vld [vmem:[%s1 + $0x978] sm:$0xf]
    %v638 = vld [vmem:[%s1 + $0x97c] sm:$0xf]
    %v639 = vld [vmem:[%s1 + $0x980] sm:$0xf]
    %v640 = vld [vmem:[%s1 + $0x984] sm:$0xf]
    %v641 = vld [vmem:[%s1 + $0x988] sm:$0xf]
    %v642 = vld [vmem:[%s1 + $0x98c] sm:$0xf]
    %v643 = vld [vmem:[%s1 + $0x990] sm:$0xf]
    %v644 = vld [vmem:[%s1 + $0x994] sm:$0xf]
    %v645 = vld [vmem:[%s1 + $0x998] sm:$0xf]
    %v646 = vld [vmem:[%s1 + $0x99c] sm:$0xf]
    %v647 = vld [vmem:[%s1 + $0x9a0] sm:$0xf]
    %v648 = vld [vmem:[%s1 + $0x9a4] sm:$0xf]
    %v649 = vld [vmem:[%s1 + $0x9a8] sm:$0xf]
    %v650 = vld [vmem:[%s1 + $0x9ac] sm:$0xf]
    %v651 = vld [vmem:[%s1 + $0x9b0] sm:$0xf]
    %v652 = vld [vmem:[%s1 + $0x9b4] sm:$0xf]
    %v653 = vld [vmem:[%s1 + $0x9b8] sm:$0xf]
    %v654 = vld [vmem:[%s1 + $0x9bc] sm:$0xf]
    %v655 = vld [vmem:[%s1 + $0x9c0] sm:$0xf]
    %v656 = vld [vmem:[%s1 + $0x9c4] sm:$0xf]
    %v657 = vld [vmem:[%s1 + $0x9c8] sm:$0xf]
    %v658 = vld [vmem:[%s1 + $0x9cc] sm:$0xf]
    %v659 = vld [vmem:[%s1 + $0x9d0] sm:$0xf]
    %v660 = vld [vmem:[%s1 + $0x9d4] sm:$0xf]
    %v661 = vld [vmem:[%s1 + $0x9d8] sm:$0xf]
    %v662 = vld [vmem:[%s1 + $0x9dc] sm:$0xf]
    %v663 = vld [vmem:[%s1 + $0x9e0] sm:$0xf]
    %v664 = vld [vmem:[%s1 + $0x9e4] sm:$0xf]
    %v665 = vld [vmem:[%s1 + $0x9e8] sm:$0xf]
    %v666 = vld [vmem:[%s1 + $0x9ec] sm:$0xf]
    %v667 = vld [vmem:[%s1 + $0x9f0] sm:$0xf]
    %v668 = vld [vmem:[%s1 + $0x9f4] sm:$0xf]
    %v669 = vld [vmem:[%s1 + $0x9f8] sm:$0xf]
    %v670 = vld [vmem:[%s1 + $0x9fc] sm:$0xf]
    %v671 = vld [vmem:[%s1 + $0xa00] sm:$0xf]
    %v672 = vld [vmem:[%s1 + $0xa04] sm:$0xf]
    %v673 = vld [vmem:[%s1 + $0xa08] sm:$0xf]
    %v674 = vld [vmem:[%s1 + $0xa0c] sm:$0xf]
    %v675 = vld [vmem:[%s1 + $0xa10] sm:$0xf]
    %v676 = vld [vmem:[%s1 + $0xa14] sm:$0xf]
    %v677 = vld [vmem:[%s1 + $0xa18] sm:$0xf]
    %v678 = vld [vmem:[%s1 + $0xa1c] sm:$0xf]
    %v679 = vld [vmem:[%s1 + $0xa20] sm:$0xf]
    %v680 = vld [vmem:[%s1 + $0xa24] sm:$0xf]
    %v681 = vld [vmem:[%s1 + $0xa28] sm:$0xf]
    %v682 = vld [vmem:[%s1 + $0xa2c] sm:$0xf]
    %v683 = vld [vmem:[%s1 + $0xa30] sm:$0xf]
    %v684 = vld [vmem:[%s1 + $0xa34] sm:$0xf]
    %v685 = vld [vmem:[%s1 + $0xa38] sm:$0xf]
    %v686 = vld [vmem:[%s1 + $0xa3c] sm:$0xf]
    %v687 = vld [vmem:[%s1 + $0xa40] sm:$0xf]
    %v688 = vld [vmem:[%s1 + $0xa44] sm:$0xf]
    %v689 = vld [vmem:[%s1 + $0xa48] sm:$0xf]
    %v690 = vld [vmem:[%s1 + $0xa4c] sm:$0xf]
    %v691 = vld [vmem:[%s1 + $0xa50] sm:$0xf]
    %v692 = vld [vmem:[%s1 + $0xa54] sm:$0xf]
    %v693 = vld [vmem:[%s1 + $0xa58] sm:$0xf]
    %v694 = vld [vmem:[%s1 + $0xa5c] sm:$0xf]
    %v695 = vld [vmem:[%s1 + $0xa60] sm:$0xf]
    %v696 = vld [vmem:[%s1 + $0xa64] sm:$0xf]
    %v697 = vld [vmem:[%s1 + $0xa68] sm:$0xf]
    %v698 = vld [vmem:[%s1 + $0xa6c] sm:$0xf]
    %v699 = vld [vmem:[%s1 + $0xa70] sm:$0xf]
    %v700 = vld [vmem:[%s1 + $0xa74] sm:$0xf]
    %v701 = vld [vmem:[%s1 + $0xa78] sm:$0xf]
    %v702 = vld [vmem:[%s1 + $0xa7c] sm:$0xf]
    %v703 = vld [vmem:[%s1 + $0xa80] sm:$0xf]
    %v704 = vld [vmem:[%s1 + $0xa84] sm:$0xf]
    %v705 = vld [vmem:[%s1 + $0xa88] sm:$0xf]
    %v706 = vld [vmem:[%s1 + $0xa8c] sm:$0xf]
    %v707 = vld [vmem:[%s1 + $0xa90] sm:$0xf]
    %v708 = vld [vmem:[%s1 + $0xa94] sm:$0xf]
    %v709 = vld [vmem:[%s1 + $0xa98] sm:$0xf]
    %v710 = vld [vmem:[%s1 + $0xa9c] sm:$0xf]
    %v711 = vld [vmem:[%s1 + $0xaa0] sm:$0xf]
    %v712 = vld [vmem:[%s1 + $0xaa4] sm:$0xf]
    %v713 = vld [vmem:[%s1 + $0xaa8] sm:$0xf]
    %v714 = vld [vmem:[%s1 + $0xaac] sm:$0xf]
    %v715 = vld [vmem:[%s1 + $0xab0] sm:$0xf]
    %v716 = vld [vmem:[%s1 + $0xab4] sm:$0xf]
    %v717 = vld [vmem:[%s1 + $0xab8] sm:$0xf]
    %v718 = vld [vmem:[%s1 + $0xabc] sm:$0xf]
    %v719 = vld [vmem:[%s1 + $0xac0] sm:$0xf]
    %v720 = vld [vmem:[%s1 + $0xac4] sm:$0xf]
    %v721 = vld [vmem:[%s1 + $0xac8] sm:$0xf]
    %v722 = vld [vmem:[%s1 + $0xacc] sm:$0xf]
    %v723 = vld [vmem:[%s1 + $0xad0] sm:$0xf]
    %v724 = vld [vmem:[%s1 + $0xad4] sm:$0xf]
    %v725 = vld [vmem:[%s1 + $0xad8] sm:$0xf]
    %v726 = vld [vmem:[%s1 + $0xadc] sm:$0xf]
    %v727 = vld [vmem:[%s1 + $0xae0] sm:$0xf]
    %v728 = vld [vmem:[%s1 + $0xae4] sm:$0xf]
    %v729 = vld [vmem:[%s1 + $0xae8] sm:$0xf]
    %v730 = vld [vmem:[%s1 + $0xaec] sm:$0xf]
    %v731 = vld [vmem:[%s1 + $0xaf0] sm:$0xf]
    %v732 = vld [vmem:[%s1 + $0xaf4] sm:$0xf]
    %v733 = vld [vmem:[%s1 + $0xaf8] sm:$0xf]
    %v734 = vld [vmem:[%s1 + $0xafc] sm:$0xf]
    %v735 = vld [vmem:[%s1 + $0xb00] sm:$0xf]
    %v736 = vld [vmem:[%s1 + $0xb04] sm:$0xf]
    %v737 = vld [vmem:[%s1 + $0xb08] sm:$0xf]
    %v738 = vld [vmem:[%s1 + $0xb0c] sm:$0xf]
    %v739 = vld [vmem:[%s1 + $0xb10] sm:$0xf]
    %v740 = vld [vmem:[%s1 + $0xb14] sm:$0xf]
    %v741 = vld [vmem:[%s1 + $0xb18] sm:$0xf]
    %v742 = vld [vmem:[%s1 + $0xb1c] sm:$0xf]
    %v743 = vld [vmem:[%s1 + $0xb20] sm:$0xf]
    %v744 = vld [vmem:[%s1 + $0xb24] sm:$0xf]
    %v745 = vld [vmem:[%s1 + $0xb28] sm:$0xf]
    %v746 = vld [vmem:[%s1 + $0xb2c] sm:$0xf]
    %v747 = vld [vmem:[%s1 + $0xb30] sm:$0xf]
    %v748 = vld [vmem:[%s1 + $0xb34] sm:$0xf]
    %v749 = vld [vmem:[%s1 + $0xb38] sm:$0xf]
    %v750 = vld [vmem:[%s1 + $0xb3c] sm:$0xf]
    %v751 = vld [vmem:[%s1 + $0xb40] sm:$0xf]
    %v752 = vld [vmem:[%s1 + $0xb44] sm:$0xf]
    %v753 = vld [vmem:[%s1 + $0xb48] sm:$0xf]
    %v754 = vld [vmem:[%s1 + $0xb4c] sm:$0xf]
    %v755 = vld [vmem:[%s1 + $0xb50] sm:$0xf]
    %v756 = vld [vmem:[%s1 + $0xb54] sm:$0xf]
    %v757 = vld [vmem:[%s1 + $0xb58] sm:$0xf]
    %v758 = vld [vmem:[%s1 + $0xb5c] sm:$0xf]
    %v759 = vld [vmem:[%s1 + $0xb60] sm:$0xf]
    %v760 = vld [vmem:[%s1 + $0xb64] sm:$0xf]
    %v761 = vld [vmem:[%s1 + $0xb68] sm:$0xf]
    %v762 = vld [vmem:[%s1 + $0xb6c] sm:$0xf]
    %v763 = vld [vmem:[%s1 + $0xb70] sm:$0xf]
    %v764 = vld [vmem:[%s1 + $0xb74] sm:$0xf]
    %v765 = vld [vmem:[%s1 + $0xb78] sm:$0xf]
    %v766 = vld [vmem:[%s1 + $0xb7c] sm:$0xf]
    %v767 = vld [vmem:[%s1 + $0xb80] sm:$0xf]
    %v768 = vld [vmem:[%s1 + $0xb84] sm:$0xf]
    %v769 = vld [vmem:[%s1 + $0xb88] sm:$0xf]
    %v770 = vld [vmem:[%s1 + $0xb8c] sm:$0xf]
    %v771 = vld [vmem:[%s1 + $0xb90] sm:$0xf]
    %v772 = vld [vmem:[%s1 + $0xb94] sm:$0xf]
    %v773 = vld [vmem:[%s1 + $0xb98] sm:$0xf]
    %v774 = vld [vmem:[%s1 + $0xb9c] sm:$0xf]
    %v775 = vld [vmem:[%s1 + $0xba0] sm:$0xf]
    %v776 = vld [vmem:[%s1 + $0xba4] sm:$0xf]
    %v777 = vld [vmem:[%s1 + $0xba8] sm:$0xf]
    %v778 = vld [vmem:[%s1 + $0xbac] sm:$0xf]
    %v779 = vld [vmem:[%s1 + $0xbb0] sm:$0xf]
    %v780 = vld [vmem:[%s1 + $0xbb4] sm:$0xf]
    %v781 = vld [vmem:[%s1 + $0xbb8] sm:$0xf]
    %v782 = vld [vmem:[%s1 + $0xbbc] sm:$0xf]
    %v783 = vld [vmem:[%s1 + $0xbc0] sm:$0xf]
    %v784 = vld [vmem:[%s1 + $0xbc4] sm:$0xf]
    %v785 = vld [vmem:[%s1 + $0xbc8] sm:$0xf]
    %v786 = vld [vmem:[%s1 + $0xbcc] sm:$0xf]
    %v787 = vld [vmem:[%s1 + $0xbd0] sm:$0xf]
    %v788 = vld [vmem:[%s1 + $0xbd4] sm:$0xf]
    %v789 = vld [vmem:[%s1 + $0xbd8] sm:$0xf]
    %v790 = vld [vmem:[%s1 + $0xbdc] sm:$0xf]
    %v791 = vld [vmem:[%s1 + $0xbe0] sm:$0xf]
    %v792 = vld [vmem:[%s1 + $0xbe4] sm:$0xf]
    %v793 = vld [vmem:[%s1 + $0xbe8] sm:$0xf]
    %v794 = vld [vmem:[%s1 + $0xbec] sm:$0xf]
    %v795 = vld [vmem:[%s1 + $0xbf0] sm:$0xf]
    %v796 = vld [vmem:[%s1 + $0xbf4] sm:$0xf]
    %v797 = vld [vmem:[%s1 + $0xbf8] sm:$0xf]
    %v798 = vld [vmem:[%s1 + $0xbfc] sm:$0xf]
    %v799 = vld [vmem:[%s1 + $0xc00] sm:$0xf]
    %v800 = vld [vmem:[%s1 + $0xc04] sm:$0xf]
    %v801 = vld [vmem:[%s1 + $0xc08] sm:$0xf]
    %v802 = vld [vmem:[%s1 + $0xc0c] sm:$0xf]
    %v803 = vld [vmem:[%s1 + $0xc10] sm:$0xf]
    %v804 = vld [vmem:[%s1 + $0xc14] sm:$0xf]
    %v805 = vld [vmem:[%s1 + $0xc18] sm:$0xf]
    %v806 = vld [vmem:[%s1 + $0xc1c] sm:$0xf]
    %v807 = vld [vmem:[%s1 + $0xc20] sm:$0xf]
    %v808 = vld [vmem:[%s1 + $0xc24] sm:$0xf]
    %v809 = vld [vmem:[%s1 + $0xc28] sm:$0xf]
    %v810 = vld [vmem:[%s1 + $0xc2c] sm:$0xf]
    %v811 = vld [vmem:[%s1 + $0xc30] sm:$0xf]
    %v812 = vld [vmem:[%s1 + $0xc34] sm:$0xf]
    %v813 = vld [vmem:[%s1 + $0xc38] sm:$0xf]
    %v814 = vld [vmem:[%s1 + $0xc3c] sm:$0xf]
    %v815 = vld [vmem:[%s1 + $0xc40] sm:$0xf]
    %v816 = vld [vmem:[%s1 + $0xc44] sm:$0xf]
    %v817 = vld [vmem:[%s1 + $0xc48] sm:$0xf]
    %v818 = vld [vmem:[%s1 + $0xc4c] sm:$0xf]
    %v819 = vld [vmem:[%s1 + $0xc50] sm:$0xf]
    %v820 = vld [vmem:[%s1 + $0xc54] sm:$0xf]
    %v821 = vld [vmem:[%s1 + $0xc58] sm:$0xf]
    %v822 = vld [vmem:[%s1 + $0xc5c] sm:$0xf]
    %v823 = vld [vmem:[%s1 + $0xc60] sm:$0xf]
    %v824 = vld [vmem:[%s1 + $0xc64] sm:$0xf]
    %v825 = vld [vmem:[%s1 + $0xc68] sm:$0xf]
    %v826 = vld [vmem:[%s1 + $0xc6c] sm:$0xf]
    %v827 = vld [vmem:[%s1 + $0xc70] sm:$0xf]
    %v828 = vld [vmem:[%s1 + $0xc74] sm:$0xf]
    %v829 = vld [vmem:[%s1 + $0xc78] sm:$0xf]
    %v830 = vld [vmem:[%s1 + $0xc7c] sm:$0xf]
    %v831 = vld [vmem:[%s1 + $0xc80] sm:$0xf]
    %v832 = vld [vmem:[%s1 + $0xc84] sm:$0xf]
    %v833 = vld [vmem:[%s1 + $0xc88] sm:$0xf]
    %v834 = vld [vmem:[%s1 + $0xc8c] sm:$0xf]
    %v835 = vld [vmem:[%s1 + $0xc90] sm:$0xf]
    %v836 = vld [vmem:[%s1 + $0xc94] sm:$0xf]
    %v837 = vld [vmem:[%s1 + $0xc98] sm:$0xf]
    %v838 = vld [vmem:[%s1 + $0xc9c] sm:$0xf]
    %v839 = vld [vmem:[%s1 + $0xca0] sm:$0xf]
    %v840 = vld [vmem:[%s1 + $0xca4] sm:$0xf]
    %v841 = vld [vmem:[%s1 + $0xca8] sm:$0xf]
    %v842 = vld [vmem:[%s1 + $0xcac] sm:$0xf]
    %v843 = vld [vmem:[%s1 + $0xcb0] sm:$0xf]
    %v844 = vld [vmem:[%s1 + $0xcb4] sm:$0xf]
    %v845 = vld [vmem:[%s1 + $0xcb8] sm:$0xf]
    %v846 = vld [vmem:[%s1 + $0xcbc] sm:$0xf]
    %v847 = vld [vmem:[%s1 + $0xcc0] sm:$0xf]
    %v848 = vld [vmem:[%s1 + $0xcc4] sm:$0xf]
    %v849 = vld [vmem:[%s1 + $0xcc8] sm:$0xf]
    %v850 = vld [vmem:[%s1 + $0xccc] sm:$0xf]
    %v851 = vld [vmem:[%s1 + $0xcd0] sm:$0xf]
    %v852 = vld [vmem:[%s1 + $0xcd4] sm:$0xf]
    %v853 = vld [vmem:[%s1 + $0xcd8] sm:$0xf]
    %v854 = vld [vmem:[%s1 + $0xcdc] sm:$0xf]
    %v855 = vld [vmem:[%s1 + $0xce0] sm:$0xf]
    %v856 = vld [vmem:[%s1 + $0xce4] sm:$0xf]
    %v857 = vld [vmem:[%s1 + $0xce8] sm:$0xf]
    %v858 = vld [vmem:[%s1 + $0xcec] sm:$0xf]
    %v859 = vld [vmem:[%s1 + $0xcf0] sm:$0xf]
    %v860 = vld [vmem:[%s1 + $0xcf4] sm:$0xf]
    %v861 = vld [vmem:[%s1 + $0xcf8] sm:$0xf]
    %v862 = vld [vmem:[%s1 + $0xcfc] sm:$0xf]
    %v863 = vld [vmem:[%s1 + $0xd00] sm:$0xf]
    %v864 = vld [vmem:[%s1 + $0xd04] sm:$0xf]
    %v865 = vld [vmem:[%s1 + $0xd08] sm:$0xf]
    %v866 = vld [vmem:[%s1 + $0xd0c] sm:$0xf]
    %v867 = vld [vmem:[%s1 + $0xd10] sm:$0xf]
    %v868 = vld [vmem:[%s1 + $0xd14] sm:$0xf]
    %v869 = vld [vmem:[%s1 + $0xd18] sm:$0xf]
    %v870 = vld [vmem:[%s1 + $0xd1c] sm:$0xf]
    %v871 = vld [vmem:[%s1 + $0xd20] sm:$0xf]
    %v872 = vld [vmem:[%s1 + $0xd24] sm:$0xf]
    %v873 = vld [vmem:[%s1 + $0xd28] sm:$0xf]
    %v874 = vld [vmem:[%s1 + $0xd2c] sm:$0xf]
    %v875 = vld [vmem:[%s1 + $0xd30] sm:$0xf]
    %v876 = vld [vmem:[%s1 + $0xd34] sm:$0xf]
    %v877 = vld [vmem:[%s1 + $0xd38] sm:$0xf]
    %v878 = vld [vmem:[%s1 + $0xd3c] sm:$0xf]
    %v879 = vld [vmem:[%s1 + $0xd40] sm:$0xf]
    %v880 = vld [vmem:[%s1 + $0xd44] sm:$0xf]
    %v881 = vld [vmem:[%s1 + $0xd48] sm:$0xf]
    %v882 = vld [vmem:[%s1 + $0xd4c] sm:$0xf]
    %v883 = vld [vmem:[%s1 + $0xd50] sm:$0xf]
    %v884 = vld [vmem:[%s1 + $0xd54] sm:$0xf]
    %v885 = vld [vmem:[%s1 + $0xd58] sm:$0xf]
    %v886 = vld [vmem:[%s1 + $0xd5c] sm:$0xf]
    %v887 = vld [vmem:[%s1 + $0xd60] sm:$0xf]
    %v888 = vld [vmem:[%s1 + $0xd64] sm:$0xf]
    %v889 = vld [vmem:[%s1 + $0xd68] sm:$0xf]
    %v890 = vld [vmem:[%s1 + $0xd6c] sm:$0xf]
    %v891 = vld [vmem:[%s1 + $0xd70] sm:$0xf]
    %v892 = vld [vmem:[%s1 + $0xd74] sm:$0xf]
    %v893 = vld [vmem:[%s1 + $0xd78] sm:$0xf]
    %v894 = vld [vmem:[%s1 + $0xd7c] sm:$0xf]
    %v895 = vld [vmem:[%s1 + $0xd80] sm:$0xf]
    %v896 = vld [vmem:[%s1 + $0xd84] sm:$0xf]
    %v897 = vld [vmem:[%s1 + $0xd88] sm:$0xf]
    %v898 = vld [vmem:[%s1 + $0xd8c] sm:$0xf]
    %v899 = vld [vmem:[%s1 + $0xd90] sm:$0xf]
    %v900 = vld [vmem:[%s1 + $0xd94] sm:$0xf]
    %v901 = vld [vmem:[%s1 + $0xd98] sm:$0xf]
    %v902 = vld [vmem:[%s1 + $0xd9c] sm:$0xf]
    %v903 = vld [vmem:[%s1 + $0xda0] sm:$0xf]
    %v904 = vld [vmem:[%s1 + $0xda4] sm:$0xf]
    %v905 = vld [vmem:[%s1 + $0xda8] sm:$0xf]
    %v906 = vld [vmem:[%s1 + $0xdac] sm:$0xf]
    %v907 = vld [vmem:[%s1 + $0xdb0] sm:$0xf]
    %v908 = vld [vmem:[%s1 + $0xdb4] sm:$0xf]
    %v909 = vld [vmem:[%s1 + $0xdb8] sm:$0xf]
    %v910 = vld [vmem:[%s1 + $0xdbc] sm:$0xf]
    %v911 = vld [vmem:[%s1 + $0xdc0] sm:$0xf]
    %v912 = vld [vmem:[%s1 + $0xdc4] sm:$0xf]
    %v913 = vld [vmem:[%s1 + $0xdc8] sm:$0xf]
    %v914 = vld [vmem:[%s1 + $0xdcc] sm:$0xf]
    %v915 = vld [vmem:[%s1 + $0xdd0] sm:$0xf]
    %v916 = vld [vmem:[%s1 + $0xdd4] sm:$0xf]
    %v917 = vld [vmem:[%s1 + $0xdd8] sm:$0xf]
    %v918 = vld [vmem:[%s1 + $0xddc] sm:$0xf]
    %v919 = vld [vmem:[%s1 + $0xde0] sm:$0xf]
    %v920 = vld [vmem:[%s1 + $0xde4] sm:$0xf]
    %v921 = vld [vmem:[%s1 + $0xde8] sm:$0xf]
    %v922 = vld [vmem:[%s1 + $0xdec] sm:$0xf]
    %v923 = vld [vmem:[%s1 + $0xdf0] sm:$0xf]
    %v924 = vld [vmem:[%s1 + $0xdf4] sm:$0xf]
    %v925 = vld [vmem:[%s1 + $0xdf8] sm:$0xf]
    %v926 = vld [vmem:[%s1 + $0xdfc] sm:$0xf]
    %v927 = vld [vmem:[%s1 + $0xe00] sm:$0xf]
    %v928 = vld [vmem:[%s1 + $0xe04] sm:$0xf]
    %v929 = vld [vmem:[%s1 + $0xe08] sm:$0xf]
    %v930 = vld [vmem:[%s1 + $0xe0c] sm:$0xf]
    %v931 = vld [vmem:[%s1 + $0xe10] sm:$0xf]
    %v932 = vld [vmem:[%s1 + $0xe14] sm:$0xf]
    %v933 = vld [vmem:[%s1 + $0xe18] sm:$0xf]
    %v934 = vld [vmem:[%s1 + $0xe1c] sm:$0xf]
    %v935 = vld [vmem:[%s1 + $0xe20] sm:$0xf]
    %v936 = vld [vmem:[%s1 + $0xe24] sm:$0xf]
    %v937 = vld [vmem:[%s1 + $0xe28] sm:$0xf]
    %v938 = vld [vmem:[%s1 + $0xe2c] sm:$0xf]
    %v939 = vld [vmem:[%s1 + $0xe30] sm:$0xf]
    %v940 = vld [vmem:[%s1 + $0xe34] sm:$0xf]
    %v941 = vld [vmem:[%s1 + $0xe38] sm:$0xf]
    %v942 = vld [vmem:[%s1 + $0xe3c] sm:$0xf]
    %v943 = vld [vmem:[%s1 + $0xe40] sm:$0xf]
    %v944 = vld [vmem:[%s1 + $0xe44] sm:$0xf]
    %v945 = vld [vmem:[%s1 + $0xe48] sm:$0xf]
    %v946 = vld [vmem:[%s1 + $0xe4c] sm:$0xf]
    %v947 = vld [vmem:[%s1 + $0xe50] sm:$0xf]
    %v948 = vld [vmem:[%s1 + $0xe54] sm:$0xf]
    %v949 = vld [vmem:[%s1 + $0xe58] sm:$0xf]
    %v950 = vld [vmem:[%s1 + $0xe5c] sm:$0xf]
    %v951 = vld [vmem:[%s1 + $0xe60] sm:$0xf]
    %v952 = vld [vmem:[%s1 + $0xe64] sm:$0xf]
    %v953 = vld [vmem:[%s1 + $0xe68] sm:$0xf]
    %v954 = vld [vmem:[%s1 + $0xe6c] sm:$0xf]
    %v955 = vld [vmem:[%s1 + $0xe70] sm:$0xf]
    %v956 = vld [vmem:[%s1 + $0xe74] sm:$0xf]
    %v957 = vld [vmem:[%s1 + $0xe78] sm:$0xf]
    %v958 = vld [vmem:[%s1 + $0xe7c] sm:$0xf]
    %v959 = vld [vmem:[%s1 + $0xe80] sm:$0xf]
    %v960 = vld [vmem:[%s1 + $0xe84] sm:$0xf]
    %v961 = vld [vmem:[%s1 + $0xe88] sm:$0xf]
    %v962 = vld [vmem:[%s1 + $0xe8c] sm:$0xf]
    %v963 = vld [vmem:[%s1 + $0xe90] sm:$0xf]
    %v964 = vld [vmem:[%s1 + $0xe94] sm:$0xf]
    %v965 = vld [vmem:[%s1 + $0xe98] sm:$0xf]
    %v966 = vld [vmem:[%s1 + $0xe9c] sm:$0xf]
    %v967 = vld [vmem:[%s1 + $0xea0] sm:$0xf]
    %v968 = vld [vmem:[%s1 + $0xea4] sm:$0xf]
    %v969 = vld [vmem:[%s1 + $0xea8] sm:$0xf]
    %v970 = vld [vmem:[%s1 + $0xeac] sm:$0xf]
    %v971 = vld [vmem:[%s1 + $0xeb0] sm:$0xf]
    %v972 = vld [vmem:[%s1 + $0xeb4] sm:$0xf]
    %v973 = vld [vmem:[%s1 + $0xeb8] sm:$0xf]
    %v974 = vld [vmem:[%s1 + $0xebc] sm:$0xf]
    %v975 = vld [vmem:[%s1 + $0xec0] sm:$0xf]
    %v976 = vld [vmem:[%s1 + $0xec4] sm:$0xf]
    %v977 = vld [vmem:[%s1 + $0xec8] sm:$0xf]
    %v978 = vld [vmem:[%s1 + $0xecc] sm:$0xf]
    %v979 = vld [vmem:[%s1 + $0xed0] sm:$0xf]
    %v980 = vld [vmem:[%s1 + $0xed4] sm:$0xf]
    %v981 = vld [vmem:[%s1 + $0xed8] sm:$0xf]
    %v982 = vld [vmem:[%s1 + $0xedc] sm:$0xf]
    %v983 = vld [vmem:[%s1 + $0xee0] sm:$0xf]
    %v984 = vld [vmem:[%s1 + $0xee4] sm:$0xf]
    %v985 = vld [vmem:[%s1 + $0xee8] sm:$0xf]
    %v986 = vld [vmem:[%s1 + $0xeec] sm:$0xf]
    %v987 = vld [vmem:[%s1 + $0xef0] sm:$0xf]
    %v988 = vld [vmem:[%s1 + $0xef4] sm:$0xf]
    %v989 = vld [vmem:[%s1 + $0xef8] sm:$0xf]
    %v990 = vld [vmem:[%s1 + $0xefc] sm:$0xf]
    %v991 = vld [vmem:[%s1 + $0xf00] sm:$0xf]
    %v992 = vld [vmem:[%s1 + $0xf04] sm:$0xf]
    %v993 = vld [vmem:[%s1 + $0xf08] sm:$0xf]
    %v994 = vld [vmem:[%s1 + $0xf0c] sm:$0xf]
    %v995 = vld [vmem:[%s1 + $0xf10] sm:$0xf]
    %v996 = vld [vmem:[%s1 + $0xf14] sm:$0xf]
    %v997 = vld [vmem:[%s1 + $0xf18] sm:$0xf]
    %v998 = vld [vmem:[%s1 + $0xf1c] sm:$0xf]
    %v999 = vld [vmem:[%s1 + $0xf20] sm:$0xf]
    %v1000 = vld [vmem:[%s1 + $0xf24] sm:$0xf]
    %v1001 = vld [vmem:[%s1 + $0xf28] sm:$0xf]
    %v1002 = vld [vmem:[%s1 + $0xf2c] sm:$0xf]
    %v1003 = vld [vmem:[%s1 + $0xf30] sm:$0xf]
    %v1004 = vld [vmem:[%s1 + $0xf34] sm:$0xf]
    %v1005 = vld [vmem:[%s1 + $0xf38] sm:$0xf]
    %v1006 = vld [vmem:[%s1 + $0xf3c] sm:$0xf]
    %v1007 = vld [vmem:[%s1 + $0xf40] sm:$0xf]
    %v1008 = vld [vmem:[%s1 + $0xf44] sm:$0xf]
    %v1009 = vld [vmem:[%s1 + $0xf48] sm:$0xf]
    %v1010 = vld [vmem:[%s1 + $0xf4c] sm:$0xf]
    %v1011 = vld [vmem:[%s1 + $0xf50] sm:$0xf]
    %v1012 = vld [vmem:[%s1 + $0xf54] sm:$0xf]
    %v1013 = vld [vmem:[%s1 + $0xf58] sm:$0xf]
    %v1014 = vld [vmem:[%s1 + $0xf5c] sm:$0xf]
    %v1015 = vld [vmem:[%s1 + $0xf60] sm:$0xf]
    %v1016 = vld [vmem:[%s1 + $0xf64] sm:$0xf]
    %v1017 = vld [vmem:[%s1 + $0xf68] sm:$0xf]
    %v1018 = vld [vmem:[%s1 + $0xf6c] sm:$0xf]
    %v1019 = vld [vmem:[%s1 + $0xf70] sm:$0xf]
    %v1020 = vld [vmem:[%s1 + $0xf74] sm:$0xf]
    %v1021 = vld [vmem:[%s1 + $0xf78] sm:$0xf]
    %v1022 = vld [vmem:[%s1 + $0xf7c] sm:$0xf]
    %v1023 = vld [vmem:[%s1 + $0xf80] sm:$0xf]
    %v1024 = vld [vmem:[%s1 + $0xf84] sm:$0xf]
    %v1025 = vld [vmem:[%s1 + $0xf88] sm:$0xf]
    %v1026 = vld [vmem:[%s1 + $0xf8c] sm:$0xf]
    %v1027 = vld [vmem:[%s1 + $0xf90] sm:$0xf]
    %v1028 = vld [vmem:[%s1 + $0xf94] sm:$0xf]
    %v1029 = vld [vmem:[%s1 + $0xf98] sm:$0xf]
    %v1030 = vld [vmem:[%s1 + $0xf9c] sm:$0xf]
    %v1031 = vld [vmem:[%s1 + $0xfa0] sm:$0xf]
    %v1032 = vld [vmem:[%s1 + $0xfa4] sm:$0xf]
    %v1033 = vld [vmem:[%s1 + $0xfa8] sm:$0xf]
    %v1034 = vld [vmem:[%s1 + $0xfac] sm:$0xf]
    %v1035 = vld [vmem:[%s1 + $0xfb0] sm:$0xf]
    %v1036 = vld [vmem:[%s1 + $0xfb4] sm:$0xf]
    %v1037 = vld [vmem:[%s1 + $0xfb8] sm:$0xf]
    %v1038 = vld [vmem:[%s1 + $0xfbc] sm:$0xf]
    %v1039 = vld [vmem:[%s1 + $0xfc0] sm:$0xf]
    %v1040 = vld [vmem:[%s1 + $0xfc4] sm:$0xf]
    %v1041 = vld [vmem:[%s1 + $0xfc8] sm:$0xf]
    %v1042 = vld [vmem:[%s1 + $0xfcc] sm:$0xf]
    %v1043 = vld [vmem:[%s1 + $0xfd0] sm:$0xf]
    %v1044 = vld [vmem:[%s1 + $0xfd4] sm:$0xf]
    %v1045 = vld [vmem:[%s1 + $0xfd8] sm:$0xf]
    %v1046 = vld [vmem:[%s1 + $0xfdc] sm:$0xf]
    %v1047 = vld [vmem:[%s1 + $0xfe0] sm:$0xf]
    %v1048 = vld [vmem:[%s1 + $0xfe4] sm:$0xf]
    %v1049 = vld [vmem:[%s1 + $0xfe8] sm:$0xf]
    %v1050 = vld [vmem:[%s1 + $0xfec] sm:$0xf]
    %v1051 = vld [vmem:[%s1 + $0xff0] sm:$0xf]
    %v1052 = vld [vmem:[%s1 + $0xff4] sm:$0xf]
    %v1053 = vld [vmem:[%s1 + $0xff8] sm:$0xf]
    %v1054 = vld [vmem:[%s1 + $0xffc] sm:$0xf]
    %v1055 = vld [vmem:[%s1 + $0x1000] sm:$0xf]
    %v1056 = vld [vmem:[%s1 + $0x1004] sm:$0xf]
    %v1057 = vld [vmem:[%s1 + $0x1008] sm:$0xf]
    %v1058 = vld [vmem:[%s1 + $0x100c] sm:$0xf]
    %v1059 = vld [vmem:[%s1 + $0x1010] sm:$0xf]
    %v1060 = vld [vmem:[%s1 + $0x1014] sm:$0xf]
    %v1061 = vld [vmem:[%s1 + $0x1018] sm:$0xf]
    %v1062 = vld [vmem:[%s1 + $0x101c] sm:$0xf]
    %v1063 = vld [vmem:[%s1 + $0x1020] sm:$0xf]
    %v1064 = vld [vmem:[%s1 + $0x1024] sm:$0xf]
    %v1065 = vld [vmem:[%s1 + $0x1028] sm:$0xf]
    %v1066 = vld [vmem:[%s1 + $0x102c] sm:$0xf]
    %v1067 = vld [vmem:[%s1 + $0x1030] sm:$0xf]
    %v1068 = vld [vmem:[%s1 + $0x1034] sm:$0xf]
    %v1069 = vld [vmem:[%s1 + $0x1038] sm:$0xf]
    %v1070 = vld [vmem:[%s1 + $0x103c] sm:$0xf]
    %v1071 = vld [vmem:[%s1 + $0x1040] sm:$0xf]
    %v1072 = vld [vmem:[%s1 + $0x1044] sm:$0xf]
    %v1073 = vld [vmem:[%s1 + $0x1048] sm:$0xf]
    %v1074 = vld [vmem:[%s1 + $0x104c] sm:$0xf]
    %v1075 = vld [vmem:[%s1 + $0x1050] sm:$0xf]
    %v1076 = vld [vmem:[%s1 + $0x1054] sm:$0xf]
    %v1077 = vld [vmem:[%s1 + $0x1058] sm:$0xf]
    %v1078 = vld [vmem:[%s1 + $0x105c] sm:$0xf]
    %v1079 = vld [vmem:[%s1 + $0x1060] sm:$0xf]
    %v1080 = vld [vmem:[%s1 + $0x1064] sm:$0xf]
    %v1081 = vld [vmem:[%s1 + $0x1068] sm:$0xf]
    %v1082 = vld [vmem:[%s1 + $0x106c] sm:$0xf]
    %v1083 = vld [vmem:[%s1 + $0x1070] sm:$0xf]
    %v1084 = vld [vmem:[%s1 + $0x1074] sm:$0xf]
    %v1085 = vld [vmem:[%s1 + $0x1078] sm:$0xf]
    %v1086 = vld [vmem:[%s1 + $0x107c] sm:$0xf]
    %v1087 = vld [vmem:[%s1 + $0x1080] sm:$0xf]
    %v1088 = vld [vmem:[%s1 + $0x1084] sm:$0xf]
    %v1089 = vld [vmem:[%s1 + $0x1088] sm:$0xf]
    %v1090 = vld [vmem:[%s1 + $0x108c] sm:$0xf]
    %v1091 = vld [vmem:[%s1 + $0x1090] sm:$0xf]
    %v1092 = vld [vmem:[%s1 + $0x1094] sm:$0xf]
    %v1093 = vld [vmem:[%s1 + $0x1098] sm:$0xf]
    %v1094 = vld [vmem:[%s1 + $0x109c] sm:$0xf]
    %v1095 = vld [vmem:[%s1 + $0x10a0] sm:$0xf]
    %v1096 = vld [vmem:[%s1 + $0x10a4] sm:$0xf]
    %v1097 = vld [vmem:[%s1 + $0x10a8] sm:$0xf]
    %v1098 = vld [vmem:[%s1 + $0x10ac] sm:$0xf]
    %v1099 = vld [vmem:[%s1 + $0x10b0] sm:$0xf]
    %v1100 = vld [vmem:[%s1 + $0x10b4] sm:$0xf]
    %v1101 = vld [vmem:[%s1 + $0x10b8] sm:$0xf]
    %v1102 = vld [vmem:[%s1 + $0x10bc] sm:$0xf]
    %v1103 = vld [vmem:[%s1 + $0x10c0] sm:$0xf]
    %v1104 = vld [vmem:[%s1 + $0x10c4] sm:$0xf]
    %v1105 = vld [vmem:[%s1 + $0x10c8] sm:$0xf]
    %v1106 = vld [vmem:[%s1 + $0x10cc] sm:$0xf]
    %v1107 = vld [vmem:[%s1 + $0x10d0] sm:$0xf]
    %v1108 = vld [vmem:[%s1 + $0x10d4] sm:$0xf]
    %v1109 = vld [vmem:[%s1 + $0x10d8] sm:$0xf]
    %v1110 = vld [vmem:[%s1 + $0x10dc] sm:$0xf]
    %v1111 = vld [vmem:[%s1 + $0x10e0] sm:$0xf]
    %v1112 = vld [vmem:[%s1 + $0x10e4] sm:$0xf]
    %v1113 = vld [vmem:[%s1 + $0x10e8] sm:$0xf]
    %v1114 = vld [vmem:[%s1 + $0x10ec] sm:$0xf]
    %v1115 = vld [vmem:[%s1 + $0x10f0] sm:$0xf]
    %v1116 = vld [vmem:[%s1 + $0x10f4] sm:$0xf]
    %v1117 = vld [vmem:[%s1 + $0x10f8] sm:$0xf]
    %v1118 = vld [vmem:[%s1 + $0x10fc] sm:$0xf]
    %v1119 = vld [vmem:[%s1 + $0x1100] sm:$0xf]
    %v1120 = vld [vmem:[%s1 + $0x1104] sm:$0xf]
    %v1121 = vld [vmem:[%s1 + $0x1108] sm:$0xf]
    %v1122 = vld [vmem:[%s1 + $0x110c] sm:$0xf]
    %v1123 = vld [vmem:[%s1 + $0x1110] sm:$0xf]
    %v1124 = vld [vmem:[%s1 + $0x1114] sm:$0xf]
    %v1125 = vld [vmem:[%s1 + $0x1118] sm:$0xf]
    %v1126 = vld [vmem:[%s1 + $0x111c] sm:$0xf]
    %v1127 = vld [vmem:[%s1 + $0x1120] sm:$0xf]
    %v1128 = vld [vmem:[%s1 + $0x1124] sm:$0xf]
    %v1129 = vld [vmem:[%s1 + $0x1128] sm:$0xf]
    %v1130 = vld [vmem:[%s1 + $0x112c] sm:$0xf]
    %v1131 = vld [vmem:[%s1 + $0x1130] sm:$0xf]
    %v1132 = vld [vmem:[%s1 + $0x1134] sm:$0xf]
    %v1133 = vld [vmem:[%s1 + $0x1138] sm:$0xf]
    %v1134 = vld [vmem:[%s1 + $0x113c] sm:$0xf]
    %v1135 = vld [vmem:[%s1 + $0x1140] sm:$0xf]
    %v1136 = vld [vmem:[%s1 + $0x1144] sm:$0xf]
    %v1137 = vld [vmem:[%s1 + $0x1148] sm:$0xf]
    %v1138 = vld [vmem:[%s1 + $0x114c] sm:$0xf]
    %v1139 = vld [vmem:[%s1 + $0x1150] sm:$0xf]
    %v1140 = vld [vmem:[%s1 + $0x1154] sm:$0xf]
    %v1141 = vld [vmem:[%s1 + $0x1158] sm:$0xf]
    %v1142 = vld [vmem:[%s1 + $0x115c] sm:$0xf]
    %v1143 = vld [vmem:[%s1 + $0x1160] sm:$0xf]
    %v1144 = vld [vmem:[%s1 + $0x1164] sm:$0xf]
    %v1145 = vld [vmem:[%s1 + $0x1168] sm:$0xf]
    %v1146 = vld [vmem:[%s1 + $0x116c] sm:$0xf]
    %v1147 = vld [vmem:[%s1 + $0x1170] sm:$0xf]
    %v1148 = vld [vmem:[%s1 + $0x1174] sm:$0xf]
    %v1149 = vld [vmem:[%s1 + $0x1178] sm:$0xf]
    %v1150 = vld [vmem:[%s1 + $0x117c] sm:$0xf]
    %v1151 = vld [vmem:[%s1 + $0x1180] sm:$0xf]
    %v1152 = vld [vmem:[%s1 + $0x1184] sm:$0xf]
    %v1153 = vld [vmem:[%s1 + $0x1188] sm:$0xf]
    %v1154 = vld [vmem:[%s1 + $0x118c] sm:$0xf]
    %v1155 = vld [vmem:[%s1 + $0x1190] sm:$0xf]
    %v1156 = vld [vmem:[%s1 + $0x1194] sm:$0xf]
    %v1157 = vld [vmem:[%s1 + $0x1198] sm:$0xf]
    %v1158 = vld [vmem:[%s1 + $0x119c] sm:$0xf]
    %v1159 = vld [vmem:[%s1 + $0x11a0] sm:$0xf]
    %v1160 = vld [vmem:[%s1 + $0x11a4] sm:$0xf]
    %v1161 = vld [vmem:[%s1 + $0x11a8] sm:$0xf]
    %v1162 = vld [vmem:[%s1 + $0x11ac] sm:$0xf]
    %v1163 = vld [vmem:[%s1 + $0x11b0] sm:$0xf]
    %v1164 = vld [vmem:[%s1 + $0x11b4] sm:$0xf]
    %v1165 = vld [vmem:[%s1 + $0x11b8] sm:$0xf]
    %v1166 = vld [vmem:[%s1 + $0x11bc] sm:$0xf]
    %v1167 = vld [vmem:[%s1 + $0x11c0] sm:$0xf]
    %v1168 = vld [vmem:[%s1 + $0x11c4] sm:$0xf]
    %v1169 = vld [vmem:[%s1 + $0x11c8] sm:$0xf]
    %v1170 = vld [vmem:[%s1 + $0x11cc] sm:$0xf]
    %v1171 = vld [vmem:[%s1 + $0x11d0] sm:$0xf]
    %v1172 = vld [vmem:[%s1 + $0x11d4] sm:$0xf]
    %v1173 = vld [vmem:[%s1 + $0x11d8] sm:$0xf]
    %v1174 = vld [vmem:[%s1 + $0x11dc] sm:$0xf]
    %v1175 = vld [vmem:[%s1 + $0x11e0] sm:$0xf]
    %v1176 = vld [vmem:[%s1 + $0x11e4] sm:$0xf]
    %v1177 = vld [vmem:[%s1 + $0x11e8] sm:$0xf]
    %v1178 = vld [vmem:[%s1 + $0x11ec] sm:$0xf]
    %v1179 = vld [vmem:[%s1 + $0x11f0] sm:$0xf]
    %v1180 = vld [vmem:[%s1 + $0x11f4] sm:$0xf]
    %v1181 = vld [vmem:[%s1 + $0x11f8] sm:$0xf]
    %v1182 = vld [vmem:[%s1 + $0x11fc] sm:$0xf]
    %v1183 = vld [vmem:[%s2] sm:$0x1]
    %v1185 = vlaneseq
    %v1186 = vshrl.u32 %v1185, 7
    %v1187 = vsub.s32 0, %v1186
    %v1188 = vrot.slane %v1183, %v1187
    %v1199 = vcombine.high %v22, %v22
    %v1201 = vunpack.c.l.s4 1966171168
    %v1202 = vunpack.c.0.s8 %v1201
    %v1203 = vlaneseq
    %v1204 = vshrl.u32 %v1203, 7
    %v1205 = vsub.s32 %v1202, %v1204
    %v1206 = vrot.slane %v22, %v1205
    %v1208 = vunpack.c.l.s4 1966171168
    %v1209 = vunpack.c.0.s8 %v1208
    %v1210 = vlaneseq
    %v1211 = vshrl.u32 %v1210, 7
    %v1212 = vsub.s32 %v1209, %v1211
    %v1213 = vrot.slane %v1199, %v1212
    %v1214 = vcombine.high %v1206, %v1206
    %v1215 = vcombine.high %v1213, %v1213
    %v1217 = vunpack.c.l.s4 1966171168
    %v1218 = vunpack.c.0.s8 %v1217
    %v1219 = vlaneseq
    %v1220 = vshrl.u32 %v1219, 7
    %v1221 = vsub.s32 %v1218, %v1220
    %v1222 = vrot.slane %v1206, %v1221
    %v1224 = vunpack.c.l.s4 1966171168
    %v1225 = vunpack.c.0.s8 %v1224
    %v1226 = vlaneseq
    %v1227 = vshrl.u32 %v1226, 7
    %v1228 = vsub.s32 %v1225, %v1227
    %v1229 = vrot.slane %v1213, %v1228
    %v1231 = vunpack.c.l.s4 1966171168
    %v1232 = vunpack.c.0.s8 %v1231
    %v1233 = vlaneseq
    %v1234 = vshrl.u32 %v1233, 7
    %v1235 = vsub.s32 %v1232, %v1234
    %v1236 = vrot.slane %v1214, %v1235
    %v1238 = vunpack.c.l.s4 1966171168
    %v1239 = vunpack.c.0.s8 %v1238
    %v1240 = vlaneseq
    %v1241 = vshrl.u32 %v1240, 7
    %v1242 = vsub.s32 %v1239, %v1241
    %v1243 = vrot.slane %v1215, %v1242
    %v1244 = vcombine.high %v1222, %v1222
    %v1245 = vcombine.high %v1229, %v1229
    %v1246 = vcombine.high %v1236, %v1236
    %v1247 = vcombine.high %v1243, %v1243
    %v1248 = vcombine.high %v23, %v23
    %v1250 = vunpack.c.l.s4 1966171168
    %v1251 = vunpack.c.0.s8 %v1250
    %v1252 = vlaneseq
    %v1253 = vshrl.u32 %v1252, 7
    %v1254 = vsub.s32 %v1251, %v1253
    %v1255 = vrot.slane %v23, %v1254
    %v1257 = vunpack.c.l.s4 1966171168
    %v1258 = vunpack.c.0.s8 %v1257
    %v1259 = vlaneseq
    %v1260 = vshrl.u32 %v1259, 7
    %v1261 = vsub.s32 %v1258, %v1260
    %v1262 = vrot.slane %v1248, %v1261
    %v1263 = vcombine.high %v1255, %v1255
    %v1264 = vcombine.high %v1262, %v1262
    %v1266 = vunpack.c.l.s4 1966171168
    %v1267 = vunpack.c.0.s8 %v1266
    %v1268 = vlaneseq
    %v1269 = vshrl.u32 %v1268, 7
    %v1270 = vsub.s32 %v1267, %v1269
    %v1271 = vrot.slane %v1255, %v1270
    %v1273 = vunpack.c.l.s4 1966171168
    %v1274 = vunpack.c.0.s8 %v1273
    %v1275 = vlaneseq
    %v1276 = vshrl.u32 %v1275, 7
    %v1277 = vsub.s32 %v1274, %v1276
    %v1278 = vrot.slane %v1262, %v1277
    %v1280 = vunpack.c.l.s4 1966171168
    %v1281 = vunpack.c.0.s8 %v1280
    %v1282 = vlaneseq
    %v1283 = vshrl.u32 %v1282, 7
    %v1284 = vsub.s32 %v1281, %v1283
    %v1285 = vrot.slane %v1263, %v1284
    %v1287 = vunpack.c.l.s4 1966171168
    %v1288 = vunpack.c.0.s8 %v1287
    %v1289 = vlaneseq
    %v1290 = vshrl.u32 %v1289, 7
    %v1291 = vsub.s32 %v1288, %v1290
    %v1292 = vrot.slane %v1264, %v1291
    %v1293 = vcombine.high %v1271, %v1271
    %v1294 = vcombine.high %v1278, %v1278
    %v1295 = vcombine.high %v1285, %v1285
    %v1296 = vcombine.high %v1292, %v1292
    %v1297 = vcombine.high %v24, %v24
    %v1299 = vunpack.c.l.s4 1966171168
    %v1300 = vunpack.c.0.s8 %v1299
    %v1301 = vlaneseq
    %v1302 = vshrl.u32 %v1301, 7
    %v1303 = vsub.s32 %v1300, %v1302
    %v1304 = vrot.slane %v24, %v1303
    %v1306 = vunpack.c.l.s4 1966171168
    %v1307 = vunpack.c.0.s8 %v1306
    %v1308 = vlaneseq
    %v1309 = vshrl.u32 %v1308, 7
    %v1310 = vsub.s32 %v1307, %v1309
    %v1311 = vrot.slane %v1297, %v1310
    %v1312 = vcombine.high %v1304, %v1304
    %v1313 = vcombine.high %v1311, %v1311
    %v1315 = vunpack.c.l.s4 1966171168
    %v1316 = vunpack.c.0.s8 %v1315
    %v1317 = vlaneseq
    %v1318 = vshrl.u32 %v1317, 7
    %v1319 = vsub.s32 %v1316, %v1318
    %v1320 = vrot.slane %v1304, %v1319
    %v1322 = vunpack.c.l.s4 1966171168
    %v1323 = vunpack.c.0.s8 %v1322
    %v1324 = vlaneseq
    %v1325 = vshrl.u32 %v1324, 7
    %v1326 = vsub.s32 %v1323, %v1325
    %v1327 = vrot.slane %v1311, %v1326
    %v1329 = vunpack.c.l.s4 1966171168
    %v1330 = vunpack.c.0.s8 %v1329
    %v1331 = vlaneseq
    %v1332 = vshrl.u32 %v1331, 7
    %v1333 = vsub.s32 %v1330, %v1332
    %v1334 = vrot.slane %v1312, %v1333
    %v1336 = vunpack.c.l.s4 1966171168
    %v1337 = vunpack.c.0.s8 %v1336
    %v1338 = vlaneseq
    %v1339 = vshrl.u32 %v1338, 7
    %v1340 = vsub.s32 %v1337, %v1339
    %v1341 = vrot.slane %v1313, %v1340
    %v1342 = vcombine.high %v1320, %v1320
    %v1343 = vcombine.high %v1327, %v1327
    %v1344 = vcombine.high %v1334, %v1334
    %v1345 = vcombine.high %v1341, %v1341
    %v1346 = vcombine.high %v25, %v25
    %v1348 = vunpack.c.l.s4 1966171168
    %v1349 = vunpack.c.0.s8 %v1348
    %v1350 = vlaneseq
    %v1351 = vshrl.u32 %v1350, 7
    %v1352 = vsub.s32 %v1349, %v1351
    %v1353 = vrot.slane %v25, %v1352
    %v1355 = vunpack.c.l.s4 1966171168
    %v1356 = vunpack.c.0.s8 %v1355
    %v1357 = vlaneseq
    %v1358 = vshrl.u32 %v1357, 7
    %v1359 = vsub.s32 %v1356, %v1358
    %v1360 = vrot.slane %v1346, %v1359
    %v1361 = vcombine.high %v1353, %v1353
    %v1362 = vcombine.high %v1360, %v1360
    %v1364 = vunpack.c.l.s4 1966171168
    %v1365 = vunpack.c.0.s8 %v1364
    %v1366 = vlaneseq
    %v1367 = vshrl.u32 %v1366, 7
    %v1368 = vsub.s32 %v1365, %v1367
    %v1369 = vrot.slane %v1353, %v1368
    %v1371 = vunpack.c.l.s4 1966171168
    %v1372 = vunpack.c.0.s8 %v1371
    %v1373 = vlaneseq
    %v1374 = vshrl.u32 %v1373, 7
    %v1375 = vsub.s32 %v1372, %v1374
    %v1376 = vrot.slane %v1360, %v1375
    %v1378 = vunpack.c.l.s4 1966171168
    %v1379 = vunpack.c.0.s8 %v1378
    %v1380 = vlaneseq
    %v1381 = vshrl.u32 %v1380, 7
    %v1382 = vsub.s32 %v1379, %v1381
    %v1383 = vrot.slane %v1361, %v1382
    %v1385 = vunpack.c.l.s4 1966171168
    %v1386 = vunpack.c.0.s8 %v1385
    %v1387 = vlaneseq
    %v1388 = vshrl.u32 %v1387, 7
    %v1389 = vsub.s32 %v1386, %v1388
    %v1390 = vrot.slane %v1362, %v1389
    %v1391 = vcombine.high %v1369, %v1369
    %v1392 = vcombine.high %v1376, %v1376
    %v1393 = vcombine.high %v1383, %v1383
    %v1394 = vcombine.high %v1390, %v1390
    %v1395 = vcombine.high %v26, %v26
    %v1397 = vunpack.c.l.s4 1966171168
    %v1398 = vunpack.c.0.s8 %v1397
    %v1399 = vlaneseq
    %v1400 = vshrl.u32 %v1399, 7
    %v1401 = vsub.s32 %v1398, %v1400
    %v1402 = vrot.slane %v26, %v1401
    %v1404 = vunpack.c.l.s4 1966171168
    %v1405 = vunpack.c.0.s8 %v1404
    %v1406 = vlaneseq
    %v1407 = vshrl.u32 %v1406, 7
    %v1408 = vsub.s32 %v1405, %v1407
    %v1409 = vrot.slane %v1395, %v1408
    %v1410 = vcombine.high %v1402, %v1402
    %v1411 = vcombine.high %v1409, %v1409
    %v1413 = vunpack.c.l.s4 1966171168
    %v1414 = vunpack.c.0.s8 %v1413
    %v1415 = vlaneseq
    %v1416 = vshrl.u32 %v1415, 7
    %v1417 = vsub.s32 %v1414, %v1416
    %v1418 = vrot.slane %v1402, %v1417
    %v1420 = vunpack.c.l.s4 1966171168
    %v1421 = vunpack.c.0.s8 %v1420
    %v1422 = vlaneseq
    %v1423 = vshrl.u32 %v1422, 7
    %v1424 = vsub.s32 %v1421, %v1423
    %v1425 = vrot.slane %v1409, %v1424
    %v1427 = vunpack.c.l.s4 1966171168
    %v1428 = vunpack.c.0.s8 %v1427
    %v1429 = vlaneseq
    %v1430 = vshrl.u32 %v1429, 7
    %v1431 = vsub.s32 %v1428, %v1430
    %v1432 = vrot.slane %v1410, %v1431
    %v1434 = vunpack.c.l.s4 1966171168
    %v1435 = vunpack.c.0.s8 %v1434
    %v1436 = vlaneseq
    %v1437 = vshrl.u32 %v1436, 7
    %v1438 = vsub.s32 %v1435, %v1437
    %v1439 = vrot.slane %v1411, %v1438
    %v1440 = vcombine.high %v1418, %v1418
    %v1441 = vcombine.high %v1425, %v1425
    %v1442 = vcombine.high %v1432, %v1432
    %v1443 = vcombine.high %v1439, %v1439
    %v1444 = vcombine.high %v27, %v27
    %v1446 = vunpack.c.l.s4 1966171168
    %v1447 = vunpack.c.0.s8 %v1446
    %v1448 = vlaneseq
    %v1449 = vshrl.u32 %v1448, 7
    %v1450 = vsub.s32 %v1447, %v1449
    %v1451 = vrot.slane %v27, %v1450
    %v1453 = vunpack.c.l.s4 1966171168
    %v1454 = vunpack.c.0.s8 %v1453
    %v1455 = vlaneseq
    %v1456 = vshrl.u32 %v1455, 7
    %v1457 = vsub.s32 %v1454, %v1456
    %v1458 = vrot.slane %v1444, %v1457
    %v1459 = vcombine.high %v1451, %v1451
    %v1460 = vcombine.high %v1458, %v1458
    %v1462 = vunpack.c.l.s4 1966171168
    %v1463 = vunpack.c.0.s8 %v1462
    %v1464 = vlaneseq
    %v1465 = vshrl.u32 %v1464, 7
    %v1466 = vsub.s32 %v1463, %v1465
    %v1467 = vrot.slane %v1451, %v1466
    %v1469 = vunpack.c.l.s4 1966171168
    %v1470 = vunpack.c.0.s8 %v1469
    %v1471 = vlaneseq
    %v1472 = vshrl.u32 %v1471, 7
    %v1473 = vsub.s32 %v1470, %v1472
    %v1474 = vrot.slane %v1458, %v1473
    %v1476 = vunpack.c.l.s4 1966171168
    %v1477 = vunpack.c.0.s8 %v1476
    %v1478 = vlaneseq
    %v1479 = vshrl.u32 %v1478, 7
    %v1480 = vsub.s32 %v1477, %v1479
    %v1481 = vrot.slane %v1459, %v1480
    %v1483 = vunpack.c.l.s4 1966171168
    %v1484 = vunpack.c.0.s8 %v1483
    %v1485 = vlaneseq
    %v1486 = vshrl.u32 %v1485, 7
    %v1487 = vsub.s32 %v1484, %v1486
    %v1488 = vrot.slane %v1460, %v1487
    %v1489 = vcombine.high %v1467, %v1467
    %v1490 = vcombine.high %v1474, %v1474
    %v1491 = vcombine.high %v1481, %v1481
    %v1492 = vcombine.high %v1488, %v1488
    %v1493 = vcombine.high %v28, %v28
    %v1495 = vunpack.c.l.s4 1966171168
    %v1496 = vunpack.c.0.s8 %v1495
    %v1497 = vlaneseq
    %v1498 = vshrl.u32 %v1497, 7
    %v1499 = vsub.s32 %v1496, %v1498
    %v1500 = vrot.slane %v28, %v1499
    %v1502 = vunpack.c.l.s4 1966171168
    %v1503 = vunpack.c.0.s8 %v1502
    %v1504 = vlaneseq
    %v1505 = vshrl.u32 %v1504, 7
    %v1506 = vsub.s32 %v1503, %v1505
    %v1507 = vrot.slane %v1493, %v1506
    %v1508 = vcombine.high %v1500, %v1500
    %v1509 = vcombine.high %v1507, %v1507
    %v1511 = vunpack.c.l.s4 1966171168
    %v1512 = vunpack.c.0.s8 %v1511
    %v1513 = vlaneseq
    %v1514 = vshrl.u32 %v1513, 7
    %v1515 = vsub.s32 %v1512, %v1514
    %v1516 = vrot.slane %v1500, %v1515
    %v1518 = vunpack.c.l.s4 1966171168
    %v1519 = vunpack.c.0.s8 %v1518
    %v1520 = vlaneseq
    %v1521 = vshrl.u32 %v1520, 7
    %v1522 = vsub.s32 %v1519, %v1521
    %v1523 = vrot.slane %v1507, %v1522
    %v1525 = vunpack.c.l.s4 1966171168
    %v1526 = vunpack.c.0.s8 %v1525
    %v1527 = vlaneseq
    %v1528 = vshrl.u32 %v1527, 7
    %v1529 = vsub.s32 %v1526, %v1528
    %v1530 = vrot.slane %v1508, %v1529
    %v1532 = vunpack.c.l.s4 1966171168
    %v1533 = vunpack.c.0.s8 %v1532
    %v1534 = vlaneseq
    %v1535 = vshrl.u32 %v1534, 7
    %v1536 = vsub.s32 %v1533, %v1535
    %v1537 = vrot.slane %v1509, %v1536
    %v1538 = vcombine.high %v1516, %v1516
    %v1539 = vcombine.high %v1523, %v1523
    %v1540 = vcombine.high %v1530, %v1530
    %v1541 = vcombine.high %v1537, %v1537
    %v1542 = vcombine.high %v29, %v29
    %v1544 = vunpack.c.l.s4 1966171168
    %v1545 = vunpack.c.0.s8 %v1544
    %v1546 = vlaneseq
    %v1547 = vshrl.u32 %v1546, 7
    %v1548 = vsub.s32 %v1545, %v1547
    %v1549 = vrot.slane %v29, %v1548
    %v1551 = vunpack.c.l.s4 1966171168
    %v1552 = vunpack.c.0.s8 %v1551
    %v1553 = vlaneseq
    %v1554 = vshrl.u32 %v1553, 7
    %v1555 = vsub.s32 %v1552, %v1554
    %v1556 = vrot.slane %v1542, %v1555
    %v1557 = vcombine.high %v1549, %v1549
    %v1558 = vcombine.high %v1556, %v1556
    %v1560 = vunpack.c.l.s4 1966171168
    %v1561 = vunpack.c.0.s8 %v1560
    %v1562 = vlaneseq
    %v1563 = vshrl.u32 %v1562, 7
    %v1564 = vsub.s32 %v1561, %v1563
    %v1565 = vrot.slane %v1549, %v1564
    %v1567 = vunpack.c.l.s4 1966171168
    %v1568 = vunpack.c.0.s8 %v1567
    %v1569 = vlaneseq
    %v1570 = vshrl.u32 %v1569, 7
    %v1571 = vsub.s32 %v1568, %v1570
    %v1572 = vrot.slane %v1556, %v1571
    %v1574 = vunpack.c.l.s4 1966171168
    %v1575 = vunpack.c.0.s8 %v1574
    %v1576 = vlaneseq
    %v1577 = vshrl.u32 %v1576, 7
    %v1578 = vsub.s32 %v1575, %v1577
    %v1579 = vrot.slane %v1557, %v1578
    %v1581 = vunpack.c.l.s4 1966171168
    %v1582 = vunpack.c.0.s8 %v1581
    %v1583 = vlaneseq
    %v1584 = vshrl.u32 %v1583, 7
    %v1585 = vsub.s32 %v1582, %v1584
    %v1586 = vrot.slane %v1558, %v1585
    %v1587 = vcombine.high %v1565, %v1565
    %v1588 = vcombine.high %v1572, %v1572
    %v1589 = vcombine.high %v1579, %v1579
    %v1590 = vcombine.high %v1586, %v1586
    %v1591 = vcombine.high %v30, %v30
    %v1593 = vunpack.c.l.s4 1966171168
    %v1594 = vunpack.c.0.s8 %v1593
    %v1595 = vlaneseq
    %v1596 = vshrl.u32 %v1595, 7
    %v1597 = vsub.s32 %v1594, %v1596
    %v1598 = vrot.slane %v30, %v1597
    %v1600 = vunpack.c.l.s4 1966171168
    %v1601 = vunpack.c.0.s8 %v1600
    %v1602 = vlaneseq
    %v1603 = vshrl.u32 %v1602, 7
    %v1604 = vsub.s32 %v1601, %v1603
    %v1605 = vrot.slane %v1591, %v1604
    %v1606 = vcombine.high %v1598, %v1598
    %v1607 = vcombine.high %v1605, %v1605
    %v1609 = vunpack.c.l.s4 1966171168
    %v1610 = vunpack.c.0.s8 %v1609
    %v1611 = vlaneseq
    %v1612 = vshrl.u32 %v1611, 7
    %v1613 = vsub.s32 %v1610, %v1612
    %v1614 = vrot.slane %v1598, %v1613
    %v1616 = vunpack.c.l.s4 1966171168
    %v1617 = vunpack.c.0.s8 %v1616
    %v1618 = vlaneseq
    %v1619 = vshrl.u32 %v1618, 7
    %v1620 = vsub.s32 %v1617, %v1619
    %v1621 = vrot.slane %v1605, %v1620
    %v1623 = vunpack.c.l.s4 1966171168
    %v1624 = vunpack.c.0.s8 %v1623
    %v1625 = vlaneseq
    %v1626 = vshrl.u32 %v1625, 7
    %v1627 = vsub.s32 %v1624, %v1626
    %v1628 = vrot.slane %v1606, %v1627
    %v1630 = vunpack.c.l.s4 1966171168
    %v1631 = vunpack.c.0.s8 %v1630
    %v1632 = vlaneseq
    %v1633 = vshrl.u32 %v1632, 7
    %v1634 = vsub.s32 %v1631, %v1633
    %v1635 = vrot.slane %v1607, %v1634
    %v1636 = vcombine.high %v1614, %v1614
    %v1637 = vcombine.high %v1621, %v1621
    %v1638 = vcombine.high %v1628, %v1628
    %v1639 = vcombine.high %v1635, %v1635
    %v2864 = vunpack.c.l.b16 %v31
    %v2865 = vunpack.c.l.b16 %v32
    %v2866 = vunpack.c.l.b16 %v33
    %v2867 = vunpack.c.l.b16 %v34
    %v2868 = vunpack.c.l.b16 %v35
    %v2869 = vunpack.c.l.b16 %v36
    %v2870 = vunpack.c.l.b16 %v37
    %v2871 = vunpack.c.l.b16 %v38
    %v2872 = vunpack.c.l.b16 %v39
    %v2873 = vunpack.c.l.b16 %v40
    %v2874 = vunpack.c.l.b16 %v41
    %v2875 = vunpack.c.l.b16 %v42
    %v2876 = vunpack.c.l.b16 %v43
    %v2877 = vunpack.c.l.b16 %v44
    %v2878 = vunpack.c.l.b16 %v45
    %v2879 = vunpack.c.l.b16 %v46
    %v2880 = vunpack.c.l.b16 %v47
    %v2881 = vunpack.c.l.b16 %v48
    %v2882 = vunpack.c.l.b16 %v49
    %v2883 = vunpack.c.l.b16 %v50
    %v2884 = vunpack.c.l.b16 %v51
    %v2885 = vunpack.c.l.b16 %v52
    %v2886 = vunpack.c.l.b16 %v53
    %v2887 = vunpack.c.l.b16 %v54
    %v2888 = vunpack.c.l.b16 %v55
    %v2889 = vunpack.c.l.b16 %v56
    %v2890 = vunpack.c.l.b16 %v57
    %v2891 = vunpack.c.l.b16 %v58
    %v2892 = vunpack.c.l.b16 %v59
    %v2893 = vunpack.c.l.b16 %v60
    %v2894 = vunpack.c.l.b16 %v61
    %v2895 = vunpack.c.l.b16 %v62
    %v2896 = vunpack.c.l.b16 %v63
    %v2897 = vunpack.c.l.b16 %v64
    %v2898 = vunpack.c.l.b16 %v65
    %v2899 = vunpack.c.l.b16 %v66
    %v2900 = vunpack.c.l.b16 %v67
    %v2901 = vunpack.c.l.b16 %v68
    %v2902 = vunpack.c.l.b16 %v69
    %v2903 = vunpack.c.l.b16 %v70
    %v2904 = vunpack.c.l.b16 %v71
    %v2905 = vunpack.c.l.b16 %v72
    %v2906 = vunpack.c.l.b16 %v73
    %v2907 = vunpack.c.l.b16 %v74
    %v2908 = vunpack.c.l.b16 %v75
    %v2909 = vunpack.c.l.b16 %v76
    %v2910 = vunpack.c.l.b16 %v77
    %v2911 = vunpack.c.l.b16 %v78
    %v2912 = vunpack.c.l.b16 %v79
    %v2913 = vunpack.c.l.b16 %v80
    %v2914 = vunpack.c.l.b16 %v81
    %v2915 = vunpack.c.l.b16 %v82
    %v2916 = vunpack.c.l.b16 %v83
    %v2917 = vunpack.c.l.b16 %v84
    %v2918 = vunpack.c.l.b16 %v85
    %v2919 = vunpack.c.l.b16 %v86
    %v2920 = vunpack.c.l.b16 %v87
    %v2921 = vunpack.c.l.b16 %v88
    %v2922 = vunpack.c.l.b16 %v89
    %v2923 = vunpack.c.l.b16 %v90
    %v2924 = vunpack.c.l.b16 %v91
    %v2925 = vunpack.c.l.b16 %v92
    %v2926 = vunpack.c.l.b16 %v93
    %v2927 = vunpack.c.l.b16 %v94
    %v2928 = vunpack.c.l.b16 %v95
    %v2929 = vunpack.c.l.b16 %v96
    %v2930 = vunpack.c.l.b16 %v97
    %v2931 = vunpack.c.l.b16 %v98
    %v2932 = vunpack.c.l.b16 %v99
    %v2933 = vunpack.c.l.b16 %v100
    %v2934 = vunpack.c.l.b16 %v101
    %v2935 = vunpack.c.l.b16 %v102
    %v2936 = vunpack.c.l.b16 %v103
    %v2937 = vunpack.c.l.b16 %v104
    %v2938 = vunpack.c.l.b16 %v105
    %v2939 = vunpack.c.l.b16 %v106
    %v2940 = vunpack.c.l.b16 %v107
    %v2941 = vunpack.c.l.b16 %v108
    %v2942 = vunpack.c.l.b16 %v109
    %v2943 = vunpack.c.l.b16 %v110
    %v2944 = vunpack.c.l.b16 %v111
    %v2945 = vunpack.c.l.b16 %v112
    %v2946 = vunpack.c.l.b16 %v113
    %v2947 = vunpack.c.l.b16 %v114
    %v2948 = vunpack.c.l.b16 %v115
    %v2949 = vunpack.c.l.b16 %v116
    %v2950 = vunpack.c.l.b16 %v117
    %v2951 = vunpack.c.l.b16 %v118
    %v2952 = vunpack.c.l.b16 %v119
    %v2953 = vunpack.c.l.b16 %v120
    %v2954 = vunpack.c.l.b16 %v121
    %v2955 = vunpack.c.l.b16 %v122
    %v2956 = vunpack.c.l.b16 %v123
    %v2957 = vunpack.c.l.b16 %v124
    %v2958 = vunpack.c.l.b16 %v125
    %v2959 = vunpack.c.l.b16 %v126
    %v2960 = vunpack.c.l.b16 %v127
    %v2961 = vunpack.c.l.b16 %v128
    %v2962 = vunpack.c.l.b16 %v129
    %v2963 = vunpack.c.l.b16 %v130
    %v2964 = vunpack.c.l.b16 %v131
    %v2965 = vunpack.c.l.b16 %v132
    %v2966 = vunpack.c.l.b16 %v133
    %v2967 = vunpack.c.l.b16 %v134
    %v2968 = vunpack.c.l.b16 %v135
    %v2969 = vunpack.c.l.b16 %v136
    %v2970 = vunpack.c.l.b16 %v137
    %v2971 = vunpack.c.l.b16 %v138
    %v2972 = vunpack.c.l.b16 %v139
    %v2973 = vunpack.c.l.b16 %v140
    %v2974 = vunpack.c.l.b16 %v141
    %v2975 = vunpack.c.l.b16 %v142
    %v2976 = vunpack.c.l.b16 %v143
    %v2977 = vunpack.c.l.b16 %v144
    %v2978 = vunpack.c.l.b16 %v145
    %v2979 = vunpack.c.l.b16 %v146
    %v2980 = vunpack.c.l.b16 %v147
    %v2981 = vunpack.c.l.b16 %v148
    %v2982 = vunpack.c.l.b16 %v149
    %v2983 = vunpack.c.l.b16 %v150
    %v2984 = vunpack.c.l.b16 %v151
    %v2985 = vunpack.c.l.b16 %v152
    %v2986 = vunpack.c.l.b16 %v153
    %v2987 = vunpack.c.l.b16 %v154
    %v2988 = vunpack.c.l.b16 %v155
    %v2989 = vunpack.c.l.b16 %v156
    %v2990 = vunpack.c.l.b16 %v157
    %v2991 = vunpack.c.l.b16 %v158
    %v2992 = vunpack.c.l.b16 %v159
    %v2993 = vunpack.c.l.b16 %v160
    %v2994 = vunpack.c.l.b16 %v161
    %v2995 = vunpack.c.l.b16 %v162
    %v2996 = vunpack.c.l.b16 %v163
    %v2997 = vunpack.c.l.b16 %v164
    %v2998 = vunpack.c.l.b16 %v165
    %v2999 = vunpack.c.l.b16 %v166
    %v3000 = vunpack.c.l.b16 %v167
    %v3001 = vunpack.c.l.b16 %v168
    %v3002 = vunpack.c.l.b16 %v169
    %v3003 = vunpack.c.l.b16 %v170
    %v3004 = vunpack.c.l.b16 %v171
    %v3005 = vunpack.c.l.b16 %v172
    %v3006 = vunpack.c.l.b16 %v173
    %v3007 = vunpack.c.l.b16 %v174
    %v3008 = vunpack.c.l.b16 %v175
    %v3009 = vunpack.c.l.b16 %v176
    %v3010 = vunpack.c.l.b16 %v177
    %v3011 = vunpack.c.l.b16 %v178
    %v3012 = vunpack.c.l.b16 %v179
    %v3013 = vunpack.c.l.b16 %v180
    %v3014 = vunpack.c.l.b16 %v181
    %v3015 = vunpack.c.l.b16 %v182
    %v3016 = vunpack.c.l.b16 %v183
    %v3017 = vunpack.c.l.b16 %v184
    %v3018 = vunpack.c.l.b16 %v185
    %v3019 = vunpack.c.l.b16 %v186
    %v3020 = vunpack.c.l.b16 %v187
    %v3021 = vunpack.c.l.b16 %v188
    %v3022 = vunpack.c.l.b16 %v189
    %v3023 = vunpack.c.l.b16 %v190
    %v3024 = vunpack.c.l.b16 %v191
    %v3025 = vunpack.c.l.b16 %v192
    %v3026 = vunpack.c.l.b16 %v193
    %v3027 = vunpack.c.l.b16 %v194
    %v3028 = vunpack.c.l.b16 %v195
    %v3029 = vunpack.c.l.b16 %v196
    %v3030 = vunpack.c.l.b16 %v197
    %v3031 = vunpack.c.l.b16 %v198
    %v3032 = vunpack.c.l.b16 %v199
    %v3033 = vunpack.c.l.b16 %v200
    %v3034 = vunpack.c.l.b16 %v201
    %v3035 = vunpack.c.l.b16 %v202
    %v3036 = vunpack.c.l.b16 %v203
    %v3037 = vunpack.c.l.b16 %v204
    %v3038 = vunpack.c.l.b16 %v205
    %v3039 = vunpack.c.l.b16 %v206
    %v3040 = vunpack.c.l.b16 %v207
    %v3041 = vunpack.c.l.b16 %v208
    %v3042 = vunpack.c.l.b16 %v209
    %v3043 = vunpack.c.l.b16 %v210
    %v3044 = vunpack.c.l.b16 %v211
    %v3045 = vunpack.c.l.b16 %v212
    %v3046 = vunpack.c.l.b16 %v213
    %v3047 = vunpack.c.l.b16 %v214
    %v3048 = vunpack.c.l.b16 %v215
    %v3049 = vunpack.c.l.b16 %v216
    %v3050 = vunpack.c.l.b16 %v217
    %v3051 = vunpack.c.l.b16 %v218
    %v3052 = vunpack.c.l.b16 %v219
    %v3053 = vunpack.c.l.b16 %v220
    %v3054 = vunpack.c.l.b16 %v221
    %v3055 = vunpack.c.l.b16 %v222
    %v3056 = vunpack.c.l.b16 %v223
    %v3057 = vunpack.c.l.b16 %v224
    %v3058 = vunpack.c.l.b16 %v225
    %v3059 = vunpack.c.l.b16 %v226
    %v3060 = vunpack.c.l.b16 %v227
    %v3061 = vunpack.c.l.b16 %v228
    %v3062 = vunpack.c.l.b16 %v229
    %v3063 = vunpack.c.l.b16 %v230
    %v3064 = vunpack.c.l.b16 %v231
    %v3065 = vunpack.c.l.b16 %v232
    %v3066 = vunpack.c.l.b16 %v233
    %v3067 = vunpack.c.l.b16 %v234
    %v3068 = vunpack.c.l.b16 %v235
    %v3069 = vunpack.c.l.b16 %v236
    %v3070 = vunpack.c.l.b16 %v237
    %v3071 = vunpack.c.l.b16 %v238
    %v3072 = vunpack.c.l.b16 %v239
    %v3073 = vunpack.c.l.b16 %v240
    %v3074 = vunpack.c.l.b16 %v241
    %v3075 = vunpack.c.l.b16 %v242
    %v3076 = vunpack.c.l.b16 %v243
    %v3077 = vunpack.c.l.b16 %v244
    %v3078 = vunpack.c.l.b16 %v245
    %v3079 = vunpack.c.l.b16 %v246
    %v3080 = vunpack.c.l.b16 %v247
    %v3081 = vunpack.c.l.b16 %v248
    %v3082 = vunpack.c.l.b16 %v249
    %v3083 = vunpack.c.l.b16 %v250
    %v3084 = vunpack.c.l.b16 %v251
    %v3085 = vunpack.c.l.b16 %v252
    %v3086 = vunpack.c.l.b16 %v253
    %v3087 = vunpack.c.l.b16 %v254
    %v3088 = vunpack.c.l.b16 %v255
    %v3089 = vunpack.c.l.b16 %v256
    %v3090 = vunpack.c.l.b16 %v257
    %v3091 = vunpack.c.l.b16 %v258
    %v3092 = vunpack.c.l.b16 %v259
    %v3093 = vunpack.c.l.b16 %v260
    %v3094 = vunpack.c.l.b16 %v261
    %v3095 = vunpack.c.l.b16 %v262
    %v3096 = vunpack.c.l.b16 %v263
    %v3097 = vunpack.c.l.b16 %v264
    %v3098 = vunpack.c.l.b16 %v265
    %v3099 = vunpack.c.l.b16 %v266
    %v3100 = vunpack.c.l.b16 %v267
    %v3101 = vunpack.c.l.b16 %v268
    %v3102 = vunpack.c.l.b16 %v269
    %v3103 = vunpack.c.l.b16 %v270
    %v3104 = vunpack.c.l.b16 %v271
    %v3105 = vunpack.c.l.b16 %v272
    %v3106 = vunpack.c.l.b16 %v273
    %v3107 = vunpack.c.l.b16 %v274
    %v3108 = vunpack.c.l.b16 %v275
    %v3109 = vunpack.c.l.b16 %v276
    %v3110 = vunpack.c.l.b16 %v277
    %v3111 = vunpack.c.l.b16 %v278
    %v3112 = vunpack.c.l.b16 %v279
    %v3113 = vunpack.c.l.b16 %v280
    %v3114 = vunpack.c.l.b16 %v281
    %v3115 = vunpack.c.l.b16 %v282
    %v3116 = vunpack.c.l.b16 %v283
    %v3117 = vunpack.c.l.b16 %v284
    %v3118 = vunpack.c.l.b16 %v285
    %v3119 = vunpack.c.l.b16 %v286
    %v3120 = vunpack.c.l.b16 %v287
    %v3121 = vunpack.c.l.b16 %v288
    %v3122 = vunpack.c.l.b16 %v289
    %v3123 = vunpack.c.l.b16 %v290
    %v3124 = vunpack.c.l.b16 %v291
    %v3125 = vunpack.c.l.b16 %v292
    %v3126 = vunpack.c.l.b16 %v293
    %v3127 = vunpack.c.l.b16 %v294
    %v3128 = vunpack.c.l.b16 %v295
    %v3129 = vunpack.c.l.b16 %v296
    %v3130 = vunpack.c.l.b16 %v297
    %v3131 = vunpack.c.l.b16 %v298
    %v3132 = vunpack.c.l.b16 %v299
    %v3133 = vunpack.c.l.b16 %v300
    %v3134 = vunpack.c.l.b16 %v301
    %v3135 = vunpack.c.l.b16 %v302
    %v3136 = vunpack.c.l.b16 %v303
    %v3137 = vunpack.c.l.b16 %v304
    %v3138 = vunpack.c.l.b16 %v305
    %v3139 = vunpack.c.l.b16 %v306
    %v3140 = vunpack.c.l.b16 %v307
    %v3141 = vunpack.c.l.b16 %v308
    %v3142 = vunpack.c.l.b16 %v309
    %v3143 = vunpack.c.l.b16 %v310
    %v3144 = vunpack.c.l.b16 %v311
    %v3145 = vunpack.c.l.b16 %v312
    %v3146 = vunpack.c.l.b16 %v313
    %v3147 = vunpack.c.l.b16 %v314
    %v3148 = vunpack.c.l.b16 %v315
    %v3149 = vunpack.c.l.b16 %v316
    %v3150 = vunpack.c.l.b16 %v317
    %v3151 = vunpack.c.l.b16 %v318
    %v3152 = vunpack.c.l.b16 %v319
    %v3153 = vunpack.c.l.b16 %v320
    %v3154 = vunpack.c.l.b16 %v321
    %v3155 = vunpack.c.l.b16 %v322
    %v3156 = vunpack.c.l.b16 %v323
    %v3157 = vunpack.c.l.b16 %v324
    %v3158 = vunpack.c.l.b16 %v325
    %v3159 = vunpack.c.l.b16 %v326
    %v3160 = vunpack.c.l.b16 %v327
    %v3161 = vunpack.c.l.b16 %v328
    %v3162 = vunpack.c.l.b16 %v329
    %v3163 = vunpack.c.l.b16 %v330
    %v3164 = vunpack.c.l.b16 %v331
    %v3165 = vunpack.c.l.b16 %v332
    %v3166 = vunpack.c.l.b16 %v333
    %v3167 = vunpack.c.l.b16 %v334
    %v3168 = vunpack.c.l.b16 %v335
    %v3169 = vunpack.c.l.b16 %v336
    %v3170 = vunpack.c.l.b16 %v337
    %v3171 = vunpack.c.l.b16 %v338
    %v3172 = vunpack.c.l.b16 %v339
    %v3173 = vunpack.c.l.b16 %v340
    %v3174 = vunpack.c.l.b16 %v341
    %v3175 = vunpack.c.l.b16 %v342
    %v3176 = vunpack.c.l.b16 %v343
    %v3177 = vunpack.c.l.b16 %v344
    %v3178 = vunpack.c.l.b16 %v345
    %v3179 = vunpack.c.l.b16 %v346
    %v3180 = vunpack.c.l.b16 %v347
    %v3181 = vunpack.c.l.b16 %v348
    %v3182 = vunpack.c.l.b16 %v349
    %v3183 = vunpack.c.l.b16 %v350
    %v3184 = vunpack.c.l.b16 %v351
    %v3185 = vunpack.c.l.b16 %v352
    %v3186 = vunpack.c.l.b16 %v353
    %v3187 = vunpack.c.l.b16 %v354
    %v3188 = vunpack.c.l.b16 %v355
    %v3189 = vunpack.c.l.b16 %v356
    %v3190 = vunpack.c.l.b16 %v357
    %v3191 = vunpack.c.l.b16 %v358
    %v3192 = vunpack.c.l.b16 %v359
    %v3193 = vunpack.c.l.b16 %v360
    %v3194 = vunpack.c.l.b16 %v361
    %v3195 = vunpack.c.l.b16 %v362
    %v3196 = vunpack.c.l.b16 %v363
    %v3197 = vunpack.c.l.b16 %v364
    %v3198 = vunpack.c.l.b16 %v365
    %v3199 = vunpack.c.l.b16 %v366
    %v3200 = vunpack.c.l.b16 %v367
    %v3201 = vunpack.c.l.b16 %v368
    %v3202 = vunpack.c.l.b16 %v369
    %v3203 = vunpack.c.l.b16 %v370
    %v3204 = vunpack.c.l.b16 %v371
    %v3205 = vunpack.c.l.b16 %v372
    %v3206 = vunpack.c.l.b16 %v373
    %v3207 = vunpack.c.l.b16 %v374
    %v3208 = vunpack.c.l.b16 %v375
    %v3209 = vunpack.c.l.b16 %v376
    %v3210 = vunpack.c.l.b16 %v377
    %v3211 = vunpack.c.l.b16 %v378
    %v3212 = vunpack.c.l.b16 %v379
    %v3213 = vunpack.c.l.b16 %v380
    %v3214 = vunpack.c.l.b16 %v381
    %v3215 = vunpack.c.l.b16 %v382
    %v3216 = vunpack.c.l.b16 %v383
    %v3217 = vunpack.c.l.b16 %v384
    %v3218 = vunpack.c.l.b16 %v385
    %v3219 = vunpack.c.l.b16 %v386
    %v3220 = vunpack.c.l.b16 %v387
    %v3221 = vunpack.c.l.b16 %v388
    %v3222 = vunpack.c.l.b16 %v389
    %v3223 = vunpack.c.l.b16 %v390
    %v3224 = vunpack.c.l.b16 %v391
    %v3225 = vunpack.c.l.b16 %v392
    %v3226 = vunpack.c.l.b16 %v393
    %v3227 = vunpack.c.l.b16 %v394
    %v3228 = vunpack.c.l.b16 %v395
    %v3229 = vunpack.c.l.b16 %v396
    %v3230 = vunpack.c.l.b16 %v397
    %v3231 = vunpack.c.l.b16 %v398
    %v3232 = vunpack.c.l.b16 %v399
    %v3233 = vunpack.c.l.b16 %v400
    %v3234 = vunpack.c.l.b16 %v401
    %v3235 = vunpack.c.l.b16 %v402
    %v3236 = vunpack.c.l.b16 %v403
    %v3237 = vunpack.c.l.b16 %v404
    %v3238 = vunpack.c.l.b16 %v405
    %v3239 = vunpack.c.l.b16 %v406
    %v3240 = vunpack.c.l.b16 %v407
    %v3241 = vunpack.c.l.b16 %v408
    %v3242 = vunpack.c.l.b16 %v409
    %v3243 = vunpack.c.l.b16 %v410
    %v3244 = vunpack.c.l.b16 %v411
    %v3245 = vunpack.c.l.b16 %v412
    %v3246 = vunpack.c.l.b16 %v413
    %v3247 = vunpack.c.l.b16 %v414
    %v3248 = vunpack.c.l.b16 %v415
    %v3249 = vunpack.c.l.b16 %v416
    %v3250 = vunpack.c.l.b16 %v417
    %v3251 = vunpack.c.l.b16 %v418
    %v3252 = vunpack.c.l.b16 %v419
    %v3253 = vunpack.c.l.b16 %v420
    %v3254 = vunpack.c.l.b16 %v421
    %v3255 = vunpack.c.l.b16 %v422
    %v3256 = vunpack.c.l.b16 %v423
    %v3257 = vunpack.c.l.b16 %v424
    %v3258 = vunpack.c.l.b16 %v425
    %v3259 = vunpack.c.l.b16 %v426
    %v3260 = vunpack.c.l.b16 %v427
    %v3261 = vunpack.c.l.b16 %v428
    %v3262 = vunpack.c.l.b16 %v429
    %v3263 = vunpack.c.l.b16 %v430
    %v3264 = vunpack.c.l.b16 %v431
    %v3265 = vunpack.c.l.b16 %v432
    %v3266 = vunpack.c.l.b16 %v433
    %v3267 = vunpack.c.l.b16 %v434
    %v3268 = vunpack.c.l.b16 %v435
    %v3269 = vunpack.c.l.b16 %v436
    %v3270 = vunpack.c.l.b16 %v437
    %v3271 = vunpack.c.l.b16 %v438
    %v3272 = vunpack.c.l.b16 %v439
    %v3273 = vunpack.c.l.b16 %v440
    %v3274 = vunpack.c.l.b16 %v441
    %v3275 = vunpack.c.l.b16 %v442
    %v3276 = vunpack.c.l.b16 %v443
    %v3277 = vunpack.c.l.b16 %v444
    %v3278 = vunpack.c.l.b16 %v445
    %v3279 = vunpack.c.l.b16 %v446
    %v3280 = vunpack.c.l.b16 %v447
    %v3281 = vunpack.c.l.b16 %v448
    %v3282 = vunpack.c.l.b16 %v449
    %v3283 = vunpack.c.l.b16 %v450
    %v3284 = vunpack.c.l.b16 %v451
    %v3285 = vunpack.c.l.b16 %v452
    %v3286 = vunpack.c.l.b16 %v453
    %v3287 = vunpack.c.l.b16 %v454
    %v3288 = vunpack.c.l.b16 %v455
    %v3289 = vunpack.c.l.b16 %v456
    %v3290 = vunpack.c.l.b16 %v457
    %v3291 = vunpack.c.l.b16 %v458
    %v3292 = vunpack.c.l.b16 %v459
    %v3293 = vunpack.c.l.b16 %v460
    %v3294 = vunpack.c.l.b16 %v461
    %v3295 = vunpack.c.l.b16 %v462
    %v3296 = vunpack.c.l.b16 %v463
    %v3297 = vunpack.c.l.b16 %v464
    %v3298 = vunpack.c.l.b16 %v465
    %v3299 = vunpack.c.l.b16 %v466
    %v3300 = vunpack.c.l.b16 %v467
    %v3301 = vunpack.c.l.b16 %v468
    %v3302 = vunpack.c.l.b16 %v469
    %v3303 = vunpack.c.l.b16 %v470
    %v3304 = vunpack.c.l.b16 %v471
    %v3305 = vunpack.c.l.b16 %v472
    %v3306 = vunpack.c.l.b16 %v473
    %v3307 = vunpack.c.l.b16 %v474
    %v3308 = vunpack.c.l.b16 %v475
    %v3309 = vunpack.c.l.b16 %v476
    %v3310 = vunpack.c.l.b16 %v477
    %v3311 = vunpack.c.l.b16 %v478
    %v3312 = vunpack.c.l.b16 %v479
    %v3313 = vunpack.c.l.b16 %v480
    %v3314 = vunpack.c.l.b16 %v481
    %v3315 = vunpack.c.l.b16 %v482
    %v3316 = vunpack.c.l.b16 %v483
    %v3317 = vunpack.c.l.b16 %v484
    %v3318 = vunpack.c.l.b16 %v485
    %v3319 = vunpack.c.l.b16 %v486
    %v3320 = vunpack.c.l.b16 %v487
    %v3321 = vunpack.c.l.b16 %v488
    %v3322 = vunpack.c.l.b16 %v489
    %v3323 = vunpack.c.l.b16 %v490
    %v3324 = vunpack.c.l.b16 %v491
    %v3325 = vunpack.c.l.b16 %v492
    %v3326 = vunpack.c.l.b16 %v493
    %v3327 = vunpack.c.l.b16 %v494
    %v3328 = vunpack.c.l.b16 %v495
    %v3329 = vunpack.c.l.b16 %v496
    %v3330 = vunpack.c.l.b16 %v497
    %v3331 = vunpack.c.l.b16 %v498
    %v3332 = vunpack.c.l.b16 %v499
    %v3333 = vunpack.c.l.b16 %v500
    %v3334 = vunpack.c.l.b16 %v501
    %v3335 = vunpack.c.l.b16 %v502
    %v3336 = vunpack.c.l.b16 %v503
    %v3337 = vunpack.c.l.b16 %v504
    %v3338 = vunpack.c.l.b16 %v505
    %v3339 = vunpack.c.l.b16 %v506
    %v3340 = vunpack.c.l.b16 %v507
    %v3341 = vunpack.c.l.b16 %v508
    %v3342 = vunpack.c.l.b16 %v509
    %v3343 = vunpack.c.l.b16 %v510
    %v3344 = vunpack.c.l.b16 %v511
    %v3345 = vunpack.c.l.b16 %v512
    %v3346 = vunpack.c.l.b16 %v513
    %v3347 = vunpack.c.l.b16 %v514
    %v3348 = vunpack.c.l.b16 %v515
    %v3349 = vunpack.c.l.b16 %v516
    %v3350 = vunpack.c.l.b16 %v517
    %v3351 = vunpack.c.l.b16 %v518
    %v3352 = vunpack.c.l.b16 %v519
    %v3353 = vunpack.c.l.b16 %v520
    %v3354 = vunpack.c.l.b16 %v521
    %v3355 = vunpack.c.l.b16 %v522
    %v3356 = vunpack.c.l.b16 %v523
    %v3357 = vunpack.c.l.b16 %v524
    %v3358 = vunpack.c.l.b16 %v525
    %v3359 = vunpack.c.l.b16 %v526
    %v3360 = vunpack.c.l.b16 %v527
    %v3361 = vunpack.c.l.b16 %v528
    %v3362 = vunpack.c.l.b16 %v529
    %v3363 = vunpack.c.l.b16 %v530
    %v3364 = vunpack.c.l.b16 %v531
    %v3365 = vunpack.c.l.b16 %v532
    %v3366 = vunpack.c.l.b16 %v533
    %v3367 = vunpack.c.l.b16 %v534
    %v3368 = vunpack.c.l.b16 %v535
    %v3369 = vunpack.c.l.b16 %v536
    %v3370 = vunpack.c.l.b16 %v537
    %v3371 = vunpack.c.l.b16 %v538
    %v3372 = vunpack.c.l.b16 %v539
    %v3373 = vunpack.c.l.b16 %v540
    %v3374 = vunpack.c.l.b16 %v541
    %v3375 = vunpack.c.l.b16 %v542
    %v3376 = vunpack.c.l.b16 %v543
    %v3377 = vunpack.c.l.b16 %v544
    %v3378 = vunpack.c.l.b16 %v545
    %v3379 = vunpack.c.l.b16 %v546
    %v3380 = vunpack.c.l.b16 %v547
    %v3381 = vunpack.c.l.b16 %v548
    %v3382 = vunpack.c.l.b16 %v549
    %v3383 = vunpack.c.l.b16 %v550
    %v3384 = vunpack.c.l.b16 %v551
    %v3385 = vunpack.c.l.b16 %v552
    %v3386 = vunpack.c.l.b16 %v553
    %v3387 = vunpack.c.l.b16 %v554
    %v3388 = vunpack.c.l.b16 %v555
    %v3389 = vunpack.c.l.b16 %v556
    %v3390 = vunpack.c.l.b16 %v557
    %v3391 = vunpack.c.l.b16 %v558
    %v3392 = vunpack.c.l.b16 %v559
    %v3393 = vunpack.c.l.b16 %v560
    %v3394 = vunpack.c.l.b16 %v561
    %v3395 = vunpack.c.l.b16 %v562
    %v3396 = vunpack.c.l.b16 %v563
    %v3397 = vunpack.c.l.b16 %v564
    %v3398 = vunpack.c.l.b16 %v565
    %v3399 = vunpack.c.l.b16 %v566
    %v3400 = vunpack.c.l.b16 %v567
    %v3401 = vunpack.c.l.b16 %v568
    %v3402 = vunpack.c.l.b16 %v569
    %v3403 = vunpack.c.l.b16 %v570
    %v3404 = vunpack.c.l.b16 %v571
    %v3405 = vunpack.c.l.b16 %v572
    %v3406 = vunpack.c.l.b16 %v573
    %v3407 = vunpack.c.l.b16 %v574
    %v3408 = vunpack.c.l.b16 %v575
    %v3409 = vunpack.c.l.b16 %v576
    %v3410 = vunpack.c.l.b16 %v577
    %v3411 = vunpack.c.l.b16 %v578
    %v3412 = vunpack.c.l.b16 %v579
    %v3413 = vunpack.c.l.b16 %v580
    %v3414 = vunpack.c.l.b16 %v581
    %v3415 = vunpack.c.l.b16 %v582
    %v3416 = vunpack.c.l.b16 %v583
    %v3417 = vunpack.c.l.b16 %v584
    %v3418 = vunpack.c.l.b16 %v585
    %v3419 = vunpack.c.l.b16 %v586
    %v3420 = vunpack.c.l.b16 %v587
    %v3421 = vunpack.c.l.b16 %v588
    %v3422 = vunpack.c.l.b16 %v589
    %v3423 = vunpack.c.l.b16 %v590
    %v3424 = vunpack.c.l.b16 %v591
    %v3425 = vunpack.c.l.b16 %v592
    %v3426 = vunpack.c.l.b16 %v593
    %v3427 = vunpack.c.l.b16 %v594
    %v3428 = vunpack.c.l.b16 %v595
    %v3429 = vunpack.c.l.b16 %v596
    %v3430 = vunpack.c.l.b16 %v597
    %v3431 = vunpack.c.l.b16 %v598
    %v3432 = vunpack.c.l.b16 %v599
    %v3433 = vunpack.c.l.b16 %v600
    %v3434 = vunpack.c.l.b16 %v601
    %v3435 = vunpack.c.l.b16 %v602
    %v3436 = vunpack.c.l.b16 %v603
    %v3437 = vunpack.c.l.b16 %v604
    %v3438 = vunpack.c.l.b16 %v605
    %v3439 = vunpack.c.l.b16 %v606
    %v3440 = vunpack.c.l.b16 %v607
    %v3441 = vunpack.c.l.b16 %v608
    %v3442 = vunpack.c.l.b16 %v609
    %v3443 = vunpack.c.l.b16 %v610
    %v3444 = vunpack.c.l.b16 %v611
    %v3445 = vunpack.c.l.b16 %v612
    %v3446 = vunpack.c.l.b16 %v613
    %v3447 = vunpack.c.l.b16 %v614
    %v3448 = vunpack.c.l.b16 %v615
    %v3449 = vunpack.c.l.b16 %v616
    %v3450 = vunpack.c.l.b16 %v617
    %v3451 = vunpack.c.l.b16 %v618
    %v3452 = vunpack.c.l.b16 %v619
    %v3453 = vunpack.c.l.b16 %v620
    %v3454 = vunpack.c.l.b16 %v621
    %v3455 = vunpack.c.l.b16 %v622
    %v3456 = vunpack.c.l.b16 %v623
    %v3457 = vunpack.c.l.b16 %v624
    %v3458 = vunpack.c.l.b16 %v625
    %v3459 = vunpack.c.l.b16 %v626
    %v3460 = vunpack.c.l.b16 %v627
    %v3461 = vunpack.c.l.b16 %v628
    %v3462 = vunpack.c.l.b16 %v629
    %v3463 = vunpack.c.l.b16 %v630
    %v3464 = vunpack.c.l.b16 %v631
    %v3465 = vunpack.c.l.b16 %v632
    %v3466 = vunpack.c.l.b16 %v633
    %v3467 = vunpack.c.l.b16 %v634
    %v3468 = vunpack.c.l.b16 %v635
    %v3469 = vunpack.c.l.b16 %v636
    %v3470 = vunpack.c.l.b16 %v637
    %v3471 = vunpack.c.l.b16 %v638
    %v3472 = vunpack.c.l.b16 %v639
    %v3473 = vunpack.c.l.b16 %v640
    %v3474 = vunpack.c.l.b16 %v641
    %v3475 = vunpack.c.l.b16 %v642
    %v3476 = vunpack.c.l.b16 %v643
    %v3477 = vunpack.c.l.b16 %v644
    %v3478 = vunpack.c.l.b16 %v645
    %v3479 = vunpack.c.l.b16 %v646
    %v3480 = vunpack.c.l.b16 %v647
    %v3481 = vunpack.c.l.b16 %v648
    %v3482 = vunpack.c.l.b16 %v649
    %v3483 = vunpack.c.l.b16 %v650
    %v3484 = vunpack.c.l.b16 %v651
    %v3485 = vunpack.c.l.b16 %v652
    %v3486 = vunpack.c.l.b16 %v653
    %v3487 = vunpack.c.l.b16 %v654
    %v3488 = vunpack.c.l.b16 %v655
    %v3489 = vunpack.c.l.b16 %v656
    %v3490 = vunpack.c.l.b16 %v657
    %v3491 = vunpack.c.l.b16 %v658
    %v3492 = vunpack.c.l.b16 %v659
    %v3493 = vunpack.c.l.b16 %v660
    %v3494 = vunpack.c.l.b16 %v661
    %v3495 = vunpack.c.l.b16 %v662
    %v3496 = vunpack.c.l.b16 %v663
    %v3497 = vunpack.c.l.b16 %v664
    %v3498 = vunpack.c.l.b16 %v665
    %v3499 = vunpack.c.l.b16 %v666
    %v3500 = vunpack.c.l.b16 %v667
    %v3501 = vunpack.c.l.b16 %v668
    %v3502 = vunpack.c.l.b16 %v669
    %v3503 = vunpack.c.l.b16 %v670
    %v3504 = vunpack.c.l.b16 %v671
    %v3505 = vunpack.c.l.b16 %v672
    %v3506 = vunpack.c.l.b16 %v673
    %v3507 = vunpack.c.l.b16 %v674
    %v3508 = vunpack.c.l.b16 %v675
    %v3509 = vunpack.c.l.b16 %v676
    %v3510 = vunpack.c.l.b16 %v677
    %v3511 = vunpack.c.l.b16 %v678
    %v3512 = vunpack.c.l.b16 %v679
    %v3513 = vunpack.c.l.b16 %v680
    %v3514 = vunpack.c.l.b16 %v681
    %v3515 = vunpack.c.l.b16 %v682
    %v3516 = vunpack.c.l.b16 %v683
    %v3517 = vunpack.c.l.b16 %v684
    %v3518 = vunpack.c.l.b16 %v685
    %v3519 = vunpack.c.l.b16 %v686
    %v3520 = vunpack.c.l.b16 %v687
    %v3521 = vunpack.c.l.b16 %v688
    %v3522 = vunpack.c.l.b16 %v689
    %v3523 = vunpack.c.l.b16 %v690
    %v3524 = vunpack.c.l.b16 %v691
    %v3525 = vunpack.c.l.b16 %v692
    %v3526 = vunpack.c.l.b16 %v693
    %v3527 = vunpack.c.l.b16 %v694
    %v3528 = vunpack.c.l.b16 %v695
    %v3529 = vunpack.c.l.b16 %v696
    %v3530 = vunpack.c.l.b16 %v697
    %v3531 = vunpack.c.l.b16 %v698
    %v3532 = vunpack.c.l.b16 %v699
    %v3533 = vunpack.c.l.b16 %v700
    %v3534 = vunpack.c.l.b16 %v701
    %v3535 = vunpack.c.l.b16 %v702
    %v3536 = vunpack.c.l.b16 %v703
    %v3537 = vunpack.c.l.b16 %v704
    %v3538 = vunpack.c.l.b16 %v705
    %v3539 = vunpack.c.l.b16 %v706
    %v3540 = vunpack.c.l.b16 %v707
    %v3541 = vunpack.c.l.b16 %v708
    %v3542 = vunpack.c.l.b16 %v709
    %v3543 = vunpack.c.l.b16 %v710
    %v3544 = vunpack.c.l.b16 %v711
    %v3545 = vunpack.c.l.b16 %v712
    %v3546 = vunpack.c.l.b16 %v713
    %v3547 = vunpack.c.l.b16 %v714
    %v3548 = vunpack.c.l.b16 %v715
    %v3549 = vunpack.c.l.b16 %v716
    %v3550 = vunpack.c.l.b16 %v717
    %v3551 = vunpack.c.l.b16 %v718
    %v3552 = vunpack.c.l.b16 %v719
    %v3553 = vunpack.c.l.b16 %v720
    %v3554 = vunpack.c.l.b16 %v721
    %v3555 = vunpack.c.l.b16 %v722
    %v3556 = vunpack.c.l.b16 %v723
    %v3557 = vunpack.c.l.b16 %v724
    %v3558 = vunpack.c.l.b16 %v725
    %v3559 = vunpack.c.l.b16 %v726
    %v3560 = vunpack.c.l.b16 %v727
    %v3561 = vunpack.c.l.b16 %v728
    %v3562 = vunpack.c.l.b16 %v729
    %v3563 = vunpack.c.l.b16 %v730
    %v3564 = vunpack.c.l.b16 %v731
    %v3565 = vunpack.c.l.b16 %v732
    %v3566 = vunpack.c.l.b16 %v733
    %v3567 = vunpack.c.l.b16 %v734
    %v3568 = vunpack.c.l.b16 %v735
    %v3569 = vunpack.c.l.b16 %v736
    %v3570 = vunpack.c.l.b16 %v737
    %v3571 = vunpack.c.l.b16 %v738
    %v3572 = vunpack.c.l.b16 %v739
    %v3573 = vunpack.c.l.b16 %v740
    %v3574 = vunpack.c.l.b16 %v741
    %v3575 = vunpack.c.l.b16 %v742
    %v3576 = vunpack.c.l.b16 %v743
    %v3577 = vunpack.c.l.b16 %v744
    %v3578 = vunpack.c.l.b16 %v745
    %v3579 = vunpack.c.l.b16 %v746
    %v3580 = vunpack.c.l.b16 %v747
    %v3581 = vunpack.c.l.b16 %v748
    %v3582 = vunpack.c.l.b16 %v749
    %v3583 = vunpack.c.l.b16 %v750
    %v3584 = vunpack.c.l.b16 %v751
    %v3585 = vunpack.c.l.b16 %v752
    %v3586 = vunpack.c.l.b16 %v753
    %v3587 = vunpack.c.l.b16 %v754
    %v3588 = vunpack.c.l.b16 %v755
    %v3589 = vunpack.c.l.b16 %v756
    %v3590 = vunpack.c.l.b16 %v757
    %v3591 = vunpack.c.l.b16 %v758
    %v3592 = vunpack.c.l.b16 %v759
    %v3593 = vunpack.c.l.b16 %v760
    %v3594 = vunpack.c.l.b16 %v761
    %v3595 = vunpack.c.l.b16 %v762
    %v3596 = vunpack.c.l.b16 %v763
    %v3597 = vunpack.c.l.b16 %v764
    %v3598 = vunpack.c.l.b16 %v765
    %v3599 = vunpack.c.l.b16 %v766
    %v3600 = vunpack.c.l.b16 %v767
    %v3601 = vunpack.c.l.b16 %v768
    %v3602 = vunpack.c.l.b16 %v769
    %v3603 = vunpack.c.l.b16 %v770
    %v3604 = vunpack.c.l.b16 %v771
    %v3605 = vunpack.c.l.b16 %v772
    %v3606 = vunpack.c.l.b16 %v773
    %v3607 = vunpack.c.l.b16 %v774
    %v3608 = vunpack.c.l.b16 %v775
    %v3609 = vunpack.c.l.b16 %v776
    %v3610 = vunpack.c.l.b16 %v777
    %v3611 = vunpack.c.l.b16 %v778
    %v3612 = vunpack.c.l.b16 %v779
    %v3613 = vunpack.c.l.b16 %v780
    %v3614 = vunpack.c.l.b16 %v781
    %v3615 = vunpack.c.l.b16 %v782
    %v3616 = vunpack.c.l.b16 %v783
    %v3617 = vunpack.c.l.b16 %v784
    %v3618 = vunpack.c.l.b16 %v785
    %v3619 = vunpack.c.l.b16 %v786
    %v3620 = vunpack.c.l.b16 %v787
    %v3621 = vunpack.c.l.b16 %v788
    %v3622 = vunpack.c.l.b16 %v789
    %v3623 = vunpack.c.l.b16 %v790
    %v3624 = vunpack.c.l.b16 %v791
    %v3625 = vunpack.c.l.b16 %v792
    %v3626 = vunpack.c.l.b16 %v793
    %v3627 = vunpack.c.l.b16 %v794
    %v3628 = vunpack.c.l.b16 %v795
    %v3629 = vunpack.c.l.b16 %v796
    %v3630 = vunpack.c.l.b16 %v797
    %v3631 = vunpack.c.l.b16 %v798
    %v3632 = vunpack.c.l.b16 %v799
    %v3633 = vunpack.c.l.b16 %v800
    %v3634 = vunpack.c.l.b16 %v801
    %v3635 = vunpack.c.l.b16 %v802
    %v3636 = vunpack.c.l.b16 %v803
    %v3637 = vunpack.c.l.b16 %v804
    %v3638 = vunpack.c.l.b16 %v805
    %v3639 = vunpack.c.l.b16 %v806
    %v3640 = vunpack.c.l.b16 %v807
    %v3641 = vunpack.c.l.b16 %v808
    %v3642 = vunpack.c.l.b16 %v809
    %v3643 = vunpack.c.l.b16 %v810
    %v3644 = vunpack.c.l.b16 %v811
    %v3645 = vunpack.c.l.b16 %v812
    %v3646 = vunpack.c.l.b16 %v813
    %v3647 = vunpack.c.l.b16 %v814
    %v3648 = vunpack.c.l.b16 %v815
    %v3649 = vunpack.c.l.b16 %v816
    %v3650 = vunpack.c.l.b16 %v817
    %v3651 = vunpack.c.l.b16 %v818
    %v3652 = vunpack.c.l.b16 %v819
    %v3653 = vunpack.c.l.b16 %v820
    %v3654 = vunpack.c.l.b16 %v821
    %v3655 = vunpack.c.l.b16 %v822
    %v3656 = vunpack.c.l.b16 %v823
    %v3657 = vunpack.c.l.b16 %v824
    %v3658 = vunpack.c.l.b16 %v825
    %v3659 = vunpack.c.l.b16 %v826
    %v3660 = vunpack.c.l.b16 %v827
    %v3661 = vunpack.c.l.b16 %v828
    %v3662 = vunpack.c.l.b16 %v829
    %v3663 = vunpack.c.l.b16 %v830
    %v3664 = vunpack.c.l.b16 %v831
    %v3665 = vunpack.c.l.b16 %v832
    %v3666 = vunpack.c.l.b16 %v833
    %v3667 = vunpack.c.l.b16 %v834
    %v3668 = vunpack.c.l.b16 %v835
    %v3669 = vunpack.c.l.b16 %v836
    %v3670 = vunpack.c.l.b16 %v837
    %v3671 = vunpack.c.l.b16 %v838
    %v3672 = vunpack.c.l.b16 %v839
    %v3673 = vunpack.c.l.b16 %v840
    %v3674 = vunpack.c.l.b16 %v841
    %v3675 = vunpack.c.l.b16 %v842
    %v3676 = vunpack.c.l.b16 %v843
    %v3677 = vunpack.c.l.b16 %v844
    %v3678 = vunpack.c.l.b16 %v845
    %v3679 = vunpack.c.l.b16 %v846
    %v3680 = vunpack.c.l.b16 %v847
    %v3681 = vunpack.c.l.b16 %v848
    %v3682 = vunpack.c.l.b16 %v849
    %v3683 = vunpack.c.l.b16 %v850
    %v3684 = vunpack.c.l.b16 %v851
    %v3685 = vunpack.c.l.b16 %v852
    %v3686 = vunpack.c.l.b16 %v853
    %v3687 = vunpack.c.l.b16 %v854
    %v3688 = vunpack.c.l.b16 %v855
    %v3689 = vunpack.c.l.b16 %v856
    %v3690 = vunpack.c.l.b16 %v857
    %v3691 = vunpack.c.l.b16 %v858
    %v3692 = vunpack.c.l.b16 %v859
    %v3693 = vunpack.c.l.b16 %v860
    %v3694 = vunpack.c.l.b16 %v861
    %v3695 = vunpack.c.l.b16 %v862
    %v3696 = vunpack.c.l.b16 %v863
    %v3697 = vunpack.c.l.b16 %v864
    %v3698 = vunpack.c.l.b16 %v865
    %v3699 = vunpack.c.l.b16 %v866
    %v3700 = vunpack.c.l.b16 %v867
    %v3701 = vunpack.c.l.b16 %v868
    %v3702 = vunpack.c.l.b16 %v869
    %v3703 = vunpack.c.l.b16 %v870
    %v3704 = vunpack.c.l.b16 %v871
    %v3705 = vunpack.c.l.b16 %v872
    %v3706 = vunpack.c.l.b16 %v873
    %v3707 = vunpack.c.l.b16 %v874
    %v3708 = vunpack.c.l.b16 %v875
    %v3709 = vunpack.c.l.b16 %v876
    %v3710 = vunpack.c.l.b16 %v877
    %v3711 = vunpack.c.l.b16 %v878
    %v3712 = vunpack.c.l.b16 %v879
    %v3713 = vunpack.c.l.b16 %v880
    %v3714 = vunpack.c.l.b16 %v881
    %v3715 = vunpack.c.l.b16 %v882
    %v3716 = vunpack.c.l.b16 %v883
    %v3717 = vunpack.c.l.b16 %v884
    %v3718 = vunpack.c.l.b16 %v885
    %v3719 = vunpack.c.l.b16 %v886
    %v3720 = vunpack.c.l.b16 %v887
    %v3721 = vunpack.c.l.b16 %v888
    %v3722 = vunpack.c.l.b16 %v889
    %v3723 = vunpack.c.l.b16 %v890
    %v3724 = vunpack.c.l.b16 %v891
    %v3725 = vunpack.c.l.b16 %v892
    %v3726 = vunpack.c.l.b16 %v893
    %v3727 = vunpack.c.l.b16 %v894
    %v3728 = vunpack.c.l.b16 %v895
    %v3729 = vunpack.c.l.b16 %v896
    %v3730 = vunpack.c.l.b16 %v897
    %v3731 = vunpack.c.l.b16 %v898
    %v3732 = vunpack.c.l.b16 %v899
    %v3733 = vunpack.c.l.b16 %v900
    %v3734 = vunpack.c.l.b16 %v901
    %v3735 = vunpack.c.l.b16 %v902
    %v3736 = vunpack.c.l.b16 %v903
    %v3737 = vunpack.c.l.b16 %v904
    %v3738 = vunpack.c.l.b16 %v905
    %v3739 = vunpack.c.l.b16 %v906
    %v3740 = vunpack.c.l.b16 %v907
    %v3741 = vunpack.c.l.b16 %v908
    %v3742 = vunpack.c.l.b16 %v909
    %v3743 = vunpack.c.l.b16 %v910
    %v3744 = vunpack.c.l.b16 %v911
    %v3745 = vunpack.c.l.b16 %v912
    %v3746 = vunpack.c.l.b16 %v913
    %v3747 = vunpack.c.l.b16 %v914
    %v3748 = vunpack.c.l.b16 %v915
    %v3749 = vunpack.c.l.b16 %v916
    %v3750 = vunpack.c.l.b16 %v917
    %v3751 = vunpack.c.l.b16 %v918
    %v3752 = vunpack.c.l.b16 %v919
    %v3753 = vunpack.c.l.b16 %v920
    %v3754 = vunpack.c.l.b16 %v921
    %v3755 = vunpack.c.l.b16 %v922
    %v3756 = vunpack.c.l.b16 %v923
    %v3757 = vunpack.c.l.b16 %v924
    %v3758 = vunpack.c.l.b16 %v925
    %v3759 = vunpack.c.l.b16 %v926
    %v3760 = vunpack.c.l.b16 %v927
    %v3761 = vunpack.c.l.b16 %v928
    %v3762 = vunpack.c.l.b16 %v929
    %v3763 = vunpack.c.l.b16 %v930
    %v3764 = vunpack.c.l.b16 %v931
    %v3765 = vunpack.c.l.b16 %v932
    %v3766 = vunpack.c.l.b16 %v933
    %v3767 = vunpack.c.l.b16 %v934
    %v3768 = vunpack.c.l.b16 %v935
    %v3769 = vunpack.c.l.b16 %v936
    %v3770 = vunpack.c.l.b16 %v937
    %v3771 = vunpack.c.l.b16 %v938
    %v3772 = vunpack.c.l.b16 %v939
    %v3773 = vunpack.c.l.b16 %v940
    %v3774 = vunpack.c.l.b16 %v941
    %v3775 = vunpack.c.l.b16 %v942
    %v3776 = vunpack.c.l.b16 %v943
    %v3777 = vunpack.c.l.b16 %v944
    %v3778 = vunpack.c.l.b16 %v945
    %v3779 = vunpack.c.l.b16 %v946
    %v3780 = vunpack.c.l.b16 %v947
    %v3781 = vunpack.c.l.b16 %v948
    %v3782 = vunpack.c.l.b16 %v949
    %v3783 = vunpack.c.l.b16 %v950
    %v3784 = vunpack.c.l.b16 %v951
    %v3785 = vunpack.c.l.b16 %v952
    %v3786 = vunpack.c.l.b16 %v953
    %v3787 = vunpack.c.l.b16 %v954
    %v3788 = vunpack.c.l.b16 %v955
    %v3789 = vunpack.c.l.b16 %v956
    %v3790 = vunpack.c.l.b16 %v957
    %v3791 = vunpack.c.l.b16 %v958
    %v3792 = vunpack.c.l.b16 %v959
    %v3793 = vunpack.c.l.b16 %v960
    %v3794 = vunpack.c.l.b16 %v961
    %v3795 = vunpack.c.l.b16 %v962
    %v3796 = vunpack.c.l.b16 %v963
    %v3797 = vunpack.c.l.b16 %v964
    %v3798 = vunpack.c.l.b16 %v965
    %v3799 = vunpack.c.l.b16 %v966
    %v3800 = vunpack.c.l.b16 %v967
    %v3801 = vunpack.c.l.b16 %v968
    %v3802 = vunpack.c.l.b16 %v969
    %v3803 = vunpack.c.l.b16 %v970
    %v3804 = vunpack.c.l.b16 %v971
    %v3805 = vunpack.c.l.b16 %v972
    %v3806 = vunpack.c.l.b16 %v973
    %v3807 = vunpack.c.l.b16 %v974
    %v3808 = vunpack.c.l.b16 %v975
    %v3809 = vunpack.c.l.b16 %v976
    %v3810 = vunpack.c.l.b16 %v977
    %v3811 = vunpack.c.l.b16 %v978
    %v3812 = vunpack.c.l.b16 %v979
    %v3813 = vunpack.c.l.b16 %v980
    %v3814 = vunpack.c.l.b16 %v981
    %v3815 = vunpack.c.l.b16 %v982
    %v3816 = vunpack.c.l.b16 %v983
    %v3817 = vunpack.c.l.b16 %v984
    %v3818 = vunpack.c.l.b16 %v985
    %v3819 = vunpack.c.l.b16 %v986
    %v3820 = vunpack.c.l.b16 %v987
    %v3821 = vunpack.c.l.b16 %v988
    %v3822 = vunpack.c.l.b16 %v989
    %v3823 = vunpack.c.l.b16 %v990
    %v3824 = vunpack.c.l.b16 %v991
    %v3825 = vunpack.c.l.b16 %v992
    %v3826 = vunpack.c.l.b16 %v993
    %v3827 = vunpack.c.l.b16 %v994
    %v3828 = vunpack.c.l.b16 %v995
    %v3829 = vunpack.c.l.b16 %v996
    %v3830 = vunpack.c.l.b16 %v997
    %v3831 = vunpack.c.l.b16 %v998
    %v3832 = vunpack.c.l.b16 %v999
    %v3833 = vunpack.c.l.b16 %v1000
    %v3834 = vunpack.c.l.b16 %v1001
    %v3835 = vunpack.c.l.b16 %v1002
    %v3836 = vunpack.c.l.b16 %v1003
    %v3837 = vunpack.c.l.b16 %v1004
    %v3838 = vunpack.c.l.b16 %v1005
    %v3839 = vunpack.c.l.b16 %v1006
    %v3840 = vunpack.c.l.b16 %v1007
    %v3841 = vunpack.c.l.b16 %v1008
    %v3842 = vunpack.c.l.b16 %v1009
    %v3843 = vunpack.c.l.b16 %v1010
    %v3844 = vunpack.c.l.b16 %v1011
    %v3845 = vunpack.c.l.b16 %v1012
    %v3846 = vunpack.c.l.b16 %v1013
    %v3847 = vunpack.c.l.b16 %v1014
    %v3848 = vunpack.c.l.b16 %v1015
    %v3849 = vunpack.c.l.b16 %v1016
    %v3850 = vunpack.c.l.b16 %v1017
    %v3851 = vunpack.c.l.b16 %v1018
    %v3852 = vunpack.c.l.b16 %v1019
    %v3853 = vunpack.c.l.b16 %v1020
    %v3854 = vunpack.c.l.b16 %v1021
    %v3855 = vunpack.c.l.b16 %v1022
    %v3856 = vunpack.c.l.b16 %v1023
    %v3857 = vunpack.c.l.b16 %v1024
    %v3858 = vunpack.c.l.b16 %v1025
    %v3859 = vunpack.c.l.b16 %v1026
    %v3860 = vunpack.c.l.b16 %v1027
    %v3861 = vunpack.c.l.b16 %v1028
    %v3862 = vunpack.c.l.b16 %v1029
    %v3863 = vunpack.c.l.b16 %v1030
    %v3864 = vunpack.c.l.b16 %v1031
    %v3865 = vunpack.c.l.b16 %v1032
    %v3866 = vunpack.c.l.b16 %v1033
    %v3867 = vunpack.c.l.b16 %v1034
    %v3868 = vunpack.c.l.b16 %v1035
    %v3869 = vunpack.c.l.b16 %v1036
    %v3870 = vunpack.c.l.b16 %v1037
    %v3871 = vunpack.c.l.b16 %v1038
    %v3872 = vunpack.c.l.b16 %v1039
    %v3873 = vunpack.c.l.b16 %v1040
    %v3874 = vunpack.c.l.b16 %v1041
    %v3875 = vunpack.c.l.b16 %v1042
    %v3876 = vunpack.c.l.b16 %v1043
    %v3877 = vunpack.c.l.b16 %v1044
    %v3878 = vunpack.c.l.b16 %v1045
    %v3879 = vunpack.c.l.b16 %v1046
    %v3880 = vunpack.c.l.b16 %v1047
    %v3881 = vunpack.c.l.b16 %v1048
    %v3882 = vunpack.c.l.b16 %v1049
    %v3883 = vunpack.c.l.b16 %v1050
    %v3884 = vunpack.c.l.b16 %v1051
    %v3885 = vunpack.c.l.b16 %v1052
    %v3886 = vunpack.c.l.b16 %v1053
    %v3887 = vunpack.c.l.b16 %v1054
    %v3888 = vunpack.c.l.b16 %v1055
    %v3889 = vunpack.c.l.b16 %v1056
    %v3890 = vunpack.c.l.b16 %v1057
    %v3891 = vunpack.c.l.b16 %v1058
    %v3892 = vunpack.c.l.b16 %v1059
    %v3893 = vunpack.c.l.b16 %v1060
    %v3894 = vunpack.c.l.b16 %v1061
    %v3895 = vunpack.c.l.b16 %v1062
    %v3896 = vunpack.c.l.b16 %v1063
    %v3897 = vunpack.c.l.b16 %v1064
    %v3898 = vunpack.c.l.b16 %v1065
    %v3899 = vunpack.c.l.b16 %v1066
    %v3900 = vunpack.c.l.b16 %v1067
    %v3901 = vunpack.c.l.b16 %v1068
    %v3902 = vunpack.c.l.b16 %v1069
    %v3903 = vunpack.c.l.b16 %v1070
    %v3904 = vunpack.c.l.b16 %v1071
    %v3905 = vunpack.c.l.b16 %v1072
    %v3906 = vunpack.c.l.b16 %v1073
    %v3907 = vunpack.c.l.b16 %v1074
    %v3908 = vunpack.c.l.b16 %v1075
    %v3909 = vunpack.c.l.b16 %v1076
    %v3910 = vunpack.c.l.b16 %v1077
    %v3911 = vunpack.c.l.b16 %v1078
    %v3912 = vunpack.c.l.b16 %v1079
    %v3913 = vunpack.c.l.b16 %v1080
    %v3914 = vunpack.c.l.b16 %v1081
    %v3915 = vunpack.c.l.b16 %v1082
    %v3916 = vunpack.c.l.b16 %v1083
    %v3917 = vunpack.c.l.b16 %v1084
    %v3918 = vunpack.c.l.b16 %v1085
    %v3919 = vunpack.c.l.b16 %v1086
    %v3920 = vunpack.c.l.b16 %v1087
    %v3921 = vunpack.c.l.b16 %v1088
    %v3922 = vunpack.c.l.b16 %v1089
    %v3923 = vunpack.c.l.b16 %v1090
    %v3924 = vunpack.c.l.b16 %v1091
    %v3925 = vunpack.c.l.b16 %v1092
    %v3926 = vunpack.c.l.b16 %v1093
    %v3927 = vunpack.c.l.b16 %v1094
    %v3928 = vunpack.c.l.b16 %v1095
    %v3929 = vunpack.c.l.b16 %v1096
    %v3930 = vunpack.c.l.b16 %v1097
    %v3931 = vunpack.c.l.b16 %v1098
    %v3932 = vunpack.c.l.b16 %v1099
    %v3933 = vunpack.c.l.b16 %v1100
    %v3934 = vunpack.c.l.b16 %v1101
    %v3935 = vunpack.c.l.b16 %v1102
    %v3936 = vunpack.c.l.b16 %v1103
    %v3937 = vunpack.c.l.b16 %v1104
    %v3938 = vunpack.c.l.b16 %v1105
    %v3939 = vunpack.c.l.b16 %v1106
    %v3940 = vunpack.c.l.b16 %v1107
    %v3941 = vunpack.c.l.b16 %v1108
    %v3942 = vunpack.c.l.b16 %v1109
    %v3943 = vunpack.c.l.b16 %v1110
    %v3944 = vunpack.c.l.b16 %v1111
    %v3945 = vunpack.c.l.b16 %v1112
    %v3946 = vunpack.c.l.b16 %v1113
    %v3947 = vunpack.c.l.b16 %v1114
    %v3948 = vunpack.c.l.b16 %v1115
    %v3949 = vunpack.c.l.b16 %v1116
    %v3950 = vunpack.c.l.b16 %v1117
    %v3951 = vunpack.c.l.b16 %v1118
    %v3952 = vunpack.c.l.b16 %v1119
    %v3953 = vunpack.c.l.b16 %v1120
    %v3954 = vunpack.c.l.b16 %v1121
    %v3955 = vunpack.c.l.b16 %v1122
    %v3956 = vunpack.c.l.b16 %v1123
    %v3957 = vunpack.c.l.b16 %v1124
    %v3958 = vunpack.c.l.b16 %v1125
    %v3959 = vunpack.c.l.b16 %v1126
    %v3960 = vunpack.c.l.b16 %v1127
    %v3961 = vunpack.c.l.b16 %v1128
    %v3962 = vunpack.c.l.b16 %v1129
    %v3963 = vunpack.c.l.b16 %v1130
    %v3964 = vunpack.c.l.b16 %v1131
    %v3965 = vunpack.c.l.b16 %v1132
    %v3966 = vunpack.c.l.b16 %v1133
    %v3967 = vunpack.c.l.b16 %v1134
    %v3968 = vunpack.c.l.b16 %v1135
    %v3969 = vunpack.c.l.b16 %v1136
    %v3970 = vunpack.c.l.b16 %v1137
    %v3971 = vunpack.c.l.b16 %v1138
    %v3972 = vunpack.c.l.b16 %v1139
    %v3973 = vunpack.c.l.b16 %v1140
    %v3974 = vunpack.c.l.b16 %v1141
    %v3975 = vunpack.c.l.b16 %v1142
    %v3976 = vunpack.c.l.b16 %v1143
    %v3977 = vunpack.c.l.b16 %v1144
    %v3978 = vunpack.c.l.b16 %v1145
    %v3979 = vunpack.c.l.b16 %v1146
    %v3980 = vunpack.c.l.b16 %v1147
    %v3981 = vunpack.c.l.b16 %v1148
    %v3982 = vunpack.c.l.b16 %v1149
    %v3983 = vunpack.c.l.b16 %v1150
    %v3984 = vunpack.c.l.b16 %v1151
    %v3985 = vunpack.c.l.b16 %v1152
    %v3986 = vunpack.c.l.b16 %v1153
    %v3987 = vunpack.c.l.b16 %v1154
    %v3988 = vunpack.c.l.b16 %v1155
    %v3989 = vunpack.c.l.b16 %v1156
    %v3990 = vunpack.c.l.b16 %v1157
    %v3991 = vunpack.c.l.b16 %v1158
    %v3992 = vunpack.c.l.b16 %v1159
    %v3993 = vunpack.c.l.b16 %v1160
    %v3994 = vunpack.c.l.b16 %v1161
    %v3995 = vunpack.c.l.b16 %v1162
    %v3996 = vunpack.c.l.b16 %v1163
    %v3997 = vunpack.c.l.b16 %v1164
    %v3998 = vunpack.c.l.b16 %v1165
    %v3999 = vunpack.c.l.b16 %v1166
    %v4000 = vunpack.c.l.b16 %v1167
    %v4001 = vunpack.c.l.b16 %v1168
    %v4002 = vunpack.c.l.b16 %v1169
    %v4003 = vunpack.c.l.b16 %v1170
    %v4004 = vunpack.c.l.b16 %v1171
    %v4005 = vunpack.c.l.b16 %v1172
    %v4006 = vunpack.c.l.b16 %v1173
    %v4007 = vunpack.c.l.b16 %v1174
    %v4008 = vunpack.c.l.b16 %v1175
    %v4009 = vunpack.c.l.b16 %v1176
    %v4010 = vunpack.c.l.b16 %v1177
    %v4011 = vunpack.c.l.b16 %v1178
    %v4012 = vunpack.c.l.b16 %v1179
    %v4013 = vunpack.c.l.b16 %v1180
    %v4014 = vunpack.c.l.b16 %v1181
    %v4015 = vunpack.c.l.b16 %v1182
    %v4016 = vpack.c.b16 %v2865, %v2864
    %v4017 = vpack.c.b16 %v2867, %v2866
    %v4018 = vpack.c.b16 %v2869, %v2868
    %v4019 = vpack.c.b16 %v2871, %v2870
    %v4020 = vpack.c.b16 %v2873, %v2872
    %v4021 = vpack.c.b16 %v2875, %v2874
    %v4022 = vpack.c.b16 %v2877, %v2876
    %v4023 = vpack.c.b16 %v2879, %v2878
    %v4024 = vpack.c.b16 %v2881, %v2880
    %v4025 = vpack.c.b16 %v2883, %v2882
    %v4026 = vpack.c.b16 %v2885, %v2884
    %v4027 = vpack.c.b16 %v2887, %v2886
    %v4028 = vpack.c.b16 %v2889, %v2888
    %v4029 = vpack.c.b16 %v2891, %v2890
    %v4030 = vpack.c.b16 %v2893, %v2892
    %v4031 = vpack.c.b16 %v2895, %v2894
    %v4032 = vpack.c.b16 %v2897, %v2896
    %v4033 = vpack.c.b16 %v2899, %v2898
    %v4034 = vpack.c.b16 %v2901, %v2900
    %v4035 = vpack.c.b16 %v2903, %v2902
    %v4036 = vpack.c.b16 %v2905, %v2904
    %v4037 = vpack.c.b16 %v2907, %v2906
    %v4038 = vpack.c.b16 %v2909, %v2908
    %v4039 = vpack.c.b16 %v2911, %v2910
    %v4040 = vpack.c.b16 %v2913, %v2912
    %v4041 = vpack.c.b16 %v2915, %v2914
    %v4042 = vpack.c.b16 %v2917, %v2916
    %v4043 = vpack.c.b16 %v2919, %v2918
    %v4044 = vpack.c.b16 %v2921, %v2920
    %v4045 = vpack.c.b16 %v2923, %v2922
    %v4046 = vpack.c.b16 %v2925, %v2924
    %v4047 = vpack.c.b16 %v2927, %v2926
    %v4048 = vpack.c.b16 %v2929, %v2928
    %v4049 = vpack.c.b16 %v2931, %v2930
    %v4050 = vpack.c.b16 %v2933, %v2932
    %v4051 = vpack.c.b16 %v2935, %v2934
    %v4052 = vpack.c.b16 %v2937, %v2936
    %v4053 = vpack.c.b16 %v2939, %v2938
    %v4054 = vpack.c.b16 %v2941, %v2940
    %v4055 = vpack.c.b16 %v2943, %v2942
    %v4056 = vpack.c.b16 %v2945, %v2944
    %v4057 = vpack.c.b16 %v2947, %v2946
    %v4058 = vpack.c.b16 %v2949, %v2948
    %v4059 = vpack.c.b16 %v2951, %v2950
    %v4060 = vpack.c.b16 %v2953, %v2952
    %v4061 = vpack.c.b16 %v2955, %v2954
    %v4062 = vpack.c.b16 %v2957, %v2956
    %v4063 = vpack.c.b16 %v2959, %v2958
    %v4064 = vpack.c.b16 %v2961, %v2960
    %v4065 = vpack.c.b16 %v2963, %v2962
    %v4066 = vpack.c.b16 %v2965, %v2964
    %v4067 = vpack.c.b16 %v2967, %v2966
    %v4068 = vpack.c.b16 %v2969, %v2968
    %v4069 = vpack.c.b16 %v2971, %v2970
    %v4070 = vpack.c.b16 %v2973, %v2972
    %v4071 = vpack.c.b16 %v2975, %v2974
    %v4072 = vpack.c.b16 %v2977, %v2976
    %v4073 = vpack.c.b16 %v2979, %v2978
    %v4074 = vpack.c.b16 %v2981, %v2980
    %v4075 = vpack.c.b16 %v2983, %v2982
    %v4076 = vpack.c.b16 %v2985, %v2984
    %v4077 = vpack.c.b16 %v2987, %v2986
    %v4078 = vpack.c.b16 %v2989, %v2988
    %v4079 = vpack.c.b16 %v2991, %v2990
    %v4080 = vpack.c.b16 %v2993, %v2992
    %v4081 = vpack.c.b16 %v2995, %v2994
    %v4082 = vpack.c.b16 %v2997, %v2996
    %v4083 = vpack.c.b16 %v2999, %v2998
    %v4084 = vpack.c.b16 %v3001, %v3000
    %v4085 = vpack.c.b16 %v3003, %v3002
    %v4086 = vpack.c.b16 %v3005, %v3004
    %v4087 = vpack.c.b16 %v3007, %v3006
    %v4088 = vpack.c.b16 %v3009, %v3008
    %v4089 = vpack.c.b16 %v3011, %v3010
    %v4090 = vpack.c.b16 %v3013, %v3012
    %v4091 = vpack.c.b16 %v3015, %v3014
    %v4092 = vpack.c.b16 %v3017, %v3016
    %v4093 = vpack.c.b16 %v3019, %v3018
    %v4094 = vpack.c.b16 %v3021, %v3020
    %v4095 = vpack.c.b16 %v3023, %v3022
    %v4096 = vpack.c.b16 %v3025, %v3024
    %v4097 = vpack.c.b16 %v3027, %v3026
    %v4098 = vpack.c.b16 %v3029, %v3028
    %v4099 = vpack.c.b16 %v3031, %v3030
    %v4100 = vpack.c.b16 %v3033, %v3032
    %v4101 = vpack.c.b16 %v3035, %v3034
    %v4102 = vpack.c.b16 %v3037, %v3036
    %v4103 = vpack.c.b16 %v3039, %v3038
    %v4104 = vpack.c.b16 %v3041, %v3040
    %v4105 = vpack.c.b16 %v3043, %v3042
    %v4106 = vpack.c.b16 %v3045, %v3044
    %v4107 = vpack.c.b16 %v3047, %v3046
    %v4108 = vpack.c.b16 %v3049, %v3048
    %v4109 = vpack.c.b16 %v3051, %v3050
    %v4110 = vpack.c.b16 %v3053, %v3052
    %v4111 = vpack.c.b16 %v3055, %v3054
    %v4112 = vpack.c.b16 %v3057, %v3056
    %v4113 = vpack.c.b16 %v3059, %v3058
    %v4114 = vpack.c.b16 %v3061, %v3060
    %v4115 = vpack.c.b16 %v3063, %v3062
    %v4116 = vpack.c.b16 %v3065, %v3064
    %v4117 = vpack.c.b16 %v3067, %v3066
    %v4118 = vpack.c.b16 %v3069, %v3068
    %v4119 = vpack.c.b16 %v3071, %v3070
    %v4120 = vpack.c.b16 %v3073, %v3072
    %v4121 = vpack.c.b16 %v3075, %v3074
    %v4122 = vpack.c.b16 %v3077, %v3076
    %v4123 = vpack.c.b16 %v3079, %v3078
    %v4124 = vpack.c.b16 %v3081, %v3080
    %v4125 = vpack.c.b16 %v3083, %v3082
    %v4126 = vpack.c.b16 %v3085, %v3084
    %v4127 = vpack.c.b16 %v3087, %v3086
    %v4128 = vpack.c.b16 %v3089, %v3088
    %v4129 = vpack.c.b16 %v3091, %v3090
    %v4130 = vpack.c.b16 %v3093, %v3092
    %v4131 = vpack.c.b16 %v3095, %v3094
    %v4132 = vpack.c.b16 %v3097, %v3096
    %v4133 = vpack.c.b16 %v3099, %v3098
    %v4134 = vpack.c.b16 %v3101, %v3100
    %v4135 = vpack.c.b16 %v3103, %v3102
    %v4136 = vpack.c.b16 %v3105, %v3104
    %v4137 = vpack.c.b16 %v3107, %v3106
    %v4138 = vpack.c.b16 %v3109, %v3108
    %v4139 = vpack.c.b16 %v3111, %v3110
    %v4140 = vpack.c.b16 %v3113, %v3112
    %v4141 = vpack.c.b16 %v3115, %v3114
    %v4142 = vpack.c.b16 %v3117, %v3116
    %v4143 = vpack.c.b16 %v3119, %v3118
    %v4144 = vpack.c.b16 %v3121, %v3120
    %v4145 = vpack.c.b16 %v3123, %v3122
    %v4146 = vpack.c.b16 %v3125, %v3124
    %v4147 = vpack.c.b16 %v3127, %v3126
    %v4148 = vpack.c.b16 %v3129, %v3128
    %v4149 = vpack.c.b16 %v3131, %v3130
    %v4150 = vpack.c.b16 %v3133, %v3132
    %v4151 = vpack.c.b16 %v3135, %v3134
    %v4152 = vpack.c.b16 %v3137, %v3136
    %v4153 = vpack.c.b16 %v3139, %v3138
    %v4154 = vpack.c.b16 %v3141, %v3140
    %v4155 = vpack.c.b16 %v3143, %v3142
    %v4156 = vpack.c.b16 %v3145, %v3144
    %v4157 = vpack.c.b16 %v3147, %v3146
    %v4158 = vpack.c.b16 %v3149, %v3148
    %v4159 = vpack.c.b16 %v3151, %v3150
    %v4160 = vpack.c.b16 %v3153, %v3152
    %v4161 = vpack.c.b16 %v3155, %v3154
    %v4162 = vpack.c.b16 %v3157, %v3156
    %v4163 = vpack.c.b16 %v3159, %v3158
    %v4164 = vpack.c.b16 %v3161, %v3160
    %v4165 = vpack.c.b16 %v3163, %v3162
    %v4166 = vpack.c.b16 %v3165, %v3164
    %v4167 = vpack.c.b16 %v3167, %v3166
    %v4168 = vpack.c.b16 %v3169, %v3168
    %v4169 = vpack.c.b16 %v3171, %v3170
    %v4170 = vpack.c.b16 %v3173, %v3172
    %v4171 = vpack.c.b16 %v3175, %v3174
    %v4172 = vpack.c.b16 %v3177, %v3176
    %v4173 = vpack.c.b16 %v3179, %v3178
    %v4174 = vpack.c.b16 %v3181, %v3180
    %v4175 = vpack.c.b16 %v3183, %v3182
    %v4176 = vpack.c.b16 %v3185, %v3184
    %v4177 = vpack.c.b16 %v3187, %v3186
    %v4178 = vpack.c.b16 %v3189, %v3188
    %v4179 = vpack.c.b16 %v3191, %v3190
    %v4180 = vpack.c.b16 %v3193, %v3192
    %v4181 = vpack.c.b16 %v3195, %v3194
    %v4182 = vpack.c.b16 %v3197, %v3196
    %v4183 = vpack.c.b16 %v3199, %v3198
    %v4184 = vpack.c.b16 %v3201, %v3200
    %v4185 = vpack.c.b16 %v3203, %v3202
    %v4186 = vpack.c.b16 %v3205, %v3204
    %v4187 = vpack.c.b16 %v3207, %v3206
    %v4188 = vpack.c.b16 %v3209, %v3208
    %v4189 = vpack.c.b16 %v3211, %v3210
    %v4190 = vpack.c.b16 %v3213, %v3212
    %v4191 = vpack.c.b16 %v3215, %v3214
    %v4192 = vpack.c.b16 %v3217, %v3216
    %v4193 = vpack.c.b16 %v3219, %v3218
    %v4194 = vpack.c.b16 %v3221, %v3220
    %v4195 = vpack.c.b16 %v3223, %v3222
    %v4196 = vpack.c.b16 %v3225, %v3224
    %v4197 = vpack.c.b16 %v3227, %v3226
    %v4198 = vpack.c.b16 %v3229, %v3228
    %v4199 = vpack.c.b16 %v3231, %v3230
    %v4200 = vpack.c.b16 %v3233, %v3232
    %v4201 = vpack.c.b16 %v3235, %v3234
    %v4202 = vpack.c.b16 %v3237, %v3236
    %v4203 = vpack.c.b16 %v3239, %v3238
    %v4204 = vpack.c.b16 %v3241, %v3240
    %v4205 = vpack.c.b16 %v3243, %v3242
    %v4206 = vpack.c.b16 %v3245, %v3244
    %v4207 = vpack.c.b16 %v3247, %v3246
    %v4208 = vpack.c.b16 %v3249, %v3248
    %v4209 = vpack.c.b16 %v3251, %v3250
    %v4210 = vpack.c.b16 %v3253, %v3252
    %v4211 = vpack.c.b16 %v3255, %v3254
    %v4212 = vpack.c.b16 %v3257, %v3256
    %v4213 = vpack.c.b16 %v3259, %v3258
    %v4214 = vpack.c.b16 %v3261, %v3260
    %v4215 = vpack.c.b16 %v3263, %v3262
    %v4216 = vpack.c.b16 %v3265, %v3264
    %v4217 = vpack.c.b16 %v3267, %v3266
    %v4218 = vpack.c.b16 %v3269, %v3268
    %v4219 = vpack.c.b16 %v3271, %v3270
    %v4220 = vpack.c.b16 %v3273, %v3272
    %v4221 = vpack.c.b16 %v3275, %v3274
    %v4222 = vpack.c.b16 %v3277, %v3276
    %v4223 = vpack.c.b16 %v3279, %v3278
    %v4224 = vpack.c.b16 %v3281, %v3280
    %v4225 = vpack.c.b16 %v3283, %v3282
    %v4226 = vpack.c.b16 %v3285, %v3284
    %v4227 = vpack.c.b16 %v3287, %v3286
    %v4228 = vpack.c.b16 %v3289, %v3288
    %v4229 = vpack.c.b16 %v3291, %v3290
    %v4230 = vpack.c.b16 %v3293, %v3292
    %v4231 = vpack.c.b16 %v3295, %v3294
    %v4232 = vpack.c.b16 %v3297, %v3296
    %v4233 = vpack.c.b16 %v3299, %v3298
    %v4234 = vpack.c.b16 %v3301, %v3300
    %v4235 = vpack.c.b16 %v3303, %v3302
    %v4236 = vpack.c.b16 %v3305, %v3304
    %v4237 = vpack.c.b16 %v3307, %v3306
    %v4238 = vpack.c.b16 %v3309, %v3308
    %v4239 = vpack.c.b16 %v3311, %v3310
    %v4240 = vpack.c.b16 %v3313, %v3312
    %v4241 = vpack.c.b16 %v3315, %v3314
    %v4242 = vpack.c.b16 %v3317, %v3316
    %v4243 = vpack.c.b16 %v3319, %v3318
    %v4244 = vpack.c.b16 %v3321, %v3320
    %v4245 = vpack.c.b16 %v3323, %v3322
    %v4246 = vpack.c.b16 %v3325, %v3324
    %v4247 = vpack.c.b16 %v3327, %v3326
    %v4248 = vpack.c.b16 %v3329, %v3328
    %v4249 = vpack.c.b16 %v3331, %v3330
    %v4250 = vpack.c.b16 %v3333, %v3332
    %v4251 = vpack.c.b16 %v3335, %v3334
    %v4252 = vpack.c.b16 %v3337, %v3336
    %v4253 = vpack.c.b16 %v3339, %v3338
    %v4254 = vpack.c.b16 %v3341, %v3340
    %v4255 = vpack.c.b16 %v3343, %v3342
    %v4256 = vpack.c.b16 %v3345, %v3344
    %v4257 = vpack.c.b16 %v3347, %v3346
    %v4258 = vpack.c.b16 %v3349, %v3348
    %v4259 = vpack.c.b16 %v3351, %v3350
    %v4260 = vpack.c.b16 %v3353, %v3352
    %v4261 = vpack.c.b16 %v3355, %v3354
    %v4262 = vpack.c.b16 %v3357, %v3356
    %v4263 = vpack.c.b16 %v3359, %v3358
    %v4264 = vpack.c.b16 %v3361, %v3360
    %v4265 = vpack.c.b16 %v3363, %v3362
    %v4266 = vpack.c.b16 %v3365, %v3364
    %v4267 = vpack.c.b16 %v3367, %v3366
    %v4268 = vpack.c.b16 %v3369, %v3368
    %v4269 = vpack.c.b16 %v3371, %v3370
    %v4270 = vpack.c.b16 %v3373, %v3372
    %v4271 = vpack.c.b16 %v3375, %v3374
    %v4272 = vpack.c.b16 %v3377, %v3376
    %v4273 = vpack.c.b16 %v3379, %v3378
    %v4274 = vpack.c.b16 %v3381, %v3380
    %v4275 = vpack.c.b16 %v3383, %v3382
    %v4276 = vpack.c.b16 %v3385, %v3384
    %v4277 = vpack.c.b16 %v3387, %v3386
    %v4278 = vpack.c.b16 %v3389, %v3388
    %v4279 = vpack.c.b16 %v3391, %v3390
    %v4280 = vpack.c.b16 %v3393, %v3392
    %v4281 = vpack.c.b16 %v3395, %v3394
    %v4282 = vpack.c.b16 %v3397, %v3396
    %v4283 = vpack.c.b16 %v3399, %v3398
    %v4284 = vpack.c.b16 %v3401, %v3400
    %v4285 = vpack.c.b16 %v3403, %v3402
    %v4286 = vpack.c.b16 %v3405, %v3404
    %v4287 = vpack.c.b16 %v3407, %v3406
    %v4288 = vpack.c.b16 %v3409, %v3408
    %v4289 = vpack.c.b16 %v3411, %v3410
    %v4290 = vpack.c.b16 %v3413, %v3412
    %v4291 = vpack.c.b16 %v3415, %v3414
    %v4292 = vpack.c.b16 %v3417, %v3416
    %v4293 = vpack.c.b16 %v3419, %v3418
    %v4294 = vpack.c.b16 %v3421, %v3420
    %v4295 = vpack.c.b16 %v3423, %v3422
    %v4296 = vpack.c.b16 %v3425, %v3424
    %v4297 = vpack.c.b16 %v3427, %v3426
    %v4298 = vpack.c.b16 %v3429, %v3428
    %v4299 = vpack.c.b16 %v3431, %v3430
    %v4300 = vpack.c.b16 %v3433, %v3432
    %v4301 = vpack.c.b16 %v3435, %v3434
    %v4302 = vpack.c.b16 %v3437, %v3436
    %v4303 = vpack.c.b16 %v3439, %v3438
    %v4304 = vpack.c.b16 %v3441, %v3440
    %v4305 = vpack.c.b16 %v3443, %v3442
    %v4306 = vpack.c.b16 %v3445, %v3444
    %v4307 = vpack.c.b16 %v3447, %v3446
    %v4308 = vpack.c.b16 %v3449, %v3448
    %v4309 = vpack.c.b16 %v3451, %v3450
    %v4310 = vpack.c.b16 %v3453, %v3452
    %v4311 = vpack.c.b16 %v3455, %v3454
    %v4312 = vpack.c.b16 %v3457, %v3456
    %v4313 = vpack.c.b16 %v3459, %v3458
    %v4314 = vpack.c.b16 %v3461, %v3460
    %v4315 = vpack.c.b16 %v3463, %v3462
    %v4316 = vpack.c.b16 %v3465, %v3464
    %v4317 = vpack.c.b16 %v3467, %v3466
    %v4318 = vpack.c.b16 %v3469, %v3468
    %v4319 = vpack.c.b16 %v3471, %v3470
    %v4320 = vpack.c.b16 %v3473, %v3472
    %v4321 = vpack.c.b16 %v3475, %v3474
    %v4322 = vpack.c.b16 %v3477, %v3476
    %v4323 = vpack.c.b16 %v3479, %v3478
    %v4324 = vpack.c.b16 %v3481, %v3480
    %v4325 = vpack.c.b16 %v3483, %v3482
    %v4326 = vpack.c.b16 %v3485, %v3484
    %v4327 = vpack.c.b16 %v3487, %v3486
    %v4328 = vpack.c.b16 %v3489, %v3488
    %v4329 = vpack.c.b16 %v3491, %v3490
    %v4330 = vpack.c.b16 %v3493, %v3492
    %v4331 = vpack.c.b16 %v3495, %v3494
    %v4332 = vpack.c.b16 %v3497, %v3496
    %v4333 = vpack.c.b16 %v3499, %v3498
    %v4334 = vpack.c.b16 %v3501, %v3500
    %v4335 = vpack.c.b16 %v3503, %v3502
    %v4336 = vpack.c.b16 %v3505, %v3504
    %v4337 = vpack.c.b16 %v3507, %v3506
    %v4338 = vpack.c.b16 %v3509, %v3508
    %v4339 = vpack.c.b16 %v3511, %v3510
    %v4340 = vpack.c.b16 %v3513, %v3512
    %v4341 = vpack.c.b16 %v3515, %v3514
    %v4342 = vpack.c.b16 %v3517, %v3516
    %v4343 = vpack.c.b16 %v3519, %v3518
    %v4344 = vpack.c.b16 %v3521, %v3520
    %v4345 = vpack.c.b16 %v3523, %v3522
    %v4346 = vpack.c.b16 %v3525, %v3524
    %v4347 = vpack.c.b16 %v3527, %v3526
    %v4348 = vpack.c.b16 %v3529, %v3528
    %v4349 = vpack.c.b16 %v3531, %v3530
    %v4350 = vpack.c.b16 %v3533, %v3532
    %v4351 = vpack.c.b16 %v3535, %v3534
    %v4352 = vpack.c.b16 %v3537, %v3536
    %v4353 = vpack.c.b16 %v3539, %v3538
    %v4354 = vpack.c.b16 %v3541, %v3540
    %v4355 = vpack.c.b16 %v3543, %v3542
    %v4356 = vpack.c.b16 %v3545, %v3544
    %v4357 = vpack.c.b16 %v3547, %v3546
    %v4358 = vpack.c.b16 %v3549, %v3548
    %v4359 = vpack.c.b16 %v3551, %v3550
    %v4360 = vpack.c.b16 %v3553, %v3552
    %v4361 = vpack.c.b16 %v3555, %v3554
    %v4362 = vpack.c.b16 %v3557, %v3556
    %v4363 = vpack.c.b16 %v3559, %v3558
    %v4364 = vpack.c.b16 %v3561, %v3560
    %v4365 = vpack.c.b16 %v3563, %v3562
    %v4366 = vpack.c.b16 %v3565, %v3564
    %v4367 = vpack.c.b16 %v3567, %v3566
    %v4368 = vpack.c.b16 %v3569, %v3568
    %v4369 = vpack.c.b16 %v3571, %v3570
    %v4370 = vpack.c.b16 %v3573, %v3572
    %v4371 = vpack.c.b16 %v3575, %v3574
    %v4372 = vpack.c.b16 %v3577, %v3576
    %v4373 = vpack.c.b16 %v3579, %v3578
    %v4374 = vpack.c.b16 %v3581, %v3580
    %v4375 = vpack.c.b16 %v3583, %v3582
    %v4376 = vpack.c.b16 %v3585, %v3584
    %v4377 = vpack.c.b16 %v3587, %v3586
    %v4378 = vpack.c.b16 %v3589, %v3588
    %v4379 = vpack.c.b16 %v3591, %v3590
    %v4380 = vpack.c.b16 %v3593, %v3592
    %v4381 = vpack.c.b16 %v3595, %v3594
    %v4382 = vpack.c.b16 %v3597, %v3596
    %v4383 = vpack.c.b16 %v3599, %v3598
    %v4384 = vpack.c.b16 %v3601, %v3600
    %v4385 = vpack.c.b16 %v3603, %v3602
    %v4386 = vpack.c.b16 %v3605, %v3604
    %v4387 = vpack.c.b16 %v3607, %v3606
    %v4388 = vpack.c.b16 %v3609, %v3608
    %v4389 = vpack.c.b16 %v3611, %v3610
    %v4390 = vpack.c.b16 %v3613, %v3612
    %v4391 = vpack.c.b16 %v3615, %v3614
    %v4392 = vpack.c.b16 %v3617, %v3616
    %v4393 = vpack.c.b16 %v3619, %v3618
    %v4394 = vpack.c.b16 %v3621, %v3620
    %v4395 = vpack.c.b16 %v3623, %v3622
    %v4396 = vpack.c.b16 %v3625, %v3624
    %v4397 = vpack.c.b16 %v3627, %v3626
    %v4398 = vpack.c.b16 %v3629, %v3628
    %v4399 = vpack.c.b16 %v3631, %v3630
    %v4400 = vpack.c.b16 %v3633, %v3632
    %v4401 = vpack.c.b16 %v3635, %v3634
    %v4402 = vpack.c.b16 %v3637, %v3636
    %v4403 = vpack.c.b16 %v3639, %v3638
    %v4404 = vpack.c.b16 %v3641, %v3640
    %v4405 = vpack.c.b16 %v3643, %v3642
    %v4406 = vpack.c.b16 %v3645, %v3644
    %v4407 = vpack.c.b16 %v3647, %v3646
    %v4408 = vpack.c.b16 %v3649, %v3648
    %v4409 = vpack.c.b16 %v3651, %v3650
    %v4410 = vpack.c.b16 %v3653, %v3652
    %v4411 = vpack.c.b16 %v3655, %v3654
    %v4412 = vpack.c.b16 %v3657, %v3656
    %v4413 = vpack.c.b16 %v3659, %v3658
    %v4414 = vpack.c.b16 %v3661, %v3660
    %v4415 = vpack.c.b16 %v3663, %v3662
    %v4416 = vpack.c.b16 %v3665, %v3664
    %v4417 = vpack.c.b16 %v3667, %v3666
    %v4418 = vpack.c.b16 %v3669, %v3668
    %v4419 = vpack.c.b16 %v3671, %v3670
    %v4420 = vpack.c.b16 %v3673, %v3672
    %v4421 = vpack.c.b16 %v3675, %v3674
    %v4422 = vpack.c.b16 %v3677, %v3676
    %v4423 = vpack.c.b16 %v3679, %v3678
    %v4424 = vpack.c.b16 %v3681, %v3680
    %v4425 = vpack.c.b16 %v3683, %v3682
    %v4426 = vpack.c.b16 %v3685, %v3684
    %v4427 = vpack.c.b16 %v3687, %v3686
    %v4428 = vpack.c.b16 %v3689, %v3688
    %v4429 = vpack.c.b16 %v3691, %v3690
    %v4430 = vpack.c.b16 %v3693, %v3692
    %v4431 = vpack.c.b16 %v3695, %v3694
    %v4432 = vpack.c.b16 %v3697, %v3696
    %v4433 = vpack.c.b16 %v3699, %v3698
    %v4434 = vpack.c.b16 %v3701, %v3700
    %v4435 = vpack.c.b16 %v3703, %v3702
    %v4436 = vpack.c.b16 %v3705, %v3704
    %v4437 = vpack.c.b16 %v3707, %v3706
    %v4438 = vpack.c.b16 %v3709, %v3708
    %v4439 = vpack.c.b16 %v3711, %v3710
    %v4440 = vpack.c.b16 %v3713, %v3712
    %v4441 = vpack.c.b16 %v3715, %v3714
    %v4442 = vpack.c.b16 %v3717, %v3716
    %v4443 = vpack.c.b16 %v3719, %v3718
    %v4444 = vpack.c.b16 %v3721, %v3720
    %v4445 = vpack.c.b16 %v3723, %v3722
    %v4446 = vpack.c.b16 %v3725, %v3724
    %v4447 = vpack.c.b16 %v3727, %v3726
    %v4448 = vpack.c.b16 %v3729, %v3728
    %v4449 = vpack.c.b16 %v3731, %v3730
    %v4450 = vpack.c.b16 %v3733, %v3732
    %v4451 = vpack.c.b16 %v3735, %v3734
    %v4452 = vpack.c.b16 %v3737, %v3736
    %v4453 = vpack.c.b16 %v3739, %v3738
    %v4454 = vpack.c.b16 %v3741, %v3740
    %v4455 = vpack.c.b16 %v3743, %v3742
    %v4456 = vpack.c.b16 %v3745, %v3744
    %v4457 = vpack.c.b16 %v3747, %v3746
    %v4458 = vpack.c.b16 %v3749, %v3748
    %v4459 = vpack.c.b16 %v3751, %v3750
    %v4460 = vpack.c.b16 %v3753, %v3752
    %v4461 = vpack.c.b16 %v3755, %v3754
    %v4462 = vpack.c.b16 %v3757, %v3756
    %v4463 = vpack.c.b16 %v3759, %v3758
    %v4464 = vpack.c.b16 %v3761, %v3760
    %v4465 = vpack.c.b16 %v3763, %v3762
    %v4466 = vpack.c.b16 %v3765, %v3764
    %v4467 = vpack.c.b16 %v3767, %v3766
    %v4468 = vpack.c.b16 %v3769, %v3768
    %v4469 = vpack.c.b16 %v3771, %v3770
    %v4470 = vpack.c.b16 %v3773, %v3772
    %v4471 = vpack.c.b16 %v3775, %v3774
    %v4472 = vpack.c.b16 %v3777, %v3776
    %v4473 = vpack.c.b16 %v3779, %v3778
    %v4474 = vpack.c.b16 %v3781, %v3780
    %v4475 = vpack.c.b16 %v3783, %v3782
    %v4476 = vpack.c.b16 %v3785, %v3784
    %v4477 = vpack.c.b16 %v3787, %v3786
    %v4478 = vpack.c.b16 %v3789, %v3788
    %v4479 = vpack.c.b16 %v3791, %v3790
    %v4480 = vpack.c.b16 %v3793, %v3792
    %v4481 = vpack.c.b16 %v3795, %v3794
    %v4482 = vpack.c.b16 %v3797, %v3796
    %v4483 = vpack.c.b16 %v3799, %v3798
    %v4484 = vpack.c.b16 %v3801, %v3800
    %v4485 = vpack.c.b16 %v3803, %v3802
    %v4486 = vpack.c.b16 %v3805, %v3804
    %v4487 = vpack.c.b16 %v3807, %v3806
    %v4488 = vpack.c.b16 %v3809, %v3808
    %v4489 = vpack.c.b16 %v3811, %v3810
    %v4490 = vpack.c.b16 %v3813, %v3812
    %v4491 = vpack.c.b16 %v3815, %v3814
    %v4492 = vpack.c.b16 %v3817, %v3816
    %v4493 = vpack.c.b16 %v3819, %v3818
    %v4494 = vpack.c.b16 %v3821, %v3820
    %v4495 = vpack.c.b16 %v3823, %v3822
    %v4496 = vpack.c.b16 %v3825, %v3824
    %v4497 = vpack.c.b16 %v3827, %v3826
    %v4498 = vpack.c.b16 %v3829, %v3828
    %v4499 = vpack.c.b16 %v3831, %v3830
    %v4500 = vpack.c.b16 %v3833, %v3832
    %v4501 = vpack.c.b16 %v3835, %v3834
    %v4502 = vpack.c.b16 %v3837, %v3836
    %v4503 = vpack.c.b16 %v3839, %v3838
    %v4504 = vpack.c.b16 %v3841, %v3840
    %v4505 = vpack.c.b16 %v3843, %v3842
    %v4506 = vpack.c.b16 %v3845, %v3844
    %v4507 = vpack.c.b16 %v3847, %v3846
    %v4508 = vpack.c.b16 %v3849, %v3848
    %v4509 = vpack.c.b16 %v3851, %v3850
    %v4510 = vpack.c.b16 %v3853, %v3852
    %v4511 = vpack.c.b16 %v3855, %v3854
    %v4512 = vpack.c.b16 %v3857, %v3856
    %v4513 = vpack.c.b16 %v3859, %v3858
    %v4514 = vpack.c.b16 %v3861, %v3860
    %v4515 = vpack.c.b16 %v3863, %v3862
    %v4516 = vpack.c.b16 %v3865, %v3864
    %v4517 = vpack.c.b16 %v3867, %v3866
    %v4518 = vpack.c.b16 %v3869, %v3868
    %v4519 = vpack.c.b16 %v3871, %v3870
    %v4520 = vpack.c.b16 %v3873, %v3872
    %v4521 = vpack.c.b16 %v3875, %v3874
    %v4522 = vpack.c.b16 %v3877, %v3876
    %v4523 = vpack.c.b16 %v3879, %v3878
    %v4524 = vpack.c.b16 %v3881, %v3880
    %v4525 = vpack.c.b16 %v3883, %v3882
    %v4526 = vpack.c.b16 %v3885, %v3884
    %v4527 = vpack.c.b16 %v3887, %v3886
    %v4528 = vpack.c.b16 %v3889, %v3888
    %v4529 = vpack.c.b16 %v3891, %v3890
    %v4530 = vpack.c.b16 %v3893, %v3892
    %v4531 = vpack.c.b16 %v3895, %v3894
    %v4532 = vpack.c.b16 %v3897, %v3896
    %v4533 = vpack.c.b16 %v3899, %v3898
    %v4534 = vpack.c.b16 %v3901, %v3900
    %v4535 = vpack.c.b16 %v3903, %v3902
    %v4536 = vpack.c.b16 %v3905, %v3904
    %v4537 = vpack.c.b16 %v3907, %v3906
    %v4538 = vpack.c.b16 %v3909, %v3908
    %v4539 = vpack.c.b16 %v3911, %v3910
    %v4540 = vpack.c.b16 %v3913, %v3912
    %v4541 = vpack.c.b16 %v3915, %v3914
    %v4542 = vpack.c.b16 %v3917, %v3916
    %v4543 = vpack.c.b16 %v3919, %v3918
    %v4544 = vpack.c.b16 %v3921, %v3920
    %v4545 = vpack.c.b16 %v3923, %v3922
    %v4546 = vpack.c.b16 %v3925, %v3924
    %v4547 = vpack.c.b16 %v3927, %v3926
    %v4548 = vpack.c.b16 %v3929, %v3928
    %v4549 = vpack.c.b16 %v3931, %v3930
    %v4550 = vpack.c.b16 %v3933, %v3932
    %v4551 = vpack.c.b16 %v3935, %v3934
    %v4552 = vpack.c.b16 %v3937, %v3936
    %v4553 = vpack.c.b16 %v3939, %v3938
    %v4554 = vpack.c.b16 %v3941, %v3940
    %v4555 = vpack.c.b16 %v3943, %v3942
    %v4556 = vpack.c.b16 %v3945, %v3944
    %v4557 = vpack.c.b16 %v3947, %v3946
    %v4558 = vpack.c.b16 %v3949, %v3948
    %v4559 = vpack.c.b16 %v3951, %v3950
    %v4560 = vpack.c.b16 %v3953, %v3952
    %v4561 = vpack.c.b16 %v3955, %v3954
    %v4562 = vpack.c.b16 %v3957, %v3956
    %v4563 = vpack.c.b16 %v3959, %v3958
    %v4564 = vpack.c.b16 %v3961, %v3960
    %v4565 = vpack.c.b16 %v3963, %v3962
    %v4566 = vpack.c.b16 %v3965, %v3964
    %v4567 = vpack.c.b16 %v3967, %v3966
    %v4568 = vpack.c.b16 %v3969, %v3968
    %v4569 = vpack.c.b16 %v3971, %v3970
    %v4570 = vpack.c.b16 %v3973, %v3972
    %v4571 = vpack.c.b16 %v3975, %v3974
    %v4572 = vpack.c.b16 %v3977, %v3976
    %v4573 = vpack.c.b16 %v3979, %v3978
    %v4574 = vpack.c.b16 %v3981, %v3980
    %v4575 = vpack.c.b16 %v3983, %v3982
    %v4576 = vpack.c.b16 %v3985, %v3984
    %v4577 = vpack.c.b16 %v3987, %v3986
    %v4578 = vpack.c.b16 %v3989, %v3988
    %v4579 = vpack.c.b16 %v3991, %v3990
    %v4580 = vpack.c.b16 %v3993, %v3992
    %v4581 = vpack.c.b16 %v3995, %v3994
    %v4582 = vpack.c.b16 %v3997, %v3996
    %v4583 = vpack.c.b16 %v3999, %v3998
    %v4584 = vpack.c.b16 %v4001, %v4000
    %v4585 = vpack.c.b16 %v4003, %v4002
    %v4586 = vpack.c.b16 %v4005, %v4004
    %v4587 = vpack.c.b16 %v4007, %v4006
    %v4588 = vpack.c.b16 %v4009, %v4008
    %v4589 = vpack.c.b16 %v4011, %v4010
    %v4590 = vpack.c.b16 %v4013, %v4012
    %v4591 = vpack.c.b16 %v4015, %v4014
    %5168 = vmatprep.subr.bf16.mxu0 0
    %5169 = vmatpush1.bf16.msra.mxu0 %v4016
    %5170 = vmatprep.subr.bf16.mxu0 0
    %5171 = vmatpush1.bf16.msra.mxu0 %v4017
    %5172 = vmatprep.subr.bf16.mxu0 0
    %5173 = vmatpush1.bf16.msra.mxu0 %v4018
    %5174 = vmatprep.subr.bf16.mxu0 0
    %5175 = vmatpush1.bf16.msra.mxu0 %v4019
    %5176 = vmatprep.subr.bf16.mxu0 0
    %5177 = vmatpush1.bf16.msra.mxu0 %v4020
    %5178 = vmatprep.subr.bf16.mxu0 0
    %5179 = vmatpush1.bf16.msra.mxu0 %v4021
    %5180 = vmatprep.subr.bf16.mxu0 0
    %5181 = vmatpush1.bf16.msra.mxu0 %v4022
    %5182 = vmatprep.subr.bf16.mxu0 0
    %5183 = vmatpush1.bf16.msra.mxu0 %v4023
    %5184 = vmatprep.subr.bf16.mxu0 0
    %5185 = vmatpush1.bf16.msra.mxu0 %v4024
    %5186 = vmatprep.subr.bf16.mxu0 0
    %5187 = vmatpush1.bf16.msra.mxu0 %v4025
    %5188 = vmatprep.subr.bf16.mxu0 0
    %5189 = vmatpush1.bf16.msra.mxu0 %v4026
    %5190 = vmatprep.subr.bf16.mxu0 0
    %5191 = vmatpush1.bf16.msra.mxu0 %v4027
    %5192 = vmatprep.subr.bf16.mxu0 0
    %5193 = vmatpush1.bf16.msra.mxu0 %v4028
    %5194 = vmatprep.subr.bf16.mxu0 0
    %5195 = vmatpush1.bf16.msra.mxu0 %v4029
    %5196 = vmatprep.subr.bf16.mxu0 0
    %5197 = vmatpush1.bf16.msra.mxu0 %v4030
    %5198 = vmatprep.subr.bf16.mxu0 0
    %5199 = vmatpush1.bf16.msra.mxu0 %v4031
    %5200 = vmatprep.mubr.bf16.mxu0 %v1236
    %5201 = vmatmul.mubr.bf16.gmra.mrb[0].mxu0 %v1222
    %v5202 = vpop.f32.mrb[0].mxu0
    %v5203 = vadd.f32 %v1188, %v5202
    %v5204 = vpop.f32.mrb[0].mxu0
    %v5205 = vpop.f32.mrb[0].mxu0
    %v5206 = vpop.f32.mrb[0].mxu0
    %5207 = vdwg.mxu0
    %5208 = vmatprep.subr.bf16.mxu0 0
    %5209 = vmatpush1.bf16.msra.mxu0 %v4032
    %5210 = vmatprep.subr.bf16.mxu0 0
    %5211 = vmatpush1.bf16.msra.mxu0 %v4033
    %5212 = vmatprep.subr.bf16.mxu0 0
    %5213 = vmatpush1.bf16.msra.mxu0 %v4034
    %5214 = vmatprep.subr.bf16.mxu0 0
    %5215 = vmatpush1.bf16.msra.mxu0 %v4035
    %5216 = vmatprep.subr.bf16.mxu0 0
    %5217 = vmatpush1.bf16.msra.mxu0 %v4036
    %5218 = vmatprep.subr.bf16.mxu0 0
    %5219 = vmatpush1.bf16.msra.mxu0 %v4037
    %5220 = vmatprep.subr.bf16.mxu0 0
    %5221 = vmatpush1.bf16.msra.mxu0 %v4038
    %5222 = vmatprep.subr.bf16.mxu0 0
    %5223 = vmatpush1.bf16.msra.mxu0 %v4039
    %5224 = vmatprep.subr.bf16.mxu0 0
    %5225 = vmatpush1.bf16.msra.mxu0 %v4040
    %5226 = vmatprep.subr.bf16.mxu0 0
    %5227 = vmatpush1.bf16.msra.mxu0 %v4041
    %5228 = vmatprep.subr.bf16.mxu0 0
    %5229 = vmatpush1.bf16.msra.mxu0 %v4042
    %5230 = vmatprep.subr.bf16.mxu0 0
    %5231 = vmatpush1.bf16.msra.mxu0 %v4043
    %5232 = vmatprep.subr.bf16.mxu0 0
    %5233 = vmatpush1.bf16.msra.mxu0 %v4044
    %5234 = vmatprep.subr.bf16.mxu0 0
    %5235 = vmatpush1.bf16.msra.mxu0 %v4045
    %5236 = vmatprep.subr.bf16.mxu0 0
    %5237 = vmatpush1.bf16.msra.mxu0 %v4046
    %5238 = vmatprep.subr.bf16.mxu0 0
    %5239 = vmatpush1.bf16.msra.mxu0 %v4047
    %5240 = vmatprep.mubr.bf16.mxu0 %v1246
    %5241 = vmatmul.mubr.bf16.gmra.mrb[0].mxu0 %v1244
    %v5242 = vpop.f32.mrb[0].mxu0
    %v5243 = vadd.f32 %v5203, %v5242
    %v5244 = vpop.f32.mrb[0].mxu0
    %v5245 = vpop.f32.mrb[0].mxu0
    %v5246 = vpop.f32.mrb[0].mxu0
    %5247 = vdwg.mxu0
    %5248 = vmatprep.subr.bf16.mxu0 0
    %5249 = vmatpush1.bf16.msra.mxu0 %v4048
    %5250 = vmatprep.subr.bf16.mxu0 0
    %5251 = vmatpush1.bf16.msra.mxu0 %v4049
    %5252 = vmatprep.subr.bf16.mxu0 0
    %5253 = vmatpush1.bf16.msra.mxu0 %v4050
    %5254 = vmatprep.subr.bf16.mxu0 0
    %5255 = vmatpush1.bf16.msra.mxu0 %v4051
    %5256 = vmatprep.subr.bf16.mxu0 0
    %5257 = vmatpush1.bf16.msra.mxu0 %v4052
    %5258 = vmatprep.subr.bf16.mxu0 0
    %5259 = vmatpush1.bf16.msra.mxu0 %v4053
    %5260 = vmatprep.subr.bf16.mxu0 0
    %5261 = vmatpush1.bf16.msra.mxu0 %v4054
    %5262 = vmatprep.subr.bf16.mxu0 0
    %5263 = vmatpush1.bf16.msra.mxu0 %v4055
    %5264 = vmatprep.subr.bf16.mxu0 0
    %5265 = vmatpush1.bf16.msra.mxu0 %v4056
    %5266 = vmatprep.subr.bf16.mxu0 0
    %5267 = vmatpush1.bf16.msra.mxu0 %v4057
    %5268 = vmatprep.subr.bf16.mxu0 0
    %5269 = vmatpush1.bf16.msra.mxu0 %v4058
    %5270 = vmatprep.subr.bf16.mxu0 0
    %5271 = vmatpush1.bf16.msra.mxu0 %v4059
    %5272 = vmatprep.subr.bf16.mxu0 0
    %5273 = vmatpush1.bf16.msra.mxu0 %v4060
    %5274 = vmatprep.subr.bf16.mxu0 0
    %5275 = vmatpush1.bf16.msra.mxu0 %v4061
    %5276 = vmatprep.subr.bf16.mxu0 0
    %5277 = vmatpush1.bf16.msra.mxu0 %v4062
    %5278 = vmatprep.subr.bf16.mxu0 0
    %5279 = vmatpush1.bf16.msra.mxu0 %v4063
    %5280 = vmatprep.mubr.bf16.mxu0 %v1243
    %5281 = vmatmul.mubr.bf16.gmra.mrb[0].mxu0 %v1229
    %v5282 = vpop.f32.mrb[0].mxu0
    %v5283 = vadd.f32 %v5243, %v5282
    %v5284 = vpop.f32.mrb[0].mxu0
    %v5285 = vpop.f32.mrb[0].mxu0
    %v5286 = vpop.f32.mrb[0].mxu0
    %5287 = vdwg.mxu0
    %5288 = vmatprep.subr.bf16.mxu0 0
    %5289 = vmatpush1.bf16.msra.mxu0 %v4064
    %5290 = vmatprep.subr.bf16.mxu0 0
    %5291 = vmatpush1.bf16.msra.mxu0 %v4065
    %5292 = vmatprep.subr.bf16.mxu0 0
    %5293 = vmatpush1.bf16.msra.mxu0 %v4066
    %5294 = vmatprep.subr.bf16.mxu0 0
    %5295 = vmatpush1.bf16.msra.mxu0 %v4067
    %5296 = vmatprep.subr.bf16.mxu0 0
    %5297 = vmatpush1.bf16.msra.mxu0 %v4068
    %5298 = vmatprep.subr.bf16.mxu0 0
    %5299 = vmatpush1.bf16.msra.mxu0 %v4069
    %5300 = vmatprep.subr.bf16.mxu0 0
    %5301 = vmatpush1.bf16.msra.mxu0 %v4070
    %5302 = vmatprep.subr.bf16.mxu0 0
    %5303 = vmatpush1.bf16.msra.mxu0 %v4071
    %5304 = vmatprep.subr.bf16.mxu0 0
    %5305 = vmatpush1.bf16.msra.mxu0 %v4072
    %5306 = vmatprep.subr.bf16.mxu0 0
    %5307 = vmatpush1.bf16.msra.mxu0 %v4073
    %5308 = vmatprep.subr.bf16.mxu0 0
    %5309 = vmatpush1.bf16.msra.mxu0 %v4074
    %5310 = vmatprep.subr.bf16.mxu0 0
    %5311 = vmatpush1.bf16.msra.mxu0 %v4075
    %5312 = vmatprep.subr.bf16.mxu0 0
    %5313 = vmatpush1.bf16.msra.mxu0 %v4076
    %5314 = vmatprep.subr.bf16.mxu0 0
    %5315 = vmatpush1.bf16.msra.mxu0 %v4077
    %5316 = vmatprep.subr.bf16.mxu0 0
    %5317 = vmatpush1.bf16.msra.mxu0 %v4078
    %5318 = vmatprep.subr.bf16.mxu0 0
    %5319 = vmatpush1.bf16.msra.mxu0 %v4079
    %5320 = vmatprep.mubr.bf16.mxu0 %v1247
    %5321 = vmatmul.mubr.bf16.gmra.mrb[0].mxu0 %v1245
    %v5322 = vpop.f32.mrb[0].mxu0
    %v5323 = vadd.f32 %v5283, %v5322
    %v5324 = vpop.f32.mrb[0].mxu0
    %v5325 = vpop.f32.mrb[0].mxu0
    %v5326 = vpop.f32.mrb[0].mxu0
    %5327 = vdwg.mxu0
    %5328 = vmatprep.subr.bf16.mxu0 0
    %5329 = vmatpush1.bf16.msra.mxu0 %v4080
    %5330 = vmatprep.subr.bf16.mxu0 0
    %5331 = vmatpush1.bf16.msra.mxu0 %v4081
    %5332 = vmatprep.subr.bf16.mxu0 0
    %5333 = vmatpush1.bf16.msra.mxu0 %v4082
    %5334 = vmatprep.subr.bf16.mxu0 0
    %5335 = vmatpush1.bf16.msra.mxu0 %v4083
    %5336 = vmatprep.subr.bf16.mxu0 0
    %5337 = vmatpush1.bf16.msra.mxu0 %v4084
    %5338 = vmatprep.subr.bf16.mxu0 0
    %5339 = vmatpush1.bf16.msra.mxu0 %v4085
    %5340 = vmatprep.subr.bf16.mxu0 0
    %5341 = vmatpush1.bf16.msra.mxu0 %v4086
    %5342 = vmatprep.subr.bf16.mxu0 0
    %5343 = vmatpush1.bf16.msra.mxu0 %v4087
    %5344 = vmatprep.subr.bf16.mxu0 0
    %5345 = vmatpush1.bf16.msra.mxu0 %v4088
    %5346 = vmatprep.subr.bf16.mxu0 0
    %5347 = vmatpush1.bf16.msra.mxu0 %v4089
    %5348 = vmatprep.subr.bf16.mxu0 0
    %5349 = vmatpush1.bf16.msra.mxu0 %v4090
    %5350 = vmatprep.subr.bf16.mxu0 0
    %5351 = vmatpush1.bf16.msra.mxu0 %v4091
    %5352 = vmatprep.subr.bf16.mxu0 0
    %5353 = vmatpush1.bf16.msra.mxu0 %v4092
    %5354 = vmatprep.subr.bf16.mxu0 0
    %5355 = vmatpush1.bf16.msra.mxu0 %v4093
    %5356 = vmatprep.subr.bf16.mxu0 0
    %5357 = vmatpush1.bf16.msra.mxu0 %v4094
    %5358 = vmatprep.subr.bf16.mxu0 0
    %5359 = vmatpush1.bf16.msra.mxu0 %v4095
    %5360 = vmatprep.mubr.bf16.mxu0 %v1285
    %5361 = vmatmul.mubr.bf16.gmra.mrb[0].mxu0 %v1271
    %v5362 = vpop.f32.mrb[0].mxu0
    %v5363 = vadd.f32 %v5323, %v5362
    %v5364 = vpop.f32.mrb[0].mxu0
    %v5365 = vpop.f32.mrb[0].mxu0
    %v5366 = vpop.f32.mrb[0].mxu0
    %5367 = vdwg.mxu0
    %5368 = vmatprep.subr.bf16.mxu0 0
    %5369 = vmatpush1.bf16.msra.mxu0 %v4096
    %5370 = vmatprep.subr.bf16.mxu0 0
    %5371 = vmatpush1.bf16.msra.mxu0 %v4097
    %5372 = vmatprep.subr.bf16.mxu0 0
    %5373 = vmatpush1.bf16.msra.mxu0 %v4098
    %5374 = vmatprep.subr.bf16.mxu0 0
    %5375 = vmatpush1.bf16.msra.mxu0 %v4099
    %5376 = vmatprep.subr.bf16.mxu0 0
    %5377 = vmatpush1.bf16.msra.mxu0 %v4100
    %5378 = vmatprep.subr.bf16.mxu0 0
    %5379 = vmatpush1.bf16.msra.mxu0 %v4101
    %5380 = vmatprep.subr.bf16.mxu0 0
    %5381 = vmatpush1.bf16.msra.mxu0 %v4102
    %5382 = vmatprep.subr.bf16.mxu0 0
    %5383 = vmatpush1.bf16.msra.mxu0 %v4103
    %5384 = vmatprep.subr.bf16.mxu0 0
    %5385 = vmatpush1.bf16.msra.mxu0 %v4104
    %5386 = vmatprep.subr.bf16.mxu0 0
    %5387 = vmatpush1.bf16.msra.mxu0 %v4105
    %5388 = vmatprep.subr.bf16.mxu0 0
    %5389 = vmatpush1.bf16.msra.mxu0 %v4106
    %5390 = vmatprep.subr.bf16.mxu0 0
    %5391 = vmatpush1.bf16.msra.mxu0 %v4107
    %5392 = vmatprep.subr.bf16.mxu0 0
    %5393 = vmatpush1.bf16.msra.mxu0 %v4108
    %5394 = vmatprep.subr.bf16.mxu0 0
    %5395 = vmatpush1.bf16.msra.mxu0 %v4109
    %5396 = vmatprep.subr.bf16.mxu0 0
    %5397 = vmatpush1.bf16.msra.mxu0 %v4110
    %5398 = vmatprep.subr.bf16.mxu0 0
    %5399 = vmatpush1.bf16.msra.mxu0 %v4111
    %5400 = vmatprep.mubr.bf16.mxu0 %v1295
    %5401 = vmatmul.mubr.bf16.gmra.mrb[0].mxu0 %v1293
    %v5402 = vpop.f32.mrb[0].mxu0
    %v5403 = vadd.f32 %v5363, %v5402
    %v5404 = vpop.f32.mrb[0].mxu0
    %v5405 = vpop.f32.mrb[0].mxu0
    %v5406 = vpop.f32.mrb[0].mxu0
    %5407 = vdwg.mxu0
    %5408 = vmatprep.subr.bf16.mxu0 0
    %5409 = vmatpush1.bf16.msra.mxu0 %v4112
    %5410 = vmatprep.subr.bf16.mxu0 0
    %5411 = vmatpush1.bf16.msra.mxu0 %v4113
    %5412 = vmatprep.subr.bf16.mxu0 0
    %5413 = vmatpush1.bf16.msra.mxu0 %v4114
    %5414 = vmatprep.subr.bf16.mxu0 0
    %5415 = vmatpush1.bf16.msra.mxu0 %v4115
    %5416 = vmatprep.subr.bf16.mxu0 0
    %5417 = vmatpush1.bf16.msra.mxu0 %v4116
    %5418 = vmatprep.subr.bf16.mxu0 0
    %5419 = vmatpush1.bf16.msra.mxu0 %v4117
    %5420 = vmatprep.subr.bf16.mxu0 0
    %5421 = vmatpush1.bf16.msra.mxu0 %v4118
    %5422 = vmatprep.subr.bf16.mxu0 0
    %5423 = vmatpush1.bf16.msra.mxu0 %v4119
    %5424 = vmatprep.subr.bf16.mxu0 0
    %5425 = vmatpush1.bf16.msra.mxu0 %v4120
    %5426 = vmatprep.subr.bf16.mxu0 0
    %5427 = vmatpush1.bf16.msra.mxu0 %v4121
    %5428 = vmatprep.subr.bf16.mxu0 0
    %5429 = vmatpush1.bf16.msra.mxu0 %v4122
    %5430 = vmatprep.subr.bf16.mxu0 0
    %5431 = vmatpush1.bf16.msra.mxu0 %v4123
    %5432 = vmatprep.subr.bf16.mxu0 0
    %5433 = vmatpush1.bf16.msra.mxu0 %v4124
    %5434 = vmatprep.subr.bf16.mxu0 0
    %5435 = vmatpush1.bf16.msra.mxu0 %v4125
    %5436 = vmatprep.subr.bf16.mxu0 0
    %5437 = vmatpush1.bf16.msra.mxu0 %v4126
    %5438 = vmatprep.subr.bf16.mxu0 0
    %5439 = vmatpush1.bf16.msra.mxu0 %v4127
    %5440 = vmatprep.mubr.bf16.mxu0 %v1292
    %5441 = vmatmul.mubr.bf16.gmra.mrb[0].mxu0 %v1278
    %v5442 = vpop.f32.mrb[0].mxu0
    %v5443 = vadd.f32 %v5403, %v5442
    %v5444 = vpop.f32.mrb[0].mxu0
    %v5445 = vpop.f32.mrb[0].mxu0
    %v5446 = vpop.f32.mrb[0].mxu0
    %5447 = vdwg.mxu0
    %5448 = vmatprep.subr.bf16.mxu0 0
    %5449 = vmatpush1.bf16.msra.mxu0 %v4128
    %5450 = vmatprep.subr.bf16.mxu0 0
    %5451 = vmatpush1.bf16.msra.mxu0 %v4129
    %5452 = vmatprep.subr.bf16.mxu0 0
    %5453 = vmatpush1.bf16.msra.mxu0 %v4130
    %5454 = vmatprep.subr.bf16.mxu0 0
    %5455 = vmatpush1.bf16.msra.mxu0 %v4131
    %5456 = vmatprep.subr.bf16.mxu0 0
    %5457 = vmatpush1.bf16.msra.mxu0 %v4132
    %5458 = vmatprep.subr.bf16.mxu0 0
    %5459 = vmatpush1.bf16.msra.mxu0 %v4133
    %5460 = vmatprep.subr.bf16.mxu0 0
    %5461 = vmatpush1.bf16.msra.mxu0 %v4134
    %5462 = vmatprep.subr.bf16.mxu0 0
    %5463 = vmatpush1.bf16.msra.mxu0 %v4135
    %5464 = vmatprep.subr.bf16.mxu0 0
    %5465 = vmatpush1.bf16.msra.mxu0 %v4136
    %5466 = vmatprep.subr.bf16.mxu0 0
    %5467 = vmatpush1.bf16.msra.mxu0 %v4137
    %5468 = vmatprep.subr.bf16.mxu0 0
    %5469 = vmatpush1.bf16.msra.mxu0 %v4138
    %5470 = vmatprep.subr.bf16.mxu0 0
    %5471 = vmatpush1.bf16.msra.mxu0 %v4139
    %5472 = vmatprep.subr.bf16.mxu0 0
    %5473 = vmatpush1.bf16.msra.mxu0 %v4140
    %5474 = vmatprep.subr.bf16.mxu0 0
    %5475 = vmatpush1.bf16.msra.mxu0 %v4141
    %5476 = vmatprep.subr.bf16.mxu0 0
    %5477 = vmatpush1.bf16.msra.mxu0 %v4142
    %5478 = vmatprep.subr.bf16.mxu0 0
    %5479 = vmatpush1.bf16.msra.mxu0 %v4143
    %5480 = vmatprep.mubr.bf16.mxu0 %v1296
    %5481 = vmatmul.mubr.bf16.gmra.mrb[0].mxu0 %v1294
    %v5482 = vpop.f32.mrb[0].mxu0
    %v5483 = vadd.f32 %v5443, %v5482
    %v5484 = vpop.f32.mrb[0].mxu0
    %v5485 = vpop.f32.mrb[0].mxu0
    %v5486 = vpop.f32.mrb[0].mxu0
    %5487 = vdwg.mxu0
    %5488 = vmatprep.subr.bf16.mxu0 0
    %5489 = vmatpush1.bf16.msra.mxu0 %v4144
    %5490 = vmatprep.subr.bf16.mxu0 0
    %5491 = vmatpush1.bf16.msra.mxu0 %v4145
    %5492 = vmatprep.subr.bf16.mxu0 0
    %5493 = vmatpush1.bf16.msra.mxu0 %v4146
    %5494 = vmatprep.subr.bf16.mxu0 0
    %5495 = vmatpush1.bf16.msra.mxu0 %v4147
    %5496 = vmatprep.subr.bf16.mxu0 0
    %5497 = vmatpush1.bf16.msra.mxu0 %v4148
    %5498 = vmatprep.subr.bf16.mxu0 0
    %5499 = vmatpush1.bf16.msra.mxu0 %v4149
    %5500 = vmatprep.subr.bf16.mxu0 0
    %5501 = vmatpush1.bf16.msra.mxu0 %v4150
    %5502 = vmatprep.subr.bf16.mxu0 0
    %5503 = vmatpush1.bf16.msra.mxu0 %v4151
    %5504 = vmatprep.subr.bf16.mxu0 0
    %5505 = vmatpush1.bf16.msra.mxu0 %v4152
    %5506 = vmatprep.subr.bf16.mxu0 0
    %5507 = vmatpush1.bf16.msra.mxu0 %v4153
    %5508 = vmatprep.subr.bf16.mxu0 0
    %5509 = vmatpush1.bf16.msra.mxu0 %v4154
    %5510 = vmatprep.subr.bf16.mxu0 0
    %5511 = vmatpush1.bf16.msra.mxu0 %v4155
    %5512 = vmatprep.subr.bf16.mxu0 0
    %5513 = vmatpush1.bf16.msra.mxu0 %v4156
    %5514 = vmatprep.subr.bf16.mxu0 0
    %5515 = vmatpush1.bf16.msra.mxu0 %v4157
    %5516 = vmatprep.subr.bf16.mxu0 0
    %5517 = vmatpush1.bf16.msra.mxu0 %v4158
    %5518 = vmatprep.subr.bf16.mxu0 0
    %5519 = vmatpush1.bf16.msra.mxu0 %v4159
    %5520 = vmatprep.mubr.bf16.mxu0 %v1334
    %5521 = vmatmul.mubr.bf16.gmra.mrb[0].mxu0 %v1320
    %v5522 = vpop.f32.mrb[0].mxu0
    %v5523 = vadd.f32 %v5483, %v5522
    %v5524 = vpop.f32.mrb[0].mxu0
    %v5525 = vpop.f32.mrb[0].mxu0
    %v5526 = vpop.f32.mrb[0].mxu0
    %5527 = vdwg.mxu0
    %5528 = vmatprep.subr.bf16.mxu0 0
    %5529 = vmatpush1.bf16.msra.mxu0 %v4160
    %5530 = vmatprep.subr.bf16.mxu0 0
    %5531 = vmatpush1.bf16.msra.mxu0 %v4161
    %5532 = vmatprep.subr.bf16.mxu0 0
    %5533 = vmatpush1.bf16.msra.mxu0 %v4162
    %5534 = vmatprep.subr.bf16.mxu0 0
    %5535 = vmatpush1.bf16.msra.mxu0 %v4163
    %5536 = vmatprep.subr.bf16.mxu0 0
    %5537 = vmatpush1.bf16.msra.mxu0 %v4164
    %5538 = vmatprep.subr.bf16.mxu0 0
    %5539 = vmatpush1.bf16.msra.mxu0 %v4165
    %5540 = vmatprep.subr.bf16.mxu0 0
    %5541 = vmatpush1.bf16.msra.mxu0 %v4166
    %5542 = vmatprep.subr.bf16.mxu0 0
    %5543 = vmatpush1.bf16.msra.mxu0 %v4167
    %5544 = vmatprep.subr.bf16.mxu0 0
    %5545 = vmatpush1.bf16.msra.mxu0 %v4168
    %5546 = vmatprep.subr.bf16.mxu0 0
    %5547 = vmatpush1.bf16.msra.mxu0 %v4169
    %5548 = vmatprep.subr.bf16.mxu0 0
    %5549 = vmatpush1.bf16.msra.mxu0 %v4170
    %5550 = vmatprep.subr.bf16.mxu0 0
    %5551 = vmatpush1.bf16.msra.mxu0 %v4171
    %5552 = vmatprep.subr.bf16.mxu0 0
    %5553 = vmatpush1.bf16.msra.mxu0 %v4172
    %5554 = vmatprep.subr.bf16.mxu0 0
    %5555 = vmatpush1.bf16.msra.mxu0 %v4173
    %5556 = vmatprep.subr.bf16.mxu0 0
    %5557 = vmatpush1.bf16.msra.mxu0 %v4174
    %5558 = vmatprep.subr.bf16.mxu0 0
    %5559 = vmatpush1.bf16.msra.mxu0 %v4175
    %5560 = vmatprep.mubr.bf16.mxu0 %v1344
    %5561 = vmatmul.mubr.bf16.gmra.mrb[0].mxu0 %v1342
    %v5562 = vpop.f32.mrb[0].mxu0
    %v5563 = vadd.f32 %v5523, %v5562
    %v5564 = vpop.f32.mrb[0].mxu0
    %v5565 = vpop.f32.mrb[0].mxu0
    %v5566 = vpop.f32.mrb[0].mxu0
    %5567 = vdwg.mxu0
    %5568 = vmatprep.subr.bf16.mxu0 0
    %5569 = vmatpush1.bf16.msra.mxu0 %v4176
    %5570 = vmatprep.subr.bf16.mxu0 0
    %5571 = vmatpush1.bf16.msra.mxu0 %v4177
    %5572 = vmatprep.subr.bf16.mxu0 0
    %5573 = vmatpush1.bf16.msra.mxu0 %v4178
    %5574 = vmatprep.subr.bf16.mxu0 0
    %5575 = vmatpush1.bf16.msra.mxu0 %v4179
    %5576 = vmatprep.subr.bf16.mxu0 0
    %5577 = vmatpush1.bf16.msra.mxu0 %v4180
    %5578 = vmatprep.subr.bf16.mxu0 0
    %5579 = vmatpush1.bf16.msra.mxu0 %v4181
    %5580 = vmatprep.subr.bf16.mxu0 0
    %5581 = vmatpush1.bf16.msra.mxu0 %v4182
    %5582 = vmatprep.subr.bf16.mxu0 0
    %5583 = vmatpush1.bf16.msra.mxu0 %v4183
    %5584 = vmatprep.subr.bf16.mxu0 0
    %5585 = vmatpush1.bf16.msra.mxu0 %v4184
    %5586 = vmatprep.subr.bf16.mxu0 0
    %5587 = vmatpush1.bf16.msra.mxu0 %v4185
    %5588 = vmatprep.subr.bf16.mxu0 0
    %5589 = vmatpush1.bf16.msra.mxu0 %v4186
    %5590 = vmatprep.subr.bf16.mxu0 0
    %5591 = vmatpush1.bf16.msra.mxu0 %v4187
    %5592 = vmatprep.subr.bf16.mxu0 0
    %5593 = vmatpush1.bf16.msra.mxu0 %v4188
    %5594 = vmatprep.subr.bf16.mxu0 0
    %5595 = vmatpush1.bf16.msra.mxu0 %v4189
    %5596 = vmatprep.subr.bf16.mxu0 0
    %5597 = vmatpush1.bf16.msra.mxu0 %v4190
    %5598 = vmatprep.subr.bf16.mxu0 0
    %5599 = vmatpush1.bf16.msra.mxu0 %v4191
    %5600 = vmatprep.mubr.bf16.mxu0 %v1341
    %5601 = vmatmul.mubr.bf16.gmra.mrb[0].mxu0 %v1327
    %v5602 = vpop.f32.mrb[0].mxu0
    %v5603 = vadd.f32 %v5563, %v5602
    %v5604 = vpop.f32.mrb[0].mxu0
    %v5605 = vpop.f32.mrb[0].mxu0
    %v5606 = vpop.f32.mrb[0].mxu0
    %5607 = vdwg.mxu0
    %5608 = vmatprep.subr.bf16.mxu0 0
    %5609 = vmatpush1.bf16.msra.mxu0 %v4192
    %5610 = vmatprep.subr.bf16.mxu0 0
    %5611 = vmatpush1.bf16.msra.mxu0 %v4193
    %5612 = vmatprep.subr.bf16.mxu0 0
    %5613 = vmatpush1.bf16.msra.mxu0 %v4194
    %5614 = vmatprep.subr.bf16.mxu0 0
    %5615 = vmatpush1.bf16.msra.mxu0 %v4195
    %5616 = vmatprep.subr.bf16.mxu0 0
    %5617 = vmatpush1.bf16.msra.mxu0 %v4196
    %5618 = vmatprep.subr.bf16.mxu0 0
    %5619 = vmatpush1.bf16.msra.mxu0 %v4197
    %5620 = vmatprep.subr.bf16.mxu0 0
    %5621 = vmatpush1.bf16.msra.mxu0 %v4198
    %5622 = vmatprep.subr.bf16.mxu0 0
    %5623 = vmatpush1.bf16.msra.mxu0 %v4199
    %5624 = vmatprep.subr.bf16.mxu0 0
    %5625 = vmatpush1.bf16.msra.mxu0 %v4200
    %5626 = vmatprep.subr.bf16.mxu0 0
    %5627 = vmatpush1.bf16.msra.mxu0 %v4201
    %5628 = vmatprep.subr.bf16.mxu0 0
    %5629 = vmatpush1.bf16.msra.mxu0 %v4202
    %5630 = vmatprep.subr.bf16.mxu0 0
    %5631 = vmatpush1.bf16.msra.mxu0 %v4203
    %5632 = vmatprep.subr.bf16.mxu0 0
    %5633 = vmatpush1.bf16.msra.mxu0 %v4204
    %5634 = vmatprep.subr.bf16.mxu0 0
    %5635 = vmatpush1.bf16.msra.mxu0 %v4205
    %5636 = vmatprep.subr.bf16.mxu0 0
    %5637 = vmatpush1.bf16.msra.mxu0 %v4206
    %5638 = vmatprep.subr.bf16.mxu0 0
    %5639 = vmatpush1.bf16.msra.mxu0 %v4207
    %5640 = vmatprep.mubr.bf16.mxu0 %v1345
    %5641 = vmatmul.mubr.bf16.gmra.mrb[0].mxu0 %v1343
    %v5642 = vpop.f32.mrb[0].mxu0
    %v5643 = vadd.f32 %v5603, %v5642
    %v5644 = vpop.f32.mrb[0].mxu0
    %v5645 = vpop.f32.mrb[0].mxu0
    %v5646 = vpop.f32.mrb[0].mxu0
    %5647 = vdwg.mxu0
    %5648 = vmatprep.subr.bf16.mxu0 0
    %5649 = vmatpush1.bf16.msra.mxu0 %v4208
    %5650 = vmatprep.subr.bf16.mxu0 0
    %5651 = vmatpush1.bf16.msra.mxu0 %v4209
    %5652 = vmatprep.subr.bf16.mxu0 0
    %5653 = vmatpush1.bf16.msra.mxu0 %v4210
    %5654 = vmatprep.subr.bf16.mxu0 0
    %5655 = vmatpush1.bf16.msra.mxu0 %v4211
    %5656 = vmatprep.subr.bf16.mxu0 0
    %5657 = vmatpush1.bf16.msra.mxu0 %v4212
    %5658 = vmatprep.subr.bf16.mxu0 0
    %5659 = vmatpush1.bf16.msra.mxu0 %v4213
    %5660 = vmatprep.subr.bf16.mxu0 0
    %5661 = vmatpush1.bf16.msra.mxu0 %v4214
    %5662 = vmatprep.subr.bf16.mxu0 0
    %5663 = vmatpush1.bf16.msra.mxu0 %v4215
    %5664 = vmatprep.subr.bf16.mxu0 0
    %5665 = vmatpush1.bf16.msra.mxu0 %v4216
    %5666 = vmatprep.subr.bf16.mxu0 0
    %5667 = vmatpush1.bf16.msra.mxu0 %v4217
    %5668 = vmatprep.subr.bf16.mxu0 0
    %5669 = vmatpush1.bf16.msra.mxu0 %v4218
    %5670 = vmatprep.subr.bf16.mxu0 0
    %5671 = vmatpush1.bf16.msra.mxu0 %v4219
    %5672 = vmatprep.subr.bf16.mxu0 0
    %5673 = vmatpush1.bf16.msra.mxu0 %v4220
    %5674 = vmatprep.subr.bf16.mxu0 0
    %5675 = vmatpush1.bf16.msra.mxu0 %v4221
    %5676 = vmatprep.subr.bf16.mxu0 0
    %5677 = vmatpush1.bf16.msra.mxu0 %v4222
    %5678 = vmatprep.subr.bf16.mxu0 0
    %5679 = vmatpush1.bf16.msra.mxu0 %v4223
    %5680 = vmatprep.mubr.bf16.mxu0 %v1383
    %5681 = vmatmul.mubr.bf16.gmra.mrb[0].mxu0 %v1369
    %v5682 = vpop.f32.mrb[0].mxu0
    %v5683 = vadd.f32 %v5643, %v5682
    %v5684 = vpop.f32.mrb[0].mxu0
    %v5685 = vpop.f32.mrb[0].mxu0
    %v5686 = vpop.f32.mrb[0].mxu0
    %5687 = vdwg.mxu0
    %5688 = vmatprep.subr.bf16.mxu0 0
    %5689 = vmatpush1.bf16.msra.mxu0 %v4224
    %5690 = vmatprep.subr.bf16.mxu0 0
    %5691 = vmatpush1.bf16.msra.mxu0 %v4225
    %5692 = vmatprep.subr.bf16.mxu0 0
    %5693 = vmatpush1.bf16.msra.mxu0 %v4226
    %5694 = vmatprep.subr.bf16.mxu0 0
    %5695 = vmatpush1.bf16.msra.mxu0 %v4227
    %5696 = vmatprep.subr.bf16.mxu0 0
    %5697 = vmatpush1.bf16.msra.mxu0 %v4228
    %5698 = vmatprep.subr.bf16.mxu0 0
    %5699 = vmatpush1.bf16.msra.mxu0 %v4229
    %5700 = vmatprep.subr.bf16.mxu0 0
    %5701 = vmatpush1.bf16.msra.mxu0 %v4230
    %5702 = vmatprep.subr.bf16.mxu0 0
    %5703 = vmatpush1.bf16.msra.mxu0 %v4231
    %5704 = vmatprep.subr.bf16.mxu0 0
    %5705 = vmatpush1.bf16.msra.mxu0 %v4232
    %5706 = vmatprep.subr.bf16.mxu0 0
    %5707 = vmatpush1.bf16.msra.mxu0 %v4233
    %5708 = vmatprep.subr.bf16.mxu0 0
    %5709 = vmatpush1.bf16.msra.mxu0 %v4234
    %5710 = vmatprep.subr.bf16.mxu0 0
    %5711 = vmatpush1.bf16.msra.mxu0 %v4235
    %5712 = vmatprep.subr.bf16.mxu0 0
    %5713 = vmatpush1.bf16.msra.mxu0 %v4236
    %5714 = vmatprep.subr.bf16.mxu0 0
    %5715 = vmatpush1.bf16.msra.mxu0 %v4237
    %5716 = vmatprep.subr.bf16.mxu0 0
    %5717 = vmatpush1.bf16.msra.mxu0 %v4238
    %5718 = vmatprep.subr.bf16.mxu0 0
    %5719 = vmatpush1.bf16.msra.mxu0 %v4239
    %5720 = vmatprep.mubr.bf16.mxu0 %v1393
    %5721 = vmatmul.mubr.bf16.gmra.mrb[0].mxu0 %v1391
    %v5722 = vpop.f32.mrb[0].mxu0
    %v5723 = vadd.f32 %v5683, %v5722
    %v5724 = vpop.f32.mrb[0].mxu0
    %v5725 = vpop.f32.mrb[0].mxu0
    %v5726 = vpop.f32.mrb[0].mxu0
    %5727 = vdwg.mxu0
    %5728 = vmatprep.subr.bf16.mxu0 0
    %5729 = vmatpush1.bf16.msra.mxu0 %v4240
    %5730 = vmatprep.subr.bf16.mxu0 0
    %5731 = vmatpush1.bf16.msra.mxu0 %v4241
    %5732 = vmatprep.subr.bf16.mxu0 0
    %5733 = vmatpush1.bf16.msra.mxu0 %v4242
    %5734 = vmatprep.subr.bf16.mxu0 0
    %5735 = vmatpush1.bf16.msra.mxu0 %v4243
    %5736 = vmatprep.subr.bf16.mxu0 0
    %5737 = vmatpush1.bf16.msra.mxu0 %v4244
    %5738 = vmatprep.subr.bf16.mxu0 0
    %5739 = vmatpush1.bf16.msra.mxu0 %v4245
    %5740 = vmatprep.subr.bf16.mxu0 0
    %5741 = vmatpush1.bf16.msra.mxu0 %v4246
    %5742 = vmatprep.subr.bf16.mxu0 0
    %5743 = vmatpush1.bf16.msra.mxu0 %v4247
    %5744 = vmatprep.subr.bf16.mxu0 0
    %5745 = vmatpush1.bf16.msra.mxu0 %v4248
    %5746 = vmatprep.subr.bf16.mxu0 0
    %5747 = vmatpush1.bf16.msra.mxu0 %v4249
    %5748 = vmatprep.subr.bf16.mxu0 0
    %5749 = vmatpush1.bf16.msra.mxu0 %v4250
    %5750 = vmatprep.subr.bf16.mxu0 0
    %5751 = vmatpush1.bf16.msra.mxu0 %v4251
    %5752 = vmatprep.subr.bf16.mxu0 0
    %5753 = vmatpush1.bf16.msra.mxu0 %v4252
    %5754 = vmatprep.subr.bf16.mxu0 0
    %5755 = vmatpush1.bf16.msra.mxu0 %v4253
    %5756 = vmatprep.subr.bf16.mxu0 0
    %5757 = vmatpush1.bf16.msra.mxu0 %v4254
    %5758 = vmatprep.subr.bf16.mxu0 0
    %5759 = vmatpush1.bf16.msra.mxu0 %v4255
    %5760 = vmatprep.mubr.bf16.mxu0 %v1390
    %5761 = vmatmul.mubr.bf16.gmra.mrb[0].mxu0 %v1376
    %v5762 = vpop.f32.mrb[0].mxu0
    %v5763 = vadd.f32 %v5723, %v5762
    %v5764 = vpop.f32.mrb[0].mxu0
    %v5765 = vpop.f32.mrb[0].mxu0
    %v5766 = vpop.f32.mrb[0].mxu0
    %5767 = vdwg.mxu0
    %5768 = vmatprep.subr.bf16.mxu0 0
    %5769 = vmatpush1.bf16.msra.mxu0 %v4256
    %5770 = vmatprep.subr.bf16.mxu0 0
    %5771 = vmatpush1.bf16.msra.mxu0 %v4257
    %5772 = vmatprep.subr.bf16.mxu0 0
    %5773 = vmatpush1.bf16.msra.mxu0 %v4258
    %5774 = vmatprep.subr.bf16.mxu0 0
    %5775 = vmatpush1.bf16.msra.mxu0 %v4259
    %5776 = vmatprep.subr.bf16.mxu0 0
    %5777 = vmatpush1.bf16.msra.mxu0 %v4260
    %5778 = vmatprep.subr.bf16.mxu0 0
    %5779 = vmatpush1.bf16.msra.mxu0 %v4261
    %5780 = vmatprep.subr.bf16.mxu0 0
    %5781 = vmatpush1.bf16.msra.mxu0 %v4262
    %5782 = vmatprep.subr.bf16.mxu0 0
    %5783 = vmatpush1.bf16.msra.mxu0 %v4263
    %5784 = vmatprep.subr.bf16.mxu0 0
    %5785 = vmatpush1.bf16.msra.mxu0 %v4264
    %5786 = vmatprep.subr.bf16.mxu0 0
    %5787 = vmatpush1.bf16.msra.mxu0 %v4265
    %5788 = vmatprep.subr.bf16.mxu0 0
    %5789 = vmatpush1.bf16.msra.mxu0 %v4266
    %5790 = vmatprep.subr.bf16.mxu0 0
    %5791 = vmatpush1.bf16.msra.mxu0 %v4267
    %5792 = vmatprep.subr.bf16.mxu0 0
    %5793 = vmatpush1.bf16.msra.mxu0 %v4268
    %5794 = vmatprep.subr.bf16.mxu0 0
    %5795 = vmatpush1.bf16.msra.mxu0 %v4269
    %5796 = vmatprep.subr.bf16.mxu0 0
    %5797 = vmatpush1.bf16.msra.mxu0 %v4270
    %5798 = vmatprep.subr.bf16.mxu0 0
    %5799 = vmatpush1.bf16.msra.mxu0 %v4271
    %5800 = vmatprep.mubr.bf16.mxu0 %v1394
    %5801 = vmatmul.mubr.bf16.gmra.mrb[0].mxu0 %v1392
    %v5802 = vpop.f32.mrb[0].mxu0
    %v5803 = vadd.f32 %v5763, %v5802
    %v5804 = vpop.f32.mrb[0].mxu0
    %v5805 = vpop.f32.mrb[0].mxu0
    %v5806 = vpop.f32.mrb[0].mxu0
    %5807 = vdwg.mxu0
    %5808 = vmatprep.subr.bf16.mxu0 0
    %5809 = vmatpush1.bf16.msra.mxu0 %v4272
    %5810 = vmatprep.subr.bf16.mxu0 0
    %5811 = vmatpush1.bf16.msra.mxu0 %v4273
    %5812 = vmatprep.subr.bf16.mxu0 0
    %5813 = vmatpush1.bf16.msra.mxu0 %v4274
    %5814 = vmatprep.subr.bf16.mxu0 0
    %5815 = vmatpush1.bf16.msra.mxu0 %v4275
    %5816 = vmatprep.subr.bf16.mxu0 0
    %5817 = vmatpush1.bf16.msra.mxu0 %v4276
    %5818 = vmatprep.subr.bf16.mxu0 0
    %5819 = vmatpush1.bf16.msra.mxu0 %v4277
    %5820 = vmatprep.subr.bf16.mxu0 0
    %5821 = vmatpush1.bf16.msra.mxu0 %v4278
    %5822 = vmatprep.subr.bf16.mxu0 0
    %5823 = vmatpush1.bf16.msra.mxu0 %v4279
    %5824 = vmatprep.subr.bf16.mxu0 0
    %5825 = vmatpush1.bf16.msra.mxu0 %v4280
    %5826 = vmatprep.subr.bf16.mxu0 0
    %5827 = vmatpush1.bf16.msra.mxu0 %v4281
    %5828 = vmatprep.subr.bf16.mxu0 0
    %5829 = vmatpush1.bf16.msra.mxu0 %v4282
    %5830 = vmatprep.subr.bf16.mxu0 0
    %5831 = vmatpush1.bf16.msra.mxu0 %v4283
    %5832 = vmatprep.subr.bf16.mxu0 0
    %5833 = vmatpush1.bf16.msra.mxu0 %v4284
    %5834 = vmatprep.subr.bf16.mxu0 0
    %5835 = vmatpush1.bf16.msra.mxu0 %v4285
    %5836 = vmatprep.subr.bf16.mxu0 0
    %5837 = vmatpush1.bf16.msra.mxu0 %v4286
    %5838 = vmatprep.subr.bf16.mxu0 0
    %5839 = vmatpush1.bf16.msra.mxu0 %v4287
    %5840 = vmatprep.mubr.bf16.mxu0 %v1432
    %5841 = vmatmul.mubr.bf16.gmra.mrb[0].mxu0 %v1418
    %v5842 = vpop.f32.mrb[0].mxu0
    %v5843 = vadd.f32 %v5803, %v5842
    %v5844 = vpop.f32.mrb[0].mxu0
    %v5845 = vpop.f32.mrb[0].mxu0
    %v5846 = vpop.f32.mrb[0].mxu0
    %5847 = vdwg.mxu0
    %5848 = vmatprep.subr.bf16.mxu0 0
    %5849 = vmatpush1.bf16.msra.mxu0 %v4288
    %5850 = vmatprep.subr.bf16.mxu0 0
    %5851 = vmatpush1.bf16.msra.mxu0 %v4289
    %5852 = vmatprep.subr.bf16.mxu0 0
    %5853 = vmatpush1.bf16.msra.mxu0 %v4290
    %5854 = vmatprep.subr.bf16.mxu0 0
    %5855 = vmatpush1.bf16.msra.mxu0 %v4291
    %5856 = vmatprep.subr.bf16.mxu0 0
    %5857 = vmatpush1.bf16.msra.mxu0 %v4292
    %5858 = vmatprep.subr.bf16.mxu0 0
    %5859 = vmatpush1.bf16.msra.mxu0 %v4293
    %5860 = vmatprep.subr.bf16.mxu0 0
    %5861 = vmatpush1.bf16.msra.mxu0 %v4294
    %5862 = vmatprep.subr.bf16.mxu0 0
    %5863 = vmatpush1.bf16.msra.mxu0 %v4295
    %5864 = vmatprep.subr.bf16.mxu0 0
    %5865 = vmatpush1.bf16.msra.mxu0 %v4296
    %5866 = vmatprep.subr.bf16.mxu0 0
    %5867 = vmatpush1.bf16.msra.mxu0 %v4297
    %5868 = vmatprep.subr.bf16.mxu0 0
    %5869 = vmatpush1.bf16.msra.mxu0 %v4298
    %5870 = vmatprep.subr.bf16.mxu0 0
    %5871 = vmatpush1.bf16.msra.mxu0 %v4299
    %5872 = vmatprep.subr.bf16.mxu0 0
    %5873 = vmatpush1.bf16.msra.mxu0 %v4300
    %5874 = vmatprep.subr.bf16.mxu0 0
    %5875 = vmatpush1.bf16.msra.mxu0 %v4301
    %5876 = vmatprep.subr.bf16.mxu0 0
    %5877 = vmatpush1.bf16.msra.mxu0 %v4302
    %5878 = vmatprep.subr.bf16.mxu0 0
    %5879 = vmatpush1.bf16.msra.mxu0 %v4303
    %5880 = vmatprep.mubr.bf16.mxu0 %v1442
    %5881 = vmatmul.mubr.bf16.gmra.mrb[0].mxu0 %v1440
    %v5882 = vpop.f32.mrb[0].mxu0
    %v5883 = vadd.f32 %v5843, %v5882
    %v5884 = vpop.f32.mrb[0].mxu0
    %v5885 = vpop.f32.mrb[0].mxu0
    %v5886 = vpop.f32.mrb[0].mxu0
    %5887 = vdwg.mxu0
    %5888 = vmatprep.subr.bf16.mxu0 0
    %5889 = vmatpush1.bf16.msra.mxu0 %v4304
    %5890 = vmatprep.subr.bf16.mxu0 0
    %5891 = vmatpush1.bf16.msra.mxu0 %v4305
    %5892 = vmatprep.subr.bf16.mxu0 0
    %5893 = vmatpush1.bf16.msra.mxu0 %v4306
    %5894 = vmatprep.subr.bf16.mxu0 0
    %5895 = vmatpush1.bf16.msra.mxu0 %v4307
    %5896 = vmatprep.subr.bf16.mxu0 0
    %5897 = vmatpush1.bf16.msra.mxu0 %v4308
    %5898 = vmatprep.subr.bf16.mxu0 0
    %5899 = vmatpush1.bf16.msra.mxu0 %v4309
    %5900 = vmatprep.subr.bf16.mxu0 0
    %5901 = vmatpush1.bf16.msra.mxu0 %v4310
    %5902 = vmatprep.subr.bf16.mxu0 0
    %5903 = vmatpush1.bf16.msra.mxu0 %v4311
    %5904 = vmatprep.subr.bf16.mxu0 0
    %5905 = vmatpush1.bf16.msra.mxu0 %v4312
    %5906 = vmatprep.subr.bf16.mxu0 0
    %5907 = vmatpush1.bf16.msra.mxu0 %v4313
    %5908 = vmatprep.subr.bf16.mxu0 0
    %5909 = vmatpush1.bf16.msra.mxu0 %v4314
    %5910 = vmatprep.subr.bf16.mxu0 0
    %5911 = vmatpush1.bf16.msra.mxu0 %v4315
    %5912 = vmatprep.subr.bf16.mxu0 0
    %5913 = vmatpush1.bf16.msra.mxu0 %v4316
    %5914 = vmatprep.subr.bf16.mxu0 0
    %5915 = vmatpush1.bf16.msra.mxu0 %v4317
    %5916 = vmatprep.subr.bf16.mxu0 0
    %5917 = vmatpush1.bf16.msra.mxu0 %v4318
    %5918 = vmatprep.subr.bf16.mxu0 0
    %5919 = vmatpush1.bf16.msra.mxu0 %v4319
    %5920 = vmatprep.mubr.bf16.mxu0 %v1439
    %5921 = vmatmul.mubr.bf16.gmra.mrb[0].mxu0 %v1425
    %v5922 = vpop.f32.mrb[0].mxu0
    %v5923 = vadd.f32 %v5883, %v5922
    %v5924 = vpop.f32.mrb[0].mxu0
    %v5925 = vpop.f32.mrb[0].mxu0
    %v5926 = vpop.f32.mrb[0].mxu0
    %5927 = vdwg.mxu0
    %5928 = vmatprep.subr.bf16.mxu0 0
    %5929 = vmatpush1.bf16.msra.mxu0 %v4320
    %5930 = vmatprep.subr.bf16.mxu0 0
    %5931 = vmatpush1.bf16.msra.mxu0 %v4321
    %5932 = vmatprep.subr.bf16.mxu0 0
    %5933 = vmatpush1.bf16.msra.mxu0 %v4322
    %5934 = vmatprep.subr.bf16.mxu0 0
    %5935 = vmatpush1.bf16.msra.mxu0 %v4323
    %5936 = vmatprep.subr.bf16.mxu0 0
    %5937 = vmatpush1.bf16.msra.mxu0 %v4324
    %5938 = vmatprep.subr.bf16.mxu0 0
    %5939 = vmatpush1.bf16.msra.mxu0 %v4325
    %5940 = vmatprep.subr.bf16.mxu0 0
    %5941 = vmatpush1.bf16.msra.mxu0 %v4326
    %5942 = vmatprep.subr.bf16.mxu0 0
    %5943 = vmatpush1.bf16.msra.mxu0 %v4327
    %5944 = vmatprep.subr.bf16.mxu0 0
    %5945 = vmatpush1.bf16.msra.mxu0 %v4328
    %5946 = vmatprep.subr.bf16.mxu0 0
    %5947 = vmatpush1.bf16.msra.mxu0 %v4329
    %5948 = vmatprep.subr.bf16.mxu0 0
    %5949 = vmatpush1.bf16.msra.mxu0 %v4330
    %5950 = vmatprep.subr.bf16.mxu0 0
    %5951 = vmatpush1.bf16.msra.mxu0 %v4331
    %5952 = vmatprep.subr.bf16.mxu0 0
    %5953 = vmatpush1.bf16.msra.mxu0 %v4332
    %5954 = vmatprep.subr.bf16.mxu0 0
    %5955 = vmatpush1.bf16.msra.mxu0 %v4333
    %5956 = vmatprep.subr.bf16.mxu0 0
    %5957 = vmatpush1.bf16.msra.mxu0 %v4334
    %5958 = vmatprep.subr.bf16.mxu0 0
    %5959 = vmatpush1.bf16.msra.mxu0 %v4335
    %5960 = vmatprep.mubr.bf16.mxu0 %v1443
    %5961 = vmatmul.mubr.bf16.gmra.mrb[0].mxu0 %v1441
    %v5962 = vpop.f32.mrb[0].mxu0
    %v5963 = vadd.f32 %v5923, %v5962
    %v5964 = vpop.f32.mrb[0].mxu0
    %v5965 = vpop.f32.mrb[0].mxu0
    %v5966 = vpop.f32.mrb[0].mxu0
    %5967 = vdwg.mxu0
    %5968 = vmatprep.subr.bf16.mxu0 0
    %5969 = vmatpush1.bf16.msra.mxu0 %v4336
    %5970 = vmatprep.subr.bf16.mxu0 0
    %5971 = vmatpush1.bf16.msra.mxu0 %v4337
    %5972 = vmatprep.subr.bf16.mxu0 0
    %5973 = vmatpush1.bf16.msra.mxu0 %v4338
    %5974 = vmatprep.subr.bf16.mxu0 0
    %5975 = vmatpush1.bf16.msra.mxu0 %v4339
    %5976 = vmatprep.subr.bf16.mxu0 0
    %5977 = vmatpush1.bf16.msra.mxu0 %v4340
    %5978 = vmatprep.subr.bf16.mxu0 0
    %5979 = vmatpush1.bf16.msra.mxu0 %v4341
    %5980 = vmatprep.subr.bf16.mxu0 0
    %5981 = vmatpush1.bf16.msra.mxu0 %v4342
    %5982 = vmatprep.subr.bf16.mxu0 0
    %5983 = vmatpush1.bf16.msra.mxu0 %v4343
    %5984 = vmatprep.subr.bf16.mxu0 0
    %5985 = vmatpush1.bf16.msra.mxu0 %v4344
    %5986 = vmatprep.subr.bf16.mxu0 0
    %5987 = vmatpush1.bf16.msra.mxu0 %v4345
    %5988 = vmatprep.subr.bf16.mxu0 0
    %5989 = vmatpush1.bf16.msra.mxu0 %v4346
    %5990 = vmatprep.subr.bf16.mxu0 0
    %5991 = vmatpush1.bf16.msra.mxu0 %v4347
    %5992 = vmatprep.subr.bf16.mxu0 0
    %5993 = vmatpush1.bf16.msra.mxu0 %v4348
    %5994 = vmatprep.subr.bf16.mxu0 0
    %5995 = vmatpush1.bf16.msra.mxu0 %v4349
    %5996 = vmatprep.subr.bf16.mxu0 0
    %5997 = vmatpush1.bf16.msra.mxu0 %v4350
    %5998 = vmatprep.subr.bf16.mxu0 0
    %5999 = vmatpush1.bf16.msra.mxu0 %v4351
    %6000 = vmatprep.mubr.bf16.mxu0 %v1481
    %6001 = vmatmul.mubr.bf16.gmra.mrb[0].mxu0 %v1467
    %v6002 = vpop.f32.mrb[0].mxu0
    %v6003 = vadd.f32 %v5963, %v6002
    %v6004 = vpop.f32.mrb[0].mxu0
    %v6005 = vpop.f32.mrb[0].mxu0
    %v6006 = vpop.f32.mrb[0].mxu0
    %6007 = vdwg.mxu0
    %6008 = vmatprep.subr.bf16.mxu0 0
    %6009 = vmatpush1.bf16.msra.mxu0 %v4352
    %6010 = vmatprep.subr.bf16.mxu0 0
    %6011 = vmatpush1.bf16.msra.mxu0 %v4353
    %6012 = vmatprep.subr.bf16.mxu0 0
    %6013 = vmatpush1.bf16.msra.mxu0 %v4354
    %6014 = vmatprep.subr.bf16.mxu0 0
    %6015 = vmatpush1.bf16.msra.mxu0 %v4355
    %6016 = vmatprep.subr.bf16.mxu0 0
    %6017 = vmatpush1.bf16.msra.mxu0 %v4356
    %6018 = vmatprep.subr.bf16.mxu0 0
    %6019 = vmatpush1.bf16.msra.mxu0 %v4357
    %6020 = vmatprep.subr.bf16.mxu0 0
    %6021 = vmatpush1.bf16.msra.mxu0 %v4358
    %6022 = vmatprep.subr.bf16.mxu0 0
    %6023 = vmatpush1.bf16.msra.mxu0 %v4359
    %6024 = vmatprep.subr.bf16.mxu0 0
    %6025 = vmatpush1.bf16.msra.mxu0 %v4360
    %6026 = vmatprep.subr.bf16.mxu0 0
    %6027 = vmatpush1.bf16.msra.mxu0 %v4361
    %6028 = vmatprep.subr.bf16.mxu0 0
    %6029 = vmatpush1.bf16.msra.mxu0 %v4362
    %6030 = vmatprep.subr.bf16.mxu0 0
    %6031 = vmatpush1.bf16.msra.mxu0 %v4363
    %6032 = vmatprep.subr.bf16.mxu0 0
    %6033 = vmatpush1.bf16.msra.mxu0 %v4364
    %6034 = vmatprep.subr.bf16.mxu0 0
    %6035 = vmatpush1.bf16.msra.mxu0 %v4365
    %6036 = vmatprep.subr.bf16.mxu0 0
    %6037 = vmatpush1.bf16.msra.mxu0 %v4366
    %6038 = vmatprep.subr.bf16.mxu0 0
    %6039 = vmatpush1.bf16.msra.mxu0 %v4367
    %6040 = vmatprep.mubr.bf16.mxu0 %v1491
    %6041 = vmatmul.mubr.bf16.gmra.mrb[0].mxu0 %v1489
    %v6042 = vpop.f32.mrb[0].mxu0
    %v6043 = vadd.f32 %v6003, %v6042
    %v6044 = vpop.f32.mrb[0].mxu0
    %v6045 = vpop.f32.mrb[0].mxu0
    %v6046 = vpop.f32.mrb[0].mxu0
    %6047 = vdwg.mxu0
    %6048 = vmatprep.subr.bf16.mxu0 0
    %6049 = vmatpush1.bf16.msra.mxu0 %v4368
    %6050 = vmatprep.subr.bf16.mxu0 0
    %6051 = vmatpush1.bf16.msra.mxu0 %v4369
    %6052 = vmatprep.subr.bf16.mxu0 0
    %6053 = vmatpush1.bf16.msra.mxu0 %v4370
    %6054 = vmatprep.subr.bf16.mxu0 0
    %6055 = vmatpush1.bf16.msra.mxu0 %v4371
    %6056 = vmatprep.subr.bf16.mxu0 0
    %6057 = vmatpush1.bf16.msra.mxu0 %v4372
    %6058 = vmatprep.subr.bf16.mxu0 0
    %6059 = vmatpush1.bf16.msra.mxu0 %v4373
    %6060 = vmatprep.subr.bf16.mxu0 0
    %6061 = vmatpush1.bf16.msra.mxu0 %v4374
    %6062 = vmatprep.subr.bf16.mxu0 0
    %6063 = vmatpush1.bf16.msra.mxu0 %v4375
    %6064 = vmatprep.subr.bf16.mxu0 0
    %6065 = vmatpush1.bf16.msra.mxu0 %v4376
    %6066 = vmatprep.subr.bf16.mxu0 0
    %6067 = vmatpush1.bf16.msra.mxu0 %v4377
    %6068 = vmatprep.subr.bf16.mxu0 0
    %6069 = vmatpush1.bf16.msra.mxu0 %v4378
    %6070 = vmatprep.subr.bf16.mxu0 0
    %6071 = vmatpush1.bf16.msra.mxu0 %v4379
    %6072 = vmatprep.subr.bf16.mxu0 0
    %6073 = vmatpush1.bf16.msra.mxu0 %v4380
    %6074 = vmatprep.subr.bf16.mxu0 0
    %6075 = vmatpush1.bf16.msra.mxu0 %v4381
    %6076 = vmatprep.subr.bf16.mxu0 0
    %6077 = vmatpush1.bf16.msra.mxu0 %v4382
    %6078 = vmatprep.subr.bf16.mxu0 0
    %6079 = vmatpush1.bf16.msra.mxu0 %v4383
    %6080 = vmatprep.mubr.bf16.mxu0 %v1488
    %6081 = vmatmul.mubr.bf16.gmra.mrb[0].mxu0 %v1474
    %v6082 = vpop.f32.mrb[0].mxu0
    %v6083 = vadd.f32 %v6043, %v6082
    %v6084 = vpop.f32.mrb[0].mxu0
    %v6085 = vpop.f32.mrb[0].mxu0
    %v6086 = vpop.f32.mrb[0].mxu0
    %6087 = vdwg.mxu0
    %6088 = vmatprep.subr.bf16.mxu0 0
    %6089 = vmatpush1.bf16.msra.mxu0 %v4384
    %6090 = vmatprep.subr.bf16.mxu0 0
    %6091 = vmatpush1.bf16.msra.mxu0 %v4385
    %6092 = vmatprep.subr.bf16.mxu0 0
    %6093 = vmatpush1.bf16.msra.mxu0 %v4386
    %6094 = vmatprep.subr.bf16.mxu0 0
    %6095 = vmatpush1.bf16.msra.mxu0 %v4387
    %6096 = vmatprep.subr.bf16.mxu0 0
    %6097 = vmatpush1.bf16.msra.mxu0 %v4388
    %6098 = vmatprep.subr.bf16.mxu0 0
    %6099 = vmatpush1.bf16.msra.mxu0 %v4389
    %6100 = vmatprep.subr.bf16.mxu0 0
    %6101 = vmatpush1.bf16.msra.mxu0 %v4390
    %6102 = vmatprep.subr.bf16.mxu0 0
    %6103 = vmatpush1.bf16.msra.mxu0 %v4391
    %6104 = vmatprep.subr.bf16.mxu0 0
    %6105 = vmatpush1.bf16.msra.mxu0 %v4392
    %6106 = vmatprep.subr.bf16.mxu0 0
    %6107 = vmatpush1.bf16.msra.mxu0 %v4393
    %6108 = vmatprep.subr.bf16.mxu0 0
    %6109 = vmatpush1.bf16.msra.mxu0 %v4394
    %6110 = vmatprep.subr.bf16.mxu0 0
    %6111 = vmatpush1.bf16.msra.mxu0 %v4395
    %6112 = vmatprep.subr.bf16.mxu0 0
    %6113 = vmatpush1.bf16.msra.mxu0 %v4396
    %6114 = vmatprep.subr.bf16.mxu0 0
    %6115 = vmatpush1.bf16.msra.mxu0 %v4397
    %6116 = vmatprep.subr.bf16.mxu0 0
    %6117 = vmatpush1.bf16.msra.mxu0 %v4398
    %6118 = vmatprep.subr.bf16.mxu0 0
    %6119 = vmatpush1.bf16.msra.mxu0 %v4399
    %6120 = vmatprep.mubr.bf16.mxu0 %v1492
    %6121 = vmatmul.mubr.bf16.gmra.mrb[0].mxu0 %v1490
    %v6122 = vpop.f32.mrb[0].mxu0
    %v6123 = vadd.f32 %v6083, %v6122
    %v6124 = vpop.f32.mrb[0].mxu0
    %v6125 = vpop.f32.mrb[0].mxu0
    %v6126 = vpop.f32.mrb[0].mxu0
    %6127 = vdwg.mxu0
    %6128 = vmatprep.subr.bf16.mxu0 0
    %6129 = vmatpush1.bf16.msra.mxu0 %v4400
    %6130 = vmatprep.subr.bf16.mxu0 0
    %6131 = vmatpush1.bf16.msra.mxu0 %v4401
    %6132 = vmatprep.subr.bf16.mxu0 0
    %6133 = vmatpush1.bf16.msra.mxu0 %v4402
    %6134 = vmatprep.subr.bf16.mxu0 0
    %6135 = vmatpush1.bf16.msra.mxu0 %v4403
    %6136 = vmatprep.subr.bf16.mxu0 0
    %6137 = vmatpush1.bf16.msra.mxu0 %v4404
    %6138 = vmatprep.subr.bf16.mxu0 0
    %6139 = vmatpush1.bf16.msra.mxu0 %v4405
    %6140 = vmatprep.subr.bf16.mxu0 0
    %6141 = vmatpush1.bf16.msra.mxu0 %v4406
    %6142 = vmatprep.subr.bf16.mxu0 0
    %6143 = vmatpush1.bf16.msra.mxu0 %v4407
    %6144 = vmatprep.subr.bf16.mxu0 0
    %6145 = vmatpush1.bf16.msra.mxu0 %v4408
    %6146 = vmatprep.subr.bf16.mxu0 0
    %6147 = vmatpush1.bf16.msra.mxu0 %v4409
    %6148 = vmatprep.subr.bf16.mxu0 0
    %6149 = vmatpush1.bf16.msra.mxu0 %v4410
    %6150 = vmatprep.subr.bf16.mxu0 0
    %6151 = vmatpush1.bf16.msra.mxu0 %v4411
    %6152 = vmatprep.subr.bf16.mxu0 0
    %6153 = vmatpush1.bf16.msra.mxu0 %v4412
    %6154 = vmatprep.subr.bf16.mxu0 0
    %6155 = vmatpush1.bf16.msra.mxu0 %v4413
    %6156 = vmatprep.subr.bf16.mxu0 0
    %6157 = vmatpush1.bf16.msra.mxu0 %v4414
    %6158 = vmatprep.subr.bf16.mxu0 0
    %6159 = vmatpush1.bf16.msra.mxu0 %v4415
    %6160 = vmatprep.mubr.bf16.mxu0 %v1530
    %6161 = vmatmul.mubr.bf16.gmra.mrb[0].mxu0 %v1516
    %v6162 = vpop.f32.mrb[0].mxu0
    %v6163 = vadd.f32 %v6123, %v6162
    %v6164 = vpop.f32.mrb[0].mxu0
    %v6165 = vpop.f32.mrb[0].mxu0
    %v6166 = vpop.f32.mrb[0].mxu0
    %6167 = vdwg.mxu0
    %6168 = vmatprep.subr.bf16.mxu0 0
    %6169 = vmatpush1.bf16.msra.mxu0 %v4416
    %6170 = vmatprep.subr.bf16.mxu0 0
    %6171 = vmatpush1.bf16.msra.mxu0 %v4417
    %6172 = vmatprep.subr.bf16.mxu0 0
    %6173 = vmatpush1.bf16.msra.mxu0 %v4418
    %6174 = vmatprep.subr.bf16.mxu0 0
    %6175 = vmatpush1.bf16.msra.mxu0 %v4419
    %6176 = vmatprep.subr.bf16.mxu0 0
    %6177 = vmatpush1.bf16.msra.mxu0 %v4420
    %6178 = vmatprep.subr.bf16.mxu0 0
    %6179 = vmatpush1.bf16.msra.mxu0 %v4421
    %6180 = vmatprep.subr.bf16.mxu0 0
    %6181 = vmatpush1.bf16.msra.mxu0 %v4422
    %6182 = vmatprep.subr.bf16.mxu0 0
    %6183 = vmatpush1.bf16.msra.mxu0 %v4423
    %6184 = vmatprep.subr.bf16.mxu0 0
    %6185 = vmatpush1.bf16.msra.mxu0 %v4424
    %6186 = vmatprep.subr.bf16.mxu0 0
    %6187 = vmatpush1.bf16.msra.mxu0 %v4425
    %6188 = vmatprep.subr.bf16.mxu0 0
    %6189 = vmatpush1.bf16.msra.mxu0 %v4426
    %6190 = vmatprep.subr.bf16.mxu0 0
    %6191 = vmatpush1.bf16.msra.mxu0 %v4427
    %6192 = vmatprep.subr.bf16.mxu0 0
    %6193 = vmatpush1.bf16.msra.mxu0 %v4428
    %6194 = vmatprep.subr.bf16.mxu0 0
    %6195 = vmatpush1.bf16.msra.mxu0 %v4429
    %6196 = vmatprep.subr.bf16.mxu0 0
    %6197 = vmatpush1.bf16.msra.mxu0 %v4430
    %6198 = vmatprep.subr.bf16.mxu0 0
    %6199 = vmatpush1.bf16.msra.mxu0 %v4431
    %6200 = vmatprep.mubr.bf16.mxu0 %v1540
    %6201 = vmatmul.mubr.bf16.gmra.mrb[0].mxu0 %v1538
    %v6202 = vpop.f32.mrb[0].mxu0
    %v6203 = vadd.f32 %v6163, %v6202
    %v6204 = vpop.f32.mrb[0].mxu0
    %v6205 = vpop.f32.mrb[0].mxu0
    %v6206 = vpop.f32.mrb[0].mxu0
    %6207 = vdwg.mxu0
    %6208 = vmatprep.subr.bf16.mxu0 0
    %6209 = vmatpush1.bf16.msra.mxu0 %v4432
    %6210 = vmatprep.subr.bf16.mxu0 0
    %6211 = vmatpush1.bf16.msra.mxu0 %v4433
    %6212 = vmatprep.subr.bf16.mxu0 0
    %6213 = vmatpush1.bf16.msra.mxu0 %v4434
    %6214 = vmatprep.subr.bf16.mxu0 0
    %6215 = vmatpush1.bf16.msra.mxu0 %v4435
    %6216 = vmatprep.subr.bf16.mxu0 0
    %6217 = vmatpush1.bf16.msra.mxu0 %v4436
    %6218 = vmatprep.subr.bf16.mxu0 0
    %6219 = vmatpush1.bf16.msra.mxu0 %v4437
    %6220 = vmatprep.subr.bf16.mxu0 0
    %6221 = vmatpush1.bf16.msra.mxu0 %v4438
    %6222 = vmatprep.subr.bf16.mxu0 0
    %6223 = vmatpush1.bf16.msra.mxu0 %v4439
    %6224 = vmatprep.subr.bf16.mxu0 0
    %6225 = vmatpush1.bf16.msra.mxu0 %v4440
    %6226 = vmatprep.subr.bf16.mxu0 0
    %6227 = vmatpush1.bf16.msra.mxu0 %v4441
    %6228 = vmatprep.subr.bf16.mxu0 0
    %6229 = vmatpush1.bf16.msra.mxu0 %v4442
    %6230 = vmatprep.subr.bf16.mxu0 0
    %6231 = vmatpush1.bf16.msra.mxu0 %v4443
    %6232 = vmatprep.subr.bf16.mxu0 0
    %6233 = vmatpush1.bf16.msra.mxu0 %v4444
    %6234 = vmatprep.subr.bf16.mxu0 0
    %6235 = vmatpush1.bf16.msra.mxu0 %v4445
    %6236 = vmatprep.subr.bf16.mxu0 0
    %6237 = vmatpush1.bf16.msra.mxu0 %v4446
    %6238 = vmatprep.subr.bf16.mxu0 0
    %6239 = vmatpush1.bf16.msra.mxu0 %v4447
    %6240 = vmatprep.mubr.bf16.mxu0 %v1537
    %6241 = vmatmul.mubr.bf16.gmra.mrb[0].mxu0 %v1523
    %v6242 = vpop.f32.mrb[0].mxu0
    %v6243 = vadd.f32 %v6203, %v6242
    %v6244 = vpop.f32.mrb[0].mxu0
    %v6245 = vpop.f32.mrb[0].mxu0
    %v6246 = vpop.f32.mrb[0].mxu0
    %6247 = vdwg.mxu0
    %6248 = vmatprep.subr.bf16.mxu0 0
    %6249 = vmatpush1.bf16.msra.mxu0 %v4448
    %6250 = vmatprep.subr.bf16.mxu0 0
    %6251 = vmatpush1.bf16.msra.mxu0 %v4449
    %6252 = vmatprep.subr.bf16.mxu0 0
    %6253 = vmatpush1.bf16.msra.mxu0 %v4450
    %6254 = vmatprep.subr.bf16.mxu0 0
    %6255 = vmatpush1.bf16.msra.mxu0 %v4451
    %6256 = vmatprep.subr.bf16.mxu0 0
    %6257 = vmatpush1.bf16.msra.mxu0 %v4452
    %6258 = vmatprep.subr.bf16.mxu0 0
    %6259 = vmatpush1.bf16.msra.mxu0 %v4453
    %6260 = vmatprep.subr.bf16.mxu0 0
    %6261 = vmatpush1.bf16.msra.mxu0 %v4454
    %6262 = vmatprep.subr.bf16.mxu0 0
    %6263 = vmatpush1.bf16.msra.mxu0 %v4455
    %6264 = vmatprep.subr.bf16.mxu0 0
    %6265 = vmatpush1.bf16.msra.mxu0 %v4456
    %6266 = vmatprep.subr.bf16.mxu0 0
    %6267 = vmatpush1.bf16.msra.mxu0 %v4457
    %6268 = vmatprep.subr.bf16.mxu0 0
    %6269 = vmatpush1.bf16.msra.mxu0 %v4458
    %6270 = vmatprep.subr.bf16.mxu0 0
    %6271 = vmatpush1.bf16.msra.mxu0 %v4459
    %6272 = vmatprep.subr.bf16.mxu0 0
    %6273 = vmatpush1.bf16.msra.mxu0 %v4460
    %6274 = vmatprep.subr.bf16.mxu0 0
    %6275 = vmatpush1.bf16.msra.mxu0 %v4461
    %6276 = vmatprep.subr.bf16.mxu0 0
    %6277 = vmatpush1.bf16.msra.mxu0 %v4462
    %6278 = vmatprep.subr.bf16.mxu0 0
    %6279 = vmatpush1.bf16.msra.mxu0 %v4463
    %6280 = vmatprep.mubr.bf16.mxu0 %v1541
    %6281 = vmatmul.mubr.bf16.gmra.mrb[0].mxu0 %v1539
    %v6282 = vpop.f32.mrb[0].mxu0
    %v6283 = vadd.f32 %v6243, %v6282
    %v6284 = vpop.f32.mrb[0].mxu0
    %v6285 = vpop.f32.mrb[0].mxu0
    %v6286 = vpop.f32.mrb[0].mxu0
    %6287 = vdwg.mxu0
    %6288 = vmatprep.subr.bf16.mxu0 0
    %6289 = vmatpush1.bf16.msra.mxu0 %v4464
    %6290 = vmatprep.subr.bf16.mxu0 0
    %6291 = vmatpush1.bf16.msra.mxu0 %v4465
    %6292 = vmatprep.subr.bf16.mxu0 0
    %6293 = vmatpush1.bf16.msra.mxu0 %v4466
    %6294 = vmatprep.subr.bf16.mxu0 0
    %6295 = vmatpush1.bf16.msra.mxu0 %v4467
    %6296 = vmatprep.subr.bf16.mxu0 0
    %6297 = vmatpush1.bf16.msra.mxu0 %v4468
    %6298 = vmatprep.subr.bf16.mxu0 0
    %6299 = vmatpush1.bf16.msra.mxu0 %v4469
    %6300 = vmatprep.subr.bf16.mxu0 0
    %6301 = vmatpush1.bf16.msra.mxu0 %v4470
    %6302 = vmatprep.subr.bf16.mxu0 0
    %6303 = vmatpush1.bf16.msra.mxu0 %v4471
    %6304 = vmatprep.subr.bf16.mxu0 0
    %6305 = vmatpush1.bf16.msra.mxu0 %v4472
    %6306 = vmatprep.subr.bf16.mxu0 0
    %6307 = vmatpush1.bf16.msra.mxu0 %v4473
    %6308 = vmatprep.subr.bf16.mxu0 0
    %6309 = vmatpush1.bf16.msra.mxu0 %v4474
    %6310 = vmatprep.subr.bf16.mxu0 0
    %6311 = vmatpush1.bf16.msra.mxu0 %v4475
    %6312 = vmatprep.subr.bf16.mxu0 0
    %6313 = vmatpush1.bf16.msra.mxu0 %v4476
    %6314 = vmatprep.subr.bf16.mxu0 0
    %6315 = vmatpush1.bf16.msra.mxu0 %v4477
    %6316 = vmatprep.subr.bf16.mxu0 0
    %6317 = vmatpush1.bf16.msra.mxu0 %v4478
    %6318 = vmatprep.subr.bf16.mxu0 0
    %6319 = vmatpush1.bf16.msra.mxu0 %v4479
    %6320 = vmatprep.mubr.bf16.mxu0 %v1579
    %6321 = vmatmul.mubr.bf16.gmra.mrb[0].mxu0 %v1565
    %v6322 = vpop.f32.mrb[0].mxu0
    %v6323 = vadd.f32 %v6283, %v6322
    %v6324 = vpop.f32.mrb[0].mxu0
    %v6325 = vpop.f32.mrb[0].mxu0
    %v6326 = vpop.f32.mrb[0].mxu0
    %6327 = vdwg.mxu0
    %6328 = vmatprep.subr.bf16.mxu0 0
    %6329 = vmatpush1.bf16.msra.mxu0 %v4480
    %6330 = vmatprep.subr.bf16.mxu0 0
    %6331 = vmatpush1.bf16.msra.mxu0 %v4481
    %6332 = vmatprep.subr.bf16.mxu0 0
    %6333 = vmatpush1.bf16.msra.mxu0 %v4482
    %6334 = vmatprep.subr.bf16.mxu0 0
    %6335 = vmatpush1.bf16.msra.mxu0 %v4483
    %6336 = vmatprep.subr.bf16.mxu0 0
    %6337 = vmatpush1.bf16.msra.mxu0 %v4484
    %6338 = vmatprep.subr.bf16.mxu0 0
    %6339 = vmatpush1.bf16.msra.mxu0 %v4485
    %6340 = vmatprep.subr.bf16.mxu0 0
    %6341 = vmatpush1.bf16.msra.mxu0 %v4486
    %6342 = vmatprep.subr.bf16.mxu0 0
    %6343 = vmatpush1.bf16.msra.mxu0 %v4487
    %6344 = vmatprep.subr.bf16.mxu0 0
    %6345 = vmatpush1.bf16.msra.mxu0 %v4488
    %6346 = vmatprep.subr.bf16.mxu0 0
    %6347 = vmatpush1.bf16.msra.mxu0 %v4489
    %6348 = vmatprep.subr.bf16.mxu0 0
    %6349 = vmatpush1.bf16.msra.mxu0 %v4490
    %6350 = vmatprep.subr.bf16.mxu0 0
    %6351 = vmatpush1.bf16.msra.mxu0 %v4491
    %6352 = vmatprep.subr.bf16.mxu0 0
    %6353 = vmatpush1.bf16.msra.mxu0 %v4492
    %6354 = vmatprep.subr.bf16.mxu0 0
    %6355 = vmatpush1.bf16.msra.mxu0 %v4493
    %6356 = vmatprep.subr.bf16.mxu0 0
    %6357 = vmatpush1.bf16.msra.mxu0 %v4494
    %6358 = vmatprep.subr.bf16.mxu0 0
    %6359 = vmatpush1.bf16.msra.mxu0 %v4495
    %6360 = vmatprep.mubr.bf16.mxu0 %v1589
    %6361 = vmatmul.mubr.bf16.gmra.mrb[0].mxu0 %v1587
    %v6362 = vpop.f32.mrb[0].mxu0
    %v6363 = vadd.f32 %v6323, %v6362
    %v6364 = vpop.f32.mrb[0].mxu0
    %v6365 = vpop.f32.mrb[0].mxu0
    %v6366 = vpop.f32.mrb[0].mxu0
    %6367 = vdwg.mxu0
    %6368 = vmatprep.subr.bf16.mxu0 0
    %6369 = vmatpush1.bf16.msra.mxu0 %v4496
    %6370 = vmatprep.subr.bf16.mxu0 0
    %6371 = vmatpush1.bf16.msra.mxu0 %v4497
    %6372 = vmatprep.subr.bf16.mxu0 0
    %6373 = vmatpush1.bf16.msra.mxu0 %v4498
    %6374 = vmatprep.subr.bf16.mxu0 0
    %6375 = vmatpush1.bf16.msra.mxu0 %v4499
    %6376 = vmatprep.subr.bf16.mxu0 0
    %6377 = vmatpush1.bf16.msra.mxu0 %v4500
    %6378 = vmatprep.subr.bf16.mxu0 0
    %6379 = vmatpush1.bf16.msra.mxu0 %v4501
    %6380 = vmatprep.subr.bf16.mxu0 0
    %6381 = vmatpush1.bf16.msra.mxu0 %v4502
    %6382 = vmatprep.subr.bf16.mxu0 0
    %6383 = vmatpush1.bf16.msra.mxu0 %v4503
    %6384 = vmatprep.subr.bf16.mxu0 0
    %6385 = vmatpush1.bf16.msra.mxu0 %v4504
    %6386 = vmatprep.subr.bf16.mxu0 0
    %6387 = vmatpush1.bf16.msra.mxu0 %v4505
    %6388 = vmatprep.subr.bf16.mxu0 0
    %6389 = vmatpush1.bf16.msra.mxu0 %v4506
    %6390 = vmatprep.subr.bf16.mxu0 0
    %6391 = vmatpush1.bf16.msra.mxu0 %v4507
    %6392 = vmatprep.subr.bf16.mxu0 0
    %6393 = vmatpush1.bf16.msra.mxu0 %v4508
    %6394 = vmatprep.subr.bf16.mxu0 0
    %6395 = vmatpush1.bf16.msra.mxu0 %v4509
    %6396 = vmatprep.subr.bf16.mxu0 0
    %6397 = vmatpush1.bf16.msra.mxu0 %v4510
    %6398 = vmatprep.subr.bf16.mxu0 0
    %6399 = vmatpush1.bf16.msra.mxu0 %v4511
    %6400 = vmatprep.mubr.bf16.mxu0 %v1586
    %6401 = vmatmul.mubr.bf16.gmra.mrb[0].mxu0 %v1572
    %v6402 = vpop.f32.mrb[0].mxu0
    %v6403 = vadd.f32 %v6363, %v6402
    %v6404 = vpop.f32.mrb[0].mxu0
    %v6405 = vpop.f32.mrb[0].mxu0
    %v6406 = vpop.f32.mrb[0].mxu0
    %6407 = vdwg.mxu0
    %6408 = vmatprep.subr.bf16.mxu0 0
    %6409 = vmatpush1.bf16.msra.mxu0 %v4512
    %6410 = vmatprep.subr.bf16.mxu0 0
    %6411 = vmatpush1.bf16.msra.mxu0 %v4513
    %6412 = vmatprep.subr.bf16.mxu0 0
    %6413 = vmatpush1.bf16.msra.mxu0 %v4514
    %6414 = vmatprep.subr.bf16.mxu0 0
    %6415 = vmatpush1.bf16.msra.mxu0 %v4515
    %6416 = vmatprep.subr.bf16.mxu0 0
    %6417 = vmatpush1.bf16.msra.mxu0 %v4516
    %6418 = vmatprep.subr.bf16.mxu0 0
    %6419 = vmatpush1.bf16.msra.mxu0 %v4517
    %6420 = vmatprep.subr.bf16.mxu0 0
    %6421 = vmatpush1.bf16.msra.mxu0 %v4518
    %6422 = vmatprep.subr.bf16.mxu0 0
    %6423 = vmatpush1.bf16.msra.mxu0 %v4519
    %6424 = vmatprep.subr.bf16.mxu0 0
    %6425 = vmatpush1.bf16.msra.mxu0 %v4520
    %6426 = vmatprep.subr.bf16.mxu0 0
    %6427 = vmatpush1.bf16.msra.mxu0 %v4521
    %6428 = vmatprep.subr.bf16.mxu0 0
    %6429 = vmatpush1.bf16.msra.mxu0 %v4522
    %6430 = vmatprep.subr.bf16.mxu0 0
    %6431 = vmatpush1.bf16.msra.mxu0 %v4523
    %6432 = vmatprep.subr.bf16.mxu0 0
    %6433 = vmatpush1.bf16.msra.mxu0 %v4524
    %6434 = vmatprep.subr.bf16.mxu0 0
    %6435 = vmatpush1.bf16.msra.mxu0 %v4525
    %6436 = vmatprep.subr.bf16.mxu0 0
    %6437 = vmatpush1.bf16.msra.mxu0 %v4526
    %6438 = vmatprep.subr.bf16.mxu0 0
    %6439 = vmatpush1.bf16.msra.mxu0 %v4527
    %6440 = vmatprep.mubr.bf16.mxu0 %v1590
    %6441 = vmatmul.mubr.bf16.gmra.mrb[0].mxu0 %v1588
    %v6442 = vpop.f32.mrb[0].mxu0
    %v6443 = vadd.f32 %v6403, %v6442
    %v6444 = vpop.f32.mrb[0].mxu0
    %v6445 = vpop.f32.mrb[0].mxu0
    %v6446 = vpop.f32.mrb[0].mxu0
    %6447 = vdwg.mxu0
    %6448 = vmatprep.subr.bf16.mxu0 0
    %6449 = vmatpush1.bf16.msra.mxu0 %v4528
    %6450 = vmatprep.subr.bf16.mxu0 0
    %6451 = vmatpush1.bf16.msra.mxu0 %v4529
    %6452 = vmatprep.subr.bf16.mxu0 0
    %6453 = vmatpush1.bf16.msra.mxu0 %v4530
    %6454 = vmatprep.subr.bf16.mxu0 0
    %6455 = vmatpush1.bf16.msra.mxu0 %v4531
    %6456 = vmatprep.subr.bf16.mxu0 0
    %6457 = vmatpush1.bf16.msra.mxu0 %v4532
    %6458 = vmatprep.subr.bf16.mxu0 0
    %6459 = vmatpush1.bf16.msra.mxu0 %v4533
    %6460 = vmatprep.subr.bf16.mxu0 0
    %6461 = vmatpush1.bf16.msra.mxu0 %v4534
    %6462 = vmatprep.subr.bf16.mxu0 0
    %6463 = vmatpush1.bf16.msra.mxu0 %v4535
    %6464 = vmatprep.subr.bf16.mxu0 0
    %6465 = vmatpush1.bf16.msra.mxu0 %v4536
    %6466 = vmatprep.subr.bf16.mxu0 0
    %6467 = vmatpush1.bf16.msra.mxu0 %v4537
    %6468 = vmatprep.subr.bf16.mxu0 0
    %6469 = vmatpush1.bf16.msra.mxu0 %v4538
    %6470 = vmatprep.subr.bf16.mxu0 0
    %6471 = vmatpush1.bf16.msra.mxu0 %v4539
    %6472 = vmatprep.subr.bf16.mxu0 0
    %6473 = vmatpush1.bf16.msra.mxu0 %v4540
    %6474 = vmatprep.subr.bf16.mxu0 0
    %6475 = vmatpush1.bf16.msra.mxu0 %v4541
    %6476 = vmatprep.subr.bf16.mxu0 0
    %6477 = vmatpush1.bf16.msra.mxu0 %v4542
    %6478 = vmatprep.subr.bf16.mxu0 0
    %6479 = vmatpush1.bf16.msra.mxu0 %v4543
    %6480 = vmatprep.mubr.bf16.mxu0 %v1628
    %6481 = vmatmul.mubr.bf16.gmra.mrb[0].mxu0 %v1614
    %v6482 = vpop.f32.mrb[0].mxu0
    %v6483 = vadd.f32 %v6443, %v6482
    %v6484 = vpop.f32.mrb[0].mxu0
    %v6485 = vpop.f32.mrb[0].mxu0
    %v6486 = vpop.f32.mrb[0].mxu0
    %6487 = vdwg.mxu0
    %6488 = vmatprep.subr.bf16.mxu0 0
    %6489 = vmatpush1.bf16.msra.mxu0 %v4544
    %6490 = vmatprep.subr.bf16.mxu0 0
    %6491 = vmatpush1.bf16.msra.mxu0 %v4545
    %6492 = vmatprep.subr.bf16.mxu0 0
    %6493 = vmatpush1.bf16.msra.mxu0 %v4546
    %6494 = vmatprep.subr.bf16.mxu0 0
    %6495 = vmatpush1.bf16.msra.mxu0 %v4547
    %6496 = vmatprep.subr.bf16.mxu0 0
    %6497 = vmatpush1.bf16.msra.mxu0 %v4548
    %6498 = vmatprep.subr.bf16.mxu0 0
    %6499 = vmatpush1.bf16.msra.mxu0 %v4549
    %6500 = vmatprep.subr.bf16.mxu0 0
    %6501 = vmatpush1.bf16.msra.mxu0 %v4550
    %6502 = vmatprep.subr.bf16.mxu0 0
    %6503 = vmatpush1.bf16.msra.mxu0 %v4551
    %6504 = vmatprep.subr.bf16.mxu0 0
    %6505 = vmatpush1.bf16.msra.mxu0 %v4552
    %6506 = vmatprep.subr.bf16.mxu0 0
    %6507 = vmatpush1.bf16.msra.mxu0 %v4553
    %6508 = vmatprep.subr.bf16.mxu0 0
    %6509 = vmatpush1.bf16.msra.mxu0 %v4554
    %6510 = vmatprep.subr.bf16.mxu0 0
    %6511 = vmatpush1.bf16.msra.mxu0 %v4555
    %6512 = vmatprep.subr.bf16.mxu0 0
    %6513 = vmatpush1.bf16.msra.mxu0 %v4556
    %6514 = vmatprep.subr.bf16.mxu0 0
    %6515 = vmatpush1.bf16.msra.mxu0 %v4557
    %6516 = vmatprep.subr.bf16.mxu0 0
    %6517 = vmatpush1.bf16.msra.mxu0 %v4558
    %6518 = vmatprep.subr.bf16.mxu0 0
    %6519 = vmatpush1.bf16.msra.mxu0 %v4559
    %6520 = vmatprep.mubr.bf16.mxu0 %v1638
    %6521 = vmatmul.mubr.bf16.gmra.mrb[0].mxu0 %v1636
    %v6522 = vpop.f32.mrb[0].mxu0
    %v6523 = vadd.f32 %v6483, %v6522
    %v6524 = vpop.f32.mrb[0].mxu0
    %v6525 = vpop.f32.mrb[0].mxu0
    %v6526 = vpop.f32.mrb[0].mxu0
    %6527 = vdwg.mxu0
    %6528 = vmatprep.subr.bf16.mxu0 0
    %6529 = vmatpush1.bf16.msra.mxu0 %v4560
    %6530 = vmatprep.subr.bf16.mxu0 0
    %6531 = vmatpush1.bf16.msra.mxu0 %v4561
    %6532 = vmatprep.subr.bf16.mxu0 0
    %6533 = vmatpush1.bf16.msra.mxu0 %v4562
    %6534 = vmatprep.subr.bf16.mxu0 0
    %6535 = vmatpush1.bf16.msra.mxu0 %v4563
    %6536 = vmatprep.subr.bf16.mxu0 0
    %6537 = vmatpush1.bf16.msra.mxu0 %v4564
    %6538 = vmatprep.subr.bf16.mxu0 0
    %6539 = vmatpush1.bf16.msra.mxu0 %v4565
    %6540 = vmatprep.subr.bf16.mxu0 0
    %6541 = vmatpush1.bf16.msra.mxu0 %v4566
    %6542 = vmatprep.subr.bf16.mxu0 0
    %6543 = vmatpush1.bf16.msra.mxu0 %v4567
    %6544 = vmatprep.subr.bf16.mxu0 0
    %6545 = vmatpush1.bf16.msra.mxu0 %v4568
    %6546 = vmatprep.subr.bf16.mxu0 0
    %6547 = vmatpush1.bf16.msra.mxu0 %v4569
    %6548 = vmatprep.subr.bf16.mxu0 0
    %6549 = vmatpush1.bf16.msra.mxu0 %v4570
    %6550 = vmatprep.subr.bf16.mxu0 0
    %6551 = vmatpush1.bf16.msra.mxu0 %v4571
    %6552 = vmatprep.subr.bf16.mxu0 0
    %6553 = vmatpush1.bf16.msra.mxu0 %v4572
    %6554 = vmatprep.subr.bf16.mxu0 0
    %6555 = vmatpush1.bf16.msra.mxu0 %v4573
    %6556 = vmatprep.subr.bf16.mxu0 0
    %6557 = vmatpush1.bf16.msra.mxu0 %v4574
    %6558 = vmatprep.subr.bf16.mxu0 0
    %6559 = vmatpush1.bf16.msra.mxu0 %v4575
    %6560 = vmatprep.mubr.bf16.mxu0 %v1635
    %6561 = vmatmul.mubr.bf16.gmra.mrb[0].mxu0 %v1621
    %v6562 = vpop.f32.mrb[0].mxu0
    %v6563 = vadd.f32 %v6523, %v6562
    %v6564 = vpop.f32.mrb[0].mxu0
    %v6565 = vpop.f32.mrb[0].mxu0
    %v6566 = vpop.f32.mrb[0].mxu0
    %6567 = vdwg.mxu0
    %6568 = vmatprep.subr.bf16.mxu0 0
    %6569 = vmatpush1.bf16.msra.mxu0 %v4576
    %6570 = vmatprep.subr.bf16.mxu0 0
    %6571 = vmatpush1.bf16.msra.mxu0 %v4577
    %6572 = vmatprep.subr.bf16.mxu0 0
    %6573 = vmatpush1.bf16.msra.mxu0 %v4578
    %6574 = vmatprep.subr.bf16.mxu0 0
    %6575 = vmatpush1.bf16.msra.mxu0 %v4579
    %6576 = vmatprep.subr.bf16.mxu0 0
    %6577 = vmatpush1.bf16.msra.mxu0 %v4580
    %6578 = vmatprep.subr.bf16.mxu0 0
    %6579 = vmatpush1.bf16.msra.mxu0 %v4581
    %6580 = vmatprep.subr.bf16.mxu0 0
    %6581 = vmatpush1.bf16.msra.mxu0 %v4582
    %6582 = vmatprep.subr.bf16.mxu0 0
    %6583 = vmatpush1.bf16.msra.mxu0 %v4583
    %6584 = vmatprep.subr.bf16.mxu0 0
    %6585 = vmatpush1.bf16.msra.mxu0 %v4584
    %6586 = vmatprep.subr.bf16.mxu0 0
    %6587 = vmatpush1.bf16.msra.mxu0 %v4585
    %6588 = vmatprep.subr.bf16.mxu0 0
    %6589 = vmatpush1.bf16.msra.mxu0 %v4586
    %6590 = vmatprep.subr.bf16.mxu0 0
    %6591 = vmatpush1.bf16.msra.mxu0 %v4587
    %6592 = vmatprep.subr.bf16.mxu0 0
    %6593 = vmatpush1.bf16.msra.mxu0 %v4588
    %6594 = vmatprep.subr.bf16.mxu0 0
    %6595 = vmatpush1.bf16.msra.mxu0 %v4589
    %6596 = vmatprep.subr.bf16.mxu0 0
    %6597 = vmatpush1.bf16.msra.mxu0 %v4590
    %6598 = vmatprep.subr.bf16.mxu0 0
    %6599 = vmatpush1.bf16.msra.mxu0 %v4591
    %6600 = vmatprep.mubr.bf16.mxu0 %v1639
    %6601 = vmatmul.mubr.bf16.gmra.mrb[0].mxu0 %v1637
    %v6602 = vpop.f32.mrb[0].mxu0
    %v6603 = vadd.f32 %v6563, %v6602
    %v6604 = vpop.f32.mrb[0].mxu0
    %v6605 = vpop.f32.mrb[0].mxu0
    %v6606 = vpop.f32.mrb[0].mxu0
    %6607 = vdwg.mxu0
    %v6608 = vmax.f32 %v6603, 0.0
    %v6609 = vpack.c.bf16 %v6608, %v6608
    %v6610 = vld [vmem:[%s3] sm:$0xf]
    %v6611 = vld [vmem:[%s3 + $0x4] sm:$0xf]
    %v6612 = vld [vmem:[%s3 + $0x8] sm:$0xf]
    %v6613 = vld [vmem:[%s3 + $0xc] sm:$0xf]
    %v6614 = vld [vmem:[%s3 + $0x10] sm:$0xf]
    %v6615 = vld [vmem:[%s3 + $0x14] sm:$0xf]
    %v6616 = vld [vmem:[%s3 + $0x18] sm:$0xf]
    %v6617 = vld [vmem:[%s3 + $0x1c] sm:$0xf]
    %v6618 = vld [vmem:[%s3 + $0x20] sm:$0xf]
    %v6619 = vld [vmem:[%s3 + $0x24] sm:$0xf]
    %v6620 = vld [vmem:[%s3 + $0x28] sm:$0xf]
    %v6621 = vld [vmem:[%s3 + $0x2c] sm:$0xf]
    %v6622 = vld [vmem:[%s3 + $0x30] sm:$0xf]
    %v6623 = vld [vmem:[%s3 + $0x34] sm:$0xf]
    %v6624 = vld [vmem:[%s3 + $0x38] sm:$0xf]
    %v6625 = vld [vmem:[%s3 + $0x3c] sm:$0xf]
    %v6626 = vld [vmem:[%s4] sm:$0x1]
    %v6628 = vlaneseq
    %v6629 = vshrl.u32 %v6628, 7
    %v6630 = vsub.s32 0, %v6629
    %v6631 = vrot.slane %v6626, %v6630
    %v6649 = vunpack.c.l.b16 %v6610
    %v6650 = vunpack.c.l.b16 %v6611
    %v6651 = vunpack.c.l.b16 %v6612
    %v6652 = vunpack.c.l.b16 %v6613
    %v6653 = vunpack.c.l.b16 %v6614
    %v6654 = vunpack.c.l.b16 %v6615
    %v6655 = vunpack.c.l.b16 %v6616
    %v6656 = vunpack.c.l.b16 %v6617
    %v6657 = vunpack.c.l.b16 %v6618
    %v6658 = vunpack.c.l.b16 %v6619
    %v6659 = vunpack.c.l.b16 %v6620
    %v6660 = vunpack.c.l.b16 %v6621
    %v6661 = vunpack.c.l.b16 %v6622
    %v6662 = vunpack.c.l.b16 %v6623
    %v6663 = vunpack.c.l.b16 %v6624
    %v6664 = vunpack.c.l.b16 %v6625
    %v6665 = vpack.c.b16 %v6650, %v6649
    %v6666 = vpack.c.b16 %v6652, %v6651
    %v6667 = vpack.c.b16 %v6654, %v6653
    %v6668 = vpack.c.b16 %v6656, %v6655
    %v6669 = vpack.c.b16 %v6658, %v6657
    %v6670 = vpack.c.b16 %v6660, %v6659
    %v6671 = vpack.c.b16 %v6662, %v6661
    %v6672 = vpack.c.b16 %v6664, %v6663
    %6681 = vmatprep.subr.bf16.mxu0 0
    %6682 = vmatpush1.bf16.msra.mxu0 %v6665
    %6683 = vmatprep.subr.bf16.mxu0 0
    %6684 = vmatpush1.bf16.msra.mxu0 %v6666
    %6685 = vmatprep.subr.bf16.mxu0 0
    %6686 = vmatpush1.bf16.msra.mxu0 %v6667
    %6687 = vmatprep.subr.bf16.mxu0 0
    %6688 = vmatpush1.bf16.msra.mxu0 %v6668
    %6689 = vmatprep.subr.bf16.mxu0 0
    %6690 = vmatpush1.bf16.msra.mxu0 %v6669
    %6691 = vmatprep.subr.bf16.mxu0 0
    %6692 = vmatpush1.bf16.msra.mxu0 %v6670
    %6693 = vmatprep.subr.bf16.mxu0 0
    %6694 = vmatpush1.bf16.msra.mxu0 %v6671
    %6695 = vmatprep.subr.bf16.mxu0 0
    %6696 = vmatpush1.bf16.msra.mxu0 %v6672
    %6697 = vmatprep.subr.bf16.mxu0 0
    %6698 = vmatpush1.bf16.msra.mxu0 0
    %6699 = vmatprep.subr.bf16.mxu0 0
    %6700 = vmatpush1.bf16.msra.mxu0 0
    %6701 = vmatprep.subr.bf16.mxu0 0
    %6702 = vmatpush1.bf16.msra.mxu0 0
    %6703 = vmatprep.subr.bf16.mxu0 0
    %6704 = vmatpush1.bf16.msra.mxu0 0
    %6705 = vmatprep.subr.bf16.mxu0 0
    %6706 = vmatpush1.bf16.msra.mxu0 0
    %6707 = vmatprep.subr.bf16.mxu0 0
    %6708 = vmatpush1.bf16.msra.mxu0 0
    %6709 = vmatprep.subr.bf16.mxu0 0
    %6710 = vmatpush1.bf16.msra.mxu0 0
    %6711 = vmatprep.subr.bf16.mxu0 0
    %6712 = vmatpush1.bf16.msra.mxu0 0
    %6713 = vmatprep.mubr.bf16.mxu0 0
    %6714 = vmatmul.mubr.bf16.gmra.mrb[0].mxu0 %v6609
    %v6715 = vpop.f32.mrb[0].mxu0
    %v6716 = vadd.f32 %v6631, %v6715
    %v6717 = vpop.f32.mrb[0].mxu0
    %v6718 = vpop.f32.mrb[0].mxu0
    %v6719 = vpop.f32.mrb[0].mxu0
    %6720 = vdwg.mxu0
    %vm6721 = vcmask 74752
    %6722 = vst.msk [vmem:[#allocation2] sm:$0x3] %vm6721, %v6716
    // Predicated region
    $region22: #{net_forward.3} parent=1 // pred_check
      _
    $region23: #{net_forward.3} parent=1 // pred_check_branch
      %6724 = sbr.rel (0) target = $region25
    $region24: #{net_forward.3} parent=1 // pred_region
      %s6726 = ssub.s32 32, 32
      %6727 = vsyncadd [#allocation3], %s6726
      %s6729 = sshll.u32 [#allocation2], 4
      %s6730 = int_to_ptr.vmem [resolvable:$true] %s6729
      %6732 = dma.vmem_to_hbm [thread:$0]  %s6730, 32, %s5, [#allocation3]
    $region25: #{net_forward.3} parent=1 // pred_fallthru
      _
    // Predicated region
    $region26: #{net_forward.3} parent=1 // pred_check
      _
    $region27: #{net_forward.3} parent=1 // pred_check_branch
      %6734 = sbr.rel (0) target = $region29
    $region28: #{net_forward.3} parent=1 // pred_region
      %6735 = dma.done [#allocation3], 32
    $region29: #{net_forward.3} parent=1 // pred_fallthru
      _
    %6736 = vsyncpa [#allocation3], 1

</llo_original>
